<compile_context>
chip_gen: v7x
topology: tpu7x:2x2x1
jax: 0.10.0
libtpu: 0.0.40
codegen_flags: <defaults>
</compile_context>

<pallas_src>
import jax
import jax.numpy as jnp
from jax.experimental import pallas as pl
from jax.experimental.pallas import tpu as pltpu

_VMEM_LIMIT = 48 * 1024 * 1024   # < v7x 64 MiB physical, above default scoped


def _round_up(x, m):
    return (x + m - 1) // m * m


def _tile_m(m):
    """16-aligned M tile, <=256, and >=2 tiles whenever possible (v7x 2 TCs)."""
    return max(16, min(256, _round_up(pl.cdiv(m, 2), 16)))


# ---------------------------------------------------------------------------
# Kernel 1: 1x1 ConvBN  ==  GEMM + f32 scale/bias + ReLU.
# Weights / scale / bias are VMEM-resident (constant index_map); grid over M.
# ---------------------------------------------------------------------------
def _gemm_scale_bias_relu_kernel(x_ref, w_ref, s_ref, b_ref, o_ref):
    acc = jnp.dot(x_ref[...], w_ref[...], preferred_element_type=jnp.float32)
    o_ref[...] = jnp.maximum(acc * s_ref[...] + b_ref[...], 0.0).astype(o_ref.dtype)


def _conv1x1_bn_relu(x, weight, scale, bias, out_dtype):
    """x: (N,H,W,Kx) bf16, channel-padded with zeros.  weight: (Cout,Cin,1,1)."""
    n, h, w, kx = x.shape
    cout, cin = weight.shape[0], weight.shape[1]
    cp = _round_up(cout, 128)
    m = n * h * w
    tm = _tile_m(m)
    mp = _round_up(m, tm)

    x2d = x.reshape(m, kx)
    if mp != m:
        x2d = jnp.pad(x2d, ((0, mp - m), (0, 0)))
    w2d = jnp.pad(weight[:, :, 0, 0].T.astype(jnp.bfloat16),
                  ((0, kx - cin), (0, cp - cout)))
    s2d = jnp.pad(scale, (0, cp - cout)).reshape(1, cp).astype(jnp.float32)
    b2d = jnp.pad(bias, (0, cp - cout)).reshape(1, cp).astype(jnp.float32)

    flops = 2 * mp * kx * cp
    bytes_accessed = (mp * kx * 2 + kx * cp * 2 + 2 * cp * 4
                      + mp * cp * jnp.dtype(out_dtype).itemsize)

    out = pl.pallas_call(
        _gemm_scale_bias_relu_kernel,
        out_shape=jax.ShapeDtypeStruct((mp, cp), out_dtype),
        grid_spec=pltpu.PrefetchScalarGridSpec(
            num_scalar_prefetch=0,
            grid=(mp // tm,),
            in_specs=[
                pl.BlockSpec((tm, kx), lambda i: (i, 0)),
                pl.BlockSpec((kx, cp), lambda i: (0, 0)),     # resident weights
                pl.BlockSpec((1, cp), lambda i: (0, 0)),      # resident scale
                pl.BlockSpec((1, cp), lambda i: (0, 0)),      # resident bias
            ],
            out_specs=pl.BlockSpec((tm, cp), lambda i: (i, 0)),
        ),
        compiler_params=pltpu.CompilerParams(
            dimension_semantics=("parallel",),
            vmem_limit_bytes=_VMEM_LIMIT),
        cost_estimate=pl.CostEstimate(flops=flops, transcendentals=0,
                                      bytes_accessed=bytes_accessed),
    )(x2d, w2d, s2d, b2d)

    return out[:m].reshape(n, h, w, cp)


# ---------------------------------------------------------------------------
# Kernel 2: kh x kw ConvBN (stride 1, "same" padding) via tap accumulation.
# No im2col: each grid step DMAs one extended (TM + halo)-row slab of the
# flattened padded activation from HBM (double-buffered), then accumulates the
# kh*kw shifted-slice matmuls into an f32 scratch.
# ---------------------------------------------------------------------------
def _make_tap_conv_kernel(shifts, tm, halo):
    n_taps = len(shifts)
    rows = tm + halo

    def kernel(x_hbm, w_ref, s_ref, b_ref, o_ref, xbuf, sems, acc_ref):
        i = pl.program_id(0)
        n = pl.num_programs(0)
        slot = i % 2

        def fetch(step, slot_):
            pltpu.make_async_copy(
                x_hbm.at[pl.ds(step * tm, rows), :],
                xbuf.at[slot_], sems.at[slot_]).start()

        @pl.when(i == 0)
        def _():                       # prime the first slab
            fetch(0, 0)

        @pl.when(i + 1 < n)
        def _():                       # prefetch the next slab into other slot
            fetch(i + 1, 1 - slot)

        pltpu.make_async_copy(         # wait on the current slab
            x_hbm.at[pl.ds(i * tm, rows), :],
            xbuf.at[slot], sems.at[slot]).wait()

        acc_ref[...] = jnp.dot(xbuf[slot, pl.ds(shifts[0], tm), :], w_ref[0],
                               preferred_element_type=jnp.float32)
        for t in range(1, n_taps):     # static unroll over the kh*kw taps
            acc_ref[...] += jnp.dot(xbuf[slot, pl.ds(shifts[t], tm), :],
                                    w_ref[t],
                                    preferred_element_type=jnp.float32)

        o_ref[...] = jnp.maximum(
            acc_ref[...] * s_ref[...] + b_ref[...], 0.0).astype(o_ref.dtype)

    return kernel


def _conv_kxk_bn_relu(x, weight, scale, bias, out_dtype):
    """x: (N,H,W,Kx) bf16 channel-padded.  weight: (Cout,Cin,kh,kw)."""
    n, h, w, kx = x.shape
    cout, cin, kh, kw = weight.shape
    ph, pw = kh // 2, kw // 2
    hp, wp = h + kh - 1, w + kw - 1
    cp = _round_up(cout, 128)
    taps = kh * kw
    # Output q = n*hp*wp + y*wp + x (padded grid) reads input row q + shift_t.
    shifts = tuple(di * wp + dj for di in range(kh) for dj in range(kw))

    m = n * hp * wp                    # outputs computed on the padded grid
    tm = _tile_m(m)
    mp = _round_up(m, tm)
    halo = _round_up(shifts[-1], 8)

    xp = jnp.pad(x, ((0, 0), (ph, kh - 1 - ph), (pw, kw - 1 - pw), (0, 0)))
    xflat = jnp.pad(xp.reshape(m, kx), ((0, mp + halo - m), (0, 0)))

    wt = jnp.transpose(weight, (2, 3, 1, 0)).reshape(taps, cin, cout)
    wt = jnp.pad(wt.astype(jnp.bfloat16), ((0, 0), (0, kx - cin), (0, cp - cout)))
    s2d = jnp.pad(scale, (0, cp - cout)).reshape(1, cp).astype(jnp.float32)
    b2d = jnp.pad(bias, (0, cp - cout)).reshape(1, cp).astype(jnp.float32)

    flops = 2 * mp * taps * kx * cp
    bytes_accessed = ((mp // tm) * (tm + halo) * kx * 2 + taps * kx * cp * 2
                      + 2 * cp * 4 + mp * cp * jnp.dtype(out_dtype).itemsize)

    out = pl.pallas_call(
        _make_tap_conv_kernel(shifts, tm, halo),
        out_shape=jax.ShapeDtypeStruct((mp, cp), out_dtype),
        grid_spec=pltpu.PrefetchScalarGridSpec(
            num_scalar_prefetch=0,
            grid=(mp // tm,),
            in_specs=[
                pl.BlockSpec(memory_space=pl.ANY),                  # HBM, manual DMA
                pl.BlockSpec((taps, kx, cp), lambda i: (0, 0, 0)),  # resident W
                pl.BlockSpec((1, cp), lambda i: (0, 0)),            # resident scale
                pl.BlockSpec((1, cp), lambda i: (0, 0)),            # resident bias
            ],
            out_specs=pl.BlockSpec((tm, cp), lambda i: (i, 0)),
            scratch_shapes=[
                pltpu.VMEM((2, tm + halo, kx), jnp.bfloat16),   # double buffer
                pltpu.SemaphoreType.DMA((2,)),
                pltpu.VMEM((tm, cp), jnp.float32),              # f32 accumulator
            ],
        ),
        compiler_params=pltpu.CompilerParams(
            # "arbitrary": manual cross-step prefetch state => sequential axis.
            dimension_semantics=("arbitrary",),
            vmem_limit_bytes=_VMEM_LIMIT),
        cost_estimate=pl.CostEstimate(flops=flops, transcendentals=0,
                                      bytes_accessed=bytes_accessed),
    )(xflat, wt, s2d, b2d)

    out = out[:m].reshape(n, hp, wp, cp)
    return out[:, :h, :w, :]           # drop the padded-grid garbage rows/cols


# ---------------------------------------------------------------------------
# ConvBN dispatcher (eval-mode BN applied as f32 scale/bias in the epilogue)
# ---------------------------------------------------------------------------
def conv_bn_relu_nhwc(x, p, out_dtype=jnp.bfloat16, slice_channels=False,
                      eps=1e-5):
    weight = p["weight"]
    cout = weight.shape[0]
    kh, kw = weight.shape[2], weight.shape[3]
    scale = p["gamma"] / jnp.sqrt(p["var"] + eps)        # f32
    bias = p["beta"] - p["mean"] * scale                 # f32
    if kh == 1 and kw == 1:
        out = _conv1x1_bn_relu(x, weight, scale, bias, out_dtype)
    else:
        out = _conv_kxk_bn_relu(x, weight, scale, bias, out_dtype)
    if slice_channels:
        out = out[..., :cout]
    return out


def _max_pool_3x3_s1_p1_nhwc(x):
    # TODO(synk): max-pool stays in XLA glue (9-way shifted max); it is
    # bandwidth-trivial next to the conv GEMMs and not worth a kernel here.
    n, h, w, c = x.shape
    xp = jnp.pad(x, ((0, 0), (1, 1), (1, 1), (0, 0)),
                 constant_values=float("-inf"))
    m = xp[:, 0:h, 0:w, :]
    for di in range(3):
        for dj in range(3):
            if di == 0 and dj == 0:
                continue
            m = jnp.maximum(m, xp[:, di:di + h, dj:dj + w, :])
    return m


# ---------------------------------------------------------------------------
# Inception_C forward (NCHW in / NCHW out; NHWC bf16 channel-padded inside)
# ---------------------------------------------------------------------------
@jax.jit
def inception_c_forward(x_nchw, params):
    n, cin, h, w = x_nchw.shape
    cin_p = _round_up(cin, 128)
    # Single boundary pass: NCHW -> NHWC, f32 -> bf16, channel-pad to 128.
    x = jnp.transpose(x_nchw, (0, 2, 3, 1)).astype(jnp.bfloat16)
    x = jnp.pad(x, ((0, 0), (0, 0), (0, 0), (0, cin_p - cin)))

    def mid(h_, p):       # intermediate layer: bf16, channel-padded output
        return conv_bn_relu_nhwc(h_, p)

    def last(h_, p):      # branch-final layer: f32, true channel count
        return conv_bn_relu_nhwc(h_, p, out_dtype=jnp.float32,
                                 slice_channels=True)

    p1 = last(x, params["p1"])

    t = mid(x, params["p2_0"])
    t = mid(t, params["p2_1"])
    p2 = last(t, params["p2_2"])

    t = mid(x, params["p3_0"])
    t = mid(t, params["p3_1"])
    t = mid(t, params["p3_2"])
    p3 = last(t, params["p3_3"])

    t = _max_pool_3x3_s1_p1_nhwc(x)
    p4 = last(t, params["p4_1"])

    # TODO(synk): branch outputs are still concatenated in XLA glue; writing
    # each final conv directly into its channel slice of a preallocated NHWC
    # buffer (input_output_aliases) would remove this copy pass.
    out = jnp.concatenate([p1, p2, p3, p4], axis=-1)
    return jnp.transpose(out, (0, 3, 1, 2))


# ---------------------------------------------------------------------------
# Parameter construction + pure-JAX reference
# ---------------------------------------------------------------------------
def _make_convbn_params(key, cin, cout, kh, kw):
    k1, k2, k3, k4, k5 = jax.random.split(key, 5)
    return dict(
        weight=jax.random.normal(k1, (cout, cin, kh, kw), jnp.float32) * 0.1,
        gamma=jax.random.uniform(k2, (cout,), jnp.float32, 0.5, 1.5),
        beta=jax.random.normal(k3, (cout,), jnp.float32) * 0.1,
        mean=jax.random.normal(k4, (cout,), jnp.float32) * 0.1,
        var=jax.random.uniform(k5, (cout,), jnp.float32, 0.5, 1.5),
    )


def make_inception_c_params(key, in_channels, cfg):
    ks = jax.random.split(key, 9)
    return dict(
        p1=_make_convbn_params(ks[0], in_channels, cfg[0], 1, 1),
        p2_0=_make_convbn_params(ks[1], in_channels, cfg[1], 1, 1),
        p2_1=_make_convbn_params(ks[2], cfg[1], cfg[2], 1, 3),
        p2_2=_make_convbn_params(ks[3], cfg[2], cfg[2], 3, 1),
        p3_0=_make_convbn_params(ks[4], in_channels, cfg[3], 1, 1),
        p3_1=_make_convbn_params(ks[5], cfg[3], cfg[4], 3, 3),
        p3_2=_make_convbn_params(ks[6], cfg[4], cfg[4], 1, 3),
        p3_3=_make_convbn_params(ks[7], cfg[4], cfg[4], 3, 1),
        p4_1=_make_convbn_params(ks[8], in_channels, cfg[5], 1, 1),
    )


def _convbn_ref(x, p, eps=1e-5):
    w = p["weight"]
    kh, kw = w.shape[2], w.shape[3]
    y = jax.lax.conv_general_dilated(
        x, w, window_strides=(1, 1),
        padding=((kh // 2, kh // 2), (kw // 2, kw // 2)),
        dimension_numbers=("NCHW", "OIHW", "NCHW"))
    scale = p["gamma"] / jnp.sqrt(p["var"] + eps)
    bias = p["beta"] - p["mean"] * scale
    y = y * scale[None, :, None, None] + bias[None, :, None, None]
    return jnp.maximum(y, 0.0)


def _inception_c_ref(x, params):
    p1 = _convbn_ref(x, params["p1"])
    t = _convbn_ref(x, params["p2_0"])
    t = _convbn_ref(t, params["p2_1"])
    p2 = _convbn_ref(t, params["p2_2"])
    t = _convbn_ref(x, params["p3_0"])
    t = _convbn_ref(t, params["p3_1"])
    t = _convbn_ref(t, params["p3_2"])
    p3 = _convbn_ref(t, params["p3_3"])
    mp = jax.lax.reduce_window(
        x, -jnp.inf, jax.lax.max, (1, 1, 3, 3), (1, 1, 1, 1),
        padding=((0, 0), (0, 0), (1, 1), (1, 1)))
    p4 = _convbn_ref(mp, params["p4_1"])
    return jnp.concatenate([p1, p2, p3, p4], axis=1)


if __name__ == "__main__":
    key = jax.random.PRNGKey(0)
    k_x, k_p = jax.random.split(key)

    # Small Inception_C: in_channels=8, channels_config=(16, 8, 16, 8, 16, 8)
    N, Cin, H, W = 2, 8, 16, 16
    cfg = (16, 8, 16, 8, 16, 8)

    x = jax.random.normal(k_x, (N, Cin, H, W), jnp.float32)
    params = make_inception_c_params(k_p, Cin, cfg)

    out = jax.block_until_ready(inception_c_forward(x, params))

    ref = _inception_c_ref(x, params)
    total_c = cfg[0] + cfg[2] + cfg[4] + cfg[5]
    assert out.shape == (N, total_c, H, W), out.shape
    max_err = float(jnp.max(jnp.abs(out - ref)))
    # bf16 MXU operands / bf16 inter-layer activations (f32 accumulation and
    # f32 BN scale/bias) => relaxed tolerance vs the pure-f32 reference.
    assert jnp.allclose(out, ref, rtol=5e-2, atol=5e-2), max_err

    print("KERNEL_OK")
</pallas_src>

<mosaic_0001>
module attributes {stable_mosaic.version = 11 : i64} {
  func.func @_gemm_scale_bias_relu_kernel(%arg0: i32, %arg1: memref<256x128xbf16, #tpu.memory_space<vmem>>, %arg2: memref<128x128xbf16, #tpu.memory_space<vmem>>, %arg3: memref<1x128xf32, #tpu.memory_space<vmem>>, %arg4: memref<1x128xf32, #tpu.memory_space<vmem>>, %arg5: memref<256x128xf32, #tpu.memory_space<vmem>>) attributes {dimension_semantics = [#tpu.dimension_semantics<parallel>], iteration_bounds = array<i64: 2>, scalar_prefetch = 0 : i64, scratch_operands = 0 : i64, tpu.core_type = #tpu.core_type<tc>, window_params = [{transform_indices = @transform_0, window_bounds = array<i64: 256, 128>}, {pipeline_mode = #tpu.pipeline_mode<synchronous>, transform_indices = @transform_1, window_bounds = array<i64: 128, 128>}, {pipeline_mode = #tpu.pipeline_mode<synchronous>, transform_indices = @transform_2, window_bounds = array<i64: 1, 128>}, {pipeline_mode = #tpu.pipeline_mode<synchronous>, transform_indices = @transform_3, window_bounds = array<i64: 1, 128>}, {transform_indices = @transform_4, window_bounds = array<i64: 256, 128>}]} {
    %c0 = arith.constant 0 : index
    %c0_0 = arith.constant 0 : index
    %0 = vector.load %arg1[%c0, %c0_0] : memref<256x128xbf16, #tpu.memory_space<vmem>>, vector<256x128xbf16>
    %c0_1 = arith.constant 0 : index
    %c0_2 = arith.constant 0 : index
    %1 = vector.load %arg2[%c0_1, %c0_2] : memref<128x128xbf16, #tpu.memory_space<vmem>>, vector<128x128xbf16>
    %cst = arith.constant dense<0.000000e+00> : vector<256x128xf32>
    %2 = tpu.matmul %0, %1, %cst {dimension_numbers = #tpu.dot_dimension_numbers<[1], [0], [0], [1], [0, 0, 1, 1], [], []>} : vector<256x128xbf16>, vector<128x128xbf16>, vector<256x128xf32> -> vector<256x128xf32>
    %c0_3 = arith.constant 0 : index
    %c0_4 = arith.constant 0 : index
    %3 = vector.load %arg3[%c0_3, %c0_4] : memref<1x128xf32, #tpu.memory_space<vmem>>, vector<1x128xf32>
    %4 = vector.broadcast %3 : vector<1x128xf32> to vector<256x128xf32>
    %5 = arith.mulf %2, %4 : vector<256x128xf32>
    %c0_5 = arith.constant 0 : index
    %c0_6 = arith.constant 0 : index
    %6 = vector.load %arg4[%c0_5, %c0_6] : memref<1x128xf32, #tpu.memory_space<vmem>>, vector<1x128xf32>
    %7 = vector.broadcast %6 : vector<1x128xf32> to vector<256x128xf32>
    %8 = arith.addf %5, %7 : vector<256x128xf32>
    %cst_7 = arith.constant 0.000000e+00 : f32
    %9 = vector.broadcast %cst_7 : f32 to vector<256x128xf32>
    %10 = arith.maximumf %8, %9 : vector<256x128xf32>
    %c0_8 = arith.constant 0 : index
    %c0_9 = arith.constant 0 : index
    %11 = vector.load %arg5[%c0_8, %c0_9] : memref<256x128xf32, #tpu.memory_space<vmem>>, vector<256x128xf32>
    tpu.vector_store %arg5[%c0_8, %c0_9], %10 {strides = array<i32>} : memref<256x128xf32, #tpu.memory_space<vmem>>, vector<256x128xf32>,
    return
  }
  func.func @transform_0(%arg0: i32) -> (i32, i32) {
    %c0_i32 = arith.constant 0 : i32
    %c0_i32_0 = arith.constant 0 : i32
    return %arg0, %c0_i32 : i32, i32
  }
  func.func @transform_1(%arg0: i32) -> (i32, i32) {
    %c0_i32 = arith.constant 0 : i32
    %c0_i32_0 = arith.constant 0 : i32
    %c0_i32_1 = arith.constant 0 : i32
    return %c0_i32, %c0_i32_0 : i32, i32
  }
  func.func @transform_2(%arg0: i32) -> (i32, i32) {
    %c0_i32 = arith.constant 0 : i32
    %c0_i32_0 = arith.constant 0 : i32
    %c0_i32_1 = arith.constant 0 : i32
    return %c0_i32, %c0_i32_0 : i32, i32
  }
  func.func @transform_3(%arg0: i32) -> (i32, i32) {
    %c0_i32 = arith.constant 0 : i32
    %c0_i32_0 = arith.constant 0 : i32
    %c0_i32_1 = arith.constant 0 : i32
    return %c0_i32, %c0_i32_0 : i32, i32
  }
  func.func @transform_4(%arg0: i32) -> (i32, i32) {
    %c0_i32 = arith.constant 0 : i32
    %c0_i32_0 = arith.constant 0 : i32
    return %arg0, %c0_i32 : i32, i32
  }
}

module attributes {stable_mosaic.version = 11 : i64} {
  func.func @_gemm_scale_bias_relu_kernel(%arg0: i32, %arg1: memref<256x128xbf16, #tpu.memory_space<vmem>>, %arg2: memref<128x128xbf16, #tpu.memory_space<vmem>>, %arg3: memref<1x128xf32, #tpu.memory_space<vmem>>, %arg4: memref<1x128xf32, #tpu.memory_space<vmem>>, %arg5: memref<256x128xbf16, #tpu.memory_space<vmem>>) attributes {dimension_semantics = [#tpu.dimension_semantics<parallel>], iteration_bounds = array<i64: 2>, scalar_prefetch = 0 : i64, scratch_operands = 0 : i64, tpu.core_type = #tpu.core_type<tc>, window_params = [{transform_indices = @transform_0, window_bounds = array<i64: 256, 128>}, {pipeline_mode = #tpu.pipeline_mode<synchronous>, transform_indices = @transform_1, window_bounds = array<i64: 128, 128>}, {pipeline_mode = #tpu.pipeline_mode<synchronous>, transform_indices = @transform_2, window_bounds = array<i64: 1, 128>}, {pipeline_mode = #tpu.pipeline_mode<synchronous>, transform_indices = @transform_3, window_bounds = array<i64: 1, 128>}, {transform_indices = @transform_4, window_bounds = array<i64: 256, 128>}]} {
    %c0 = arith.constant 0 : index
    %c0_0 = arith.constant 0 : index
    %0 = vector.load %arg1[%c0, %c0_0] : memref<256x128xbf16, #tpu.memory_space<vmem>>, vector<256x128xbf16>
    %c0_1 = arith.constant 0 : index
    %c0_2 = arith.constant 0 : index
    %1 = vector.load %arg2[%c0_1, %c0_2] : memref<128x128xbf16, #tpu.memory_space<vmem>>, vector<128x128xbf16>
    %cst = arith.constant dense<0.000000e+00> : vector<256x128xf32>
    %2 = tpu.matmul %0, %1, %cst {dimension_numbers = #tpu.dot_dimension_numbers<[1], [0], [0], [1], [0, 0, 1, 1], [], []>} : vector<256x128xbf16>, vector<128x128xbf16>, vector<256x128xf32> -> vector<256x128xf32>
    %c0_3 = arith.constant 0 : index
    %c0_4 = arith.constant 0 : index
    %3 = vector.load %arg3[%c0_3, %c0_4] : memref<1x128xf32, #tpu.memory_space<vmem>>, vector<1x128xf32>
    %4 = vector.broadcast %3 : vector<1x128xf32> to vector<256x128xf32>
    %5 = arith.mulf %2, %4 : vector<256x128xf32>
    %c0_5 = arith.constant 0 : index
    %c0_6 = arith.constant 0 : index
    %6 = vector.load %arg4[%c0_5, %c0_6] : memref<1x128xf32, #tpu.memory_space<vmem>>, vector<1x128xf32>
    %7 = vector.broadcast %6 : vector<1x128xf32> to vector<256x128xf32>
    %8 = arith.addf %5, %7 : vector<256x128xf32>
    %cst_7 = arith.constant 0.000000e+00 : f32
    %9 = vector.broadcast %cst_7 : f32 to vector<256x128xf32>
    %10 = arith.maximumf %8, %9 : vector<256x128xf32>
    %11 = arith.truncf %10 : vector<256x128xf32> to vector<256x128xbf16>
    %c0_8 = arith.constant 0 : index
    %c0_9 = arith.constant 0 : index
    %12 = vector.load %arg5[%c0_8, %c0_9] : memref<256x128xbf16, #tpu.memory_space<vmem>>, vector<256x128xbf16>
    tpu.vector_store %arg5[%c0_8, %c0_9], %11 {strides = array<i32>} : memref<256x128xbf16, #tpu.memory_space<vmem>>, vector<256x128xbf16>,
    return
  }
  func.func @transform_0(%arg0: i32) -> (i32, i32) {
    %c0_i32 = arith.constant 0 : i32
    %c0_i32_0 = arith.constant 0 : i32
    return %arg0, %c0_i32 : i32, i32
  }
  func.func @transform_1(%arg0: i32) -> (i32, i32) {
    %c0_i32 = arith.constant 0 : i32
    %c0_i32_0 = arith.constant 0 : i32
    %c0_i32_1 = arith.constant 0 : i32
    return %c0_i32, %c0_i32_0 : i32, i32
  }
  func.func @transform_2(%arg0: i32) -> (i32, i32) {
    %c0_i32 = arith.constant 0 : i32
    %c0_i32_0 = arith.constant 0 : i32
    %c0_i32_1 = arith.constant 0 : i32
    return %c0_i32, %c0_i32_0 : i32, i32
  }
  func.func @transform_3(%arg0: i32) -> (i32, i32) {
    %c0_i32 = arith.constant 0 : i32
    %c0_i32_0 = arith.constant 0 : i32
    %c0_i32_1 = arith.constant 0 : i32
    return %c0_i32, %c0_i32_0 : i32, i32
  }
  func.func @transform_4(%arg0: i32) -> (i32, i32) {
    %c0_i32 = arith.constant 0 : i32
    %c0_i32_0 = arith.constant 0 : i32
    return %arg0, %c0_i32 : i32, i32
  }
}

module attributes {stable_mosaic.version = 11 : i64} {
  func.func @kernel(%arg0: i32, %arg1: memref<808x128xbf16, #tpu.memory_space<any>>, %arg2: memref<9x128x128xbf16, #tpu.memory_space<vmem>>, %arg3: memref<1x128xf32, #tpu.memory_space<vmem>>, %arg4: memref<1x128xf32, #tpu.memory_space<vmem>>, %arg5: memref<256x128xbf16, #tpu.memory_space<vmem>>, %arg6: memref<2x296x128xbf16, #tpu.memory_space<vmem>>, %arg7: memref<2x!tpu.dma_semaphore, #tpu.memory_space<semaphore_mem>>, %arg8: memref<256x128xf32, #tpu.memory_space<vmem>>) attributes {dimension_semantics = [#tpu.dimension_semantics<arbitrary>], iteration_bounds = array<i64: 3>, scalar_prefetch = 0 : i64, scratch_operands = 3 : i64, tpu.core_type = #tpu.core_type<tc>, window_params = [{}, {pipeline_mode = #tpu.pipeline_mode<synchronous>, transform_indices = @transform_1, window_bounds = array<i64: 9, 128, 128>}, {pipeline_mode = #tpu.pipeline_mode<synchronous>, transform_indices = @transform_2, window_bounds = array<i64: 1, 128>}, {pipeline_mode = #tpu.pipeline_mode<synchronous>, transform_indices = @transform_3, window_bounds = array<i64: 1, 128>}, {transform_indices = @transform_4, window_bounds = array<i64: 256, 128>}]} {
    %c2_i32 = arith.constant 2 : i32
    %c0_i32 = arith.constant 0 : i32
    %0 = arith.cmpi eq, %c2_i32, %c0_i32 : i32
    %c1_i32 = arith.constant 1 : i32
    %1 = arith.select %0, %c1_i32, %c2_i32 : i32
    %2 = arith.remsi %arg0, %1 : i32
    %c0_i32_0 = arith.constant 0 : i32
    %3 = arith.cmpi ne, %2, %c0_i32_0 : i32
    %c0_i32_1 = arith.constant 0 : i32
    %4 = arith.cmpi slt, %2, %c0_i32_1 : i32
    %c0_i32_2 = arith.constant 0 : i32
    %5 = arith.cmpi slt, %1, %c0_i32_2 : i32
    %6 = arith.xori %4, %5 : i1
    %7 = arith.andi %6, %3 : i1
    %8 = arith.addi %2, %1 : i32
    %9 = arith.select %7, %8, %2 : i32
    %c0_i32_3 = arith.constant 0 : i32
    %10 = arith.cmpi eq, %arg0, %c0_i32_3 : i32
    %11 = arith.extui %10 : i1 to i32
    %c0_i32_4 = arith.constant 0 : i32
    %12 = arith.cmpi ne, %11, %c0_i32_4 : i32
    scf.if %12 {
      %c0_i32_91 = arith.constant 0 : i32
      %c0_i32_92 = arith.constant 0 : i32
      %c0_i32_93 = arith.constant 0 : i32
      %c0_i32_94 = arith.constant 0 : i32
      %113 = tpu.memref_slice %arg1[%c0_i32_93, %c0_i32_94] : memref<808x128xbf16, #tpu.memory_space<any>> -> memref<296x128xbf16, #tpu.memory_space<any>>
      %c0_i32_95 = arith.constant 0 : i32
      %c0_i32_96 = arith.constant 0 : i32
      %114 = tpu.memref_slice %arg6[%c0_i32_91, %c0_i32_95, %c0_i32_96] : memref<2x296x128xbf16, #tpu.memory_space<vmem>> -> memref<1x296x128xbf16, #tpu.memory_space<vmem>>
      %115 = tpu.memref_squeeze %114 : memref<1x296x128xbf16, #tpu.memory_space<vmem>> -> memref<296x128xbf16, #tpu.memory_space<vmem>>
      %116 = tpu.memref_slice %arg7[%c0_i32_92] : memref<2x!tpu.dma_semaphore, #tpu.memory_space<semaphore_mem>> -> memref<1x!tpu.dma_semaphore, #tpu.memory_space<semaphore_mem>>
      %117 = tpu.memref_squeeze %116 : memref<1x!tpu.dma_semaphore, #tpu.memory_space<semaphore_mem>> -> memref<!tpu.dma_semaphore, #tpu.memory_space<semaphore_mem>>
      tpu.enqueue_dma source(%113 : memref<296x128xbf16, #tpu.memory_space<any>>) target(%115 : memref<296x128xbf16, #tpu.memory_space<vmem>>) target_semaphore(%117 : memref<!tpu.dma_semaphore, #tpu.memory_space<semaphore_mem>>)
    } else {
    }
    %c1_i32_5 = arith.constant 1 : i32
    %13 = arith.addi %arg0, %c1_i32_5 : i32
    %c3_i32 = arith.constant 3 : i32
    %14 = arith.cmpi slt, %13, %c3_i32 : i32
    %15 = arith.extui %14 : i1 to i32
    %c0_i32_6 = arith.constant 0 : i32
    %16 = arith.cmpi ne, %15, %c0_i32_6 : i32
    scf.if %16 {
      %c1_i32_91 = arith.constant 1 : i32
      %113 = arith.addi %arg0, %c1_i32_91 : i32
      %c1_i32_92 = arith.constant 1 : i32
      %114 = arith.subi %c1_i32_92, %9 : i32
      %c256_i32_93 = arith.constant 256 : i32
      %115 = arith.muli %113, %c256_i32_93 : i32
      %c0_i32_94 = arith.constant 0 : i32
      %116 = tpu.memref_slice %arg1[%115, %c0_i32_94] : memref<808x128xbf16, #tpu.memory_space<any>> -> memref<296x128xbf16, #tpu.memory_space<any>>
      %c0_i32_95 = arith.constant 0 : i32
      %c0_i32_96 = arith.constant 0 : i32
      %117 = tpu.memref_slice %arg6[%114, %c0_i32_95, %c0_i32_96] : memref<2x296x128xbf16, #tpu.memory_space<vmem>> -> memref<1x296x128xbf16, #tpu.memory_space<vmem>>
      %118 = tpu.memref_squeeze %117 : memref<1x296x128xbf16, #tpu.memory_space<vmem>> -> memref<296x128xbf16, #tpu.memory_space<vmem>>
      %119 = tpu.memref_slice %arg7[%114] : memref<2x!tpu.dma_semaphore, #tpu.memory_space<semaphore_mem>> -> memref<1x!tpu.dma_semaphore, #tpu.memory_space<semaphore_mem>>
      %120 = tpu.memref_squeeze %119 : memref<1x!tpu.dma_semaphore, #tpu.memory_space<semaphore_mem>> -> memref<!tpu.dma_semaphore, #tpu.memory_space<semaphore_mem>>
      tpu.enqueue_dma source(%116 : memref<296x128xbf16, #tpu.memory_space<any>>) target(%118 : memref<296x128xbf16, #tpu.memory_space<vmem>>) target_semaphore(%120 : memref<!tpu.dma_semaphore, #tpu.memory_space<semaphore_mem>>)
    } else {
    }
    %c256_i32 = arith.constant 256 : i32
    %17 = arith.muli %arg0, %c256_i32 : i32
    %c0_i32_7 = arith.constant 0 : i32
    %18 = tpu.memref_slice %arg1[%17, %c0_i32_7] : memref<808x128xbf16, #tpu.memory_space<any>> -> memref<296x128xbf16, #tpu.memory_space<any>>
    %c0_i32_8 = arith.constant 0 : i32
    %c0_i32_9 = arith.constant 0 : i32
    %19 = tpu.memref_slice %arg6[%9, %c0_i32_8, %c0_i32_9] : memref<2x296x128xbf16, #tpu.memory_space<vmem>> -> memref<1x296x128xbf16, #tpu.memory_space<vmem>>
    %20 = tpu.memref_squeeze %19 : memref<1x296x128xbf16, #tpu.memory_space<vmem>> -> memref<296x128xbf16, #tpu.memory_space<vmem>>
    %21 = tpu.memref_slice %arg7[%9] : memref<2x!tpu.dma_semaphore, #tpu.memory_space<semaphore_mem>> -> memref<1x!tpu.dma_semaphore, #tpu.memory_space<semaphore_mem>>
    %22 = tpu.memref_squeeze %21 : memref<1x!tpu.dma_semaphore, #tpu.memory_space<semaphore_mem>> -> memref<!tpu.dma_semaphore, #tpu.memory_space<semaphore_mem>>
    tpu.wait_dma2 semaphore(%22 : memref<!tpu.dma_semaphore, #tpu.memory_space<semaphore_mem>>) src(%18 : memref<296x128xbf16, #tpu.memory_space<any>>) dst(%20 : memref<296x128xbf16, #tpu.memory_space<vmem>>)
    %23 = arith.index_cast %9 : i32 to index
    %c0 = arith.constant 0 : index
    %c0_10 = arith.constant 0 : index
    %24 = vector.load %arg6[%23, %c0, %c0_10] : memref<2x296x128xbf16, #tpu.memory_space<vmem>>, vector<1x256x128xbf16>
    %25 = vector.shape_cast %24 : vector<1x256x128xbf16> to vector<256x128xbf16>
    %c0_11 = arith.constant 0 : index
    %c0_12 = arith.constant 0 : index
    %c0_13 = arith.constant 0 : index
    %26 = vector.load %arg2[%c0_11, %c0_12, %c0_13] : memref<9x128x128xbf16, #tpu.memory_space<vmem>>, vector<1x128x128xbf16>
    %27 = vector.shape_cast %26 : vector<1x128x128xbf16> to vector<128x128xbf16>
    %cst = arith.constant dense<0.000000e+00> : vector<256x128xf32>
    %28 = tpu.matmul %25, %27, %cst {dimension_numbers = #tpu.dot_dimension_numbers<[1], [0], [0], [1], [0, 0, 1, 1], [], []>} : vector<256x128xbf16>, vector<128x128xbf16>, vector<256x128xf32> -> vector<256x128xf32>
    %c0_14 = arith.constant 0 : index
    %c0_15 = arith.constant 0 : index
    %29 = vector.load %arg8[%c0_14, %c0_15] : memref<256x128xf32, #tpu.memory_space<vmem>>, vector<256x128xf32>
    tpu.vector_store %arg8[%c0_14, %c0_15], %28 {strides = array<i32>} : memref<256x128xf32, #tpu.memory_space<vmem>>, vector<256x128xf32>,
    %c0_16 = arith.constant 0 : index
    %c0_17 = arith.constant 0 : index
    %30 = vector.load %arg8[%c0_16, %c0_17] : memref<256x128xf32, #tpu.memory_space<vmem>>, vector<256x128xf32>
    %31 = arith.index_cast %9 : i32 to index
    %c1 = arith.constant 1 : index
    %c0_18 = arith.constant 0 : index
    %32 = vector.load %arg6[%31, %c1, %c0_18] : memref<2x296x128xbf16, #tpu.memory_space<vmem>>, vector<1x256x128xbf16>
    %33 = vector.shape_cast %32 : vector<1x256x128xbf16> to vector<256x128xbf16>
    %c1_19 = arith.constant 1 : index
    %c0_20 = arith.constant 0 : index
    %c0_21 = arith.constant 0 : index
    %34 = vector.load %arg2[%c1_19, %c0_20, %c0_21] : memref<9x128x128xbf16, #tpu.memory_space<vmem>>, vector<1x128x128xbf16>
    %35 = vector.shape_cast %34 : vector<1x128x128xbf16> to vector<128x128xbf16>
    %cst_22 = arith.constant dense<0.000000e+00> : vector<256x128xf32>
    %36 = tpu.matmul %33, %35, %cst_22 {dimension_numbers = #tpu.dot_dimension_numbers<[1], [0], [0], [1], [0, 0, 1, 1], [], []>} : vector<256x128xbf16>, vector<128x128xbf16>, vector<256x128xf32> -> vector<256x128xf32>
    %37 = arith.addf %30, %36 : vector<256x128xf32>
    %c0_23 = arith.constant 0 : index
    %c0_24 = arith.constant 0 : index
    %38 = vector.load %arg8[%c0_23, %c0_24] : memref<256x128xf32, #tpu.memory_space<vmem>>, vector<256x128xf32>
    tpu.vector_store %arg8[%c0_23, %c0_24], %37 {strides = array<i32>} : memref<256x128xf32, #tpu.memory_space<vmem>>, vector<256x128xf32>,
    %c0_25 = arith.constant 0 : index
    %c0_26 = arith.constant 0 : index
    %39 = vector.load %arg8[%c0_25, %c0_26] : memref<256x128xf32, #tpu.memory_space<vmem>>, vector<256x128xf32>
    %40 = arith.index_cast %9 : i32 to index
    %c2 = arith.constant 2 : index
    %c0_27 = arith.constant 0 : index
    %41 = vector.load %arg6[%40, %c2, %c0_27] : memref<2x296x128xbf16, #tpu.memory_space<vmem>>, vector<1x256x128xbf16>
    %42 = vector.shape_cast %41 : vector<1x256x128xbf16> to vector<256x128xbf16>
    %c2_28 = arith.constant 2 : index
    %c0_29 = arith.constant 0 : index
    %c0_30 = arith.constant 0 : index
    %43 = vector.load %arg2[%c2_28, %c0_29, %c0_30] : memref<9x128x128xbf16, #tpu.memory_space<vmem>>, vector<1x128x128xbf16>
    %44 = vector.shape_cast %43 : vector<1x128x128xbf16> to vector<128x128xbf16>
    %cst_31 = arith.constant dense<0.000000e+00> : vector<256x128xf32>
    %45 = tpu.matmul %42, %44, %cst_31 {dimension_numbers = #tpu.dot_dimension_numbers<[1], [0], [0], [1], [0, 0, 1, 1], [], []>} : vector<256x128xbf16>, vector<128x128xbf16>, vector<256x128xf32> -> vector<256x128xf32>
    %46 = arith.addf %39, %45 : vector<256x128xf32>
    %c0_32 = arith.constant 0 : index
    %c0_33 = arith.constant 0 : index
    %47 = vector.load %arg8[%c0_32, %c0_33] : memref<256x128xf32, #tpu.memory_space<vmem>>, vector<256x128xf32>
    tpu.vector_store %arg8[%c0_32, %c0_33], %46 {strides = array<i32>} : memref<256x128xf32, #tpu.memory_space<vmem>>, vector<256x128xf32>,
    %c0_34 = arith.constant 0 : index
    %c0_35 = arith.constant 0 : index
    %48 = vector.load %arg8[%c0_34, %c0_35] : memref<256x128xf32, #tpu.memory_space<vmem>>, vector<256x128xf32>
    %49 = arith.index_cast %9 : i32 to index
    %c18 = arith.constant 18 : index
    %c0_36 = arith.constant 0 : index
    %50 = vector.load %arg6[%49, %c18, %c0_36] : memref<2x296x128xbf16, #tpu.memory_space<vmem>>, vector<1x256x128xbf16>
    %51 = vector.shape_cast %50 : vector<1x256x128xbf16> to vector<256x128xbf16>
    %c3 = arith.constant 3 : index
    %c0_37 = arith.constant 0 : index
    %c0_38 = arith.constant 0 : index
    %52 = vector.load %arg2[%c3, %c0_37, %c0_38] : memref<9x128x128xbf16, #tpu.memory_space<vmem>>, vector<1x128x128xbf16>
    %53 = vector.shape_cast %52 : vector<1x128x128xbf16> to vector<128x128xbf16>
    %cst_39 = arith.constant dense<0.000000e+00> : vector<256x128xf32>
    %54 = tpu.matmul %51, %53, %cst_39 {dimension_numbers = #tpu.dot_dimension_numbers<[1], [0], [0], [1], [0, 0, 1, 1], [], []>} : vector<256x128xbf16>, vector<128x128xbf16>, vector<256x128xf32> -> vector<256x128xf32>
    %55 = arith.addf %48, %54 : vector<256x128xf32>
    %c0_40 = arith.constant 0 : index
    %c0_41 = arith.constant 0 : index
    %56 = vector.load %arg8[%c0_40, %c0_41] : memref<256x128xf32, #tpu.memory_space<vmem>>, vector<256x128xf32>
    tpu.vector_store %arg8[%c0_40, %c0_41], %55 {strides = array<i32>} : memref<256x128xf32, #tpu.memory_space<vmem>>, vector<256x128xf32>,
    %c0_42 = arith.constant 0 : index
    %c0_43 = arith.constant 0 : index
    %57 = vector.load %arg8[%c0_42, %c0_43] : memref<256x128xf32, #tpu.memory_space<vmem>>, vector<256x128xf32>
    %58 = arith.index_cast %9 : i32 to index
    %c19 = arith.constant 19 : index
    %c0_44 = arith.constant 0 : index
    %59 = vector.load %arg6[%58, %c19, %c0_44] : memref<2x296x128xbf16, #tpu.memory_space<vmem>>, vector<1x256x128xbf16>
    %60 = vector.shape_cast %59 : vector<1x256x128xbf16> to vector<256x128xbf16>
    %c4 = arith.constant 4 : index
    %c0_45 = arith.constant 0 : index
    %c0_46 = arith.constant 0 : index
    %61 = vector.load %arg2[%c4, %c0_45, %c0_46] : memref<9x128x128xbf16, #tpu.memory_space<vmem>>, vector<1x128x128xbf16>
    %62 = vector.shape_cast %61 : vector<1x128x128xbf16> to vector<128x128xbf16>
    %cst_47 = arith.constant dense<0.000000e+00> : vector<256x128xf32>
    %63 = tpu.matmul %60, %62, %cst_47 {dimension_numbers = #tpu.dot_dimension_numbers<[1], [0], [0], [1], [0, 0, 1, 1], [], []>} : vector<256x128xbf16>, vector<128x128xbf16>, vector<256x128xf32> -> vector<256x128xf32>
    %64 = arith.addf %57, %63 : vector<256x128xf32>
    %c0_48 = arith.constant 0 : index
    %c0_49 = arith.constant 0 : index
    %65 = vector.load %arg8[%c0_48, %c0_49] : memref<256x128xf32, #tpu.memory_space<vmem>>, vector<256x128xf32>
    tpu.vector_store %arg8[%c0_48, %c0_49], %64 {strides = array<i32>} : memref<256x128xf32, #tpu.memory_space<vmem>>, vector<256x128xf32>,
    %c0_50 = arith.constant 0 : index
    %c0_51 = arith.constant 0 : index
    %66 = vector.load %arg8[%c0_50, %c0_51] : memref<256x128xf32, #tpu.memory_space<vmem>>, vector<256x128xf32>
    %67 = arith.index_cast %9 : i32 to index
    %c20 = arith.constant 20 : index
    %c0_52 = arith.constant 0 : index
    %68 = vector.load %arg6[%67, %c20, %c0_52] : memref<2x296x128xbf16, #tpu.memory_space<vmem>>, vector<1x256x128xbf16>
    %69 = vector.shape_cast %68 : vector<1x256x128xbf16> to vector<256x128xbf16>
    %c5 = arith.constant 5 : index
    %c0_53 = arith.constant 0 : index
    %c0_54 = arith.constant 0 : index
    %70 = vector.load %arg2[%c5, %c0_53, %c0_54] : memref<9x128x128xbf16, #tpu.memory_space<vmem>>, vector<1x128x128xbf16>
    %71 = vector.shape_cast %70 : vector<1x128x128xbf16> to vector<128x128xbf16>
    %cst_55 = arith.constant dense<0.000000e+00> : vector<256x128xf32>
    %72 = tpu.matmul %69, %71, %cst_55 {dimension_numbers = #tpu.dot_dimension_numbers<[1], [0], [0], [1], [0, 0, 1, 1], [], []>} : vector<256x128xbf16>, vector<128x128xbf16>, vector<256x128xf32> -> vector<256x128xf32>
    %73 = arith.addf %66, %72 : vector<256x128xf32>
    %c0_56 = arith.constant 0 : index
    %c0_57 = arith.constant 0 : index
    %74 = vector.load %arg8[%c0_56, %c0_57] : memref<256x128xf32, #tpu.memory_space<vmem>>, vector<256x128xf32>
    tpu.vector_store %arg8[%c0_56, %c0_57], %73 {strides = array<i32>} : memref<256x128xf32, #tpu.memory_space<vmem>>, vector<256x128xf32>,
    %c0_58 = arith.constant 0 : index
    %c0_59 = arith.constant 0 : index
    %75 = vector.load %arg8[%c0_58, %c0_59] : memref<256x128xf32, #tpu.memory_space<vmem>>, vector<256x128xf32>
    %76 = arith.index_cast %9 : i32 to index
    %c36 = arith.constant 36 : index
    %c0_60 = arith.constant 0 : index
    %77 = vector.load %arg6[%76, %c36, %c0_60] : memref<2x296x128xbf16, #tpu.memory_space<vmem>>, vector<1x256x128xbf16>
    %78 = vector.shape_cast %77 : vector<1x256x128xbf16> to vector<256x128xbf16>
    %c6 = arith.constant 6 : index
    %c0_61 = arith.constant 0 : index
    %c0_62 = arith.constant 0 : index
    %79 = vector.load %arg2[%c6, %c0_61, %c0_62] : memref<9x128x128xbf16, #tpu.memory_space<vmem>>, vector<1x128x128xbf16>
    %80 = vector.shape_cast %79 : vector<1x128x128xbf16> to vector<128x128xbf16>
    %cst_63 = arith.constant dense<0.000000e+00> : vector<256x128xf32>
    %81 = tpu.matmul %78, %80, %cst_63 {dimension_numbers = #tpu.dot_dimension_numbers<[1], [0], [0], [1], [0, 0, 1, 1], [], []>} : vector<256x128xbf16>, vector<128x128xbf16>, vector<256x128xf32> -> vector<256x128xf32>
    %82 = arith.addf %75, %81 : vector<256x128xf32>
    %c0_64 = arith.constant 0 : index
    %c0_65 = arith.constant 0 : index
    %83 = vector.load %arg8[%c0_64, %c0_65] : memref<256x128xf32, #tpu.memory_space<vmem>>, vector<256x128xf32>
    tpu.vector_store %arg8[%c0_64, %c0_65], %82 {strides = array<i32>} : memref<256x128xf32, #tpu.memory_space<vmem>>, vector<256x128xf32>,
    %c0_66 = arith.constant 0 : index
    %c0_67 = arith.constant 0 : index
    %84 = vector.load %arg8[%c0_66, %c0_67] : memref<256x128xf32, #tpu.memory_space<vmem>>, vector<256x128xf32>
    %85 = arith.index_cast %9 : i32 to index
    %c37 = arith.constant 37 : index
    %c0_68 = arith.constant 0 : index
    %86 = vector.load %arg6[%85, %c37, %c0_68] : memref<2x296x128xbf16, #tpu.memory_space<vmem>>, vector<1x256x128xbf16>
    %87 = vector.shape_cast %86 : vector<1x256x128xbf16> to vector<256x128xbf16>
    %c7 = arith.constant 7 : index
    %c0_69 = arith.constant 0 : index
    %c0_70 = arith.constant 0 : index
    %88 = vector.load %arg2[%c7, %c0_69, %c0_70] : memref<9x128x128xbf16, #tpu.memory_space<vmem>>, vector<1x128x128xbf16>
    %89 = vector.shape_cast %88 : vector<1x128x128xbf16> to vector<128x128xbf16>
    %cst_71 = arith.constant dense<0.000000e+00> : vector<256x128xf32>
    %90 = tpu.matmul %87, %89, %cst_71 {dimension_numbers = #tpu.dot_dimension_numbers<[1], [0], [0], [1], [0, 0, 1, 1], [], []>} : vector<256x128xbf16>, vector<128x128xbf16>, vector<256x128xf32> -> vector<256x128xf32>
    %91 = arith.addf %84, %90 : vector<256x128xf32>
    %c0_72 = arith.constant 0 : index
    %c0_73 = arith.constant 0 : index
    %92 = vector.load %arg8[%c0_72, %c0_73] : memref<256x128xf32, #tpu.memory_space<vmem>>, vector<256x128xf32>
    tpu.vector_store %arg8[%c0_72, %c0_73], %91 {strides = array<i32>} : memref<256x128xf32, #tpu.memory_space<vmem>>, vector<256x128xf32>,
    %c0_74 = arith.constant 0 : index
    %c0_75 = arith.constant 0 : index
    %93 = vector.load %arg8[%c0_74, %c0_75] : memref<256x128xf32, #tpu.memory_space<vmem>>, vector<256x128xf32>
    %94 = arith.index_cast %9 : i32 to index
    %c38 = arith.constant 38 : index
    %c0_76 = arith.constant 0 : index
    %95 = vector.load %arg6[%94, %c38, %c0_76] : memref<2x296x128xbf16, #tpu.memory_space<vmem>>, vector<1x256x128xbf16>
    %96 = vector.shape_cast %95 : vector<1x256x128xbf16> to vector<256x128xbf16>
    %c8 = arith.constant 8 : index
    %c0_77 = arith.constant 0 : index
    %c0_78 = arith.constant 0 : index
    %97 = vector.load %arg2[%c8, %c0_77, %c0_78] : memref<9x128x128xbf16, #tpu.memory_space<vmem>>, vector<1x128x128xbf16>
    %98 = vector.shape_cast %97 : vector<1x128x128xbf16> to vector<128x128xbf16>
    %cst_79 = arith.constant dense<0.000000e+00> : vector<256x128xf32>
    %99 = tpu.matmul %96, %98, %cst_79 {dimension_numbers = #tpu.dot_dimension_numbers<[1], [0], [0], [1], [0, 0, 1, 1], [], []>} : vector<256x128xbf16>, vector<128x128xbf16>, vector<256x128xf32> -> vector<256x128xf32>
    %100 = arith.addf %93, %99 : vector<256x128xf32>
    %c0_80 = arith.constant 0 : index
    %c0_81 = arith.constant 0 : index
    %101 = vector.load %arg8[%c0_80, %c0_81] : memref<256x128xf32, #tpu.memory_space<vmem>>, vector<256x128xf32>
    tpu.vector_store %arg8[%c0_80, %c0_81], %100 {strides = array<i32>} : memref<256x128xf32, #tpu.memory_space<vmem>>, vector<256x128xf32>,
    %c0_82 = arith.constant 0 : index
    %c0_83 = arith.constant 0 : index
    %102 = vector.load %arg8[%c0_82, %c0_83] : memref<256x128xf32, #tpu.memory_space<vmem>>, vector<256x128xf32>
    %c0_84 = arith.constant 0 : index
    %c0_85 = arith.constant 0 : index
    %103 = vector.load %arg3[%c0_84, %c0_85] : memref<1x128xf32, #tpu.memory_space<vmem>>, vector<1x128xf32>
    %104 = vector.broadcast %103 : vector<1x128xf32> to vector<256x128xf32>
    %105 = arith.mulf %102, %104 : vector<256x128xf32>
    %c0_86 = arith.constant 0 : index
    %c0_87 = arith.constant 0 : index
    %106 = vector.load %arg4[%c0_86, %c0_87] : memref<1x128xf32, #tpu.memory_space<vmem>>, vector<1x128xf32>
    %107 = vector.broadcast %106 : vector<1x128xf32> to vector<256x128xf32>
    %108 = arith.addf %105, %107 : vector<256x128xf32>
    %cst_88 = arith.constant 0.000000e+00 : f32
    %109 = vector.broadcast %cst_88 : f32 to vector<256x128xf32>
    %110 = arith.maximumf %108, %109 : vector<256x128xf32>
    %111 = arith.truncf %110 : vector<256x128xf32> to vector<256x128xbf16>
    %c0_89 = arith.constant 0 : index
    %c0_90 = arith.constant 0 : index
    %112 = vector.load %arg5[%c0_89, %c0_90] : memref<256x128xbf16, #tpu.memory_space<vmem>>, vector<256x128xbf16>
    tpu.vector_store %arg5[%c0_89, %c0_90], %111 {strides = array<i32>} : memref<256x128xbf16, #tpu.memory_space<vmem>>, vector<256x128xbf16>,
    return
  }
  func.func @transform_1(%arg0: i32) -> (i32, i32, i32) {
    %c0_i32 = arith.constant 0 : i32
    %c0_i32_0 = arith.constant 0 : i32
    %c0_i32_1 = arith.constant 0 : i32
    %c0_i32_2 = arith.constant 0 : i32
    return %c0_i32, %c0_i32_0, %c0_i32_1 : i32, i32, i32
  }
  func.func @transform_2(%arg0: i32) -> (i32, i32) {
    %c0_i32 = arith.constant 0 : i32
    %c0_i32_0 = arith.constant 0 : i32
    %c0_i32_1 = arith.constant 0 : i32
    return %c0_i32, %c0_i32_0 : i32, i32
  }
  func.func @transform_3(%arg0: i32) -> (i32, i32) {
    %c0_i32 = arith.constant 0 : i32
    %c0_i32_0 = arith.constant 0 : i32
    %c0_i32_1 = arith.constant 0 : i32
    return %c0_i32, %c0_i32_0 : i32, i32
  }
  func.func @transform_4(%arg0: i32) -> (i32, i32) {
    %c0_i32 = arith.constant 0 : i32
    %c0_i32_0 = arith.constant 0 : i32
    return %arg0, %c0_i32 : i32, i32
  }
}

module attributes {stable_mosaic.version = 11 : i64} {
  func.func @kernel(%arg0: i32, %arg1: memref<776x128xbf16, #tpu.memory_space<any>>, %arg2: memref<3x128x128xbf16, #tpu.memory_space<vmem>>, %arg3: memref<1x128xf32, #tpu.memory_space<vmem>>, %arg4: memref<1x128xf32, #tpu.memory_space<vmem>>, %arg5: memref<256x128xbf16, #tpu.memory_space<vmem>>, %arg6: memref<2x264x128xbf16, #tpu.memory_space<vmem>>, %arg7: memref<2x!tpu.dma_semaphore, #tpu.memory_space<semaphore_mem>>, %arg8: memref<256x128xf32, #tpu.memory_space<vmem>>) attributes {dimension_semantics = [#tpu.dimension_semantics<arbitrary>], iteration_bounds = array<i64: 3>, scalar_prefetch = 0 : i64, scratch_operands = 3 : i64, tpu.core_type = #tpu.core_type<tc>, window_params = [{}, {pipeline_mode = #tpu.pipeline_mode<synchronous>, transform_indices = @transform_1, window_bounds = array<i64: 3, 128, 128>}, {pipeline_mode = #tpu.pipeline_mode<synchronous>, transform_indices = @transform_2, window_bounds = array<i64: 1, 128>}, {pipeline_mode = #tpu.pipeline_mode<synchronous>, transform_indices = @transform_3, window_bounds = array<i64: 1, 128>}, {transform_indices = @transform_4, window_bounds = array<i64: 256, 128>}]} {
    %c2_i32 = arith.constant 2 : i32
    %c0_i32 = arith.constant 0 : i32
    %0 = arith.cmpi eq, %c2_i32, %c0_i32 : i32
    %c1_i32 = arith.constant 1 : i32
    %1 = arith.select %0, %c1_i32, %c2_i32 : i32
    %2 = arith.remsi %arg0, %1 : i32
    %c0_i32_0 = arith.constant 0 : i32
    %3 = arith.cmpi ne, %2, %c0_i32_0 : i32
    %c0_i32_1 = arith.constant 0 : i32
    %4 = arith.cmpi slt, %2, %c0_i32_1 : i32
    %c0_i32_2 = arith.constant 0 : i32
    %5 = arith.cmpi slt, %1, %c0_i32_2 : i32
    %6 = arith.xori %4, %5 : i1
    %7 = arith.andi %6, %3 : i1
    %8 = arith.addi %2, %1 : i32
    %9 = arith.select %7, %8, %2 : i32
    %c0_i32_3 = arith.constant 0 : i32
    %10 = arith.cmpi eq, %arg0, %c0_i32_3 : i32
    %11 = arith.extui %10 : i1 to i32
    %c0_i32_4 = arith.constant 0 : i32
    %12 = arith.cmpi ne, %11, %c0_i32_4 : i32
    scf.if %12 {
      %c0_i32_43 = arith.constant 0 : i32
      %c0_i32_44 = arith.constant 0 : i32
      %c0_i32_45 = arith.constant 0 : i32
      %c0_i32_46 = arith.constant 0 : i32
      %59 = tpu.memref_slice %arg1[%c0_i32_45, %c0_i32_46] : memref<776x128xbf16, #tpu.memory_space<any>> -> memref<264x128xbf16, #tpu.memory_space<any>>
      %c0_i32_47 = arith.constant 0 : i32
      %c0_i32_48 = arith.constant 0 : i32
      %60 = tpu.memref_slice %arg6[%c0_i32_43, %c0_i32_47, %c0_i32_48] : memref<2x264x128xbf16, #tpu.memory_space<vmem>> -> memref<1x264x128xbf16, #tpu.memory_space<vmem>>
      %61 = tpu.memref_squeeze %60 : memref<1x264x128xbf16, #tpu.memory_space<vmem>> -> memref<264x128xbf16, #tpu.memory_space<vmem>>
      %62 = tpu.memref_slice %arg7[%c0_i32_44] : memref<2x!tpu.dma_semaphore, #tpu.memory_space<semaphore_mem>> -> memref<1x!tpu.dma_semaphore, #tpu.memory_space<semaphore_mem>>
      %63 = tpu.memref_squeeze %62 : memref<1x!tpu.dma_semaphore, #tpu.memory_space<semaphore_mem>> -> memref<!tpu.dma_semaphore, #tpu.memory_space<semaphore_mem>>
      tpu.enqueue_dma source(%59 : memref<264x128xbf16, #tpu.memory_space<any>>) target(%61 : memref<264x128xbf16, #tpu.memory_space<vmem>>) target_semaphore(%63 : memref<!tpu.dma_semaphore, #tpu.memory_space<semaphore_mem>>)
    } else {
    }
    %c1_i32_5 = arith.constant 1 : i32
    %13 = arith.addi %arg0, %c1_i32_5 : i32
    %c3_i32 = arith.constant 3 : i32
    %14 = arith.cmpi slt, %13, %c3_i32 : i32
    %15 = arith.extui %14 : i1 to i32
    %c0_i32_6 = arith.constant 0 : i32
    %16 = arith.cmpi ne, %15, %c0_i32_6 : i32
    scf.if %16 {
      %c1_i32_43 = arith.constant 1 : i32
      %59 = arith.addi %arg0, %c1_i32_43 : i32
      %c1_i32_44 = arith.constant 1 : i32
      %60 = arith.subi %c1_i32_44, %9 : i32
      %c256_i32_45 = arith.constant 256 : i32
      %61 = arith.muli %59, %c256_i32_45 : i32
      %c0_i32_46 = arith.constant 0 : i32
      %62 = tpu.memref_slice %arg1[%61, %c0_i32_46] : memref<776x128xbf16, #tpu.memory_space<any>> -> memref<264x128xbf16, #tpu.memory_space<any>>
      %c0_i32_47 = arith.constant 0 : i32
      %c0_i32_48 = arith.constant 0 : i32
      %63 = tpu.memref_slice %arg6[%60, %c0_i32_47, %c0_i32_48] : memref<2x264x128xbf16, #tpu.memory_space<vmem>> -> memref<1x264x128xbf16, #tpu.memory_space<vmem>>
      %64 = tpu.memref_squeeze %63 : memref<1x264x128xbf16, #tpu.memory_space<vmem>> -> memref<264x128xbf16, #tpu.memory_space<vmem>>
      %65 = tpu.memref_slice %arg7[%60] : memref<2x!tpu.dma_semaphore, #tpu.memory_space<semaphore_mem>> -> memref<1x!tpu.dma_semaphore, #tpu.memory_space<semaphore_mem>>
      %66 = tpu.memref_squeeze %65 : memref<1x!tpu.dma_semaphore, #tpu.memory_space<semaphore_mem>> -> memref<!tpu.dma_semaphore, #tpu.memory_space<semaphore_mem>>
      tpu.enqueue_dma source(%62 : memref<264x128xbf16, #tpu.memory_space<any>>) target(%64 : memref<264x128xbf16, #tpu.memory_space<vmem>>) target_semaphore(%66 : memref<!tpu.dma_semaphore, #tpu.memory_space<semaphore_mem>>)
    } else {
    }
    %c256_i32 = arith.constant 256 : i32
    %17 = arith.muli %arg0, %c256_i32 : i32
    %c0_i32_7 = arith.constant 0 : i32
    %18 = tpu.memref_slice %arg1[%17, %c0_i32_7] : memref<776x128xbf16, #tpu.memory_space<any>> -> memref<264x128xbf16, #tpu.memory_space<any>>
    %c0_i32_8 = arith.constant 0 : i32
    %c0_i32_9 = arith.constant 0 : i32
    %19 = tpu.memref_slice %arg6[%9, %c0_i32_8, %c0_i32_9] : memref<2x264x128xbf16, #tpu.memory_space<vmem>> -> memref<1x264x128xbf16, #tpu.memory_space<vmem>>
    %20 = tpu.memref_squeeze %19 : memref<1x264x128xbf16, #tpu.memory_space<vmem>> -> memref<264x128xbf16, #tpu.memory_space<vmem>>
    %21 = tpu.memref_slice %arg7[%9] : memref<2x!tpu.dma_semaphore, #tpu.memory_space<semaphore_mem>> -> memref<1x!tpu.dma_semaphore, #tpu.memory_space<semaphore_mem>>
    %22 = tpu.memref_squeeze %21 : memref<1x!tpu.dma_semaphore, #tpu.memory_space<semaphore_mem>> -> memref<!tpu.dma_semaphore, #tpu.memory_space<semaphore_mem>>
    tpu.wait_dma2 semaphore(%22 : memref<!tpu.dma_semaphore, #tpu.memory_space<semaphore_mem>>) src(%18 : memref<264x128xbf16, #tpu.memory_space<any>>) dst(%20 : memref<264x128xbf16, #tpu.memory_space<vmem>>)
    %23 = arith.index_cast %9 : i32 to index
    %c0 = arith.constant 0 : index
    %c0_10 = arith.constant 0 : index
    %24 = vector.load %arg6[%23, %c0, %c0_10] : memref<2x264x128xbf16, #tpu.memory_space<vmem>>, vector<1x256x128xbf16>
    %25 = vector.shape_cast %24 : vector<1x256x128xbf16> to vector<256x128xbf16>
    %c0_11 = arith.constant 0 : index
    %c0_12 = arith.constant 0 : index
    %c0_13 = arith.constant 0 : index
    %26 = vector.load %arg2[%c0_11, %c0_12, %c0_13] : memref<3x128x128xbf16, #tpu.memory_space<vmem>>, vector<1x128x128xbf16>
    %27 = vector.shape_cast %26 : vector<1x128x128xbf16> to vector<128x128xbf16>
    %cst = arith.constant dense<0.000000e+00> : vector<256x128xf32>
    %28 = tpu.matmul %25, %27, %cst {dimension_numbers = #tpu.dot_dimension_numbers<[1], [0], [0], [1], [0, 0, 1, 1], [], []>} : vector<256x128xbf16>, vector<128x128xbf16>, vector<256x128xf32> -> vector<256x128xf32>
    %c0_14 = arith.constant 0 : index
    %c0_15 = arith.constant 0 : index
    %29 = vector.load %arg8[%c0_14, %c0_15] : memref<256x128xf32, #tpu.memory_space<vmem>>, vector<256x128xf32>
    tpu.vector_store %arg8[%c0_14, %c0_15], %28 {strides = array<i32>} : memref<256x128xf32, #tpu.memory_space<vmem>>, vector<256x128xf32>,
    %c0_16 = arith.constant 0 : index
    %c0_17 = arith.constant 0 : index
    %30 = vector.load %arg8[%c0_16, %c0_17] : memref<256x128xf32, #tpu.memory_space<vmem>>, vector<256x128xf32>
    %31 = arith.index_cast %9 : i32 to index
    %c1 = arith.constant 1 : index
    %c0_18 = arith.constant 0 : index
    %32 = vector.load %arg6[%31, %c1, %c0_18] : memref<2x264x128xbf16, #tpu.memory_space<vmem>>, vector<1x256x128xbf16>
    %33 = vector.shape_cast %32 : vector<1x256x128xbf16> to vector<256x128xbf16>
    %c1_19 = arith.constant 1 : index
    %c0_20 = arith.constant 0 : index
    %c0_21 = arith.constant 0 : index
    %34 = vector.load %arg2[%c1_19, %c0_20, %c0_21] : memref<3x128x128xbf16, #tpu.memory_space<vmem>>, vector<1x128x128xbf16>
    %35 = vector.shape_cast %34 : vector<1x128x128xbf16> to vector<128x128xbf16>
    %cst_22 = arith.constant dense<0.000000e+00> : vector<256x128xf32>
    %36 = tpu.matmul %33, %35, %cst_22 {dimension_numbers = #tpu.dot_dimension_numbers<[1], [0], [0], [1], [0, 0, 1, 1], [], []>} : vector<256x128xbf16>, vector<128x128xbf16>, vector<256x128xf32> -> vector<256x128xf32>
    %37 = arith.addf %30, %36 : vector<256x128xf32>
    %c0_23 = arith.constant 0 : index
    %c0_24 = arith.constant 0 : index
    %38 = vector.load %arg8[%c0_23, %c0_24] : memref<256x128xf32, #tpu.memory_space<vmem>>, vector<256x128xf32>
    tpu.vector_store %arg8[%c0_23, %c0_24], %37 {strides = array<i32>} : memref<256x128xf32, #tpu.memory_space<vmem>>, vector<256x128xf32>,
    %c0_25 = arith.constant 0 : index
    %c0_26 = arith.constant 0 : index
    %39 = vector.load %arg8[%c0_25, %c0_26] : memref<256x128xf32, #tpu.memory_space<vmem>>, vector<256x128xf32>
    %40 = arith.index_cast %9 : i32 to index
    %c2 = arith.constant 2 : index
    %c0_27 = arith.constant 0 : index
    %41 = vector.load %arg6[%40, %c2, %c0_27] : memref<2x264x128xbf16, #tpu.memory_space<vmem>>, vector<1x256x128xbf16>
    %42 = vector.shape_cast %41 : vector<1x256x128xbf16> to vector<256x128xbf16>
    %c2_28 = arith.constant 2 : index
    %c0_29 = arith.constant 0 : index
    %c0_30 = arith.constant 0 : index
    %43 = vector.load %arg2[%c2_28, %c0_29, %c0_30] : memref<3x128x128xbf16, #tpu.memory_space<vmem>>, vector<1x128x128xbf16>
    %44 = vector.shape_cast %43 : vector<1x128x128xbf16> to vector<128x128xbf16>
    %cst_31 = arith.constant dense<0.000000e+00> : vector<256x128xf32>
    %45 = tpu.matmul %42, %44, %cst_31 {dimension_numbers = #tpu.dot_dimension_numbers<[1], [0], [0], [1], [0, 0, 1, 1], [], []>} : vector<256x128xbf16>, vector<128x128xbf16>, vector<256x128xf32> -> vector<256x128xf32>
    %46 = arith.addf %39, %45 : vector<256x128xf32>
    %c0_32 = arith.constant 0 : index
    %c0_33 = arith.constant 0 : index
    %47 = vector.load %arg8[%c0_32, %c0_33] : memref<256x128xf32, #tpu.memory_space<vmem>>, vector<256x128xf32>
    tpu.vector_store %arg8[%c0_32, %c0_33], %46 {strides = array<i32>} : memref<256x128xf32, #tpu.memory_space<vmem>>, vector<256x128xf32>,
    %c0_34 = arith.constant 0 : index
    %c0_35 = arith.constant 0 : index
    %48 = vector.load %arg8[%c0_34, %c0_35] : memref<256x128xf32, #tpu.memory_space<vmem>>, vector<256x128xf32>
    %c0_36 = arith.constant 0 : index
    %c0_37 = arith.constant 0 : index
    %49 = vector.load %arg3[%c0_36, %c0_37] : memref<1x128xf32, #tpu.memory_space<vmem>>, vector<1x128xf32>
    %50 = vector.broadcast %49 : vector<1x128xf32> to vector<256x128xf32>
    %51 = arith.mulf %48, %50 : vector<256x128xf32>
    %c0_38 = arith.constant 0 : index
    %c0_39 = arith.constant 0 : index
    %52 = vector.load %arg4[%c0_38, %c0_39] : memref<1x128xf32, #tpu.memory_space<vmem>>, vector<1x128xf32>
    %53 = vector.broadcast %52 : vector<1x128xf32> to vector<256x128xf32>
    %54 = arith.addf %51, %53 : vector<256x128xf32>
    %cst_40 = arith.constant 0.000000e+00 : f32
    %55 = vector.broadcast %cst_40 : f32 to vector<256x128xf32>
    %56 = arith.maximumf %54, %55 : vector<256x128xf32>
    %57 = arith.truncf %56 : vector<256x128xf32> to vector<256x128xbf16>
    %c0_41 = arith.constant 0 : index
    %c0_42 = arith.constant 0 : index
    %58 = vector.load %arg5[%c0_41, %c0_42] : memref<256x128xbf16, #tpu.memory_space<vmem>>, vector<256x128xbf16>
    tpu.vector_store %arg5[%c0_41, %c0_42], %57 {strides = array<i32>} : memref<256x128xbf16, #tpu.memory_space<vmem>>, vector<256x128xbf16>,
    return
  }
  func.func @transform_1(%arg0: i32) -> (i32, i32, i32) {
    %c0_i32 = arith.constant 0 : i32
    %c0_i32_0 = arith.constant 0 : i32
    %c0_i32_1 = arith.constant 0 : i32
    %c0_i32_2 = arith.constant 0 : i32
    return %c0_i32, %c0_i32_0, %c0_i32_1 : i32, i32, i32
  }
  func.func @transform_2(%arg0: i32) -> (i32, i32) {
    %c0_i32 = arith.constant 0 : i32
    %c0_i32_0 = arith.constant 0 : i32
    %c0_i32_1 = arith.constant 0 : i32
    return %c0_i32, %c0_i32_0 : i32, i32
  }
  func.func @transform_3(%arg0: i32) -> (i32, i32) {
    %c0_i32 = arith.constant 0 : i32
    %c0_i32_0 = arith.constant 0 : i32
    %c0_i32_1 = arith.constant 0 : i32
    return %c0_i32, %c0_i32_0 : i32, i32
  }
  func.func @transform_4(%arg0: i32) -> (i32, i32) {
    %c0_i32 = arith.constant 0 : i32
    %c0_i32_0 = arith.constant 0 : i32
    return %arg0, %c0_i32 : i32, i32
  }
}

module attributes {stable_mosaic.version = 11 : i64} {
  func.func @kernel(%arg0: i32, %arg1: memref<800x128xbf16, #tpu.memory_space<any>>, %arg2: memref<3x128x128xbf16, #tpu.memory_space<vmem>>, %arg3: memref<1x128xf32, #tpu.memory_space<vmem>>, %arg4: memref<1x128xf32, #tpu.memory_space<vmem>>, %arg5: memref<256x128xf32, #tpu.memory_space<vmem>>, %arg6: memref<2x288x128xbf16, #tpu.memory_space<vmem>>, %arg7: memref<2x!tpu.dma_semaphore, #tpu.memory_space<semaphore_mem>>, %arg8: memref<256x128xf32, #tpu.memory_space<vmem>>) attributes {dimension_semantics = [#tpu.dimension_semantics<arbitrary>], iteration_bounds = array<i64: 3>, scalar_prefetch = 0 : i64, scratch_operands = 3 : i64, tpu.core_type = #tpu.core_type<tc>, window_params = [{}, {pipeline_mode = #tpu.pipeline_mode<synchronous>, transform_indices = @transform_1, window_bounds = array<i64: 3, 128, 128>}, {pipeline_mode = #tpu.pipeline_mode<synchronous>, transform_indices = @transform_2, window_bounds = array<i64: 1, 128>}, {pipeline_mode = #tpu.pipeline_mode<synchronous>, transform_indices = @transform_3, window_bounds = array<i64: 1, 128>}, {transform_indices = @transform_4, window_bounds = array<i64: 256, 128>}]} {
    %c2_i32 = arith.constant 2 : i32
    %c0_i32 = arith.constant 0 : i32
    %0 = arith.cmpi eq, %c2_i32, %c0_i32 : i32
    %c1_i32 = arith.constant 1 : i32
    %1 = arith.select %0, %c1_i32, %c2_i32 : i32
    %2 = arith.remsi %arg0, %1 : i32
    %c0_i32_0 = arith.constant 0 : i32
    %3 = arith.cmpi ne, %2, %c0_i32_0 : i32
    %c0_i32_1 = arith.constant 0 : i32
    %4 = arith.cmpi slt, %2, %c0_i32_1 : i32
    %c0_i32_2 = arith.constant 0 : i32
    %5 = arith.cmpi slt, %1, %c0_i32_2 : i32
    %6 = arith.xori %4, %5 : i1
    %7 = arith.andi %6, %3 : i1
    %8 = arith.addi %2, %1 : i32
    %9 = arith.select %7, %8, %2 : i32
    %c0_i32_3 = arith.constant 0 : i32
    %10 = arith.cmpi eq, %arg0, %c0_i32_3 : i32
    %11 = arith.extui %10 : i1 to i32
    %c0_i32_4 = arith.constant 0 : i32
    %12 = arith.cmpi ne, %11, %c0_i32_4 : i32
    scf.if %12 {
      %c0_i32_41 = arith.constant 0 : i32
      %c0_i32_42 = arith.constant 0 : i32
      %c0_i32_43 = arith.constant 0 : i32
      %c0_i32_44 = arith.constant 0 : i32
      %58 = tpu.memref_slice %arg1[%c0_i32_43, %c0_i32_44] : memref<800x128xbf16, #tpu.memory_space<any>> -> memref<288x128xbf16, #tpu.memory_space<any>>
      %c0_i32_45 = arith.constant 0 : i32
      %c0_i32_46 = arith.constant 0 : i32
      %59 = tpu.memref_slice %arg6[%c0_i32_41, %c0_i32_45, %c0_i32_46] : memref<2x288x128xbf16, #tpu.memory_space<vmem>> -> memref<1x288x128xbf16, #tpu.memory_space<vmem>>
      %60 = tpu.memref_squeeze %59 : memref<1x288x128xbf16, #tpu.memory_space<vmem>> -> memref<288x128xbf16, #tpu.memory_space<vmem>>
      %61 = tpu.memref_slice %arg7[%c0_i32_42] : memref<2x!tpu.dma_semaphore, #tpu.memory_space<semaphore_mem>> -> memref<1x!tpu.dma_semaphore, #tpu.memory_space<semaphore_mem>>
      %62 = tpu.memref_squeeze %61 : memref<1x!tpu.dma_semaphore, #tpu.memory_space<semaphore_mem>> -> memref<!tpu.dma_semaphore, #tpu.memory_space<semaphore_mem>>
      tpu.enqueue_dma source(%58 : memref<288x128xbf16, #tpu.memory_space<any>>) target(%60 : memref<288x128xbf16, #tpu.memory_space<vmem>>) target_semaphore(%62 : memref<!tpu.dma_semaphore, #tpu.memory_space<semaphore_mem>>)
    } else {
    }
    %c1_i32_5 = arith.constant 1 : i32
    %13 = arith.addi %arg0, %c1_i32_5 : i32
    %c3_i32 = arith.constant 3 : i32
    %14 = arith.cmpi slt, %13, %c3_i32 : i32
    %15 = arith.extui %14 : i1 to i32
    %c0_i32_6 = arith.constant 0 : i32
    %16 = arith.cmpi ne, %15, %c0_i32_6 : i32
    scf.if %16 {
      %c1_i32_41 = arith.constant 1 : i32
      %58 = arith.addi %arg0, %c1_i32_41 : i32
      %c1_i32_42 = arith.constant 1 : i32
      %59 = arith.subi %c1_i32_42, %9 : i32
      %c256_i32_43 = arith.constant 256 : i32
      %60 = arith.muli %58, %c256_i32_43 : i32
      %c0_i32_44 = arith.constant 0 : i32
      %61 = tpu.memref_slice %arg1[%60, %c0_i32_44] : memref<800x128xbf16, #tpu.memory_space<any>> -> memref<288x128xbf16, #tpu.memory_space<any>>
      %c0_i32_45 = arith.constant 0 : i32
      %c0_i32_46 = arith.constant 0 : i32
      %62 = tpu.memref_slice %arg6[%59, %c0_i32_45, %c0_i32_46] : memref<2x288x128xbf16, #tpu.memory_space<vmem>> -> memref<1x288x128xbf16, #tpu.memory_space<vmem>>
      %63 = tpu.memref_squeeze %62 : memref<1x288x128xbf16, #tpu.memory_space<vmem>> -> memref<288x128xbf16, #tpu.memory_space<vmem>>
      %64 = tpu.memref_slice %arg7[%59] : memref<2x!tpu.dma_semaphore, #tpu.memory_space<semaphore_mem>> -> memref<1x!tpu.dma_semaphore, #tpu.memory_space<semaphore_mem>>
      %65 = tpu.memref_squeeze %64 : memref<1x!tpu.dma_semaphore, #tpu.memory_space<semaphore_mem>> -> memref<!tpu.dma_semaphore, #tpu.memory_space<semaphore_mem>>
      tpu.enqueue_dma source(%61 : memref<288x128xbf16, #tpu.memory_space<any>>) target(%63 : memref<288x128xbf16, #tpu.memory_space<vmem>>) target_semaphore(%65 : memref<!tpu.dma_semaphore, #tpu.memory_space<semaphore_mem>>)
    } else {
    }
    %c256_i32 = arith.constant 256 : i32
    %17 = arith.muli %arg0, %c256_i32 : i32
    %c0_i32_7 = arith.constant 0 : i32
    %18 = tpu.memref_slice %arg1[%17, %c0_i32_7] : memref<800x128xbf16, #tpu.memory_space<any>> -> memref<288x128xbf16, #tpu.memory_space<any>>
    %c0_i32_8 = arith.constant 0 : i32
    %c0_i32_9 = arith.constant 0 : i32
    %19 = tpu.memref_slice %arg6[%9, %c0_i32_8, %c0_i32_9] : memref<2x288x128xbf16, #tpu.memory_space<vmem>> -> memref<1x288x128xbf16, #tpu.memory_space<vmem>>
    %20 = tpu.memref_squeeze %19 : memref<1x288x128xbf16, #tpu.memory_space<vmem>> -> memref<288x128xbf16, #tpu.memory_space<vmem>>
    %21 = tpu.memref_slice %arg7[%9] : memref<2x!tpu.dma_semaphore, #tpu.memory_space<semaphore_mem>> -> memref<1x!tpu.dma_semaphore, #tpu.memory_space<semaphore_mem>>
    %22 = tpu.memref_squeeze %21 : memref<1x!tpu.dma_semaphore, #tpu.memory_space<semaphore_mem>> -> memref<!tpu.dma_semaphore, #tpu.memory_space<semaphore_mem>>
    tpu.wait_dma2 semaphore(%22 : memref<!tpu.dma_semaphore, #tpu.memory_space<semaphore_mem>>) src(%18 : memref<288x128xbf16, #tpu.memory_space<any>>) dst(%20 : memref<288x128xbf16, #tpu.memory_space<vmem>>)
    %23 = arith.index_cast %9 : i32 to index
    %c0 = arith.constant 0 : index
    %c0_10 = arith.constant 0 : index
    %24 = vector.load %arg6[%23, %c0, %c0_10] : memref<2x288x128xbf16, #tpu.memory_space<vmem>>, vector<1x256x128xbf16>
    %25 = vector.shape_cast %24 : vector<1x256x128xbf16> to vector<256x128xbf16>
    %c0_11 = arith.constant 0 : index
    %c0_12 = arith.constant 0 : index
    %c0_13 = arith.constant 0 : index
    %26 = vector.load %arg2[%c0_11, %c0_12, %c0_13] : memref<3x128x128xbf16, #tpu.memory_space<vmem>>, vector<1x128x128xbf16>
    %27 = vector.shape_cast %26 : vector<1x128x128xbf16> to vector<128x128xbf16>
    %cst = arith.constant dense<0.000000e+00> : vector<256x128xf32>
    %28 = tpu.matmul %25, %27, %cst {dimension_numbers = #tpu.dot_dimension_numbers<[1], [0], [0], [1], [0, 0, 1, 1], [], []>} : vector<256x128xbf16>, vector<128x128xbf16>, vector<256x128xf32> -> vector<256x128xf32>
    %c0_14 = arith.constant 0 : index
    %c0_15 = arith.constant 0 : index
    %29 = vector.load %arg8[%c0_14, %c0_15] : memref<256x128xf32, #tpu.memory_space<vmem>>, vector<256x128xf32>
    tpu.vector_store %arg8[%c0_14, %c0_15], %28 {strides = array<i32>} : memref<256x128xf32, #tpu.memory_space<vmem>>, vector<256x128xf32>,
    %c0_16 = arith.constant 0 : index
    %c0_17 = arith.constant 0 : index
    %30 = vector.load %arg8[%c0_16, %c0_17] : memref<256x128xf32, #tpu.memory_space<vmem>>, vector<256x128xf32>
    %31 = arith.index_cast %9 : i32 to index
    %c16 = arith.constant 16 : index
    %c0_18 = arith.constant 0 : index
    %32 = vector.load %arg6[%31, %c16, %c0_18] : memref<2x288x128xbf16, #tpu.memory_space<vmem>>, vector<1x256x128xbf16>
    %33 = vector.shape_cast %32 : vector<1x256x128xbf16> to vector<256x128xbf16>
    %c1 = arith.constant 1 : index
    %c0_19 = arith.constant 0 : index
    %c0_20 = arith.constant 0 : index
    %34 = vector.load %arg2[%c1, %c0_19, %c0_20] : memref<3x128x128xbf16, #tpu.memory_space<vmem>>, vector<1x128x128xbf16>
    %35 = vector.shape_cast %34 : vector<1x128x128xbf16> to vector<128x128xbf16>
    %cst_21 = arith.constant dense<0.000000e+00> : vector<256x128xf32>
    %36 = tpu.matmul %33, %35, %cst_21 {dimension_numbers = #tpu.dot_dimension_numbers<[1], [0], [0], [1], [0, 0, 1, 1], [], []>} : vector<256x128xbf16>, vector<128x128xbf16>, vector<256x128xf32> -> vector<256x128xf32>
    %37 = arith.addf %30, %36 : vector<256x128xf32>
    %c0_22 = arith.constant 0 : index
    %c0_23 = arith.constant 0 : index
    %38 = vector.load %arg8[%c0_22, %c0_23] : memref<256x128xf32, #tpu.memory_space<vmem>>, vector<256x128xf32>
    tpu.vector_store %arg8[%c0_22, %c0_23], %37 {strides = array<i32>} : memref<256x128xf32, #tpu.memory_space<vmem>>, vector<256x128xf32>,
    %c0_24 = arith.constant 0 : index
    %c0_25 = arith.constant 0 : index
    %39 = vector.load %arg8[%c0_24, %c0_25] : memref<256x128xf32, #tpu.memory_space<vmem>>, vector<256x128xf32>
    %40 = arith.index_cast %9 : i32 to index
    %c32 = arith.constant 32 : index
    %c0_26 = arith.constant 0 : index
    %41 = vector.load %arg6[%40, %c32, %c0_26] : memref<2x288x128xbf16, #tpu.memory_space<vmem>>, vector<1x256x128xbf16>
    %42 = vector.shape_cast %41 : vector<1x256x128xbf16> to vector<256x128xbf16>
    %c2 = arith.constant 2 : index
    %c0_27 = arith.constant 0 : index
    %c0_28 = arith.constant 0 : index
    %43 = vector.load %arg2[%c2, %c0_27, %c0_28] : memref<3x128x128xbf16, #tpu.memory_space<vmem>>, vector<1x128x128xbf16>
    %44 = vector.shape_cast %43 : vector<1x128x128xbf16> to vector<128x128xbf16>
    %cst_29 = arith.constant dense<0.000000e+00> : vector<256x128xf32>
    %45 = tpu.matmul %42, %44, %cst_29 {dimension_numbers = #tpu.dot_dimension_numbers<[1], [0], [0], [1], [0, 0, 1, 1], [], []>} : vector<256x128xbf16>, vector<128x128xbf16>, vector<256x128xf32> -> vector<256x128xf32>
    %46 = arith.addf %39, %45 : vector<256x128xf32>
    %c0_30 = arith.constant 0 : index
    %c0_31 = arith.constant 0 : index
    %47 = vector.load %arg8[%c0_30, %c0_31] : memref<256x128xf32, #tpu.memory_space<vmem>>, vector<256x128xf32>
    tpu.vector_store %arg8[%c0_30, %c0_31], %46 {strides = array<i32>} : memref<256x128xf32, #tpu.memory_space<vmem>>, vector<256x128xf32>,
    %c0_32 = arith.constant 0 : index
    %c0_33 = arith.constant 0 : index
    %48 = vector.load %arg8[%c0_32, %c0_33] : memref<256x128xf32, #tpu.memory_space<vmem>>, vector<256x128xf32>
    %c0_34 = arith.constant 0 : index
    %c0_35 = arith.constant 0 : index
    %49 = vector.load %arg3[%c0_34, %c0_35] : memref<1x128xf32, #tpu.memory_space<vmem>>, vector<1x128xf32>
    %50 = vector.broadcast %49 : vector<1x128xf32> to vector<256x128xf32>
    %51 = arith.mulf %48, %50 : vector<256x128xf32>
    %c0_36 = arith.constant 0 : index
    %c0_37 = arith.constant 0 : index
    %52 = vector.load %arg4[%c0_36, %c0_37] : memref<1x128xf32, #tpu.memory_space<vmem>>, vector<1x128xf32>
    %53 = vector.broadcast %52 : vector<1x128xf32> to vector<256x128xf32>
    %54 = arith.addf %51, %53 : vector<256x128xf32>
    %cst_38 = arith.constant 0.000000e+00 : f32
    %55 = vector.broadcast %cst_38 : f32 to vector<256x128xf32>
    %56 = arith.maximumf %54, %55 : vector<256x128xf32>
    %c0_39 = arith.constant 0 : index
    %c0_40 = arith.constant 0 : index
    %57 = vector.load %arg5[%c0_39, %c0_40] : memref<256x128xf32, #tpu.memory_space<vmem>>, vector<256x128xf32>
    tpu.vector_store %arg5[%c0_39, %c0_40], %56 {strides = array<i32>} : memref<256x128xf32, #tpu.memory_space<vmem>>, vector<256x128xf32>,
    return
  }
  func.func @transform_1(%arg0: i32) -> (i32, i32, i32) {
    %c0_i32 = arith.constant 0 : i32
    %c0_i32_0 = arith.constant 0 : i32
    %c0_i32_1 = arith.constant 0 : i32
    %c0_i32_2 = arith.constant 0 : i32
    return %c0_i32, %c0_i32_0, %c0_i32_1 : i32, i32, i32
  }
  func.func @transform_2(%arg0: i32) -> (i32, i32) {
    %c0_i32 = arith.constant 0 : i32
    %c0_i32_0 = arith.constant 0 : i32
    %c0_i32_1 = arith.constant 0 : i32
    return %c0_i32, %c0_i32_0 : i32, i32
  }
  func.func @transform_3(%arg0: i32) -> (i32, i32) {
    %c0_i32 = arith.constant 0 : i32
    %c0_i32_0 = arith.constant 0 : i32
    %c0_i32_1 = arith.constant 0 : i32
    return %c0_i32, %c0_i32_0 : i32, i32
  }
  func.func @transform_4(%arg0: i32) -> (i32, i32) {
    %c0_i32 = arith.constant 0 : i32
    %c0_i32_0 = arith.constant 0 : i32
    return %arg0, %c0_i32 : i32, i32
  }
}

</mosaic_0001>

<llo_original>
// kernel: inception_c_forward.17
$region0: #{inception_c_forward.17}
  #allocation0 [shape = 'u32[]', space=smem, size = 0x4, offset = 0x4, fixed_abs, tag = 'smem constant byte address 0x4 - core index']
  #allocation1 [shape = 'u32[144,128]{1,0:T(1,128)}', space=vmem, size = 0x12000, scoped, tag = 'internal scratch']
  %s0 = inlined_call_operand.vmem [shape: bf16[512,128], index: 0, kind: input, shape index: {}]
  %s1 = inlined_call_operand.vmem [shape: bf16[128,128], index: 1, kind: input, shape index: {}]
  %s2 = inlined_call_operand.vmem [shape: f32[1,128], index: 2, kind: input, shape index: {}]
  %s3 = inlined_call_operand.vmem [shape: f32[1,128], index: 3, kind: input, shape index: {}]
  %s4 = inlined_call_operand.vmem [shape: f32[512,128], index: 4, kind: output, shape index: {}]
  %s5 = sld [smem:[#allocation0]]
  $region49: #{inception_c_forward.17} parent=0
    _
  %s7 = ssub.s32 1, %s5
  %s8 = scalar_select 0, %s7, %s5
  loop: start=0, step=1, limit=4
  $region2: #{inception_c_forward.17} parent=0 // loop_pre_header
    _
  $region3: #{inception_c_forward.17} parent=0 // loop_header
    %s10 = sphi 0, %s14
    %p11 = scmp.ge.s32.totalorder %s10, 4
    %s20 = sphi 0, %s22
    %s23 = sphi 0, %s20
    %s24 = sphi 0, %s23
    %s40 = sphi 0, %s24
    %s44 = sphi 0, %s44
    %s46 = sphi 0, %s44
    %s47 = sphi 0, %s46
    %s61 = sphi 0, %s47
    %s65 = sphi 0, %s65
    %s67 = sphi 0, %s65
    %s68 = sphi 0, %s67
    %s82 = sphi 0, %s68
    %s86 = sphi 0, %s86
    %s88 = sphi 0, %s86
    %s89 = sphi 0, %s88
    %s103 = sphi 0, %s89
    %s109 = sphi 0, %s111
    %s112 = sphi 0, %s109
    %s113 = sphi 0, %s112
    %s129 = sphi 0, %s113
  $region4: #{inception_c_forward.17} parent=0 // loop_header_branch
    %13 = sbr.rel (%p11) target = $region8
  $region5: #{inception_c_forward.17} parent=0 // loop_body
    %s15 = ssub.s32 %s10, 1
    %s16 = ssub.s32 %s10, 2
    %s17 = sadd.s32 %s10, 1
    %s18 = ssub.s32 %s10, %s17
    %p19 = scmp.eq.s32.totalorder %s18, 0
    %s21 = sadd.s32 %s20, 1
    %s22 = scalar_select %p19, %s20, %s21
    %p25 = pneg %p19
    %p26 = scmp.eq.s32.totalorder %s10, 1
    %p27 = por %p25, %p26
    %p28 = scmp.ne.s32.totalorder %s20, %s23
    %p29 = scmp.eq.s32.totalorder %s10, 0
    %p30 = por %p28, %p29
    %p31 = scmp.ne.s32.totalorder %s20, %s23
    %p32 = scmp.eq.s32.totalorder %s15, 1
    %p33 = por %p31, %p32
    %p34 = scmp.ne.s32.totalorder %s23, %s24
    %p35 = scmp.eq.s32.totalorder %s15, 0
    %p36 = por %p34, %p35
    %p37 = scmp.ne.s32.totalorder %s23, %s24
    %p38 = scmp.eq.s32.totalorder %s16, 1
    %p39 = por %p37, %p38
    %p41 = scmp.ne.s32.totalorder %s24, %s40
    %p42 = scmp.eq.s32.totalorder %s16, 0
    %p43 = por %p41, %p42
    %s45 = sadd.s32 %s44, 1
    %p48 = scmp.eq.s32.totalorder %s10, 1
    %p49 = scmp.ne.s32.totalorder %s44, %s46
    %p50 = scmp.eq.s32.totalorder %s10, 0
    %p51 = por %p49, %p50
    %p52 = scmp.ne.s32.totalorder %s44, %s46
    %p53 = scmp.eq.s32.totalorder %s15, 1
    %p54 = por %p52, %p53
    %p55 = scmp.ne.s32.totalorder %s46, %s47
    %p56 = scmp.eq.s32.totalorder %s15, 0
    %p57 = por %p55, %p56
    %p58 = scmp.ne.s32.totalorder %s46, %s47
    %p59 = scmp.eq.s32.totalorder %s16, 1
    %p60 = por %p58, %p59
    %p62 = scmp.ne.s32.totalorder %s47, %s61
    %p63 = scmp.eq.s32.totalorder %s16, 0
    %p64 = por %p62, %p63
    %s66 = sadd.s32 %s65, 1
    %p69 = scmp.eq.s32.totalorder %s10, 1
    %p70 = scmp.ne.s32.totalorder %s65, %s67
    %p71 = scmp.eq.s32.totalorder %s10, 0
    %p72 = por %p70, %p71
    %p73 = scmp.ne.s32.totalorder %s65, %s67
    %p74 = scmp.eq.s32.totalorder %s15, 1
    %p75 = por %p73, %p74
    %p76 = scmp.ne.s32.totalorder %s67, %s68
    %p77 = scmp.eq.s32.totalorder %s15, 0
    %p78 = por %p76, %p77
    %p79 = scmp.ne.s32.totalorder %s67, %s68
    %p80 = scmp.eq.s32.totalorder %s16, 1
    %p81 = por %p79, %p80
    %p83 = scmp.ne.s32.totalorder %s68, %s82
    %p84 = scmp.eq.s32.totalorder %s16, 0
    %p85 = por %p83, %p84
    %s87 = sadd.s32 %s86, 1
    %p90 = scmp.eq.s32.totalorder %s10, 1
    %p91 = scmp.ne.s32.totalorder %s86, %s88
    %p92 = scmp.eq.s32.totalorder %s10, 0
    %p93 = por %p91, %p92
    %p94 = scmp.ne.s32.totalorder %s86, %s88
    %p95 = scmp.eq.s32.totalorder %s15, 1
    %p96 = por %p94, %p95
    %p97 = scmp.ne.s32.totalorder %s88, %s89
    %p98 = scmp.eq.s32.totalorder %s15, 0
    %p99 = por %p97, %p98
    %p100 = scmp.ne.s32.totalorder %s88, %s89
    %p101 = scmp.eq.s32.totalorder %s16, 1
    %p102 = por %p100, %p101
    %p104 = scmp.ne.s32.totalorder %s89, %s103
    %p105 = scmp.eq.s32.totalorder %s16, 0
    %p106 = por %p104, %p105
    %s107 = ssub.s32 %s10, %s17
    %p108 = scmp.eq.s32.totalorder %s107, 0
    %s110 = sadd.s32 %s109, 1
    %s111 = scalar_select %p108, %s109, %s110
    %p114 = pneg %p108
    %p115 = scmp.eq.s32.totalorder %s10, 1
    %p116 = por %p114, %p115
    %p117 = scmp.ne.s32.totalorder %s109, %s112
    %p118 = scmp.eq.s32.totalorder %s10, 0
    %p119 = por %p117, %p118
    %p120 = scmp.ne.s32.totalorder %s109, %s112
    %p121 = scmp.eq.s32.totalorder %s15, 1
    %p122 = por %p120, %p121
    %p123 = scmp.ne.s32.totalorder %s112, %s113
    %p124 = scmp.eq.s32.totalorder %s15, 0
    %p125 = por %p123, %p124
    %p126 = scmp.ne.s32.totalorder %s112, %s113
    %p127 = scmp.eq.s32.totalorder %s16, 1
    %p128 = por %p126, %p127
    %p130 = scmp.ne.s32.totalorder %s113, %s129
    %p131 = scmp.eq.s32.totalorder %s16, 0
    %p132 = por %p130, %p131
    %p133 = scmp.le.s32.totalorder 1, %s10
    %p134 = scmp.lt.s32.totalorder %s10, 3
    %p135 = pnand %p133, %p134
    %p136 = pneg %p135
    // Predicated region
    $region9: #{inception_c_forward.17} parent=5 // pred_check
      _
    $region10: #{inception_c_forward.17} parent=5 // pred_check_branch
      %138 = sbr.rel (%p135) target = $region12
    $region11: #{inception_c_forward.17} parent=5 // pred_region
      %s139 = ssub.s32 %s10, 1
      // Predicated region
      $region13: #{inception_c_forward.17} parent=11 // pred_check
        %p140 = pneg %p57
      $region14: #{inception_c_forward.17} parent=11 // pred_check_branch
        %142 = sbr.rel (%p140) target = $region16
      $region15: #{inception_c_forward.17} parent=11 // pred_region
        _
      $region16: #{inception_c_forward.17} parent=11 // pred_fallthru
        _
      // Predicated region
      $region17: #{inception_c_forward.17} parent=11 // pred_check
        %p143 = pneg %p78
      $region18: #{inception_c_forward.17} parent=11 // pred_check_branch
        %145 = sbr.rel (%p143) target = $region20
      $region19: #{inception_c_forward.17} parent=11 // pred_region
        _
      $region20: #{inception_c_forward.17} parent=11 // pred_fallthru
        _
      // Predicated region
      $region21: #{inception_c_forward.17} parent=11 // pred_check
        %p146 = pneg %p99
      $region22: #{inception_c_forward.17} parent=11 // pred_check_branch
        %148 = sbr.rel (%p146) target = $region24
      $region23: #{inception_c_forward.17} parent=11 // pred_region
        _
      $region24: #{inception_c_forward.17} parent=11 // pred_fallthru
        _
    $region12: #{inception_c_forward.17} parent=5 // pred_fallthru
      _
    %p149 = scmp.lt.s32.totalorder %s10, 2
    // Predicated region
    $region25: #{inception_c_forward.17} parent=5 // pred_check
      %p150 = pneg %p149
    $region26: #{inception_c_forward.17} parent=5 // pred_check_branch
      %152 = sbr.rel (%p150) target = $region28
    $region27: #{inception_c_forward.17} parent=5 // pred_region
      // Predicated region
      $region29: #{inception_c_forward.17} parent=27 // pred_check
        %p153 = pneg %p30
      $region30: #{inception_c_forward.17} parent=27 // pred_check_branch
        %155 = sbr.rel (%p153) target = $region32
      $region31: #{inception_c_forward.17} parent=27 // pred_region
        %s156 = smul.u32 32, %s10
        %p157 = scmp.lt.s32.totalorder %s156, 63
        %s158 = scalar_select %p157, %s156, 63
        %s159 = smul.addr %s158, 4
        %s160 = scalar_lea.vmem %s0, %s159
        %s161 = smul.u32 32, %s10
      $region32: #{inception_c_forward.17} parent=27 // pred_fallthru
        _
    $region28: #{inception_c_forward.17} parent=5 // pred_fallthru
      _
    %p162 = scmp.le.s32.totalorder 1, %s10
    %p163 = scmp.lt.s32.totalorder %s10, 3
    %p164 = pnand %p162, %p163
    %p165 = pneg %p164
    // Predicated region
    $region33: #{inception_c_forward.17} parent=5 // pred_check
      _
    $region34: #{inception_c_forward.17} parent=5 // pred_check_branch
      %167 = sbr.rel (%p164) target = $region36
    $region35: #{inception_c_forward.17} parent=5 // pred_region
      %s168 = ssub.s32 %s10, 1
      %s169 = smul.u32 32, %s15
      %p170 = scmp.lt.s32.totalorder %s169, 63
      %s171 = scalar_select %p170, %s169, 63
      %s172 = smul.addr %s171, 4
      %s173 = scalar_lea.vmem %s0, %s172
      %p174 = pneg %p36
      %p175 = pneg %p33
      %p176 = pneg %p57
      %p177 = pneg %p54
      %p178 = pneg %p78
      %p179 = pneg %p75
      %p180 = pneg %p99
      %p181 = pneg %p96
      %p182 = pneg %p125
      %p183 = pneg %p122
      %s184 = smul.u32 32, %s15
      %p185 = scmp.lt.s32.totalorder %s184, 63
      %s186 = scalar_select %p185, %s184, 63
      %s187 = smul.addr %s186, 8
      %s188 = scalar_lea.vmem %s4, %s187
      %s189 = smul.u32 32, %s15
      %p190 = scmp.lt.s32.totalorder %s189, 63
      %s191 = scalar_select %p190, %s189, 63
      %s192 = smul.addr %s191, 4
      %s193 = scalar_lea.vmem %s0, %s192
      %s194 = smul.u32 32, %s15
      %s195 = smul.u32 32, %s15
      %p196 = scmp.lt.s32.totalorder %s195, 63
      %s197 = scalar_select %p196, %s195, 63
      %s198 = smul.addr %s197, 8
      %s199 = scalar_lea.vmem %s4, %s198
      %s200 = smul.u32 32, %s15
      %v202 = vld [vmem:[%s193] sm:$0xf]
      %v203 = vld [vmem:[%s193 + $0x4] sm:$0xf]
      %v204 = vld [vmem:[%s193 + $0x8] sm:$0xf]
      %v205 = vld [vmem:[%s193 + $0xc] sm:$0xf]
      %v206 = vld [vmem:[%s193 + $0x10] sm:$0xf]
      %v207 = vld [vmem:[%s193 + $0x14] sm:$0xf]
      %v208 = vld [vmem:[%s193 + $0x18] sm:$0xf]
      %v209 = vld [vmem:[%s193 + $0x1c] sm:$0xf]
      %v210 = vld [vmem:[%s193 + $0x20] sm:$0xf]
      %v211 = vld [vmem:[%s193 + $0x24] sm:$0xf]
      %v212 = vld [vmem:[%s193 + $0x28] sm:$0xf]
      %v213 = vld [vmem:[%s193 + $0x2c] sm:$0xf]
      %v214 = vld [vmem:[%s193 + $0x30] sm:$0xf]
      %v215 = vld [vmem:[%s193 + $0x34] sm:$0xf]
      %v216 = vld [vmem:[%s193 + $0x38] sm:$0xf]
      %v217 = vld [vmem:[%s193 + $0x3c] sm:$0xf]
      %v218 = vld [vmem:[%s193 + $0x40] sm:$0xf]
      %v219 = vld [vmem:[%s193 + $0x44] sm:$0xf]
      %v220 = vld [vmem:[%s193 + $0x48] sm:$0xf]
      %v221 = vld [vmem:[%s193 + $0x4c] sm:$0xf]
      %v222 = vld [vmem:[%s193 + $0x50] sm:$0xf]
      %v223 = vld [vmem:[%s193 + $0x54] sm:$0xf]
      %v224 = vld [vmem:[%s193 + $0x58] sm:$0xf]
      %v225 = vld [vmem:[%s193 + $0x5c] sm:$0xf]
      %v226 = vld [vmem:[%s193 + $0x60] sm:$0xf]
      %v227 = vld [vmem:[%s193 + $0x64] sm:$0xf]
      %v228 = vld [vmem:[%s193 + $0x68] sm:$0xf]
      %v229 = vld [vmem:[%s193 + $0x6c] sm:$0xf]
      %v230 = vld [vmem:[%s193 + $0x70] sm:$0xf]
      %v231 = vld [vmem:[%s193 + $0x74] sm:$0xf]
      %v232 = vld [vmem:[%s193 + $0x78] sm:$0xf]
      %v233 = vld [vmem:[%s193 + $0x7c] sm:$0xf]
      %v234 = vld [vmem:[%s1] sm:$0xf]
      %v235 = vld [vmem:[%s1 + $0x4] sm:$0xf]
      %v236 = vld [vmem:[%s1 + $0x8] sm:$0xf]
      %v237 = vld [vmem:[%s1 + $0xc] sm:$0xf]
      %v238 = vld [vmem:[%s1 + $0x10] sm:$0xf]
      %v239 = vld [vmem:[%s1 + $0x14] sm:$0xf]
      %v240 = vld [vmem:[%s1 + $0x18] sm:$0xf]
      %v241 = vld [vmem:[%s1 + $0x1c] sm:$0xf]
      %v242 = vld [vmem:[%s1 + $0x20] sm:$0xf]
      %v243 = vld [vmem:[%s1 + $0x24] sm:$0xf]
      %v244 = vld [vmem:[%s1 + $0x28] sm:$0xf]
      %v245 = vld [vmem:[%s1 + $0x2c] sm:$0xf]
      %v246 = vld [vmem:[%s1 + $0x30] sm:$0xf]
      %v247 = vld [vmem:[%s1 + $0x34] sm:$0xf]
      %v248 = vld [vmem:[%s1 + $0x38] sm:$0xf]
      %v249 = vld [vmem:[%s1 + $0x3c] sm:$0xf]
      %v282 = vunpack.c.l.b16 %v202
      %v283 = vunpack.c.l.b16 %v203
      %v284 = vunpack.c.l.b16 %v204
      %v285 = vunpack.c.l.b16 %v205
      %v286 = vunpack.c.l.b16 %v206
      %v287 = vunpack.c.l.b16 %v207
      %v288 = vunpack.c.l.b16 %v208
      %v289 = vunpack.c.l.b16 %v209
      %v290 = vunpack.c.l.b16 %v210
      %v291 = vunpack.c.l.b16 %v211
      %v292 = vunpack.c.l.b16 %v212
      %v293 = vunpack.c.l.b16 %v213
      %v294 = vunpack.c.l.b16 %v214
      %v295 = vunpack.c.l.b16 %v215
      %v296 = vunpack.c.l.b16 %v216
      %v297 = vunpack.c.l.b16 %v217
      %v298 = vunpack.c.l.b16 %v218
      %v299 = vunpack.c.l.b16 %v219
      %v300 = vunpack.c.l.b16 %v220
      %v301 = vunpack.c.l.b16 %v221
      %v302 = vunpack.c.l.b16 %v222
      %v303 = vunpack.c.l.b16 %v223
      %v304 = vunpack.c.l.b16 %v224
      %v305 = vunpack.c.l.b16 %v225
      %v306 = vunpack.c.l.b16 %v226
      %v307 = vunpack.c.l.b16 %v227
      %v308 = vunpack.c.l.b16 %v228
      %v309 = vunpack.c.l.b16 %v229
      %v310 = vunpack.c.l.b16 %v230
      %v311 = vunpack.c.l.b16 %v231
      %v312 = vunpack.c.l.b16 %v232
      %v313 = vunpack.c.l.b16 %v233
      %v314 = vpack.c.b16 %v283, %v282
      %v315 = vpack.c.b16 %v285, %v284
      %v316 = vpack.c.b16 %v287, %v286
      %v317 = vpack.c.b16 %v289, %v288
      %v318 = vpack.c.b16 %v291, %v290
      %v319 = vpack.c.b16 %v293, %v292
      %v320 = vpack.c.b16 %v295, %v294
      %v321 = vpack.c.b16 %v297, %v296
      %v322 = vpack.c.b16 %v299, %v298
      %v323 = vpack.c.b16 %v301, %v300
      %v324 = vpack.c.b16 %v303, %v302
      %v325 = vpack.c.b16 %v305, %v304
      %v326 = vpack.c.b16 %v307, %v306
      %v327 = vpack.c.b16 %v309, %v308
      %v328 = vpack.c.b16 %v311, %v310
      %v329 = vpack.c.b16 %v313, %v312
      %v362 = vunpack.c.l.b16 %v234
      %v363 = vunpack.c.l.b16 %v235
      %v364 = vunpack.c.l.b16 %v236
      %v365 = vunpack.c.l.b16 %v237
      %v366 = vunpack.c.l.b16 %v238
      %v367 = vunpack.c.l.b16 %v239
      %v368 = vunpack.c.l.b16 %v240
      %v369 = vunpack.c.l.b16 %v241
      %v370 = vunpack.c.l.b16 %v242
      %v371 = vunpack.c.l.b16 %v243
      %v372 = vunpack.c.l.b16 %v244
      %v373 = vunpack.c.l.b16 %v245
      %v374 = vunpack.c.l.b16 %v246
      %v375 = vunpack.c.l.b16 %v247
      %v376 = vunpack.c.l.b16 %v248
      %v377 = vunpack.c.l.b16 %v249
      %v378 = vpack.c.b16 %v363, %v362
      %v379 = vpack.c.b16 %v365, %v364
      %v380 = vpack.c.b16 %v367, %v366
      %v381 = vpack.c.b16 %v369, %v368
      %v382 = vpack.c.b16 %v371, %v370
      %v383 = vpack.c.b16 %v373, %v372
      %v384 = vpack.c.b16 %v375, %v374
      %v385 = vpack.c.b16 %v377, %v376
      %394 = vmatprep.subr.bf16.mxu0 0
      %395 = vmatpush1.bf16.msra.mxu0 %v378
      %396 = vmatprep.subr.bf16.mxu0 0
      %397 = vmatpush1.bf16.msra.mxu0 %v379
      %398 = vmatprep.subr.bf16.mxu0 0
      %399 = vmatpush1.bf16.msra.mxu0 %v380
      %400 = vmatprep.subr.bf16.mxu0 0
      %401 = vmatpush1.bf16.msra.mxu0 %v381
      %402 = vmatprep.subr.bf16.mxu0 0
      %403 = vmatpush1.bf16.msra.mxu0 %v382
      %404 = vmatprep.subr.bf16.mxu0 0
      %405 = vmatpush1.bf16.msra.mxu0 %v383
      %406 = vmatprep.subr.bf16.mxu0 0
      %407 = vmatpush1.bf16.msra.mxu0 %v384
      %408 = vmatprep.subr.bf16.mxu0 0
      %409 = vmatpush1.bf16.msra.mxu0 %v385
      %410 = vmatprep.subr.bf16.mxu0 0
      %411 = vmatpush1.bf16.msra.mxu0 0
      %412 = vmatprep.subr.bf16.mxu0 0
      %413 = vmatpush1.bf16.msra.mxu0 0
      %414 = vmatprep.subr.bf16.mxu0 0
      %415 = vmatpush1.bf16.msra.mxu0 0
      %416 = vmatprep.subr.bf16.mxu0 0
      %417 = vmatpush1.bf16.msra.mxu0 0
      %418 = vmatprep.subr.bf16.mxu0 0
      %419 = vmatpush1.bf16.msra.mxu0 0
      %420 = vmatprep.subr.bf16.mxu0 0
      %421 = vmatpush1.bf16.msra.mxu0 0
      %422 = vmatprep.subr.bf16.mxu0 0
      %423 = vmatpush1.bf16.msra.mxu0 0
      %424 = vmatprep.subr.bf16.mxu0 0
      %425 = vmatpush1.bf16.msra.mxu0 0
      %426 = vmatprep.mubr.bf16.mxu0 0
      %427 = vmatmul.mubr.bf16.gmra.mrb[0].mxu0 %v314
      %v428 = vpop.f32.mrb[0].mxu0
      %v429 = vadd.f32 0.0, %v428
      %v430 = vpop.f32.mrb[0].mxu0
      %v431 = vpop.f32.mrb[0].mxu0
      %v432 = vadd.f32 0.0, %v431
      %v433 = vpop.f32.mrb[0].mxu0
      %434 = vmatprep.mubr.bf16.mxu0 0
      %435 = vmatmul.mubr.bf16.gmra.mrb[0].mxu0 %v315
      %v436 = vpop.f32.mrb[0].mxu0
      %v437 = vadd.f32 0.0, %v436
      %v438 = vpop.f32.mrb[0].mxu0
      %v439 = vpop.f32.mrb[0].mxu0
      %v440 = vadd.f32 0.0, %v439
      %v441 = vpop.f32.mrb[0].mxu0
      %442 = vmatprep.mubr.bf16.mxu0 0
      %443 = vmatmul.mubr.bf16.gmra.mrb[0].mxu0 %v316
      %v444 = vpop.f32.mrb[0].mxu0
      %v445 = vadd.f32 0.0, %v444
      %v446 = vpop.f32.mrb[0].mxu0
      %v447 = vpop.f32.mrb[0].mxu0
      %v448 = vadd.f32 0.0, %v447
      %v449 = vpop.f32.mrb[0].mxu0
      %450 = vmatprep.mubr.bf16.mxu0 0
      %451 = vmatmul.mubr.bf16.gmra.mrb[0].mxu0 %v317
      %v452 = vpop.f32.mrb[0].mxu0
      %v453 = vadd.f32 0.0, %v452
      %v454 = vpop.f32.mrb[0].mxu0
      %v455 = vpop.f32.mrb[0].mxu0
      %v456 = vadd.f32 0.0, %v455
      %v457 = vpop.f32.mrb[0].mxu0
      %458 = vmatprep.mubr.bf16.mxu0 0
      %459 = vmatmul.mubr.bf16.gmra.mrb[0].mxu0 %v318
      %v460 = vpop.f32.mrb[0].mxu0
      %v461 = vadd.f32 0.0, %v460
      %v462 = vpop.f32.mrb[0].mxu0
      %v463 = vpop.f32.mrb[0].mxu0
      %v464 = vadd.f32 0.0, %v463
      %v465 = vpop.f32.mrb[0].mxu0
      %466 = vmatprep.mubr.bf16.mxu0 0
      %467 = vmatmul.mubr.bf16.gmra.mrb[0].mxu0 %v319
      %v468 = vpop.f32.mrb[0].mxu0
      %v469 = vadd.f32 0.0, %v468
      %v470 = vpop.f32.mrb[0].mxu0
      %v471 = vpop.f32.mrb[0].mxu0
      %v472 = vadd.f32 0.0, %v471
      %v473 = vpop.f32.mrb[0].mxu0
      %474 = vmatprep.mubr.bf16.mxu0 0
      %475 = vmatmul.mubr.bf16.gmra.mrb[0].mxu0 %v320
      %v476 = vpop.f32.mrb[0].mxu0
      %v477 = vadd.f32 0.0, %v476
      %v478 = vpop.f32.mrb[0].mxu0
      %v479 = vpop.f32.mrb[0].mxu0
      %v480 = vadd.f32 0.0, %v479
      %v481 = vpop.f32.mrb[0].mxu0
      %482 = vmatprep.mubr.bf16.mxu0 0
      %483 = vmatmul.mubr.bf16.gmra.mrb[0].mxu0 %v321
      %v484 = vpop.f32.mrb[0].mxu0
      %v485 = vadd.f32 0.0, %v484
      %v486 = vpop.f32.mrb[0].mxu0
      %v487 = vpop.f32.mrb[0].mxu0
      %v488 = vadd.f32 0.0, %v487
      %v489 = vpop.f32.mrb[0].mxu0
      %490 = vmatprep.mubr.bf16.mxu0 0
      %491 = vmatmul.mubr.bf16.gmra.mrb[0].mxu0 %v322
      %v492 = vpop.f32.mrb[0].mxu0
      %v493 = vadd.f32 0.0, %v492
      %v494 = vpop.f32.mrb[0].mxu0
      %v495 = vpop.f32.mrb[0].mxu0
      %v496 = vadd.f32 0.0, %v495
      %v497 = vpop.f32.mrb[0].mxu0
      %498 = vmatprep.mubr.bf16.mxu0 0
      %499 = vmatmul.mubr.bf16.gmra.mrb[0].mxu0 %v323
      %v500 = vpop.f32.mrb[0].mxu0
      %v501 = vadd.f32 0.0, %v500
      %v502 = vpop.f32.mrb[0].mxu0
      %v503 = vpop.f32.mrb[0].mxu0
      %v504 = vadd.f32 0.0, %v503
      %v505 = vpop.f32.mrb[0].mxu0
      %506 = vmatprep.mubr.bf16.mxu0 0
      %507 = vmatmul.mubr.bf16.gmra.mrb[0].mxu0 %v324
      %v508 = vpop.f32.mrb[0].mxu0
      %v509 = vadd.f32 0.0, %v508
      %v510 = vpop.f32.mrb[0].mxu0
      %v511 = vpop.f32.mrb[0].mxu0
      %v512 = vadd.f32 0.0, %v511
      %v513 = vpop.f32.mrb[0].mxu0
      %514 = vmatprep.mubr.bf16.mxu0 0
      %515 = vmatmul.mubr.bf16.gmra.mrb[0].mxu0 %v325
      %v516 = vpop.f32.mrb[0].mxu0
      %v517 = vadd.f32 0.0, %v516
      %v518 = vpop.f32.mrb[0].mxu0
      %v519 = vpop.f32.mrb[0].mxu0
      %v520 = vadd.f32 0.0, %v519
      %v521 = vpop.f32.mrb[0].mxu0
      %522 = vmatprep.mubr.bf16.mxu0 0
      %523 = vmatmul.mubr.bf16.gmra.mrb[0].mxu0 %v326
      %v524 = vpop.f32.mrb[0].mxu0
      %v525 = vadd.f32 0.0, %v524
      %v526 = vpop.f32.mrb[0].mxu0
      %v527 = vpop.f32.mrb[0].mxu0
      %v528 = vadd.f32 0.0, %v527
      %v529 = vpop.f32.mrb[0].mxu0
      %530 = vmatprep.mubr.bf16.mxu0 0
      %531 = vmatmul.mubr.bf16.gmra.mrb[0].mxu0 %v327
      %v532 = vpop.f32.mrb[0].mxu0
      %v533 = vadd.f32 0.0, %v532
      %v534 = vpop.f32.mrb[0].mxu0
      %v535 = vpop.f32.mrb[0].mxu0
      %v536 = vadd.f32 0.0, %v535
      %v537 = vpop.f32.mrb[0].mxu0
      %538 = vmatprep.mubr.bf16.mxu0 0
      %539 = vmatmul.mubr.bf16.gmra.mrb[0].mxu0 %v328
      %v540 = vpop.f32.mrb[0].mxu0
      %v541 = vadd.f32 0.0, %v540
      %v542 = vpop.f32.mrb[0].mxu0
      %v543 = vpop.f32.mrb[0].mxu0
      %v544 = vadd.f32 0.0, %v543
      %v545 = vpop.f32.mrb[0].mxu0
      %546 = vmatprep.mubr.bf16.mxu0 0
      %547 = vmatmul.mubr.bf16.gmra.mrb[0].mxu0 %v329
      %v548 = vpop.f32.mrb[0].mxu0
      %v549 = vadd.f32 0.0, %v548
      %v550 = vpop.f32.mrb[0].mxu0
      %v551 = vpop.f32.mrb[0].mxu0
      %v552 = vadd.f32 0.0, %v551
      %v553 = vpop.f32.mrb[0].mxu0
      %554 = vdwg.mxu0
      %v555 = vld [vmem:[%s2] sm:$0x1]
      %v557 = vlaneseq
      %v558 = vshrl.u32 %v557, 7
      %v559 = vsub.s32 0, %v558
      %v560 = vrot.slane %v555, %v559
      %v562 = vmul.f32 %v429, %v560
      %v563 = vmul.f32 %v432, %v560
      %v564 = vmul.f32 %v437, %v560
      %v565 = vmul.f32 %v440, %v560
      %v566 = vmul.f32 %v445, %v560
      %v567 = vmul.f32 %v448, %v560
      %v568 = vmul.f32 %v453, %v560
      %v569 = vmul.f32 %v456, %v560
      %v570 = vmul.f32 %v461, %v560
      %v571 = vmul.f32 %v464, %v560
      %v572 = vmul.f32 %v469, %v560
      %v573 = vmul.f32 %v472, %v560
      %v574 = vmul.f32 %v477, %v560
      %v575 = vmul.f32 %v480, %v560
      %v576 = vmul.f32 %v485, %v560
      %v577 = vmul.f32 %v488, %v560
      %v578 = vmul.f32 %v493, %v560
      %v579 = vmul.f32 %v496, %v560
      %v580 = vmul.f32 %v501, %v560
      %v581 = vmul.f32 %v504, %v560
      %v582 = vmul.f32 %v509, %v560
      %v583 = vmul.f32 %v512, %v560
      %v584 = vmul.f32 %v517, %v560
      %v585 = vmul.f32 %v520, %v560
      %v586 = vmul.f32 %v525, %v560
      %v587 = vmul.f32 %v528, %v560
      %v588 = vmul.f32 %v533, %v560
      %v589 = vmul.f32 %v536, %v560
      %v590 = vmul.f32 %v541, %v560
      %v591 = vmul.f32 %v544, %v560
      %v592 = vmul.f32 %v549, %v560
      %v593 = vmul.f32 %v552, %v560
      %v594 = vld [vmem:[%s3] sm:$0x1]
      %v596 = vlaneseq
      %v597 = vshrl.u32 %v596, 7
      %v598 = vsub.s32 0, %v597
      %v599 = vrot.slane %v594, %v598
      %v601 = vadd.f32 %v562, %v599
      %v602 = vadd.f32 %v563, %v599
      %v603 = vadd.f32 %v564, %v599
      %v604 = vadd.f32 %v565, %v599
      %v605 = vadd.f32 %v566, %v599
      %v606 = vadd.f32 %v567, %v599
      %v607 = vadd.f32 %v568, %v599
      %v608 = vadd.f32 %v569, %v599
      %v609 = vadd.f32 %v570, %v599
      %v610 = vadd.f32 %v571, %v599
      %v611 = vadd.f32 %v572, %v599
      %v612 = vadd.f32 %v573, %v599
      %v613 = vadd.f32 %v574, %v599
      %v614 = vadd.f32 %v575, %v599
      %v615 = vadd.f32 %v576, %v599
      %v616 = vadd.f32 %v577, %v599
      %v617 = vadd.f32 %v578, %v599
      %v618 = vadd.f32 %v579, %v599
      %v619 = vadd.f32 %v580, %v599
      %v620 = vadd.f32 %v581, %v599
      %v621 = vadd.f32 %v582, %v599
      %v622 = vadd.f32 %v583, %v599
      %v623 = vadd.f32 %v584, %v599
      %v624 = vadd.f32 %v585, %v599
      %v625 = vadd.f32 %v586, %v599
      %v626 = vadd.f32 %v587, %v599
      %v627 = vadd.f32 %v588, %v599
      %v628 = vadd.f32 %v589, %v599
      %v629 = vadd.f32 %v590, %v599
      %v630 = vadd.f32 %v591, %v599
      %v631 = vadd.f32 %v592, %v599
      %v632 = vadd.f32 %v593, %v599
      %v633 = vmax.f32 %v601, 0.0
      %v634 = vmax.f32 %v602, 0.0
      %v635 = vmax.f32 %v603, 0.0
      %v636 = vmax.f32 %v604, 0.0
      %v637 = vmax.f32 %v605, 0.0
      %v638 = vmax.f32 %v606, 0.0
      %v639 = vmax.f32 %v607, 0.0
      %v640 = vmax.f32 %v608, 0.0
      %v641 = vmax.f32 %v609, 0.0
      %v642 = vmax.f32 %v610, 0.0
      %v643 = vmax.f32 %v611, 0.0
      %v644 = vmax.f32 %v612, 0.0
      %v645 = vmax.f32 %v613, 0.0
      %v646 = vmax.f32 %v614, 0.0
      %v647 = vmax.f32 %v615, 0.0
      %v648 = vmax.f32 %v616, 0.0
      %v649 = vmax.f32 %v617, 0.0
      %v650 = vmax.f32 %v618, 0.0
      %v651 = vmax.f32 %v619, 0.0
      %v652 = vmax.f32 %v620, 0.0
      %v653 = vmax.f32 %v621, 0.0
      %v654 = vmax.f32 %v622, 0.0
      %v655 = vmax.f32 %v623, 0.0
      %v656 = vmax.f32 %v624, 0.0
      %v657 = vmax.f32 %v625, 0.0
      %v658 = vmax.f32 %v626, 0.0
      %v659 = vmax.f32 %v627, 0.0
      %v660 = vmax.f32 %v628, 0.0
      %v661 = vmax.f32 %v629, 0.0
      %v662 = vmax.f32 %v630, 0.0
      %v663 = vmax.f32 %v631, 0.0
      %v664 = vmax.f32 %v632, 0.0
      %665 = vst [vmem:[%s199] sm:$0xff] %v633
      %666 = vst [vmem:[%s199 + $0x8] sm:$0xff] %v634
      %667 = vst [vmem:[%s199 + $0x10] sm:$0xff] %v635
      %668 = vst [vmem:[%s199 + $0x18] sm:$0xff] %v636
      %669 = vst [vmem:[%s199 + $0x20] sm:$0xff] %v637
      %670 = vst [vmem:[%s199 + $0x28] sm:$0xff] %v638
      %671 = vst [vmem:[%s199 + $0x30] sm:$0xff] %v639
      %672 = vst [vmem:[%s199 + $0x38] sm:$0xff] %v640
      %673 = vst [vmem:[%s199 + $0x40] sm:$0xff] %v641
      %674 = vst [vmem:[%s199 + $0x48] sm:$0xff] %v642
      %675 = vst [vmem:[%s199 + $0x50] sm:$0xff] %v643
      %676 = vst [vmem:[%s199 + $0x58] sm:$0xff] %v644
      %677 = vst [vmem:[%s199 + $0x60] sm:$0xff] %v645
      %678 = vst [vmem:[%s199 + $0x68] sm:$0xff] %v646
      %679 = vst [vmem:[%s199 + $0x70] sm:$0xff] %v647
      %680 = vst [vmem:[%s199 + $0x78] sm:$0xff] %v648
      %681 = vst [vmem:[%s199 + $0x80] sm:$0xff] %v649
      %682 = vst [vmem:[%s199 + $0x88] sm:$0xff] %v650
      %683 = vst [vmem:[%s199 + $0x90] sm:$0xff] %v651
      %684 = vst [vmem:[%s199 + $0x98] sm:$0xff] %v652
      %685 = vst [vmem:[%s199 + $0xa0] sm:$0xff] %v653
      %686 = vst [vmem:[%s199 + $0xa8] sm:$0xff] %v654
      %687 = vst [vmem:[%s199 + $0xb0] sm:$0xff] %v655
      %688 = vst [vmem:[%s199 + $0xb8] sm:$0xff] %v656
      %689 = vst [vmem:[%s199 + $0xc0] sm:$0xff] %v657
      %690 = vst [vmem:[%s199 + $0xc8] sm:$0xff] %v658
      %691 = vst [vmem:[%s199 + $0xd0] sm:$0xff] %v659
      %692 = vst [vmem:[%s199 + $0xd8] sm:$0xff] %v660
      %693 = vst [vmem:[%s199 + $0xe0] sm:$0xff] %v661
      %694 = vst [vmem:[%s199 + $0xe8] sm:$0xff] %v662
      %695 = vst [vmem:[%s199 + $0xf0] sm:$0xff] %v663
      %696 = vst [vmem:[%s199 + $0xf8] sm:$0xff] %v664
      %s697 = smul.u32 32, %s15
      %p698 = scmp.lt.s32.totalorder %s697, 63
      %s699 = scalar_select %p698, %s697, 63
      %s700 = smul.addr %s699, 8
      %s701 = scalar_lea.vmem %s4, %s700
      // Predicated region
      $region37: #{inception_c_forward.17} parent=35 // pred_check
        %p702 = pneg %p122
      $region38: #{inception_c_forward.17} parent=35 // pred_check_branch
        %704 = sbr.rel (%p702) target = $region40
      $region39: #{inception_c_forward.17} parent=35 // pred_region
        %s705 = smul.u32 32, %s15
      $region40: #{inception_c_forward.17} parent=35 // pred_fallthru
        _
    $region36: #{inception_c_forward.17} parent=5 // pred_fallthru
      _
    %p706 = scmp.le.s32.totalorder 2, %s10
    // Predicated region
    $region41: #{inception_c_forward.17} parent=5 // pred_check
      %p707 = pneg %p706
    $region42: #{inception_c_forward.17} parent=5 // pred_check_branch
      %709 = sbr.rel (%p707) target = $region44
    $region43: #{inception_c_forward.17} parent=5 // pred_region
      %s710 = ssub.s32 %s10, 2
      // Predicated region
      $region45: #{inception_c_forward.17} parent=43 // pred_check
        %p711 = pneg %p128
      $region46: #{inception_c_forward.17} parent=43 // pred_check_branch
        %713 = sbr.rel (%p711) target = $region48
      $region47: #{inception_c_forward.17} parent=43 // pred_region
        %s714 = smul.u32 32, %s16
        %p715 = scmp.lt.s32.totalorder %s714, 63
        %s716 = scalar_select %p715, %s714, 63
        %s717 = smul.addr %s716, 8
        %s718 = scalar_lea.vmem %s4, %s717
      $region48: #{inception_c_forward.17} parent=43 // pred_fallthru
        _
    $region44: #{inception_c_forward.17} parent=5 // pred_fallthru
      _
  $region6: #{inception_c_forward.17} parent=0 // loop_footer
    %s14 = sadd.s32 1, %s10
  $region7: #{inception_c_forward.17} parent=0 // loop_footer_branch
    %9 = sbr.rel target = $region3
  $region8: #{inception_c_forward.17} parent=0 // loop_exit
    _

// kernel: inception_c_forward.13
$region0: #{inception_c_forward.13}
  #allocation0 [shape = 'u32[]', space=smem, size = 0x4, offset = 0x4, fixed_abs, tag = 'smem constant byte address 0x4 - core index']
  #allocation1 [shape = 'u32[144,128]{1,0:T(1,128)}', space=vmem, size = 0x12000, scoped, tag = 'internal scratch']
  %s0 = inlined_call_operand.vmem [shape: bf16[512,128], index: 0, kind: input, shape index: {}]
  %s1 = inlined_call_operand.vmem [shape: bf16[128,128], index: 1, kind: input, shape index: {}]
  %s2 = inlined_call_operand.vmem [shape: f32[1,128], index: 2, kind: input, shape index: {}]
  %s3 = inlined_call_operand.vmem [shape: f32[1,128], index: 3, kind: input, shape index: {}]
  %s4 = inlined_call_operand.vmem [shape: bf16[512,128], index: 4, kind: output, shape index: {}]
  %s5 = sld [smem:[#allocation0]]
  $region49: #{inception_c_forward.13} parent=0
    _
  %s7 = ssub.s32 1, %s5
  %s8 = scalar_select 0, %s7, %s5
  loop: start=0, step=1, limit=4
  $region2: #{inception_c_forward.13} parent=0 // loop_pre_header
    _
  $region3: #{inception_c_forward.13} parent=0 // loop_header
    %s10 = sphi 0, %s14
    %p11 = scmp.ge.s32.totalorder %s10, 4
    %s20 = sphi 0, %s22
    %s23 = sphi 0, %s20
    %s24 = sphi 0, %s23
    %s40 = sphi 0, %s24
    %s44 = sphi 0, %s44
    %s46 = sphi 0, %s44
    %s47 = sphi 0, %s46
    %s61 = sphi 0, %s47
    %s65 = sphi 0, %s65
    %s67 = sphi 0, %s65
    %s68 = sphi 0, %s67
    %s82 = sphi 0, %s68
    %s86 = sphi 0, %s86
    %s88 = sphi 0, %s86
    %s89 = sphi 0, %s88
    %s103 = sphi 0, %s89
    %s109 = sphi 0, %s111
    %s112 = sphi 0, %s109
    %s113 = sphi 0, %s112
    %s129 = sphi 0, %s113
  $region4: #{inception_c_forward.13} parent=0 // loop_header_branch
    %13 = sbr.rel (%p11) target = $region8
  $region5: #{inception_c_forward.13} parent=0 // loop_body
    %s15 = ssub.s32 %s10, 1
    %s16 = ssub.s32 %s10, 2
    %s17 = sadd.s32 %s10, 1
    %s18 = ssub.s32 %s10, %s17
    %p19 = scmp.eq.s32.totalorder %s18, 0
    %s21 = sadd.s32 %s20, 1
    %s22 = scalar_select %p19, %s20, %s21
    %p25 = pneg %p19
    %p26 = scmp.eq.s32.totalorder %s10, 1
    %p27 = por %p25, %p26
    %p28 = scmp.ne.s32.totalorder %s20, %s23
    %p29 = scmp.eq.s32.totalorder %s10, 0
    %p30 = por %p28, %p29
    %p31 = scmp.ne.s32.totalorder %s20, %s23
    %p32 = scmp.eq.s32.totalorder %s15, 1
    %p33 = por %p31, %p32
    %p34 = scmp.ne.s32.totalorder %s23, %s24
    %p35 = scmp.eq.s32.totalorder %s15, 0
    %p36 = por %p34, %p35
    %p37 = scmp.ne.s32.totalorder %s23, %s24
    %p38 = scmp.eq.s32.totalorder %s16, 1
    %p39 = por %p37, %p38
    %p41 = scmp.ne.s32.totalorder %s24, %s40
    %p42 = scmp.eq.s32.totalorder %s16, 0
    %p43 = por %p41, %p42
    %s45 = sadd.s32 %s44, 1
    %p48 = scmp.eq.s32.totalorder %s10, 1
    %p49 = scmp.ne.s32.totalorder %s44, %s46
    %p50 = scmp.eq.s32.totalorder %s10, 0
    %p51 = por %p49, %p50
    %p52 = scmp.ne.s32.totalorder %s44, %s46
    %p53 = scmp.eq.s32.totalorder %s15, 1
    %p54 = por %p52, %p53
    %p55 = scmp.ne.s32.totalorder %s46, %s47
    %p56 = scmp.eq.s32.totalorder %s15, 0
    %p57 = por %p55, %p56
    %p58 = scmp.ne.s32.totalorder %s46, %s47
    %p59 = scmp.eq.s32.totalorder %s16, 1
    %p60 = por %p58, %p59
    %p62 = scmp.ne.s32.totalorder %s47, %s61
    %p63 = scmp.eq.s32.totalorder %s16, 0
    %p64 = por %p62, %p63
    %s66 = sadd.s32 %s65, 1
    %p69 = scmp.eq.s32.totalorder %s10, 1
    %p70 = scmp.ne.s32.totalorder %s65, %s67
    %p71 = scmp.eq.s32.totalorder %s10, 0
    %p72 = por %p70, %p71
    %p73 = scmp.ne.s32.totalorder %s65, %s67
    %p74 = scmp.eq.s32.totalorder %s15, 1
    %p75 = por %p73, %p74
    %p76 = scmp.ne.s32.totalorder %s67, %s68
    %p77 = scmp.eq.s32.totalorder %s15, 0
    %p78 = por %p76, %p77
    %p79 = scmp.ne.s32.totalorder %s67, %s68
    %p80 = scmp.eq.s32.totalorder %s16, 1
    %p81 = por %p79, %p80
    %p83 = scmp.ne.s32.totalorder %s68, %s82
    %p84 = scmp.eq.s32.totalorder %s16, 0
    %p85 = por %p83, %p84
    %s87 = sadd.s32 %s86, 1
    %p90 = scmp.eq.s32.totalorder %s10, 1
    %p91 = scmp.ne.s32.totalorder %s86, %s88
    %p92 = scmp.eq.s32.totalorder %s10, 0
    %p93 = por %p91, %p92
    %p94 = scmp.ne.s32.totalorder %s86, %s88
    %p95 = scmp.eq.s32.totalorder %s15, 1
    %p96 = por %p94, %p95
    %p97 = scmp.ne.s32.totalorder %s88, %s89
    %p98 = scmp.eq.s32.totalorder %s15, 0
    %p99 = por %p97, %p98
    %p100 = scmp.ne.s32.totalorder %s88, %s89
    %p101 = scmp.eq.s32.totalorder %s16, 1
    %p102 = por %p100, %p101
    %p104 = scmp.ne.s32.totalorder %s89, %s103
    %p105 = scmp.eq.s32.totalorder %s16, 0
    %p106 = por %p104, %p105
    %s107 = ssub.s32 %s10, %s17
    %p108 = scmp.eq.s32.totalorder %s107, 0
    %s110 = sadd.s32 %s109, 1
    %s111 = scalar_select %p108, %s109, %s110
    %p114 = pneg %p108
    %p115 = scmp.eq.s32.totalorder %s10, 1
    %p116 = por %p114, %p115
    %p117 = scmp.ne.s32.totalorder %s109, %s112
    %p118 = scmp.eq.s32.totalorder %s10, 0
    %p119 = por %p117, %p118
    %p120 = scmp.ne.s32.totalorder %s109, %s112
    %p121 = scmp.eq.s32.totalorder %s15, 1
    %p122 = por %p120, %p121
    %p123 = scmp.ne.s32.totalorder %s112, %s113
    %p124 = scmp.eq.s32.totalorder %s15, 0
    %p125 = por %p123, %p124
    %p126 = scmp.ne.s32.totalorder %s112, %s113
    %p127 = scmp.eq.s32.totalorder %s16, 1
    %p128 = por %p126, %p127
    %p130 = scmp.ne.s32.totalorder %s113, %s129
    %p131 = scmp.eq.s32.totalorder %s16, 0
    %p132 = por %p130, %p131
    %p133 = scmp.le.s32.totalorder 1, %s10
    %p134 = scmp.lt.s32.totalorder %s10, 3
    %p135 = pnand %p133, %p134
    %p136 = pneg %p135
    // Predicated region
    $region9: #{inception_c_forward.13} parent=5 // pred_check
      _
    $region10: #{inception_c_forward.13} parent=5 // pred_check_branch
      %138 = sbr.rel (%p135) target = $region12
    $region11: #{inception_c_forward.13} parent=5 // pred_region
      %s139 = ssub.s32 %s10, 1
      // Predicated region
      $region13: #{inception_c_forward.13} parent=11 // pred_check
        %p140 = pneg %p57
      $region14: #{inception_c_forward.13} parent=11 // pred_check_branch
        %142 = sbr.rel (%p140) target = $region16
      $region15: #{inception_c_forward.13} parent=11 // pred_region
        _
      $region16: #{inception_c_forward.13} parent=11 // pred_fallthru
        _
      // Predicated region
      $region17: #{inception_c_forward.13} parent=11 // pred_check
        %p143 = pneg %p78
      $region18: #{inception_c_forward.13} parent=11 // pred_check_branch
        %145 = sbr.rel (%p143) target = $region20
      $region19: #{inception_c_forward.13} parent=11 // pred_region
        _
      $region20: #{inception_c_forward.13} parent=11 // pred_fallthru
        _
      // Predicated region
      $region21: #{inception_c_forward.13} parent=11 // pred_check
        %p146 = pneg %p99
      $region22: #{inception_c_forward.13} parent=11 // pred_check_branch
        %148 = sbr.rel (%p146) target = $region24
      $region23: #{inception_c_forward.13} parent=11 // pred_region
        _
      $region24: #{inception_c_forward.13} parent=11 // pred_fallthru
        _
    $region12: #{inception_c_forward.13} parent=5 // pred_fallthru
      _
    %p149 = scmp.lt.s32.totalorder %s10, 2
    // Predicated region
    $region25: #{inception_c_forward.13} parent=5 // pred_check
      %p150 = pneg %p149
    $region26: #{inception_c_forward.13} parent=5 // pred_check_branch
      %152 = sbr.rel (%p150) target = $region28
    $region27: #{inception_c_forward.13} parent=5 // pred_region
      // Predicated region
      $region29: #{inception_c_forward.13} parent=27 // pred_check
        %p153 = pneg %p30
      $region30: #{inception_c_forward.13} parent=27 // pred_check_branch
        %155 = sbr.rel (%p153) target = $region32
      $region31: #{inception_c_forward.13} parent=27 // pred_region
        %s156 = smul.u32 32, %s10
        %p157 = scmp.lt.s32.totalorder %s156, 63
        %s158 = scalar_select %p157, %s156, 63
        %s159 = smul.addr %s158, 4
        %s160 = scalar_lea.vmem %s0, %s159
        %s161 = smul.u32 32, %s10
      $region32: #{inception_c_forward.13} parent=27 // pred_fallthru
        _
    $region28: #{inception_c_forward.13} parent=5 // pred_fallthru
      _
    %p162 = scmp.le.s32.totalorder 1, %s10
    %p163 = scmp.lt.s32.totalorder %s10, 3
    %p164 = pnand %p162, %p163
    %p165 = pneg %p164
    // Predicated region
    $region33: #{inception_c_forward.13} parent=5 // pred_check
      _
    $region34: #{inception_c_forward.13} parent=5 // pred_check_branch
      %167 = sbr.rel (%p164) target = $region36
    $region35: #{inception_c_forward.13} parent=5 // pred_region
      %s168 = ssub.s32 %s10, 1
      %s169 = smul.u32 32, %s15
      %p170 = scmp.lt.s32.totalorder %s169, 63
      %s171 = scalar_select %p170, %s169, 63
      %s172 = smul.addr %s171, 4
      %s173 = scalar_lea.vmem %s0, %s172
      %p174 = pneg %p36
      %p175 = pneg %p33
      %p176 = pneg %p57
      %p177 = pneg %p54
      %p178 = pneg %p78
      %p179 = pneg %p75
      %p180 = pneg %p99
      %p181 = pneg %p96
      %p182 = pneg %p125
      %p183 = pneg %p122
      %s184 = smul.u32 32, %s15
      %p185 = scmp.lt.s32.totalorder %s184, 63
      %s186 = scalar_select %p185, %s184, 63
      %s187 = smul.addr %s186, 4
      %s188 = scalar_lea.vmem %s4, %s187
      %s189 = smul.u32 32, %s15
      %p190 = scmp.lt.s32.totalorder %s189, 63
      %s191 = scalar_select %p190, %s189, 63
      %s192 = smul.addr %s191, 4
      %s193 = scalar_lea.vmem %s0, %s192
      %s194 = smul.u32 32, %s15
      %s195 = smul.u32 32, %s15
      %p196 = scmp.lt.s32.totalorder %s195, 63
      %s197 = scalar_select %p196, %s195, 63
      %s198 = smul.addr %s197, 4
      %s199 = scalar_lea.vmem %s4, %s198
      %s200 = smul.u32 32, %s15
      %v202 = vld [vmem:[%s193] sm:$0xf]
      %v203 = vld [vmem:[%s193 + $0x4] sm:$0xf]
      %v204 = vld [vmem:[%s193 + $0x8] sm:$0xf]
      %v205 = vld [vmem:[%s193 + $0xc] sm:$0xf]
      %v206 = vld [vmem:[%s193 + $0x10] sm:$0xf]
      %v207 = vld [vmem:[%s193 + $0x14] sm:$0xf]
      %v208 = vld [vmem:[%s193 + $0x18] sm:$0xf]
      %v209 = vld [vmem:[%s193 + $0x1c] sm:$0xf]
      %v210 = vld [vmem:[%s193 + $0x20] sm:$0xf]
      %v211 = vld [vmem:[%s193 + $0x24] sm:$0xf]
      %v212 = vld [vmem:[%s193 + $0x28] sm:$0xf]
      %v213 = vld [vmem:[%s193 + $0x2c] sm:$0xf]
      %v214 = vld [vmem:[%s193 + $0x30] sm:$0xf]
      %v215 = vld [vmem:[%s193 + $0x34] sm:$0xf]
      %v216 = vld [vmem:[%s193 + $0x38] sm:$0xf]
      %v217 = vld [vmem:[%s193 + $0x3c] sm:$0xf]
      %v218 = vld [vmem:[%s193 + $0x40] sm:$0xf]
      %v219 = vld [vmem:[%s193 + $0x44] sm:$0xf]
      %v220 = vld [vmem:[%s193 + $0x48] sm:$0xf]
      %v221 = vld [vmem:[%s193 + $0x4c] sm:$0xf]
      %v222 = vld [vmem:[%s193 + $0x50] sm:$0xf]
      %v223 = vld [vmem:[%s193 + $0x54] sm:$0xf]
      %v224 = vld [vmem:[%s193 + $0x58] sm:$0xf]
      %v225 = vld [vmem:[%s193 + $0x5c] sm:$0xf]
      %v226 = vld [vmem:[%s193 + $0x60] sm:$0xf]
      %v227 = vld [vmem:[%s193 + $0x64] sm:$0xf]
      %v228 = vld [vmem:[%s193 + $0x68] sm:$0xf]
      %v229 = vld [vmem:[%s193 + $0x6c] sm:$0xf]
      %v230 = vld [vmem:[%s193 + $0x70] sm:$0xf]
      %v231 = vld [vmem:[%s193 + $0x74] sm:$0xf]
      %v232 = vld [vmem:[%s193 + $0x78] sm:$0xf]
      %v233 = vld [vmem:[%s193 + $0x7c] sm:$0xf]
      %v234 = vld [vmem:[%s1] sm:$0xf]
      %v235 = vld [vmem:[%s1 + $0x4] sm:$0xf]
      %v236 = vld [vmem:[%s1 + $0x8] sm:$0xf]
      %v237 = vld [vmem:[%s1 + $0xc] sm:$0xf]
      %v238 = vld [vmem:[%s1 + $0x10] sm:$0xf]
      %v239 = vld [vmem:[%s1 + $0x14] sm:$0xf]
      %v240 = vld [vmem:[%s1 + $0x18] sm:$0xf]
      %v241 = vld [vmem:[%s1 + $0x1c] sm:$0xf]
      %v242 = vld [vmem:[%s1 + $0x20] sm:$0xf]
      %v243 = vld [vmem:[%s1 + $0x24] sm:$0xf]
      %v244 = vld [vmem:[%s1 + $0x28] sm:$0xf]
      %v245 = vld [vmem:[%s1 + $0x2c] sm:$0xf]
      %v246 = vld [vmem:[%s1 + $0x30] sm:$0xf]
      %v247 = vld [vmem:[%s1 + $0x34] sm:$0xf]
      %v248 = vld [vmem:[%s1 + $0x38] sm:$0xf]
      %v249 = vld [vmem:[%s1 + $0x3c] sm:$0xf]
      %v282 = vunpack.c.l.b16 %v202
      %v283 = vunpack.c.l.b16 %v203
      %v284 = vunpack.c.l.b16 %v204
      %v285 = vunpack.c.l.b16 %v205
      %v286 = vunpack.c.l.b16 %v206
      %v287 = vunpack.c.l.b16 %v207
      %v288 = vunpack.c.l.b16 %v208
      %v289 = vunpack.c.l.b16 %v209
      %v290 = vunpack.c.l.b16 %v210
      %v291 = vunpack.c.l.b16 %v211
      %v292 = vunpack.c.l.b16 %v212
      %v293 = vunpack.c.l.b16 %v213
      %v294 = vunpack.c.l.b16 %v214
      %v295 = vunpack.c.l.b16 %v215
      %v296 = vunpack.c.l.b16 %v216
      %v297 = vunpack.c.l.b16 %v217
      %v298 = vunpack.c.l.b16 %v218
      %v299 = vunpack.c.l.b16 %v219
      %v300 = vunpack.c.l.b16 %v220
      %v301 = vunpack.c.l.b16 %v221
      %v302 = vunpack.c.l.b16 %v222
      %v303 = vunpack.c.l.b16 %v223
      %v304 = vunpack.c.l.b16 %v224
      %v305 = vunpack.c.l.b16 %v225
      %v306 = vunpack.c.l.b16 %v226
      %v307 = vunpack.c.l.b16 %v227
      %v308 = vunpack.c.l.b16 %v228
      %v309 = vunpack.c.l.b16 %v229
      %v310 = vunpack.c.l.b16 %v230
      %v311 = vunpack.c.l.b16 %v231
      %v312 = vunpack.c.l.b16 %v232
      %v313 = vunpack.c.l.b16 %v233
      %v314 = vpack.c.b16 %v283, %v282
      %v315 = vpack.c.b16 %v285, %v284
      %v316 = vpack.c.b16 %v287, %v286
      %v317 = vpack.c.b16 %v289, %v288
      %v318 = vpack.c.b16 %v291, %v290
      %v319 = vpack.c.b16 %v293, %v292
      %v320 = vpack.c.b16 %v295, %v294
      %v321 = vpack.c.b16 %v297, %v296
      %v322 = vpack.c.b16 %v299, %v298
      %v323 = vpack.c.b16 %v301, %v300
      %v324 = vpack.c.b16 %v303, %v302
      %v325 = vpack.c.b16 %v305, %v304
      %v326 = vpack.c.b16 %v307, %v306
      %v327 = vpack.c.b16 %v309, %v308
      %v328 = vpack.c.b16 %v311, %v310
      %v329 = vpack.c.b16 %v313, %v312
      %v362 = vunpack.c.l.b16 %v234
      %v363 = vunpack.c.l.b16 %v235
      %v364 = vunpack.c.l.b16 %v236
      %v365 = vunpack.c.l.b16 %v237
      %v366 = vunpack.c.l.b16 %v238
      %v367 = vunpack.c.l.b16 %v239
      %v368 = vunpack.c.l.b16 %v240
      %v369 = vunpack.c.l.b16 %v241
      %v370 = vunpack.c.l.b16 %v242
      %v371 = vunpack.c.l.b16 %v243
      %v372 = vunpack.c.l.b16 %v244
      %v373 = vunpack.c.l.b16 %v245
      %v374 = vunpack.c.l.b16 %v246
      %v375 = vunpack.c.l.b16 %v247
      %v376 = vunpack.c.l.b16 %v248
      %v377 = vunpack.c.l.b16 %v249
      %v378 = vpack.c.b16 %v363, %v362
      %v379 = vpack.c.b16 %v365, %v364
      %v380 = vpack.c.b16 %v367, %v366
      %v381 = vpack.c.b16 %v369, %v368
      %v382 = vpack.c.b16 %v371, %v370
      %v383 = vpack.c.b16 %v373, %v372
      %v384 = vpack.c.b16 %v375, %v374
      %v385 = vpack.c.b16 %v377, %v376
      %394 = vmatprep.subr.bf16.mxu0 0
      %395 = vmatpush1.bf16.msra.mxu0 %v378
      %396 = vmatprep.subr.bf16.mxu0 0
      %397 = vmatpush1.bf16.msra.mxu0 %v379
      %398 = vmatprep.subr.bf16.mxu0 0
      %399 = vmatpush1.bf16.msra.mxu0 %v380
      %400 = vmatprep.subr.bf16.mxu0 0
      %401 = vmatpush1.bf16.msra.mxu0 %v381
      %402 = vmatprep.subr.bf16.mxu0 0
      %403 = vmatpush1.bf16.msra.mxu0 %v382
      %404 = vmatprep.subr.bf16.mxu0 0
      %405 = vmatpush1.bf16.msra.mxu0 %v383
      %406 = vmatprep.subr.bf16.mxu0 0
      %407 = vmatpush1.bf16.msra.mxu0 %v384
      %408 = vmatprep.subr.bf16.mxu0 0
      %409 = vmatpush1.bf16.msra.mxu0 %v385
      %410 = vmatprep.subr.bf16.mxu0 0
      %411 = vmatpush1.bf16.msra.mxu0 0
      %412 = vmatprep.subr.bf16.mxu0 0
      %413 = vmatpush1.bf16.msra.mxu0 0
      %414 = vmatprep.subr.bf16.mxu0 0
      %415 = vmatpush1.bf16.msra.mxu0 0
      %416 = vmatprep.subr.bf16.mxu0 0
      %417 = vmatpush1.bf16.msra.mxu0 0
      %418 = vmatprep.subr.bf16.mxu0 0
      %419 = vmatpush1.bf16.msra.mxu0 0
      %420 = vmatprep.subr.bf16.mxu0 0
      %421 = vmatpush1.bf16.msra.mxu0 0
      %422 = vmatprep.subr.bf16.mxu0 0
      %423 = vmatpush1.bf16.msra.mxu0 0
      %424 = vmatprep.subr.bf16.mxu0 0
      %425 = vmatpush1.bf16.msra.mxu0 0
      %426 = vmatprep.mubr.bf16.mxu0 0
      %427 = vmatmul.mubr.bf16.gmra.mrb[0].mxu0 %v314
      %v428 = vpop.f32.mrb[0].mxu0
      %v429 = vadd.f32 0.0, %v428
      %v430 = vpop.f32.mrb[0].mxu0
      %v431 = vpop.f32.mrb[0].mxu0
      %v432 = vadd.f32 0.0, %v431
      %v433 = vpop.f32.mrb[0].mxu0
      %434 = vmatprep.mubr.bf16.mxu0 0
      %435 = vmatmul.mubr.bf16.gmra.mrb[0].mxu0 %v315
      %v436 = vpop.f32.mrb[0].mxu0
      %v437 = vadd.f32 0.0, %v436
      %v438 = vpop.f32.mrb[0].mxu0
      %v439 = vpop.f32.mrb[0].mxu0
      %v440 = vadd.f32 0.0, %v439
      %v441 = vpop.f32.mrb[0].mxu0
      %442 = vmatprep.mubr.bf16.mxu0 0
      %443 = vmatmul.mubr.bf16.gmra.mrb[0].mxu0 %v316
      %v444 = vpop.f32.mrb[0].mxu0
      %v445 = vadd.f32 0.0, %v444
      %v446 = vpop.f32.mrb[0].mxu0
      %v447 = vpop.f32.mrb[0].mxu0
      %v448 = vadd.f32 0.0, %v447
      %v449 = vpop.f32.mrb[0].mxu0
      %450 = vmatprep.mubr.bf16.mxu0 0
      %451 = vmatmul.mubr.bf16.gmra.mrb[0].mxu0 %v317
      %v452 = vpop.f32.mrb[0].mxu0
      %v453 = vadd.f32 0.0, %v452
      %v454 = vpop.f32.mrb[0].mxu0
      %v455 = vpop.f32.mrb[0].mxu0
      %v456 = vadd.f32 0.0, %v455
      %v457 = vpop.f32.mrb[0].mxu0
      %458 = vmatprep.mubr.bf16.mxu0 0
      %459 = vmatmul.mubr.bf16.gmra.mrb[0].mxu0 %v318
      %v460 = vpop.f32.mrb[0].mxu0
      %v461 = vadd.f32 0.0, %v460
      %v462 = vpop.f32.mrb[0].mxu0
      %v463 = vpop.f32.mrb[0].mxu0
      %v464 = vadd.f32 0.0, %v463
      %v465 = vpop.f32.mrb[0].mxu0
      %466 = vmatprep.mubr.bf16.mxu0 0
      %467 = vmatmul.mubr.bf16.gmra.mrb[0].mxu0 %v319
      %v468 = vpop.f32.mrb[0].mxu0
      %v469 = vadd.f32 0.0, %v468
      %v470 = vpop.f32.mrb[0].mxu0
      %v471 = vpop.f32.mrb[0].mxu0
      %v472 = vadd.f32 0.0, %v471
      %v473 = vpop.f32.mrb[0].mxu0
      %474 = vmatprep.mubr.bf16.mxu0 0
      %475 = vmatmul.mubr.bf16.gmra.mrb[0].mxu0 %v320
      %v476 = vpop.f32.mrb[0].mxu0
      %v477 = vadd.f32 0.0, %v476
      %v478 = vpop.f32.mrb[0].mxu0
      %v479 = vpop.f32.mrb[0].mxu0
      %v480 = vadd.f32 0.0, %v479
      %v481 = vpop.f32.mrb[0].mxu0
      %482 = vmatprep.mubr.bf16.mxu0 0
      %483 = vmatmul.mubr.bf16.gmra.mrb[0].mxu0 %v321
      %v484 = vpop.f32.mrb[0].mxu0
      %v485 = vadd.f32 0.0, %v484
      %v486 = vpop.f32.mrb[0].mxu0
      %v487 = vpop.f32.mrb[0].mxu0
      %v488 = vadd.f32 0.0, %v487
      %v489 = vpop.f32.mrb[0].mxu0
      %490 = vmatprep.mubr.bf16.mxu0 0
      %491 = vmatmul.mubr.bf16.gmra.mrb[0].mxu0 %v322
      %v492 = vpop.f32.mrb[0].mxu0
      %v493 = vadd.f32 0.0, %v492
      %v494 = vpop.f32.mrb[0].mxu0
      %v495 = vpop.f32.mrb[0].mxu0
      %v496 = vadd.f32 0.0, %v495
      %v497 = vpop.f32.mrb[0].mxu0
      %498 = vmatprep.mubr.bf16.mxu0 0
      %499 = vmatmul.mubr.bf16.gmra.mrb[0].mxu0 %v323
      %v500 = vpop.f32.mrb[0].mxu0
      %v501 = vadd.f32 0.0, %v500
      %v502 = vpop.f32.mrb[0].mxu0
      %v503 = vpop.f32.mrb[0].mxu0
      %v504 = vadd.f32 0.0, %v503
      %v505 = vpop.f32.mrb[0].mxu0
      %506 = vmatprep.mubr.bf16.mxu0 0
      %507 = vmatmul.mubr.bf16.gmra.mrb[0].mxu0 %v324
      %v508 = vpop.f32.mrb[0].mxu0
      %v509 = vadd.f32 0.0, %v508
      %v510 = vpop.f32.mrb[0].mxu0
      %v511 = vpop.f32.mrb[0].mxu0
      %v512 = vadd.f32 0.0, %v511
      %v513 = vpop.f32.mrb[0].mxu0
      %514 = vmatprep.mubr.bf16.mxu0 0
      %515 = vmatmul.mubr.bf16.gmra.mrb[0].mxu0 %v325
      %v516 = vpop.f32.mrb[0].mxu0
      %v517 = vadd.f32 0.0, %v516
      %v518 = vpop.f32.mrb[0].mxu0
      %v519 = vpop.f32.mrb[0].mxu0
      %v520 = vadd.f32 0.0, %v519
      %v521 = vpop.f32.mrb[0].mxu0
      %522 = vmatprep.mubr.bf16.mxu0 0
      %523 = vmatmul.mubr.bf16.gmra.mrb[0].mxu0 %v326
      %v524 = vpop.f32.mrb[0].mxu0
      %v525 = vadd.f32 0.0, %v524
      %v526 = vpop.f32.mrb[0].mxu0
      %v527 = vpop.f32.mrb[0].mxu0
      %v528 = vadd.f32 0.0, %v527
      %v529 = vpop.f32.mrb[0].mxu0
      %530 = vmatprep.mubr.bf16.mxu0 0
      %531 = vmatmul.mubr.bf16.gmra.mrb[0].mxu0 %v327
      %v532 = vpop.f32.mrb[0].mxu0
      %v533 = vadd.f32 0.0, %v532
      %v534 = vpop.f32.mrb[0].mxu0
      %v535 = vpop.f32.mrb[0].mxu0
      %v536 = vadd.f32 0.0, %v535
      %v537 = vpop.f32.mrb[0].mxu0
      %538 = vmatprep.mubr.bf16.mxu0 0
      %539 = vmatmul.mubr.bf16.gmra.mrb[0].mxu0 %v328
      %v540 = vpop.f32.mrb[0].mxu0
      %v541 = vadd.f32 0.0, %v540
      %v542 = vpop.f32.mrb[0].mxu0
      %v543 = vpop.f32.mrb[0].mxu0
      %v544 = vadd.f32 0.0, %v543
      %v545 = vpop.f32.mrb[0].mxu0
      %546 = vmatprep.mubr.bf16.mxu0 0
      %547 = vmatmul.mubr.bf16.gmra.mrb[0].mxu0 %v329
      %v548 = vpop.f32.mrb[0].mxu0
      %v549 = vadd.f32 0.0, %v548
      %v550 = vpop.f32.mrb[0].mxu0
      %v551 = vpop.f32.mrb[0].mxu0
      %v552 = vadd.f32 0.0, %v551
      %v553 = vpop.f32.mrb[0].mxu0
      %554 = vdwg.mxu0
      %v555 = vld [vmem:[%s2] sm:$0x1]
      %v557 = vlaneseq
      %v558 = vshrl.u32 %v557, 7
      %v559 = vsub.s32 0, %v558
      %v560 = vrot.slane %v555, %v559
      %v562 = vmul.f32 %v429, %v560
      %v563 = vmul.f32 %v432, %v560
      %v564 = vmul.f32 %v437, %v560
      %v565 = vmul.f32 %v440, %v560
      %v566 = vmul.f32 %v445, %v560
      %v567 = vmul.f32 %v448, %v560
      %v568 = vmul.f32 %v453, %v560
      %v569 = vmul.f32 %v456, %v560
      %v570 = vmul.f32 %v461, %v560
      %v571 = vmul.f32 %v464, %v560
      %v572 = vmul.f32 %v469, %v560
      %v573 = vmul.f32 %v472, %v560
      %v574 = vmul.f32 %v477, %v560
      %v575 = vmul.f32 %v480, %v560
      %v576 = vmul.f32 %v485, %v560
      %v577 = vmul.f32 %v488, %v560
      %v578 = vmul.f32 %v493, %v560
      %v579 = vmul.f32 %v496, %v560
      %v580 = vmul.f32 %v501, %v560
      %v581 = vmul.f32 %v504, %v560
      %v582 = vmul.f32 %v509, %v560
      %v583 = vmul.f32 %v512, %v560
      %v584 = vmul.f32 %v517, %v560
      %v585 = vmul.f32 %v520, %v560
      %v586 = vmul.f32 %v525, %v560
      %v587 = vmul.f32 %v528, %v560
      %v588 = vmul.f32 %v533, %v560
      %v589 = vmul.f32 %v536, %v560
      %v590 = vmul.f32 %v541, %v560
      %v591 = vmul.f32 %v544, %v560
      %v592 = vmul.f32 %v549, %v560
      %v593 = vmul.f32 %v552, %v560
      %v594 = vld [vmem:[%s3] sm:$0x1]
      %v596 = vlaneseq
      %v597 = vshrl.u32 %v596, 7
      %v598 = vsub.s32 0, %v597
      %v599 = vrot.slane %v594, %v598
      %v601 = vadd.f32 %v562, %v599
      %v602 = vadd.f32 %v563, %v599
      %v603 = vadd.f32 %v564, %v599
      %v604 = vadd.f32 %v565, %v599
      %v605 = vadd.f32 %v566, %v599
      %v606 = vadd.f32 %v567, %v599
      %v607 = vadd.f32 %v568, %v599
      %v608 = vadd.f32 %v569, %v599
      %v609 = vadd.f32 %v570, %v599
      %v610 = vadd.f32 %v571, %v599
      %v611 = vadd.f32 %v572, %v599
      %v612 = vadd.f32 %v573, %v599
      %v613 = vadd.f32 %v574, %v599
      %v614 = vadd.f32 %v575, %v599
      %v615 = vadd.f32 %v576, %v599
      %v616 = vadd.f32 %v577, %v599
      %v617 = vadd.f32 %v578, %v599
      %v618 = vadd.f32 %v579, %v599
      %v619 = vadd.f32 %v580, %v599
      %v620 = vadd.f32 %v581, %v599
      %v621 = vadd.f32 %v582, %v599
      %v622 = vadd.f32 %v583, %v599
      %v623 = vadd.f32 %v584, %v599
      %v624 = vadd.f32 %v585, %v599
      %v625 = vadd.f32 %v586, %v599
      %v626 = vadd.f32 %v587, %v599
      %v627 = vadd.f32 %v588, %v599
      %v628 = vadd.f32 %v589, %v599
      %v629 = vadd.f32 %v590, %v599
      %v630 = vadd.f32 %v591, %v599
      %v631 = vadd.f32 %v592, %v599
      %v632 = vadd.f32 %v593, %v599
      %v633 = vmax.f32 %v601, 0.0
      %v634 = vmax.f32 %v602, 0.0
      %v635 = vmax.f32 %v603, 0.0
      %v636 = vmax.f32 %v604, 0.0
      %v637 = vmax.f32 %v605, 0.0
      %v638 = vmax.f32 %v606, 0.0
      %v639 = vmax.f32 %v607, 0.0
      %v640 = vmax.f32 %v608, 0.0
      %v641 = vmax.f32 %v609, 0.0
      %v642 = vmax.f32 %v610, 0.0
      %v643 = vmax.f32 %v611, 0.0
      %v644 = vmax.f32 %v612, 0.0
      %v645 = vmax.f32 %v613, 0.0
      %v646 = vmax.f32 %v614, 0.0
      %v647 = vmax.f32 %v615, 0.0
      %v648 = vmax.f32 %v616, 0.0
      %v649 = vmax.f32 %v617, 0.0
      %v650 = vmax.f32 %v618, 0.0
      %v651 = vmax.f32 %v619, 0.0
      %v652 = vmax.f32 %v620, 0.0
      %v653 = vmax.f32 %v621, 0.0
      %v654 = vmax.f32 %v622, 0.0
      %v655 = vmax.f32 %v623, 0.0
      %v656 = vmax.f32 %v624, 0.0
      %v657 = vmax.f32 %v625, 0.0
      %v658 = vmax.f32 %v626, 0.0
      %v659 = vmax.f32 %v627, 0.0
      %v660 = vmax.f32 %v628, 0.0
      %v661 = vmax.f32 %v629, 0.0
      %v662 = vmax.f32 %v630, 0.0
      %v663 = vmax.f32 %v631, 0.0
      %v664 = vmax.f32 %v632, 0.0
      %v665 = vpack.c.bf16 %v634, %v633
      %v666 = vpack.c.bf16 %v636, %v635
      %v667 = vpack.c.bf16 %v638, %v637
      %v668 = vpack.c.bf16 %v640, %v639
      %v669 = vpack.c.bf16 %v642, %v641
      %v670 = vpack.c.bf16 %v644, %v643
      %v671 = vpack.c.bf16 %v646, %v645
      %v672 = vpack.c.bf16 %v648, %v647
      %v673 = vpack.c.bf16 %v650, %v649
      %v674 = vpack.c.bf16 %v652, %v651
      %v675 = vpack.c.bf16 %v654, %v653
      %v676 = vpack.c.bf16 %v656, %v655
      %v677 = vpack.c.bf16 %v658, %v657
      %v678 = vpack.c.bf16 %v660, %v659
      %v679 = vpack.c.bf16 %v662, %v661
      %v680 = vpack.c.bf16 %v664, %v663
      %v697 = vunpack.c.l.b16 %v665
      %v698 = vunpack.c.h.b16 %v665
      %v699 = vunpack.c.l.b16 %v666
      %v700 = vunpack.c.h.b16 %v666
      %v701 = vunpack.c.l.b16 %v667
      %v702 = vunpack.c.h.b16 %v667
      %v703 = vunpack.c.l.b16 %v668
      %v704 = vunpack.c.h.b16 %v668
      %v705 = vunpack.c.l.b16 %v669
      %v706 = vunpack.c.h.b16 %v669
      %v707 = vunpack.c.l.b16 %v670
      %v708 = vunpack.c.h.b16 %v670
      %v709 = vunpack.c.l.b16 %v671
      %v710 = vunpack.c.h.b16 %v671
      %v711 = vunpack.c.l.b16 %v672
      %v712 = vunpack.c.h.b16 %v672
      %v713 = vunpack.c.l.b16 %v673
      %v714 = vunpack.c.h.b16 %v673
      %v715 = vunpack.c.l.b16 %v674
      %v716 = vunpack.c.h.b16 %v674
      %v717 = vunpack.c.l.b16 %v675
      %v718 = vunpack.c.h.b16 %v675
      %v719 = vunpack.c.l.b16 %v676
      %v720 = vunpack.c.h.b16 %v676
      %v721 = vunpack.c.l.b16 %v677
      %v722 = vunpack.c.h.b16 %v677
      %v723 = vunpack.c.l.b16 %v678
      %v724 = vunpack.c.h.b16 %v678
      %v725 = vunpack.c.l.b16 %v679
      %v726 = vunpack.c.h.b16 %v679
      %v727 = vunpack.c.l.b16 %v680
      %v728 = vunpack.c.h.b16 %v680
      %v729 = vpack.c.b16 %v697, %v697
      %v730 = vpack.c.b16 %v698, %v698
      %v731 = vpack.c.b16 %v699, %v699
      %v732 = vpack.c.b16 %v700, %v700
      %v733 = vpack.c.b16 %v701, %v701
      %v734 = vpack.c.b16 %v702, %v702
      %v735 = vpack.c.b16 %v703, %v703
      %v736 = vpack.c.b16 %v704, %v704
      %v737 = vpack.c.b16 %v705, %v705
      %v738 = vpack.c.b16 %v706, %v706
      %v739 = vpack.c.b16 %v707, %v707
      %v740 = vpack.c.b16 %v708, %v708
      %v741 = vpack.c.b16 %v709, %v709
      %v742 = vpack.c.b16 %v710, %v710
      %v743 = vpack.c.b16 %v711, %v711
      %v744 = vpack.c.b16 %v712, %v712
      %v745 = vpack.c.b16 %v713, %v713
      %v746 = vpack.c.b16 %v714, %v714
      %v747 = vpack.c.b16 %v715, %v715
      %v748 = vpack.c.b16 %v716, %v716
      %v749 = vpack.c.b16 %v717, %v717
      %v750 = vpack.c.b16 %v718, %v718
      %v751 = vpack.c.b16 %v719, %v719
      %v752 = vpack.c.b16 %v720, %v720
      %v753 = vpack.c.b16 %v721, %v721
      %v754 = vpack.c.b16 %v722, %v722
      %v755 = vpack.c.b16 %v723, %v723
      %v756 = vpack.c.b16 %v724, %v724
      %v757 = vpack.c.b16 %v725, %v725
      %v758 = vpack.c.b16 %v726, %v726
      %v759 = vpack.c.b16 %v727, %v727
      %v760 = vpack.c.b16 %v728, %v728
      %793 = vst [vmem:[%s199] sm:$0xf] %v729
      %794 = vst [vmem:[%s199 + $0x4] sm:$0xf] %v730
      %795 = vst [vmem:[%s199 + $0x8] sm:$0xf] %v731
      %796 = vst [vmem:[%s199 + $0xc] sm:$0xf] %v732
      %797 = vst [vmem:[%s199 + $0x10] sm:$0xf] %v733
      %798 = vst [vmem:[%s199 + $0x14] sm:$0xf] %v734
      %799 = vst [vmem:[%s199 + $0x18] sm:$0xf] %v735
      %800 = vst [vmem:[%s199 + $0x1c] sm:$0xf] %v736
      %801 = vst [vmem:[%s199 + $0x20] sm:$0xf] %v737
      %802 = vst [vmem:[%s199 + $0x24] sm:$0xf] %v738
      %803 = vst [vmem:[%s199 + $0x28] sm:$0xf] %v739
      %804 = vst [vmem:[%s199 + $0x2c] sm:$0xf] %v740
      %805 = vst [vmem:[%s199 + $0x30] sm:$0xf] %v741
      %806 = vst [vmem:[%s199 + $0x34] sm:$0xf] %v742
      %807 = vst [vmem:[%s199 + $0x38] sm:$0xf] %v743
      %808 = vst [vmem:[%s199 + $0x3c] sm:$0xf] %v744
      %809 = vst [vmem:[%s199 + $0x40] sm:$0xf] %v745
      %810 = vst [vmem:[%s199 + $0x44] sm:$0xf] %v746
      %811 = vst [vmem:[%s199 + $0x48] sm:$0xf] %v747
      %812 = vst [vmem:[%s199 + $0x4c] sm:$0xf] %v748
      %813 = vst [vmem:[%s199 + $0x50] sm:$0xf] %v749
      %814 = vst [vmem:[%s199 + $0x54] sm:$0xf] %v750
      %815 = vst [vmem:[%s199 + $0x58] sm:$0xf] %v751
      %816 = vst [vmem:[%s199 + $0x5c] sm:$0xf] %v752
      %817 = vst [vmem:[%s199 + $0x60] sm:$0xf] %v753
      %818 = vst [vmem:[%s199 + $0x64] sm:$0xf] %v754
      %819 = vst [vmem:[%s199 + $0x68] sm:$0xf] %v755
      %820 = vst [vmem:[%s199 + $0x6c] sm:$0xf] %v756
      %821 = vst [vmem:[%s199 + $0x70] sm:$0xf] %v757
      %822 = vst [vmem:[%s199 + $0x74] sm:$0xf] %v758
      %823 = vst [vmem:[%s199 + $0x78] sm:$0xf] %v759
      %824 = vst [vmem:[%s199 + $0x7c] sm:$0xf] %v760
      %s825 = smul.u32 32, %s15
      %p826 = scmp.lt.s32.totalorder %s825, 63
      %s827 = scalar_select %p826, %s825, 63
      %s828 = smul.addr %s827, 4
      %s829 = scalar_lea.vmem %s4, %s828
      // Predicated region
      $region37: #{inception_c_forward.13} parent=35 // pred_check
        %p830 = pneg %p122
      $region38: #{inception_c_forward.13} parent=35 // pred_check_branch
        %832 = sbr.rel (%p830) target = $region40
      $region39: #{inception_c_forward.13} parent=35 // pred_region
        %s833 = smul.u32 32, %s15
      $region40: #{inception_c_forward.13} parent=35 // pred_fallthru
        _
    $region36: #{inception_c_forward.13} parent=5 // pred_fallthru
      _
    %p834 = scmp.le.s32.totalorder 2, %s10
    // Predicated region
    $region41: #{inception_c_forward.13} parent=5 // pred_check
      %p835 = pneg %p834
    $region42: #{inception_c_forward.13} parent=5 // pred_check_branch
      %837 = sbr.rel (%p835) target = $region44
    $region43: #{inception_c_forward.13} parent=5 // pred_region
      %s838 = ssub.s32 %s10, 2
      // Predicated region
      $region45: #{inception_c_forward.13} parent=43 // pred_check
        %p839 = pneg %p128
      $region46: #{inception_c_forward.13} parent=43 // pred_check_branch
        %841 = sbr.rel (%p839) target = $region48
      $region47: #{inception_c_forward.13} parent=43 // pred_region
        %s842 = smul.u32 32, %s16
        %p843 = scmp.lt.s32.totalorder %s842, 63
        %s844 = scalar_select %p843, %s842, 63
        %s845 = smul.addr %s844, 4
        %s846 = scalar_lea.vmem %s4, %s845
      $region48: #{inception_c_forward.13} parent=43 // pred_fallthru
        _
    $region44: #{inception_c_forward.13} parent=5 // pred_fallthru
      _
  $region6: #{inception_c_forward.13} parent=0 // loop_footer
    %s14 = sadd.s32 1, %s10
  $region7: #{inception_c_forward.13} parent=0 // loop_footer_branch
    %9 = sbr.rel target = $region3
  $region8: #{inception_c_forward.13} parent=0 // loop_exit
    _

// kernel: inception_c_forward.15
$region0: #{inception_c_forward.15}
  #allocation0 [shape = 'u32[]', space=smem, size = 0x4, offset = 0x4, fixed_abs, tag = 'smem constant byte address 0x4 - core index']
  #allocation1 [shape = 'u32[144,128]{1,0:T(1,128)}', space=vmem, size = 0x12000, scoped, tag = 'internal scratch']
  #allocation2 [shape = 'bf16[2,264,128]{2,1,0:T(8,128)(2,1)}', space=vmem, size = 0x21000, scoped, tag = 'scratch operand']
  #allocation3 [shape = 's32[2]{0}', space=sflag, size = 0x8, scoped, tag = 'scratch operand']
  #allocation4 [shape = 'f32[256,128]{1,0:T(8,128)}', space=vmem, size = 0x20000, scoped, tag = 'scratch operand']
  #allocation5 [shape = 's32[]', space=sflag, size = 0x4, offset = 0, fixed_abs, tag = 'sflag constant byte address 0x0 - dummy sync flag']
  #allocation6 [shape = 's32[]', space=sflag, size = 0x4, offset = 0, fixed_abs, tag = 'sflag constant byte address 0x0 - dummy sync flag']
  %s0 = inlined_call_operand.vmem [shape: bf16[776,128], index: 0, kind: input, shape index: {}]
  %s1 = inlined_call_operand.vmem [shape: bf16[3,128,128], index: 1, kind: input, shape index: {}]
  %s2 = inlined_call_operand.vmem [shape: f32[1,128], index: 2, kind: input, shape index: {}]
  %s3 = inlined_call_operand.vmem [shape: f32[1,128], index: 3, kind: input, shape index: {}]
  %s4 = inlined_call_operand.vmem [shape: bf16[768,128], index: 4, kind: output, shape index: {}]
  %s5 = sld [smem:[#allocation0]]
  $region127: #{inception_c_forward.15} parent=0
    _
  %s7 = ssub.s32 1, %s5
  %s8 = scalar_select 0, %s7, %s5
  loop: start=0, step=1, limit=5
  $region2: #{inception_c_forward.15} parent=0 // loop_pre_header
    _
  $region3: #{inception_c_forward.15} parent=0 // loop_header
    %s10 = sphi 0, %s14
    %p11 = scmp.ge.s32.totalorder %s10, 5
    %s18 = sphi 0, %s18
    %s20 = sphi 0, %s18
    %s21 = sphi 0, %s20
    %s35 = sphi 0, %s21
    %s39 = sphi 0, %s39
    %s41 = sphi 0, %s39
    %s42 = sphi 0, %s41
    %s56 = sphi 0, %s42
    %s60 = sphi 0, %s60
    %s62 = sphi 0, %s60
    %s63 = sphi 0, %s62
    %s77 = sphi 0, %s63
    %s83 = sphi 0, %s85
    %s86 = sphi 0, %s83
    %s87 = sphi 0, %s86
    %s103 = sphi 0, %s87
  $region4: #{inception_c_forward.15} parent=0 // loop_header_branch
    %13 = sbr.rel (%p11) target = $region8
  $region5: #{inception_c_forward.15} parent=0 // loop_body
    %s15 = ssub.s32 %s10, 1
    %s16 = ssub.s32 %s10, 2
    %s17 = sadd.s32 %s10, 1
    %s19 = sadd.s32 %s18, 1
    %p22 = scmp.eq.s32.totalorder %s10, 2
    %p23 = scmp.ne.s32.totalorder %s18, %s20
    %p24 = scmp.eq.s32.totalorder %s10, 0
    %p25 = por %p23, %p24
    %p26 = scmp.ne.s32.totalorder %s18, %s20
    %p27 = scmp.eq.s32.totalorder %s15, 2
    %p28 = por %p26, %p27
    %p29 = scmp.ne.s32.totalorder %s20, %s21
    %p30 = scmp.eq.s32.totalorder %s15, 0
    %p31 = por %p29, %p30
    %p32 = scmp.ne.s32.totalorder %s20, %s21
    %p33 = scmp.eq.s32.totalorder %s16, 2
    %p34 = por %p32, %p33
    %p36 = scmp.ne.s32.totalorder %s21, %s35
    %p37 = scmp.eq.s32.totalorder %s16, 0
    %p38 = por %p36, %p37
    %s40 = sadd.s32 %s39, 1
    %p43 = scmp.eq.s32.totalorder %s10, 2
    %p44 = scmp.ne.s32.totalorder %s39, %s41
    %p45 = scmp.eq.s32.totalorder %s10, 0
    %p46 = por %p44, %p45
    %p47 = scmp.ne.s32.totalorder %s39, %s41
    %p48 = scmp.eq.s32.totalorder %s15, 2
    %p49 = por %p47, %p48
    %p50 = scmp.ne.s32.totalorder %s41, %s42
    %p51 = scmp.eq.s32.totalorder %s15, 0
    %p52 = por %p50, %p51
    %p53 = scmp.ne.s32.totalorder %s41, %s42
    %p54 = scmp.eq.s32.totalorder %s16, 2
    %p55 = por %p53, %p54
    %p57 = scmp.ne.s32.totalorder %s42, %s56
    %p58 = scmp.eq.s32.totalorder %s16, 0
    %p59 = por %p57, %p58
    %s61 = sadd.s32 %s60, 1
    %p64 = scmp.eq.s32.totalorder %s10, 2
    %p65 = scmp.ne.s32.totalorder %s60, %s62
    %p66 = scmp.eq.s32.totalorder %s10, 0
    %p67 = por %p65, %p66
    %p68 = scmp.ne.s32.totalorder %s60, %s62
    %p69 = scmp.eq.s32.totalorder %s15, 2
    %p70 = por %p68, %p69
    %p71 = scmp.ne.s32.totalorder %s62, %s63
    %p72 = scmp.eq.s32.totalorder %s15, 0
    %p73 = por %p71, %p72
    %p74 = scmp.ne.s32.totalorder %s62, %s63
    %p75 = scmp.eq.s32.totalorder %s16, 2
    %p76 = por %p74, %p75
    %p78 = scmp.ne.s32.totalorder %s63, %s77
    %p79 = scmp.eq.s32.totalorder %s16, 0
    %p80 = por %p78, %p79
    %s81 = ssub.s32 %s10, %s17
    %p82 = scmp.eq.s32.totalorder %s81, 0
    %s84 = sadd.s32 %s83, 1
    %s85 = scalar_select %p82, %s83, %s84
    %p88 = pneg %p82
    %p89 = scmp.eq.s32.totalorder %s10, 2
    %p90 = por %p88, %p89
    %p91 = scmp.ne.s32.totalorder %s83, %s86
    %p92 = scmp.eq.s32.totalorder %s10, 0
    %p93 = por %p91, %p92
    %p94 = scmp.ne.s32.totalorder %s83, %s86
    %p95 = scmp.eq.s32.totalorder %s15, 2
    %p96 = por %p94, %p95
    %p97 = scmp.ne.s32.totalorder %s86, %s87
    %p98 = scmp.eq.s32.totalorder %s15, 0
    %p99 = por %p97, %p98
    %p100 = scmp.ne.s32.totalorder %s86, %s87
    %p101 = scmp.eq.s32.totalorder %s16, 2
    %p102 = por %p100, %p101
    %p104 = scmp.ne.s32.totalorder %s87, %s103
    %p105 = scmp.eq.s32.totalorder %s16, 0
    %p106 = por %p104, %p105
    %p107 = scmp.le.s32.totalorder 1, %s10
    %p108 = scmp.lt.s32.totalorder %s10, 4
    %p109 = pnand %p107, %p108
    %p110 = pneg %p109
    // Predicated region
    $region9: #{inception_c_forward.15} parent=5 // pred_check
      _
    $region10: #{inception_c_forward.15} parent=5 // pred_check_branch
      %112 = sbr.rel (%p109) target = $region12
    $region11: #{inception_c_forward.15} parent=5 // pred_region
      %s113 = ssub.s32 %s10, 1
      // Predicated region
      $region13: #{inception_c_forward.15} parent=11 // pred_check
        %p114 = pneg %p31
      $region14: #{inception_c_forward.15} parent=11 // pred_check_branch
        %116 = sbr.rel (%p114) target = $region16
      $region15: #{inception_c_forward.15} parent=11 // pred_region
        _
      $region16: #{inception_c_forward.15} parent=11 // pred_fallthru
        _
      // Predicated region
      $region17: #{inception_c_forward.15} parent=11 // pred_check
        %p117 = pneg %p52
      $region18: #{inception_c_forward.15} parent=11 // pred_check_branch
        %119 = sbr.rel (%p117) target = $region20
      $region19: #{inception_c_forward.15} parent=11 // pred_region
        _
      $region20: #{inception_c_forward.15} parent=11 // pred_fallthru
        _
      // Predicated region
      $region21: #{inception_c_forward.15} parent=11 // pred_check
        %p120 = pneg %p73
      $region22: #{inception_c_forward.15} parent=11 // pred_check_branch
        %122 = sbr.rel (%p120) target = $region24
      $region23: #{inception_c_forward.15} parent=11 // pred_region
        _
      $region24: #{inception_c_forward.15} parent=11 // pred_fallthru
        _
    $region12: #{inception_c_forward.15} parent=5 // pred_fallthru
      _
    %p123 = scmp.lt.s32.totalorder %s10, 3
    // Predicated region
    $region25: #{inception_c_forward.15} parent=5 // pred_check
      %p124 = pneg %p123
    $region26: #{inception_c_forward.15} parent=5 // pred_check_branch
      %126 = sbr.rel (%p124) target = $region28
    $region27: #{inception_c_forward.15} parent=5 // pred_region
      _
    $region28: #{inception_c_forward.15} parent=5 // pred_fallthru
      _
    %p127 = scmp.le.s32.totalorder 1, %s10
    %p128 = scmp.lt.s32.totalorder %s10, 4
    %p129 = pnand %p127, %p128
    %p130 = pneg %p129
    // Predicated region
    $region29: #{inception_c_forward.15} parent=5 // pred_check
      _
    $region30: #{inception_c_forward.15} parent=5 // pred_check_branch
      %132 = sbr.rel (%p129) target = $region32
    $region31: #{inception_c_forward.15} parent=5 // pred_region
      %s133 = ssub.s32 %s10, 1
      %p134 = pneg %p31
      %p135 = pneg %p28
      %p136 = pneg %p52
      %p137 = pneg %p49
      %p138 = pneg %p73
      %p139 = pneg %p70
      %p140 = pneg %p99
      %p141 = pneg %p96
      %s142 = smul.u32 32, %s15
      %p143 = scmp.lt.s32.totalorder %s142, 95
      %s144 = scalar_select %p143, %s142, 95
      %s145 = smul.addr %s144, 4
      %s146 = scalar_lea.vmem %s4, %s145
      %s147 = smul.u32 32, %s15
      %p148 = scmp.lt.s32.totalorder %s147, 95
      %s149 = scalar_select %p148, %s147, 95
      %s150 = smul.addr %s149, 4
      %s151 = scalar_lea.vmem %s4, %s150
      %s152 = smul.u32 32, %s15
      %p154 = scmp.lt.s32.totalorder %s15, 0
      %s155 = ssub.s32 0, %s15
      %s156 = scalar_select %p154, %s155, %s15
      %s157 = sand.u32 %s156, 1
      %s158 = ssub.s32 0, %s157
      %s159 = scalar_select %p154, %s158, %s157
      %p160 = scmp.ne.s32.totalorder %s159, 0
      %p161 = scmp.lt.s32.totalorder %s159, 0
      %p162 = pnand %p161, %p160
      %p163 = pneg %p162
      %s164 = sadd.s32 %s159, 2
      %s165 = scalar_select %p163, %s164, %s159
      %p166 = scmp.eq.s32.totalorder %s15, 0
      // Predicated region
      $region33: #{inception_c_forward.15} parent=31 // pred_check
        %p167 = pneg %p166
      $region34: #{inception_c_forward.15} parent=31 // pred_check_branch
        %169 = sbr.rel (%p167) target = $region36
      $region35: #{inception_c_forward.15} parent=31 // pred_region
        %p171 = scmp.lt.u32.totalorder 132, 8
        %p172 = pneg %p171
        // Predicated region
        $region37: #{inception_c_forward.15} parent=35 // pred_check
          _
        $region38: #{inception_c_forward.15} parent=35 // pred_check_branch
          %174 = sbr.rel (%p171) target = $region40
        $region39: #{inception_c_forward.15} parent=35 // pred_region
          %s189 = sand.u32 132, 7
          %p190 = scmp.eq.s32.totalorder %s189, 0
          %p191 = pneg %p190
          // Predicated region
          $region52: #{inception_c_forward.15} parent=39 // pred_check
            _
          $region53: #{inception_c_forward.15} parent=39 // pred_check_branch
            %193 = sbr.rel (%p190) target = $region55
          $region54: #{inception_c_forward.15} parent=39 // pred_region
            %s194 = sand.u32 132, 7
            %s195 = ssub.s32 132, %s194
            %s196 = scalar_lea.vmem %s0, %s195
            %s197 = ssub.s32 132, %s194
            %s198 = scalar_lea.vmem [#allocation2], %s197
            loop: start=0, step=1, limit=1
            $region56: #{inception_c_forward.15} parent=54 // loop_pre_header
              _
            $region57: #{inception_c_forward.15} parent=54 // loop_header
              %s200 = sphi 0, %s204
              %p201 = scmp.ge.s32.totalorder %s200, 1
              %s205 = sphi %s0, %s0
              %s206 = sphi [#allocation2], [#allocation2]
            $region58: #{inception_c_forward.15} parent=54 // loop_header_branch
              %203 = sbr.rel (%p201) target = $region62
            $region59: #{inception_c_forward.15} parent=54 // loop_body
              %v207 = vld [vmem:[%s205] sm:$0xff]
              %208 = vst [vmem:[%s206] sm:$0xff] %v207
              %v209 = vld [vmem:[%s205 + $0x8] sm:$0xff]
              %210 = vst [vmem:[%s206 + $0x8] sm:$0xff] %v209
              %v211 = vld [vmem:[%s205 + $0x10] sm:$0xff]
              %212 = vst [vmem:[%s206 + $0x10] sm:$0xff] %v211
              %v213 = vld [vmem:[%s205 + $0x18] sm:$0xff]
              %214 = vst [vmem:[%s206 + $0x18] sm:$0xff] %v213
              %v215 = vld [vmem:[%s205 + $0x20] sm:$0xff]
              %216 = vst [vmem:[%s206 + $0x20] sm:$0xff] %v215
              %v217 = vld [vmem:[%s205 + $0x28] sm:$0xff]
              %218 = vst [vmem:[%s206 + $0x28] sm:$0xff] %v217
              %v219 = vld [vmem:[%s205 + $0x30] sm:$0xff]
              %220 = vst [vmem:[%s206 + $0x30] sm:$0xff] %v219
              %v221 = vld [vmem:[%s205 + $0x38] sm:$0xff]
              %222 = vst [vmem:[%s206 + $0x38] sm:$0xff] %v221
              %v223 = vld [vmem:[%s205 + $0x40] sm:$0xff]
              %224 = vst [vmem:[%s206 + $0x40] sm:$0xff] %v223
              %v225 = vld [vmem:[%s205 + $0x48] sm:$0xff]
              %226 = vst [vmem:[%s206 + $0x48] sm:$0xff] %v225
              %v227 = vld [vmem:[%s205 + $0x50] sm:$0xff]
              %228 = vst [vmem:[%s206 + $0x50] sm:$0xff] %v227
              %v229 = vld [vmem:[%s205 + $0x58] sm:$0xff]
              %230 = vst [vmem:[%s206 + $0x58] sm:$0xff] %v229
              %v231 = vld [vmem:[%s205 + $0x60] sm:$0xff]
              %232 = vst [vmem:[%s206 + $0x60] sm:$0xff] %v231
              %v233 = vld [vmem:[%s205 + $0x68] sm:$0xff]
              %234 = vst [vmem:[%s206 + $0x68] sm:$0xff] %v233
              %v235 = vld [vmem:[%s205 + $0x70] sm:$0xff]
              %236 = vst [vmem:[%s206 + $0x70] sm:$0xff] %v235
              %v237 = vld [vmem:[%s205 + $0x78] sm:$0xff]
              %238 = vst [vmem:[%s206 + $0x78] sm:$0xff] %v237
            $region60: #{inception_c_forward.15} parent=54 // loop_footer
              %s204 = sadd.s32 1, %s200
            $region61: #{inception_c_forward.15} parent=54 // loop_footer_branch
              %199 = sbr.rel target = $region57
            $region62: #{inception_c_forward.15} parent=54 // loop_exit
              _
            %s239 = sshllo.u32 0, %s194
            loop: start=0, step=1, limit=1
            $region63: #{inception_c_forward.15} parent=54 // loop_pre_header
              _
            $region64: #{inception_c_forward.15} parent=54 // loop_header
              %s241 = sphi 0, %s245
              %p242 = scmp.ge.s32.totalorder %s241, 1
              %s246 = sphi %s196, %s196
              %s247 = sphi %s198, %s198
            $region65: #{inception_c_forward.15} parent=54 // loop_header_branch
              %244 = sbr.rel (%p242) target = $region69
            $region66: #{inception_c_forward.15} parent=54 // loop_body
              %v248 = vld [vmem:[%s246] sm:%s239]
              %249 = vst [vmem:[%s247] sm:%s239] %v248
            $region67: #{inception_c_forward.15} parent=54 // loop_footer
              %s245 = sadd.s32 1, %s241
            $region68: #{inception_c_forward.15} parent=54 // loop_footer_branch
              %240 = sbr.rel target = $region64
            $region69: #{inception_c_forward.15} parent=54 // loop_exit
              _
          $region55: #{inception_c_forward.15} parent=39 // pred_fallthru
            _
        $region40: #{inception_c_forward.15} parent=35 // pred_fallthru
          _
        // Predicated region
        $region41: #{inception_c_forward.15} parent=35 // pred_check
          %p175 = pneg %p171
        $region42: #{inception_c_forward.15} parent=35 // pred_check_branch
          %177 = sbr.rel (%p175) target = $region44
        $region43: #{inception_c_forward.15} parent=35 // pred_region
          %s178 = sshllo.u32 0, 132
          loop: start=0, step=1, limit=1
          $region45: #{inception_c_forward.15} parent=43 // loop_pre_header
            _
          $region46: #{inception_c_forward.15} parent=43 // loop_header
            %s180 = sphi 0, %s184
            %p181 = scmp.ge.s32.totalorder %s180, 1
            %s185 = sphi %s0, %s0
            %s186 = sphi [#allocation2], [#allocation2]
          $region47: #{inception_c_forward.15} parent=43 // loop_header_branch
            %183 = sbr.rel (%p181) target = $region51
          $region48: #{inception_c_forward.15} parent=43 // loop_body
            %v187 = vld [vmem:[%s185] sm:%s178]
            %188 = vst [vmem:[%s186] sm:%s178] %v187
          $region49: #{inception_c_forward.15} parent=43 // loop_footer
            %s184 = sadd.s32 1, %s180
          $region50: #{inception_c_forward.15} parent=43 // loop_footer_branch
            %179 = sbr.rel target = $region46
          $region51: #{inception_c_forward.15} parent=43 // loop_exit
            _
        $region44: #{inception_c_forward.15} parent=35 // pred_fallthru
          _
        // Predicated region
        $region70: #{inception_c_forward.15} parent=35 // pred_check
          _
        $region71: #{inception_c_forward.15} parent=35 // pred_check_branch
          %252 = sbr.rel (0) target = $region73
        $region72: #{inception_c_forward.15} parent=35 // pred_region
          %253 = vsyncadd [#allocation3], 2112
        $region73: #{inception_c_forward.15} parent=35 // pred_fallthru
          _
      $region36: #{inception_c_forward.15} parent=31 // pred_fallthru
        _
      %s254 = sadd.s32 %s15, 1
      %p255 = scmp.lt.s32.totalorder %s254, 3
      // Predicated region
      $region74: #{inception_c_forward.15} parent=31 // pred_check
        %p256 = pneg %p255
      $region75: #{inception_c_forward.15} parent=31 // pred_check_branch
        %258 = sbr.rel (%p256) target = $region77
      $region76: #{inception_c_forward.15} parent=31 // pred_region
        %s259 = ssub.s32 1, %s165
        %s260 = smul.u32 %s254, 256
        %s261 = sshra.s32 %s260, 3
        %s262 = sand.u32 %s260, 7
        %s263 = smul.addr %s261, 4
        %s264 = scalar_lea.vmem %s0, %s263
        %s265 = smul.u32 %s259, 33
        %s266 = smul.addr %s265, 4
        %s267 = scalar_lea.vmem [#allocation2], %s266
        %s268 = scalar_lea.sflag [#allocation3], %s259
        %p270 = scmp.lt.u32.totalorder 132, 8
        %p271 = pneg %p270
        // Predicated region
        $region78: #{inception_c_forward.15} parent=76 // pred_check
          _
        $region79: #{inception_c_forward.15} parent=76 // pred_check_branch
          %273 = sbr.rel (%p270) target = $region81
        $region80: #{inception_c_forward.15} parent=76 // pred_region
          %s288 = sand.u32 132, 7
          %p289 = scmp.eq.s32.totalorder %s288, 0
          %p290 = pneg %p289
          // Predicated region
          $region93: #{inception_c_forward.15} parent=80 // pred_check
            _
          $region94: #{inception_c_forward.15} parent=80 // pred_check_branch
            %292 = sbr.rel (%p289) target = $region96
          $region95: #{inception_c_forward.15} parent=80 // pred_region
            %s293 = sand.u32 132, 7
            %s294 = ssub.s32 132, %s293
            %s295 = scalar_lea.vmem %s264, %s294
            %s296 = ssub.s32 132, %s293
            %s297 = scalar_lea.vmem %s267, %s296 [#allocation2]
            loop: start=0, step=1, limit=1
            $region97: #{inception_c_forward.15} parent=95 // loop_pre_header
              _
            $region98: #{inception_c_forward.15} parent=95 // loop_header
              %s299 = sphi 0, %s303
              %p300 = scmp.ge.s32.totalorder %s299, 1
              %s304 = sphi %s264, %s264
              %s305 = sphi %s267, %s267
            $region99: #{inception_c_forward.15} parent=95 // loop_header_branch
              %302 = sbr.rel (%p300) target = $region103
            $region100: #{inception_c_forward.15} parent=95 // loop_body
              %v306 = vld [vmem:[%s304] sm:$0xff]
              %307 = vst [vmem:[%s305] sm:$0xff] %v306
              %v308 = vld [vmem:[%s304 + $0x8] sm:$0xff]
              %309 = vst [vmem:[%s305 + $0x8] sm:$0xff] %v308
              %v310 = vld [vmem:[%s304 + $0x10] sm:$0xff]
              %311 = vst [vmem:[%s305 + $0x10] sm:$0xff] %v310
              %v312 = vld [vmem:[%s304 + $0x18] sm:$0xff]
              %313 = vst [vmem:[%s305 + $0x18] sm:$0xff] %v312
              %v314 = vld [vmem:[%s304 + $0x20] sm:$0xff]
              %315 = vst [vmem:[%s305 + $0x20] sm:$0xff] %v314
              %v316 = vld [vmem:[%s304 + $0x28] sm:$0xff]
              %317 = vst [vmem:[%s305 + $0x28] sm:$0xff] %v316
              %v318 = vld [vmem:[%s304 + $0x30] sm:$0xff]
              %319 = vst [vmem:[%s305 + $0x30] sm:$0xff] %v318
              %v320 = vld [vmem:[%s304 + $0x38] sm:$0xff]
              %321 = vst [vmem:[%s305 + $0x38] sm:$0xff] %v320
              %v322 = vld [vmem:[%s304 + $0x40] sm:$0xff]
              %323 = vst [vmem:[%s305 + $0x40] sm:$0xff] %v322
              %v324 = vld [vmem:[%s304 + $0x48] sm:$0xff]
              %325 = vst [vmem:[%s305 + $0x48] sm:$0xff] %v324
              %v326 = vld [vmem:[%s304 + $0x50] sm:$0xff]
              %327 = vst [vmem:[%s305 + $0x50] sm:$0xff] %v326
              %v328 = vld [vmem:[%s304 + $0x58] sm:$0xff]
              %329 = vst [vmem:[%s305 + $0x58] sm:$0xff] %v328
              %v330 = vld [vmem:[%s304 + $0x60] sm:$0xff]
              %331 = vst [vmem:[%s305 + $0x60] sm:$0xff] %v330
              %v332 = vld [vmem:[%s304 + $0x68] sm:$0xff]
              %333 = vst [vmem:[%s305 + $0x68] sm:$0xff] %v332
              %v334 = vld [vmem:[%s304 + $0x70] sm:$0xff]
              %335 = vst [vmem:[%s305 + $0x70] sm:$0xff] %v334
              %v336 = vld [vmem:[%s304 + $0x78] sm:$0xff]
              %337 = vst [vmem:[%s305 + $0x78] sm:$0xff] %v336
            $region101: #{inception_c_forward.15} parent=95 // loop_footer
              %s303 = sadd.s32 1, %s299
            $region102: #{inception_c_forward.15} parent=95 // loop_footer_branch
              %298 = sbr.rel target = $region98
            $region103: #{inception_c_forward.15} parent=95 // loop_exit
              _
            %s338 = sshllo.u32 0, %s293
            loop: start=0, step=1, limit=1
            $region104: #{inception_c_forward.15} parent=95 // loop_pre_header
              _
            $region105: #{inception_c_forward.15} parent=95 // loop_header
              %s340 = sphi 0, %s344
              %p341 = scmp.ge.s32.totalorder %s340, 1
              %s345 = sphi %s295, %s295
              %s346 = sphi %s297, %s297
            $region106: #{inception_c_forward.15} parent=95 // loop_header_branch
              %343 = sbr.rel (%p341) target = $region110
            $region107: #{inception_c_forward.15} parent=95 // loop_body
              %v347 = vld [vmem:[%s345] sm:%s338]
              %348 = vst [vmem:[%s346] sm:%s338] %v347
            $region108: #{inception_c_forward.15} parent=95 // loop_footer
              %s344 = sadd.s32 1, %s340
            $region109: #{inception_c_forward.15} parent=95 // loop_footer_branch
              %339 = sbr.rel target = $region105
            $region110: #{inception_c_forward.15} parent=95 // loop_exit
              _
          $region96: #{inception_c_forward.15} parent=80 // pred_fallthru
            _
        $region81: #{inception_c_forward.15} parent=76 // pred_fallthru
          _
        // Predicated region
        $region82: #{inception_c_forward.15} parent=76 // pred_check
          %p274 = pneg %p270
        $region83: #{inception_c_forward.15} parent=76 // pred_check_branch
          %276 = sbr.rel (%p274) target = $region85
        $region84: #{inception_c_forward.15} parent=76 // pred_region
          %s277 = sshllo.u32 0, 132
          loop: start=0, step=1, limit=1
          $region86: #{inception_c_forward.15} parent=84 // loop_pre_header
            _
          $region87: #{inception_c_forward.15} parent=84 // loop_header
            %s279 = sphi 0, %s283
            %p280 = scmp.ge.s32.totalorder %s279, 1
            %s284 = sphi %s264, %s264
            %s285 = sphi %s267, %s267
          $region88: #{inception_c_forward.15} parent=84 // loop_header_branch
            %282 = sbr.rel (%p280) target = $region92
          $region89: #{inception_c_forward.15} parent=84 // loop_body
            %v286 = vld [vmem:[%s284] sm:%s277]
            %287 = vst [vmem:[%s285] sm:%s277] %v286
          $region90: #{inception_c_forward.15} parent=84 // loop_footer
            %s283 = sadd.s32 1, %s279
          $region91: #{inception_c_forward.15} parent=84 // loop_footer_branch
            %278 = sbr.rel target = $region87
          $region92: #{inception_c_forward.15} parent=84 // loop_exit
            _
        $region85: #{inception_c_forward.15} parent=76 // pred_fallthru
          _
        // Predicated region
        $region111: #{inception_c_forward.15} parent=76 // pred_check
          _
        $region112: #{inception_c_forward.15} parent=76 // pred_check_branch
          %351 = sbr.rel (0) target = $region114
        $region113: #{inception_c_forward.15} parent=76 // pred_region
          %352 = vsyncadd %s268, 2112
        $region114: #{inception_c_forward.15} parent=76 // pred_fallthru
          _
      $region77: #{inception_c_forward.15} parent=31 // pred_fallthru
        _
      %s353 = smul.u32 %s165, 33
      %s354 = smul.addr %s353, 4
      %s355 = scalar_lea.vmem [#allocation2], %s354
      %s356 = scalar_lea.sflag [#allocation3], %s165
      %s357 = smul.u32 4, 33
      %s358 = smul.u32 %s357, 1
      %s359 = sshll.u32 %s358, 4
      %360 = dma.done %s356, %s359
      %v361 = vld [vmem:[%s355] sm:$0xf]
      %v362 = vld [vmem:[%s355 + $0x4] sm:$0xf]
      %v363 = vld [vmem:[%s355 + $0x8] sm:$0xf]
      %v364 = vld [vmem:[%s355 + $0xc] sm:$0xf]
      %v365 = vld [vmem:[%s355 + $0x10] sm:$0xf]
      %v366 = vld [vmem:[%s355 + $0x14] sm:$0xf]
      %v367 = vld [vmem:[%s355 + $0x18] sm:$0xf]
      %v368 = vld [vmem:[%s355 + $0x1c] sm:$0xf]
      %v369 = vld [vmem:[%s355 + $0x20] sm:$0xf]
      %v370 = vld [vmem:[%s355 + $0x24] sm:$0xf]
      %v371 = vld [vmem:[%s355 + $0x28] sm:$0xf]
      %v372 = vld [vmem:[%s355 + $0x2c] sm:$0xf]
      %v373 = vld [vmem:[%s355 + $0x30] sm:$0xf]
      %v374 = vld [vmem:[%s355 + $0x34] sm:$0xf]
      %v375 = vld [vmem:[%s355 + $0x38] sm:$0xf]
      %v376 = vld [vmem:[%s355 + $0x3c] sm:$0xf]
      %v377 = vld [vmem:[%s355 + $0x40] sm:$0xf]
      %v378 = vld [vmem:[%s355 + $0x44] sm:$0xf]
      %v379 = vld [vmem:[%s355 + $0x48] sm:$0xf]
      %v380 = vld [vmem:[%s355 + $0x4c] sm:$0xf]
      %v381 = vld [vmem:[%s355 + $0x50] sm:$0xf]
      %v382 = vld [vmem:[%s355 + $0x54] sm:$0xf]
      %v383 = vld [vmem:[%s355 + $0x58] sm:$0xf]
      %v384 = vld [vmem:[%s355 + $0x5c] sm:$0xf]
      %v385 = vld [vmem:[%s355 + $0x60] sm:$0xf]
      %v386 = vld [vmem:[%s355 + $0x64] sm:$0xf]
      %v387 = vld [vmem:[%s355 + $0x68] sm:$0xf]
      %v388 = vld [vmem:[%s355 + $0x6c] sm:$0xf]
      %v389 = vld [vmem:[%s355 + $0x70] sm:$0xf]
      %v390 = vld [vmem:[%s355 + $0x74] sm:$0xf]
      %v391 = vld [vmem:[%s355 + $0x78] sm:$0xf]
      %v392 = vld [vmem:[%s355 + $0x7c] sm:$0xf]
      %v393 = vld [vmem:[%s1] sm:$0xf]
      %v394 = vld [vmem:[%s1 + $0x4] sm:$0xf]
      %v395 = vld [vmem:[%s1 + $0x8] sm:$0xf]
      %v396 = vld [vmem:[%s1 + $0xc] sm:$0xf]
      %v397 = vld [vmem:[%s1 + $0x10] sm:$0xf]
      %v398 = vld [vmem:[%s1 + $0x14] sm:$0xf]
      %v399 = vld [vmem:[%s1 + $0x18] sm:$0xf]
      %v400 = vld [vmem:[%s1 + $0x1c] sm:$0xf]
      %v401 = vld [vmem:[%s1 + $0x20] sm:$0xf]
      %v402 = vld [vmem:[%s1 + $0x24] sm:$0xf]
      %v403 = vld [vmem:[%s1 + $0x28] sm:$0xf]
      %v404 = vld [vmem:[%s1 + $0x2c] sm:$0xf]
      %v405 = vld [vmem:[%s1 + $0x30] sm:$0xf]
      %v406 = vld [vmem:[%s1 + $0x34] sm:$0xf]
      %v407 = vld [vmem:[%s1 + $0x38] sm:$0xf]
      %v408 = vld [vmem:[%s1 + $0x3c] sm:$0xf]
      %v441 = vunpack.c.l.b16 %v361
      %v442 = vunpack.c.l.b16 %v362
      %v443 = vunpack.c.l.b16 %v363
      %v444 = vunpack.c.l.b16 %v364
      %v445 = vunpack.c.l.b16 %v365
      %v446 = vunpack.c.l.b16 %v366
      %v447 = vunpack.c.l.b16 %v367
      %v448 = vunpack.c.l.b16 %v368
      %v449 = vunpack.c.l.b16 %v369
      %v450 = vunpack.c.l.b16 %v370
      %v451 = vunpack.c.l.b16 %v371
      %v452 = vunpack.c.l.b16 %v372
      %v453 = vunpack.c.l.b16 %v373
      %v454 = vunpack.c.l.b16 %v374
      %v455 = vunpack.c.l.b16 %v375
      %v456 = vunpack.c.l.b16 %v376
      %v457 = vunpack.c.l.b16 %v377
      %v458 = vunpack.c.l.b16 %v378
      %v459 = vunpack.c.l.b16 %v379
      %v460 = vunpack.c.l.b16 %v380
      %v461 = vunpack.c.l.b16 %v381
      %v462 = vunpack.c.l.b16 %v382
      %v463 = vunpack.c.l.b16 %v383
      %v464 = vunpack.c.l.b16 %v384
      %v465 = vunpack.c.l.b16 %v385
      %v466 = vunpack.c.l.b16 %v386
      %v467 = vunpack.c.l.b16 %v387
      %v468 = vunpack.c.l.b16 %v388
      %v469 = vunpack.c.l.b16 %v389
      %v470 = vunpack.c.l.b16 %v390
      %v471 = vunpack.c.l.b16 %v391
      %v472 = vunpack.c.l.b16 %v392
      %v473 = vpack.c.b16 %v442, %v441
      %v474 = vpack.c.b16 %v444, %v443
      %v475 = vpack.c.b16 %v446, %v445
      %v476 = vpack.c.b16 %v448, %v447
      %v477 = vpack.c.b16 %v450, %v449
      %v478 = vpack.c.b16 %v452, %v451
      %v479 = vpack.c.b16 %v454, %v453
      %v480 = vpack.c.b16 %v456, %v455
      %v481 = vpack.c.b16 %v458, %v457
      %v482 = vpack.c.b16 %v460, %v459
      %v483 = vpack.c.b16 %v462, %v461
      %v484 = vpack.c.b16 %v464, %v463
      %v485 = vpack.c.b16 %v466, %v465
      %v486 = vpack.c.b16 %v468, %v467
      %v487 = vpack.c.b16 %v470, %v469
      %v488 = vpack.c.b16 %v472, %v471
      %v521 = vunpack.c.l.b16 %v393
      %v522 = vunpack.c.l.b16 %v394
      %v523 = vunpack.c.l.b16 %v395
      %v524 = vunpack.c.l.b16 %v396
      %v525 = vunpack.c.l.b16 %v397
      %v526 = vunpack.c.l.b16 %v398
      %v527 = vunpack.c.l.b16 %v399
      %v528 = vunpack.c.l.b16 %v400
      %v529 = vunpack.c.l.b16 %v401
      %v530 = vunpack.c.l.b16 %v402
      %v531 = vunpack.c.l.b16 %v403
      %v532 = vunpack.c.l.b16 %v404
      %v533 = vunpack.c.l.b16 %v405
      %v534 = vunpack.c.l.b16 %v406
      %v535 = vunpack.c.l.b16 %v407
      %v536 = vunpack.c.l.b16 %v408
      %v537 = vpack.c.b16 %v522, %v521
      %v538 = vpack.c.b16 %v524, %v523
      %v539 = vpack.c.b16 %v526, %v525
      %v540 = vpack.c.b16 %v528, %v527
      %v541 = vpack.c.b16 %v530, %v529
      %v542 = vpack.c.b16 %v532, %v531
      %v543 = vpack.c.b16 %v534, %v533
      %v544 = vpack.c.b16 %v536, %v535
      %553 = vmatprep.subr.bf16.mxu0 0
      %554 = vmatpush1.bf16.msra.mxu0 %v537
      %555 = vmatprep.subr.bf16.mxu0 0
      %556 = vmatpush1.bf16.msra.mxu0 %v538
      %557 = vmatprep.subr.bf16.mxu0 0
      %558 = vmatpush1.bf16.msra.mxu0 %v539
      %559 = vmatprep.subr.bf16.mxu0 0
      %560 = vmatpush1.bf16.msra.mxu0 %v540
      %561 = vmatprep.subr.bf16.mxu0 0
      %562 = vmatpush1.bf16.msra.mxu0 %v541
      %563 = vmatprep.subr.bf16.mxu0 0
      %564 = vmatpush1.bf16.msra.mxu0 %v542
      %565 = vmatprep.subr.bf16.mxu0 0
      %566 = vmatpush1.bf16.msra.mxu0 %v543
      %567 = vmatprep.subr.bf16.mxu0 0
      %568 = vmatpush1.bf16.msra.mxu0 %v544
      %569 = vmatprep.subr.bf16.mxu0 0
      %570 = vmatpush1.bf16.msra.mxu0 0
      %571 = vmatprep.subr.bf16.mxu0 0
      %572 = vmatpush1.bf16.msra.mxu0 0
      %573 = vmatprep.subr.bf16.mxu0 0
      %574 = vmatpush1.bf16.msra.mxu0 0
      %575 = vmatprep.subr.bf16.mxu0 0
      %576 = vmatpush1.bf16.msra.mxu0 0
      %577 = vmatprep.subr.bf16.mxu0 0
      %578 = vmatpush1.bf16.msra.mxu0 0
      %579 = vmatprep.subr.bf16.mxu0 0
      %580 = vmatpush1.bf16.msra.mxu0 0
      %581 = vmatprep.subr.bf16.mxu0 0
      %582 = vmatpush1.bf16.msra.mxu0 0
      %583 = vmatprep.subr.bf16.mxu0 0
      %584 = vmatpush1.bf16.msra.mxu0 0
      %585 = vmatprep.mubr.bf16.mxu0 0
      %586 = vmatmul.mubr.bf16.gmra.mrb[0].mxu0 %v473
      %v587 = vpop.f32.mrb[0].mxu0
      %v588 = vadd.f32 0.0, %v587
      %v589 = vpop.f32.mrb[0].mxu0
      %v590 = vpop.f32.mrb[0].mxu0
      %v591 = vadd.f32 0.0, %v590
      %v592 = vpop.f32.mrb[0].mxu0
      %593 = vmatprep.mubr.bf16.mxu0 0
      %594 = vmatmul.mubr.bf16.gmra.mrb[0].mxu0 %v474
      %v595 = vpop.f32.mrb[0].mxu0
      %v596 = vadd.f32 0.0, %v595
      %v597 = vpop.f32.mrb[0].mxu0
      %v598 = vpop.f32.mrb[0].mxu0
      %v599 = vadd.f32 0.0, %v598
      %v600 = vpop.f32.mrb[0].mxu0
      %601 = vmatprep.mubr.bf16.mxu0 0
      %602 = vmatmul.mubr.bf16.gmra.mrb[0].mxu0 %v475
      %v603 = vpop.f32.mrb[0].mxu0
      %v604 = vadd.f32 0.0, %v603
      %v605 = vpop.f32.mrb[0].mxu0
      %v606 = vpop.f32.mrb[0].mxu0
      %v607 = vadd.f32 0.0, %v606
      %v608 = vpop.f32.mrb[0].mxu0
      %609 = vmatprep.mubr.bf16.mxu0 0
      %610 = vmatmul.mubr.bf16.gmra.mrb[0].mxu0 %v476
      %v611 = vpop.f32.mrb[0].mxu0
      %v612 = vadd.f32 0.0, %v611
      %v613 = vpop.f32.mrb[0].mxu0
      %v614 = vpop.f32.mrb[0].mxu0
      %v615 = vadd.f32 0.0, %v614
      %v616 = vpop.f32.mrb[0].mxu0
      %617 = vmatprep.mubr.bf16.mxu0 0
      %618 = vmatmul.mubr.bf16.gmra.mrb[0].mxu0 %v477
      %v619 = vpop.f32.mrb[0].mxu0
      %v620 = vadd.f32 0.0, %v619
      %v621 = vpop.f32.mrb[0].mxu0
      %v622 = vpop.f32.mrb[0].mxu0
      %v623 = vadd.f32 0.0, %v622
      %v624 = vpop.f32.mrb[0].mxu0
      %625 = vmatprep.mubr.bf16.mxu0 0
      %626 = vmatmul.mubr.bf16.gmra.mrb[0].mxu0 %v478
      %v627 = vpop.f32.mrb[0].mxu0
      %v628 = vadd.f32 0.0, %v627
      %v629 = vpop.f32.mrb[0].mxu0
      %v630 = vpop.f32.mrb[0].mxu0
      %v631 = vadd.f32 0.0, %v630
      %v632 = vpop.f32.mrb[0].mxu0
      %633 = vmatprep.mubr.bf16.mxu0 0
      %634 = vmatmul.mubr.bf16.gmra.mrb[0].mxu0 %v479
      %v635 = vpop.f32.mrb[0].mxu0
      %v636 = vadd.f32 0.0, %v635
      %v637 = vpop.f32.mrb[0].mxu0
      %v638 = vpop.f32.mrb[0].mxu0
      %v639 = vadd.f32 0.0, %v638
      %v640 = vpop.f32.mrb[0].mxu0
      %641 = vmatprep.mubr.bf16.mxu0 0
      %642 = vmatmul.mubr.bf16.gmra.mrb[0].mxu0 %v480
      %v643 = vpop.f32.mrb[0].mxu0
      %v644 = vadd.f32 0.0, %v643
      %v645 = vpop.f32.mrb[0].mxu0
      %v646 = vpop.f32.mrb[0].mxu0
      %v647 = vadd.f32 0.0, %v646
      %v648 = vpop.f32.mrb[0].mxu0
      %649 = vmatprep.mubr.bf16.mxu0 0
      %650 = vmatmul.mubr.bf16.gmra.mrb[0].mxu0 %v481
      %v651 = vpop.f32.mrb[0].mxu0
      %v652 = vadd.f32 0.0, %v651
      %v653 = vpop.f32.mrb[0].mxu0
      %v654 = vpop.f32.mrb[0].mxu0
      %v655 = vadd.f32 0.0, %v654
      %v656 = vpop.f32.mrb[0].mxu0
      %657 = vmatprep.mubr.bf16.mxu0 0
      %658 = vmatmul.mubr.bf16.gmra.mrb[0].mxu0 %v482
      %v659 = vpop.f32.mrb[0].mxu0
      %v660 = vadd.f32 0.0, %v659
      %v661 = vpop.f32.mrb[0].mxu0
      %v662 = vpop.f32.mrb[0].mxu0
      %v663 = vadd.f32 0.0, %v662
      %v664 = vpop.f32.mrb[0].mxu0
      %665 = vmatprep.mubr.bf16.mxu0 0
      %666 = vmatmul.mubr.bf16.gmra.mrb[0].mxu0 %v483
      %v667 = vpop.f32.mrb[0].mxu0
      %v668 = vadd.f32 0.0, %v667
      %v669 = vpop.f32.mrb[0].mxu0
      %v670 = vpop.f32.mrb[0].mxu0
      %v671 = vadd.f32 0.0, %v670
      %v672 = vpop.f32.mrb[0].mxu0
      %673 = vmatprep.mubr.bf16.mxu0 0
      %674 = vmatmul.mubr.bf16.gmra.mrb[0].mxu0 %v484
      %v675 = vpop.f32.mrb[0].mxu0
      %v676 = vadd.f32 0.0, %v675
      %v677 = vpop.f32.mrb[0].mxu0
      %v678 = vpop.f32.mrb[0].mxu0
      %v679 = vadd.f32 0.0, %v678
      %v680 = vpop.f32.mrb[0].mxu0
      %681 = vmatprep.mubr.bf16.mxu0 0
      %682 = vmatmul.mubr.bf16.gmra.mrb[0].mxu0 %v485
      %v683 = vpop.f32.mrb[0].mxu0
      %v684 = vadd.f32 0.0, %v683
      %v685 = vpop.f32.mrb[0].mxu0
      %v686 = vpop.f32.mrb[0].mxu0
      %v687 = vadd.f32 0.0, %v686
      %v688 = vpop.f32.mrb[0].mxu0
      %689 = vmatprep.mubr.bf16.mxu0 0
      %690 = vmatmul.mubr.bf16.gmra.mrb[0].mxu0 %v486
      %v691 = vpop.f32.mrb[0].mxu0
      %v692 = vadd.f32 0.0, %v691
      %v693 = vpop.f32.mrb[0].mxu0
      %v694 = vpop.f32.mrb[0].mxu0
      %v695 = vadd.f32 0.0, %v694
      %v696 = vpop.f32.mrb[0].mxu0
      %697 = vmatprep.mubr.bf16.mxu0 0
      %698 = vmatmul.mubr.bf16.gmra.mrb[0].mxu0 %v487
      %v699 = vpop.f32.mrb[0].mxu0
      %v700 = vadd.f32 0.0, %v699
      %v701 = vpop.f32.mrb[0].mxu0
      %v702 = vpop.f32.mrb[0].mxu0
      %v703 = vadd.f32 0.0, %v702
      %v704 = vpop.f32.mrb[0].mxu0
      %705 = vmatprep.mubr.bf16.mxu0 0
      %706 = vmatmul.mubr.bf16.gmra.mrb[0].mxu0 %v488
      %v707 = vpop.f32.mrb[0].mxu0
      %v708 = vadd.f32 0.0, %v707
      %v709 = vpop.f32.mrb[0].mxu0
      %v710 = vpop.f32.mrb[0].mxu0
      %v711 = vadd.f32 0.0, %v710
      %v712 = vpop.f32.mrb[0].mxu0
      %713 = vdwg.mxu0
      %714 = vst [vmem:[#allocation4] sm:$0xff] %v588
      %715 = vst [vmem:[#allocation4 + $0x8] sm:$0xff] %v591
      %716 = vst [vmem:[#allocation4 + $0x10] sm:$0xff] %v596
      %717 = vst [vmem:[#allocation4 + $0x18] sm:$0xff] %v599
      %718 = vst [vmem:[#allocation4 + $0x20] sm:$0xff] %v604
      %719 = vst [vmem:[#allocation4 + $0x28] sm:$0xff] %v607
      %720 = vst [vmem:[#allocation4 + $0x30] sm:$0xff] %v612
      %721 = vst [vmem:[#allocation4 + $0x38] sm:$0xff] %v615
      %722 = vst [vmem:[#allocation4 + $0x40] sm:$0xff] %v620
      %723 = vst [vmem:[#allocation4 + $0x48] sm:$0xff] %v623
      %724 = vst [vmem:[#allocation4 + $0x50] sm:$0xff] %v628
      %725 = vst [vmem:[#allocation4 + $0x58] sm:$0xff] %v631
      %726 = vst [vmem:[#allocation4 + $0x60] sm:$0xff] %v636
      %727 = vst [vmem:[#allocation4 + $0x68] sm:$0xff] %v639
      %728 = vst [vmem:[#allocation4 + $0x70] sm:$0xff] %v644
      %729 = vst [vmem:[#allocation4 + $0x78] sm:$0xff] %v647
      %730 = vst [vmem:[#allocation4 + $0x80] sm:$0xff] %v652
      %731 = vst [vmem:[#allocation4 + $0x88] sm:$0xff] %v655
      %732 = vst [vmem:[#allocation4 + $0x90] sm:$0xff] %v660
      %733 = vst [vmem:[#allocation4 + $0x98] sm:$0xff] %v663
      %734 = vst [vmem:[#allocation4 + $0xa0] sm:$0xff] %v668
      %735 = vst [vmem:[#allocation4 + $0xa8] sm:$0xff] %v671
      %736 = vst [vmem:[#allocation4 + $0xb0] sm:$0xff] %v676
      %737 = vst [vmem:[#allocation4 + $0xb8] sm:$0xff] %v679
      %738 = vst [vmem:[#allocation4 + $0xc0] sm:$0xff] %v684
      %739 = vst [vmem:[#allocation4 + $0xc8] sm:$0xff] %v687
      %740 = vst [vmem:[#allocation4 + $0xd0] sm:$0xff] %v692
      %741 = vst [vmem:[#allocation4 + $0xd8] sm:$0xff] %v695
      %742 = vst [vmem:[#allocation4 + $0xe0] sm:$0xff] %v700
      %743 = vst [vmem:[#allocation4 + $0xe8] sm:$0xff] %v703
      %744 = vst [vmem:[#allocation4 + $0xf0] sm:$0xff] %v708
      %745 = vst [vmem:[#allocation4 + $0xf8] sm:$0xff] %v711
      %v746 = vld [vmem:[#allocation4] sm:$0xff]
      %v747 = vld [vmem:[#allocation4 + $0x8] sm:$0xff]
      %v748 = vld [vmem:[#allocation4 + $0x10] sm:$0xff]
      %v749 = vld [vmem:[#allocation4 + $0x18] sm:$0xff]
      %v750 = vld [vmem:[#allocation4 + $0x20] sm:$0xff]
      %v751 = vld [vmem:[#allocation4 + $0x28] sm:$0xff]
      %v752 = vld [vmem:[#allocation4 + $0x30] sm:$0xff]
      %v753 = vld [vmem:[#allocation4 + $0x38] sm:$0xff]
      %v754 = vld [vmem:[#allocation4 + $0x40] sm:$0xff]
      %v755 = vld [vmem:[#allocation4 + $0x48] sm:$0xff]
      %v756 = vld [vmem:[#allocation4 + $0x50] sm:$0xff]
      %v757 = vld [vmem:[#allocation4 + $0x58] sm:$0xff]
      %v758 = vld [vmem:[#allocation4 + $0x60] sm:$0xff]
      %v759 = vld [vmem:[#allocation4 + $0x68] sm:$0xff]
      %v760 = vld [vmem:[#allocation4 + $0x70] sm:$0xff]
      %v761 = vld [vmem:[#allocation4 + $0x78] sm:$0xff]
      %v762 = vld [vmem:[#allocation4 + $0x80] sm:$0xff]
      %v763 = vld [vmem:[#allocation4 + $0x88] sm:$0xff]
      %v764 = vld [vmem:[#allocation4 + $0x90] sm:$0xff]
      %v765 = vld [vmem:[#allocation4 + $0x98] sm:$0xff]
      %v766 = vld [vmem:[#allocation4 + $0xa0] sm:$0xff]
      %v767 = vld [vmem:[#allocation4 + $0xa8] sm:$0xff]
      %v768 = vld [vmem:[#allocation4 + $0xb0] sm:$0xff]
      %v769 = vld [vmem:[#allocation4 + $0xb8] sm:$0xff]
      %v770 = vld [vmem:[#allocation4 + $0xc0] sm:$0xff]
      %v771 = vld [vmem:[#allocation4 + $0xc8] sm:$0xff]
      %v772 = vld [vmem:[#allocation4 + $0xd0] sm:$0xff]
      %v773 = vld [vmem:[#allocation4 + $0xd8] sm:$0xff]
      %v774 = vld [vmem:[#allocation4 + $0xe0] sm:$0xff]
      %v775 = vld [vmem:[#allocation4 + $0xe8] sm:$0xff]
      %v776 = vld [vmem:[#allocation4 + $0xf0] sm:$0xff]
      %v777 = vld [vmem:[#allocation4 + $0xf8] sm:$0xff]
      %v778 = vld [vmem:[%s355] sm:$0xf]
      %v779 = vld [vmem:[%s355 + $0x4] sm:$0xf]
      %v780 = vld [vmem:[%s355 + $0x8] sm:$0xf]
      %v781 = vld [vmem:[%s355 + $0xc] sm:$0xf]
      %v782 = vld [vmem:[%s355 + $0x10] sm:$0xf]
      %v783 = vld [vmem:[%s355 + $0x14] sm:$0xf]
      %v784 = vld [vmem:[%s355 + $0x18] sm:$0xf]
      %v785 = vld [vmem:[%s355 + $0x1c] sm:$0xf]
      %v786 = vld [vmem:[%s355 + $0x20] sm:$0xf]
      %v787 = vld [vmem:[%s355 + $0x24] sm:$0xf]
      %v788 = vld [vmem:[%s355 + $0x28] sm:$0xf]
      %v789 = vld [vmem:[%s355 + $0x2c] sm:$0xf]
      %v790 = vld [vmem:[%s355 + $0x30] sm:$0xf]
      %v791 = vld [vmem:[%s355 + $0x34] sm:$0xf]
      %v792 = vld [vmem:[%s355 + $0x38] sm:$0xf]
      %v793 = vld [vmem:[%s355 + $0x3c] sm:$0xf]
      %v794 = vld [vmem:[%s355 + $0x40] sm:$0xf]
      %v795 = vld [vmem:[%s355 + $0x44] sm:$0xf]
      %v796 = vld [vmem:[%s355 + $0x48] sm:$0xf]
      %v797 = vld [vmem:[%s355 + $0x4c] sm:$0xf]
      %v798 = vld [vmem:[%s355 + $0x50] sm:$0xf]
      %v799 = vld [vmem:[%s355 + $0x54] sm:$0xf]
      %v800 = vld [vmem:[%s355 + $0x58] sm:$0xf]
      %v801 = vld [vmem:[%s355 + $0x5c] sm:$0xf]
      %v802 = vld [vmem:[%s355 + $0x60] sm:$0xf]
      %v803 = vld [vmem:[%s355 + $0x64] sm:$0xf]
      %v804 = vld [vmem:[%s355 + $0x68] sm:$0xf]
      %v805 = vld [vmem:[%s355 + $0x6c] sm:$0xf]
      %v806 = vld [vmem:[%s355 + $0x70] sm:$0xf]
      %v807 = vld [vmem:[%s355 + $0x74] sm:$0xf]
      %v808 = vld [vmem:[%s355 + $0x78] sm:$0xf]
      %v809 = vld [vmem:[%s355 + $0x7c] sm:$0xf]
      %v810 = vld [vmem:[%s355 + $0x80] sm:$0x1]
      %s811 = scalar_lea.vmem %s1, 64
      %v812 = vld [vmem:[%s811] sm:$0xf]
      %v813 = vld [vmem:[%s811 + $0x4] sm:$0xf]
      %v814 = vld [vmem:[%s811 + $0x8] sm:$0xf]
      %v815 = vld [vmem:[%s811 + $0xc] sm:$0xf]
      %v816 = vld [vmem:[%s811 + $0x10] sm:$0xf]
      %v817 = vld [vmem:[%s811 + $0x14] sm:$0xf]
      %v818 = vld [vmem:[%s811 + $0x18] sm:$0xf]
      %v819 = vld [vmem:[%s811 + $0x1c] sm:$0xf]
      %v820 = vld [vmem:[%s811 + $0x20] sm:$0xf]
      %v821 = vld [vmem:[%s811 + $0x24] sm:$0xf]
      %v822 = vld [vmem:[%s811 + $0x28] sm:$0xf]
      %v823 = vld [vmem:[%s811 + $0x2c] sm:$0xf]
      %v824 = vld [vmem:[%s811 + $0x30] sm:$0xf]
      %v825 = vld [vmem:[%s811 + $0x34] sm:$0xf]
      %v826 = vld [vmem:[%s811 + $0x38] sm:$0xf]
      %v827 = vld [vmem:[%s811 + $0x3c] sm:$0xf]
      %v861 = vunpack.c.l.b16 %v778
      %v862 = vunpack.c.l.b16 %v779
      %v863 = vunpack.c.l.b16 %v780
      %v864 = vunpack.c.l.b16 %v781
      %v865 = vunpack.c.l.b16 %v782
      %v866 = vunpack.c.l.b16 %v783
      %v867 = vunpack.c.l.b16 %v784
      %v868 = vunpack.c.l.b16 %v785
      %v869 = vunpack.c.l.b16 %v786
      %v870 = vunpack.c.l.b16 %v787
      %v871 = vunpack.c.l.b16 %v788
      %v872 = vunpack.c.l.b16 %v789
      %v873 = vunpack.c.l.b16 %v790
      %v874 = vunpack.c.l.b16 %v791
      %v875 = vunpack.c.l.b16 %v792
      %v876 = vunpack.c.l.b16 %v793
      %v877 = vunpack.c.l.b16 %v794
      %v878 = vunpack.c.l.b16 %v795
      %v879 = vunpack.c.l.b16 %v796
      %v880 = vunpack.c.l.b16 %v797
      %v881 = vunpack.c.l.b16 %v798
      %v882 = vunpack.c.l.b16 %v799
      %v883 = vunpack.c.l.b16 %v800
      %v884 = vunpack.c.l.b16 %v801
      %v885 = vunpack.c.l.b16 %v802
      %v886 = vunpack.c.l.b16 %v803
      %v887 = vunpack.c.l.b16 %v804
      %v888 = vunpack.c.l.b16 %v805
      %v889 = vunpack.c.l.b16 %v806
      %v890 = vunpack.c.l.b16 %v807
      %v891 = vunpack.c.l.b16 %v808
      %v892 = vunpack.c.l.b16 %v809
      %v893 = vunpack.c.l.b16 %v810
      %v894 = vpack.c.b16 %v862, %v861
      %v895 = vpack.c.b16 %v864, %v863
      %v896 = vpack.c.b16 %v866, %v865
      %v897 = vpack.c.b16 %v868, %v867
      %v898 = vpack.c.b16 %v870, %v869
      %v899 = vpack.c.b16 %v872, %v871
      %v900 = vpack.c.b16 %v874, %v873
      %v901 = vpack.c.b16 %v876, %v875
      %v902 = vpack.c.b16 %v878, %v877
      %v903 = vpack.c.b16 %v880, %v879
      %v904 = vpack.c.b16 %v882, %v881
      %v905 = vpack.c.b16 %v884, %v883
      %v906 = vpack.c.b16 %v886, %v885
      %v907 = vpack.c.b16 %v888, %v887
      %v908 = vpack.c.b16 %v890, %v889
      %v909 = vpack.c.b16 %v892, %v891
      %v910 = vpack.c.b16 %v893, %v893
      %vm911 = vsmask.f32 7424
      %v913 = vshrl.u32 %v894, 16
      %v915 = vshll.u32 %v894, 16
      %v917 = vrot.slane %v915, 1
      %v918 = vor.u32 %v913, %v917
      %v920 = vshll.u32 %v895, 16
      %v922 = vrot.slane %v920, 1
      %v923 = vsel %vm911, %v918, %v922
      %v924 = vshrl.u32 %v895, 16
      %v926 = vor.u32 %v924, %v922
      %v928 = vshll.u32 %v896, 16
      %v930 = vrot.slane %v928, 1
      %v931 = vsel %vm911, %v926, %v930
      %v932 = vshrl.u32 %v896, 16
      %v934 = vor.u32 %v932, %v930
      %v936 = vshll.u32 %v897, 16
      %v938 = vrot.slane %v936, 1
      %v939 = vsel %vm911, %v934, %v938
      %v940 = vshrl.u32 %v897, 16
      %v942 = vor.u32 %v940, %v938
      %v944 = vshll.u32 %v898, 16
      %v946 = vrot.slane %v944, 1
      %v947 = vsel %vm911, %v942, %v946
      %v948 = vshrl.u32 %v898, 16
      %v950 = vor.u32 %v948, %v946
      %v952 = vshll.u32 %v899, 16
      %v954 = vrot.slane %v952, 1
      %v955 = vsel %vm911, %v950, %v954
      %v956 = vshrl.u32 %v899, 16
      %v958 = vor.u32 %v956, %v954
      %v960 = vshll.u32 %v900, 16
      %v962 = vrot.slane %v960, 1
      %v963 = vsel %vm911, %v958, %v962
      %v964 = vshrl.u32 %v900, 16
      %v966 = vor.u32 %v964, %v962
      %v968 = vshll.u32 %v901, 16
      %v970 = vrot.slane %v968, 1
      %v971 = vsel %vm911, %v966, %v970
      %v972 = vshrl.u32 %v901, 16
      %v974 = vor.u32 %v972, %v970
      %v976 = vshll.u32 %v902, 16
      %v978 = vrot.slane %v976, 1
      %v979 = vsel %vm911, %v974, %v978
      %v980 = vshrl.u32 %v902, 16
      %v982 = vor.u32 %v980, %v978
      %v984 = vshll.u32 %v903, 16
      %v986 = vrot.slane %v984, 1
      %v987 = vsel %vm911, %v982, %v986
      %v988 = vshrl.u32 %v903, 16
      %v990 = vor.u32 %v988, %v986
      %v992 = vshll.u32 %v904, 16
      %v994 = vrot.slane %v992, 1
      %v995 = vsel %vm911, %v990, %v994
      %v996 = vshrl.u32 %v904, 16
      %v998 = vor.u32 %v996, %v994
      %v1000 = vshll.u32 %v905, 16
      %v1002 = vrot.slane %v1000, 1
      %v1003 = vsel %vm911, %v998, %v1002
      %v1004 = vshrl.u32 %v905, 16
      %v1006 = vor.u32 %v1004, %v1002
      %v1008 = vshll.u32 %v906, 16
      %v1010 = vrot.slane %v1008, 1
      %v1011 = vsel %vm911, %v1006, %v1010
      %v1012 = vshrl.u32 %v906, 16
      %v1014 = vor.u32 %v1012, %v1010
      %v1016 = vshll.u32 %v907, 16
      %v1018 = vrot.slane %v1016, 1
      %v1019 = vsel %vm911, %v1014, %v1018
      %v1020 = vshrl.u32 %v907, 16
      %v1022 = vor.u32 %v1020, %v1018
      %v1024 = vshll.u32 %v908, 16
      %v1026 = vrot.slane %v1024, 1
      %v1027 = vsel %vm911, %v1022, %v1026
      %v1028 = vshrl.u32 %v908, 16
      %v1030 = vor.u32 %v1028, %v1026
      %v1032 = vshll.u32 %v909, 16
      %v1034 = vrot.slane %v1032, 1
      %v1035 = vsel %vm911, %v1030, %v1034
      %v1036 = vshrl.u32 %v909, 16
      %v1038 = vor.u32 %v1036, %v1034
      %v1040 = vshll.u32 %v910, 16
      %v1042 = vrot.slane %v1040, 1
      %v1043 = vsel %vm911, %v1038, %v1042
      %v1076 = vunpack.c.l.b16 %v812
      %v1077 = vunpack.c.l.b16 %v813
      %v1078 = vunpack.c.l.b16 %v814
      %v1079 = vunpack.c.l.b16 %v815
      %v1080 = vunpack.c.l.b16 %v816
      %v1081 = vunpack.c.l.b16 %v817
      %v1082 = vunpack.c.l.b16 %v818
      %v1083 = vunpack.c.l.b16 %v819
      %v1084 = vunpack.c.l.b16 %v820
      %v1085 = vunpack.c.l.b16 %v821
      %v1086 = vunpack.c.l.b16 %v822
      %v1087 = vunpack.c.l.b16 %v823
      %v1088 = vunpack.c.l.b16 %v824
      %v1089 = vunpack.c.l.b16 %v825
      %v1090 = vunpack.c.l.b16 %v826
      %v1091 = vunpack.c.l.b16 %v827
      %v1092 = vpack.c.b16 %v1077, %v1076
      %v1093 = vpack.c.b16 %v1079, %v1078
      %v1094 = vpack.c.b16 %v1081, %v1080
      %v1095 = vpack.c.b16 %v1083, %v1082
      %v1096 = vpack.c.b16 %v1085, %v1084
      %v1097 = vpack.c.b16 %v1087, %v1086
      %v1098 = vpack.c.b16 %v1089, %v1088
      %v1099 = vpack.c.b16 %v1091, %v1090
      %1108 = vmatprep.subr.bf16.mxu0 0
      %1109 = vmatpush1.bf16.msra.mxu0 %v1092
      %1110 = vmatprep.subr.bf16.mxu0 0
      %1111 = vmatpush1.bf16.msra.mxu0 %v1093
      %1112 = vmatprep.subr.bf16.mxu0 0
      %1113 = vmatpush1.bf16.msra.mxu0 %v1094
      %1114 = vmatprep.subr.bf16.mxu0 0
      %1115 = vmatpush1.bf16.msra.mxu0 %v1095
      %1116 = vmatprep.subr.bf16.mxu0 0
      %1117 = vmatpush1.bf16.msra.mxu0 %v1096
      %1118 = vmatprep.subr.bf16.mxu0 0
      %1119 = vmatpush1.bf16.msra.mxu0 %v1097
      %1120 = vmatprep.subr.bf16.mxu0 0
      %1121 = vmatpush1.bf16.msra.mxu0 %v1098
      %1122 = vmatprep.subr.bf16.mxu0 0
      %1123 = vmatpush1.bf16.msra.mxu0 %v1099
      %1124 = vmatprep.subr.bf16.mxu0 0
      %1125 = vmatpush1.bf16.msra.mxu0 0
      %1126 = vmatprep.subr.bf16.mxu0 0
      %1127 = vmatpush1.bf16.msra.mxu0 0
      %1128 = vmatprep.subr.bf16.mxu0 0
      %1129 = vmatpush1.bf16.msra.mxu0 0
      %1130 = vmatprep.subr.bf16.mxu0 0
      %1131 = vmatpush1.bf16.msra.mxu0 0
      %1132 = vmatprep.subr.bf16.mxu0 0
      %1133 = vmatpush1.bf16.msra.mxu0 0
      %1134 = vmatprep.subr.bf16.mxu0 0
      %1135 = vmatpush1.bf16.msra.mxu0 0
      %1136 = vmatprep.subr.bf16.mxu0 0
      %1137 = vmatpush1.bf16.msra.mxu0 0
      %1138 = vmatprep.subr.bf16.mxu0 0
      %1139 = vmatpush1.bf16.msra.mxu0 0
      %1140 = vmatprep.mubr.bf16.mxu0 0
      %1141 = vmatmul.mubr.bf16.gmra.mrb[0].mxu0 %v923
      %v1142 = vpop.f32.mrb[0].mxu0
      %v1143 = vadd.f32 0.0, %v1142
      %v1144 = vpop.f32.mrb[0].mxu0
      %v1145 = vpop.f32.mrb[0].mxu0
      %v1146 = vadd.f32 0.0, %v1145
      %v1147 = vpop.f32.mrb[0].mxu0
      %1148 = vmatprep.mubr.bf16.mxu0 0
      %1149 = vmatmul.mubr.bf16.gmra.mrb[0].mxu0 %v931
      %v1150 = vpop.f32.mrb[0].mxu0
      %v1151 = vadd.f32 0.0, %v1150
      %v1152 = vpop.f32.mrb[0].mxu0
      %v1153 = vpop.f32.mrb[0].mxu0
      %v1154 = vadd.f32 0.0, %v1153
      %v1155 = vpop.f32.mrb[0].mxu0
      %1156 = vmatprep.mubr.bf16.mxu0 0
      %1157 = vmatmul.mubr.bf16.gmra.mrb[0].mxu0 %v939
      %v1158 = vpop.f32.mrb[0].mxu0
      %v1159 = vadd.f32 0.0, %v1158
      %v1160 = vpop.f32.mrb[0].mxu0
      %v1161 = vpop.f32.mrb[0].mxu0
      %v1162 = vadd.f32 0.0, %v1161
      %v1163 = vpop.f32.mrb[0].mxu0
      %1164 = vmatprep.mubr.bf16.mxu0 0
      %1165 = vmatmul.mubr.bf16.gmra.mrb[0].mxu0 %v947
      %v1166 = vpop.f32.mrb[0].mxu0
      %v1167 = vadd.f32 0.0, %v1166
      %v1168 = vpop.f32.mrb[0].mxu0
      %v1169 = vpop.f32.mrb[0].mxu0
      %v1170 = vadd.f32 0.0, %v1169
      %v1171 = vpop.f32.mrb[0].mxu0
      %1172 = vmatprep.mubr.bf16.mxu0 0
      %1173 = vmatmul.mubr.bf16.gmra.mrb[0].mxu0 %v955
      %v1174 = vpop.f32.mrb[0].mxu0
      %v1175 = vadd.f32 0.0, %v1174
      %v1176 = vpop.f32.mrb[0].mxu0
      %v1177 = vpop.f32.mrb[0].mxu0
      %v1178 = vadd.f32 0.0, %v1177
      %v1179 = vpop.f32.mrb[0].mxu0
      %1180 = vmatprep.mubr.bf16.mxu0 0
      %1181 = vmatmul.mubr.bf16.gmra.mrb[0].mxu0 %v963
      %v1182 = vpop.f32.mrb[0].mxu0
      %v1183 = vadd.f32 0.0, %v1182
      %v1184 = vpop.f32.mrb[0].mxu0
      %v1185 = vpop.f32.mrb[0].mxu0
      %v1186 = vadd.f32 0.0, %v1185
      %v1187 = vpop.f32.mrb[0].mxu0
      %1188 = vmatprep.mubr.bf16.mxu0 0
      %1189 = vmatmul.mubr.bf16.gmra.mrb[0].mxu0 %v971
      %v1190 = vpop.f32.mrb[0].mxu0
      %v1191 = vadd.f32 0.0, %v1190
      %v1192 = vpop.f32.mrb[0].mxu0
      %v1193 = vpop.f32.mrb[0].mxu0
      %v1194 = vadd.f32 0.0, %v1193
      %v1195 = vpop.f32.mrb[0].mxu0
      %1196 = vmatprep.mubr.bf16.mxu0 0
      %1197 = vmatmul.mubr.bf16.gmra.mrb[0].mxu0 %v979
      %v1198 = vpop.f32.mrb[0].mxu0
      %v1199 = vadd.f32 0.0, %v1198
      %v1200 = vpop.f32.mrb[0].mxu0
      %v1201 = vpop.f32.mrb[0].mxu0
      %v1202 = vadd.f32 0.0, %v1201
      %v1203 = vpop.f32.mrb[0].mxu0
      %1204 = vmatprep.mubr.bf16.mxu0 0
      %1205 = vmatmul.mubr.bf16.gmra.mrb[0].mxu0 %v987
      %v1206 = vpop.f32.mrb[0].mxu0
      %v1207 = vadd.f32 0.0, %v1206
      %v1208 = vpop.f32.mrb[0].mxu0
      %v1209 = vpop.f32.mrb[0].mxu0
      %v1210 = vadd.f32 0.0, %v1209
      %v1211 = vpop.f32.mrb[0].mxu0
      %1212 = vmatprep.mubr.bf16.mxu0 0
      %1213 = vmatmul.mubr.bf16.gmra.mrb[0].mxu0 %v995
      %v1214 = vpop.f32.mrb[0].mxu0
      %v1215 = vadd.f32 0.0, %v1214
      %v1216 = vpop.f32.mrb[0].mxu0
      %v1217 = vpop.f32.mrb[0].mxu0
      %v1218 = vadd.f32 0.0, %v1217
      %v1219 = vpop.f32.mrb[0].mxu0
      %1220 = vmatprep.mubr.bf16.mxu0 0
      %1221 = vmatmul.mubr.bf16.gmra.mrb[0].mxu0 %v1003
      %v1222 = vpop.f32.mrb[0].mxu0
      %v1223 = vadd.f32 0.0, %v1222
      %v1224 = vpop.f32.mrb[0].mxu0
      %v1225 = vpop.f32.mrb[0].mxu0
      %v1226 = vadd.f32 0.0, %v1225
      %v1227 = vpop.f32.mrb[0].mxu0
      %1228 = vmatprep.mubr.bf16.mxu0 0
      %1229 = vmatmul.mubr.bf16.gmra.mrb[0].mxu0 %v1011
      %v1230 = vpop.f32.mrb[0].mxu0
      %v1231 = vadd.f32 0.0, %v1230
      %v1232 = vpop.f32.mrb[0].mxu0
      %v1233 = vpop.f32.mrb[0].mxu0
      %v1234 = vadd.f32 0.0, %v1233
      %v1235 = vpop.f32.mrb[0].mxu0
      %1236 = vmatprep.mubr.bf16.mxu0 0
      %1237 = vmatmul.mubr.bf16.gmra.mrb[0].mxu0 %v1019
      %v1238 = vpop.f32.mrb[0].mxu0
      %v1239 = vadd.f32 0.0, %v1238
      %v1240 = vpop.f32.mrb[0].mxu0
      %v1241 = vpop.f32.mrb[0].mxu0
      %v1242 = vadd.f32 0.0, %v1241
      %v1243 = vpop.f32.mrb[0].mxu0
      %1244 = vmatprep.mubr.bf16.mxu0 0
      %1245 = vmatmul.mubr.bf16.gmra.mrb[0].mxu0 %v1027
      %v1246 = vpop.f32.mrb[0].mxu0
      %v1247 = vadd.f32 0.0, %v1246
      %v1248 = vpop.f32.mrb[0].mxu0
      %v1249 = vpop.f32.mrb[0].mxu0
      %v1250 = vadd.f32 0.0, %v1249
      %v1251 = vpop.f32.mrb[0].mxu0
      %1252 = vmatprep.mubr.bf16.mxu0 0
      %1253 = vmatmul.mubr.bf16.gmra.mrb[0].mxu0 %v1035
      %v1254 = vpop.f32.mrb[0].mxu0
      %v1255 = vadd.f32 0.0, %v1254
      %v1256 = vpop.f32.mrb[0].mxu0
      %v1257 = vpop.f32.mrb[0].mxu0
      %v1258 = vadd.f32 0.0, %v1257
      %v1259 = vpop.f32.mrb[0].mxu0
      %1260 = vmatprep.mubr.bf16.mxu0 0
      %1261 = vmatmul.mubr.bf16.gmra.mrb[0].mxu0 %v1043
      %v1262 = vpop.f32.mrb[0].mxu0
      %v1263 = vadd.f32 0.0, %v1262
      %v1264 = vpop.f32.mrb[0].mxu0
      %v1265 = vpop.f32.mrb[0].mxu0
      %v1266 = vadd.f32 0.0, %v1265
      %v1267 = vpop.f32.mrb[0].mxu0
      %1268 = vdwg.mxu0
      %v1269 = vadd.f32 %v746, %v1143
      %v1270 = vadd.f32 %v747, %v1146
      %v1271 = vadd.f32 %v748, %v1151
      %v1272 = vadd.f32 %v749, %v1154
      %v1273 = vadd.f32 %v750, %v1159
      %v1274 = vadd.f32 %v751, %v1162
      %v1275 = vadd.f32 %v752, %v1167
      %v1276 = vadd.f32 %v753, %v1170
      %v1277 = vadd.f32 %v754, %v1175
      %v1278 = vadd.f32 %v755, %v1178
      %v1279 = vadd.f32 %v756, %v1183
      %v1280 = vadd.f32 %v757, %v1186
      %v1281 = vadd.f32 %v758, %v1191
      %v1282 = vadd.f32 %v759, %v1194
      %v1283 = vadd.f32 %v760, %v1199
      %v1284 = vadd.f32 %v761, %v1202
      %v1285 = vadd.f32 %v762, %v1207
      %v1286 = vadd.f32 %v763, %v1210
      %v1287 = vadd.f32 %v764, %v1215
      %v1288 = vadd.f32 %v765, %v1218
      %v1289 = vadd.f32 %v766, %v1223
      %v1290 = vadd.f32 %v767, %v1226
      %v1291 = vadd.f32 %v768, %v1231
      %v1292 = vadd.f32 %v769, %v1234
      %v1293 = vadd.f32 %v770, %v1239
      %v1294 = vadd.f32 %v771, %v1242
      %v1295 = vadd.f32 %v772, %v1247
      %v1296 = vadd.f32 %v773, %v1250
      %v1297 = vadd.f32 %v774, %v1255
      %v1298 = vadd.f32 %v775, %v1258
      %v1299 = vadd.f32 %v776, %v1263
      %v1300 = vadd.f32 %v777, %v1266
      %1301 = vst [vmem:[#allocation4] sm:$0xff] %v1269
      %1302 = vst [vmem:[#allocation4 + $0x8] sm:$0xff] %v1270
      %1303 = vst [vmem:[#allocation4 + $0x10] sm:$0xff] %v1271
      %1304 = vst [vmem:[#allocation4 + $0x18] sm:$0xff] %v1272
      %1305 = vst [vmem:[#allocation4 + $0x20] sm:$0xff] %v1273
      %1306 = vst [vmem:[#allocation4 + $0x28] sm:$0xff] %v1274
      %1307 = vst [vmem:[#allocation4 + $0x30] sm:$0xff] %v1275
      %1308 = vst [vmem:[#allocation4 + $0x38] sm:$0xff] %v1276
      %1309 = vst [vmem:[#allocation4 + $0x40] sm:$0xff] %v1277
      %1310 = vst [vmem:[#allocation4 + $0x48] sm:$0xff] %v1278
      %1311 = vst [vmem:[#allocation4 + $0x50] sm:$0xff] %v1279
      %1312 = vst [vmem:[#allocation4 + $0x58] sm:$0xff] %v1280
      %1313 = vst [vmem:[#allocation4 + $0x60] sm:$0xff] %v1281
      %1314 = vst [vmem:[#allocation4 + $0x68] sm:$0xff] %v1282
      %1315 = vst [vmem:[#allocation4 + $0x70] sm:$0xff] %v1283
      %1316 = vst [vmem:[#allocation4 + $0x78] sm:$0xff] %v1284
      %1317 = vst [vmem:[#allocation4 + $0x80] sm:$0xff] %v1285
      %1318 = vst [vmem:[#allocation4 + $0x88] sm:$0xff] %v1286
      %1319 = vst [vmem:[#allocation4 + $0x90] sm:$0xff] %v1287
      %1320 = vst [vmem:[#allocation4 + $0x98] sm:$0xff] %v1288
      %1321 = vst [vmem:[#allocation4 + $0xa0] sm:$0xff] %v1289
      %1322 = vst [vmem:[#allocation4 + $0xa8] sm:$0xff] %v1290
      %1323 = vst [vmem:[#allocation4 + $0xb0] sm:$0xff] %v1291
      %1324 = vst [vmem:[#allocation4 + $0xb8] sm:$0xff] %v1292
      %1325 = vst [vmem:[#allocation4 + $0xc0] sm:$0xff] %v1293
      %1326 = vst [vmem:[#allocation4 + $0xc8] sm:$0xff] %v1294
      %1327 = vst [vmem:[#allocation4 + $0xd0] sm:$0xff] %v1295
      %1328 = vst [vmem:[#allocation4 + $0xd8] sm:$0xff] %v1296
      %1329 = vst [vmem:[#allocation4 + $0xe0] sm:$0xff] %v1297
      %1330 = vst [vmem:[#allocation4 + $0xe8] sm:$0xff] %v1298
      %1331 = vst [vmem:[#allocation4 + $0xf0] sm:$0xff] %v1299
      %1332 = vst [vmem:[#allocation4 + $0xf8] sm:$0xff] %v1300
      %v1333 = vld [vmem:[#allocation4] sm:$0xff]
      %v1334 = vld [vmem:[#allocation4 + $0x8] sm:$0xff]
      %v1335 = vld [vmem:[#allocation4 + $0x10] sm:$0xff]
      %v1336 = vld [vmem:[#allocation4 + $0x18] sm:$0xff]
      %v1337 = vld [vmem:[#allocation4 + $0x20] sm:$0xff]
      %v1338 = vld [vmem:[#allocation4 + $0x28] sm:$0xff]
      %v1339 = vld [vmem:[#allocation4 + $0x30] sm:$0xff]
      %v1340 = vld [vmem:[#allocation4 + $0x38] sm:$0xff]
      %v1341 = vld [vmem:[#allocation4 + $0x40] sm:$0xff]
      %v1342 = vld [vmem:[#allocation4 + $0x48] sm:$0xff]
      %v1343 = vld [vmem:[#allocation4 + $0x50] sm:$0xff]
      %v1344 = vld [vmem:[#allocation4 + $0x58] sm:$0xff]
      %v1345 = vld [vmem:[#allocation4 + $0x60] sm:$0xff]
      %v1346 = vld [vmem:[#allocation4 + $0x68] sm:$0xff]
      %v1347 = vld [vmem:[#allocation4 + $0x70] sm:$0xff]
      %v1348 = vld [vmem:[#allocation4 + $0x78] sm:$0xff]
      %v1349 = vld [vmem:[#allocation4 + $0x80] sm:$0xff]
      %v1350 = vld [vmem:[#allocation4 + $0x88] sm:$0xff]
      %v1351 = vld [vmem:[#allocation4 + $0x90] sm:$0xff]
      %v1352 = vld [vmem:[#allocation4 + $0x98] sm:$0xff]
      %v1353 = vld [vmem:[#allocation4 + $0xa0] sm:$0xff]
      %v1354 = vld [vmem:[#allocation4 + $0xa8] sm:$0xff]
      %v1355 = vld [vmem:[#allocation4 + $0xb0] sm:$0xff]
      %v1356 = vld [vmem:[#allocation4 + $0xb8] sm:$0xff]
      %v1357 = vld [vmem:[#allocation4 + $0xc0] sm:$0xff]
      %v1358 = vld [vmem:[#allocation4 + $0xc8] sm:$0xff]
      %v1359 = vld [vmem:[#allocation4 + $0xd0] sm:$0xff]
      %v1360 = vld [vmem:[#allocation4 + $0xd8] sm:$0xff]
      %v1361 = vld [vmem:[#allocation4 + $0xe0] sm:$0xff]
      %v1362 = vld [vmem:[#allocation4 + $0xe8] sm:$0xff]
      %v1363 = vld [vmem:[#allocation4 + $0xf0] sm:$0xff]
      %v1364 = vld [vmem:[#allocation4 + $0xf8] sm:$0xff]
      %v1365 = vld [vmem:[%s355] sm:$0xe]
      %v1366 = vld [vmem:[%s355 + $0x4] sm:$0xf]
      %v1367 = vld [vmem:[%s355 + $0x8] sm:$0xf]
      %v1368 = vld [vmem:[%s355 + $0xc] sm:$0xf]
      %v1369 = vld [vmem:[%s355 + $0x10] sm:$0xf]
      %v1370 = vld [vmem:[%s355 + $0x14] sm:$0xf]
      %v1371 = vld [vmem:[%s355 + $0x18] sm:$0xf]
      %v1372 = vld [vmem:[%s355 + $0x1c] sm:$0xf]
      %v1373 = vld [vmem:[%s355 + $0x20] sm:$0xf]
      %v1374 = vld [vmem:[%s355 + $0x24] sm:$0xf]
      %v1375 = vld [vmem:[%s355 + $0x28] sm:$0xf]
      %v1376 = vld [vmem:[%s355 + $0x2c] sm:$0xf]
      %v1377 = vld [vmem:[%s355 + $0x30] sm:$0xf]
      %v1378 = vld [vmem:[%s355 + $0x34] sm:$0xf]
      %v1379 = vld [vmem:[%s355 + $0x38] sm:$0xf]
      %v1380 = vld [vmem:[%s355 + $0x3c] sm:$0xf]
      %v1381 = vld [vmem:[%s355 + $0x40] sm:$0xf]
      %v1382 = vld [vmem:[%s355 + $0x44] sm:$0xf]
      %v1383 = vld [vmem:[%s355 + $0x48] sm:$0xf]
      %v1384 = vld [vmem:[%s355 + $0x4c] sm:$0xf]
      %v1385 = vld [vmem:[%s355 + $0x50] sm:$0xf]
      %v1386 = vld [vmem:[%s355 + $0x54] sm:$0xf]
      %v1387 = vld [vmem:[%s355 + $0x58] sm:$0xf]
      %v1388 = vld [vmem:[%s355 + $0x5c] sm:$0xf]
      %v1389 = vld [vmem:[%s355 + $0x60] sm:$0xf]
      %v1390 = vld [vmem:[%s355 + $0x64] sm:$0xf]
      %v1391 = vld [vmem:[%s355 + $0x68] sm:$0xf]
      %v1392 = vld [vmem:[%s355 + $0x6c] sm:$0xf]
      %v1393 = vld [vmem:[%s355 + $0x70] sm:$0xf]
      %v1394 = vld [vmem:[%s355 + $0x74] sm:$0xf]
      %v1395 = vld [vmem:[%s355 + $0x78] sm:$0xf]
      %v1396 = vld [vmem:[%s355 + $0x7c] sm:$0xf]
      %v1397 = vld [vmem:[%s355 + $0x80] sm:$0x1]
      %s1398 = scalar_lea.vmem %s1, 128
      %v1399 = vld [vmem:[%s1398] sm:$0xf]
      %v1400 = vld [vmem:[%s1398 + $0x4] sm:$0xf]
      %v1401 = vld [vmem:[%s1398 + $0x8] sm:$0xf]
      %v1402 = vld [vmem:[%s1398 + $0xc] sm:$0xf]
      %v1403 = vld [vmem:[%s1398 + $0x10] sm:$0xf]
      %v1404 = vld [vmem:[%s1398 + $0x14] sm:$0xf]
      %v1405 = vld [vmem:[%s1398 + $0x18] sm:$0xf]
      %v1406 = vld [vmem:[%s1398 + $0x1c] sm:$0xf]
      %v1407 = vld [vmem:[%s1398 + $0x20] sm:$0xf]
      %v1408 = vld [vmem:[%s1398 + $0x24] sm:$0xf]
      %v1409 = vld [vmem:[%s1398 + $0x28] sm:$0xf]
      %v1410 = vld [vmem:[%s1398 + $0x2c] sm:$0xf]
      %v1411 = vld [vmem:[%s1398 + $0x30] sm:$0xf]
      %v1412 = vld [vmem:[%s1398 + $0x34] sm:$0xf]
      %v1413 = vld [vmem:[%s1398 + $0x38] sm:$0xf]
      %v1414 = vld [vmem:[%s1398 + $0x3c] sm:$0xf]
      %v1448 = vunpack.c.l.b16 %v1365
      %v1449 = vunpack.c.l.b16 %v1366
      %v1450 = vunpack.c.l.b16 %v1367
      %v1451 = vunpack.c.l.b16 %v1368
      %v1452 = vunpack.c.l.b16 %v1369
      %v1453 = vunpack.c.l.b16 %v1370
      %v1454 = vunpack.c.l.b16 %v1371
      %v1455 = vunpack.c.l.b16 %v1372
      %v1456 = vunpack.c.l.b16 %v1373
      %v1457 = vunpack.c.l.b16 %v1374
      %v1458 = vunpack.c.l.b16 %v1375
      %v1459 = vunpack.c.l.b16 %v1376
      %v1460 = vunpack.c.l.b16 %v1377
      %v1461 = vunpack.c.l.b16 %v1378
      %v1462 = vunpack.c.l.b16 %v1379
      %v1463 = vunpack.c.l.b16 %v1380
      %v1464 = vunpack.c.l.b16 %v1381
      %v1465 = vunpack.c.l.b16 %v1382
      %v1466 = vunpack.c.l.b16 %v1383
      %v1467 = vunpack.c.l.b16 %v1384
      %v1468 = vunpack.c.l.b16 %v1385
      %v1469 = vunpack.c.l.b16 %v1386
      %v1470 = vunpack.c.l.b16 %v1387
      %v1471 = vunpack.c.l.b16 %v1388
      %v1472 = vunpack.c.l.b16 %v1389
      %v1473 = vunpack.c.l.b16 %v1390
      %v1474 = vunpack.c.l.b16 %v1391
      %v1475 = vunpack.c.l.b16 %v1392
      %v1476 = vunpack.c.l.b16 %v1393
      %v1477 = vunpack.c.l.b16 %v1394
      %v1478 = vunpack.c.l.b16 %v1395
      %v1479 = vunpack.c.l.b16 %v1396
      %v1480 = vunpack.c.l.b16 %v1397
      %v1481 = vpack.c.b16 %v1449, %v1448
      %v1482 = vpack.c.b16 %v1451, %v1450
      %v1483 = vpack.c.b16 %v1453, %v1452
      %v1484 = vpack.c.b16 %v1455, %v1454
      %v1485 = vpack.c.b16 %v1457, %v1456
      %v1486 = vpack.c.b16 %v1459, %v1458
      %v1487 = vpack.c.b16 %v1461, %v1460
      %v1488 = vpack.c.b16 %v1463, %v1462
      %v1489 = vpack.c.b16 %v1465, %v1464
      %v1490 = vpack.c.b16 %v1467, %v1466
      %v1491 = vpack.c.b16 %v1469, %v1468
      %v1492 = vpack.c.b16 %v1471, %v1470
      %v1493 = vpack.c.b16 %v1473, %v1472
      %v1494 = vpack.c.b16 %v1475, %v1474
      %v1495 = vpack.c.b16 %v1477, %v1476
      %v1496 = vpack.c.b16 %v1479, %v1478
      %v1497 = vpack.c.b16 %v1480, %v1480
      %vm1498 = vcmask 1046528
      %v1499 = vrot.slane %v1481, 1
      %v1500 = vrot.slane %v1482, 1
      %v1501 = vsel %vm1498, %v1499, %v1500
      %v1502 = vrot.slane %v1483, 1
      %v1503 = vsel %vm1498, %v1500, %v1502
      %v1504 = vrot.slane %v1484, 1
      %v1505 = vsel %vm1498, %v1502, %v1504
      %v1506 = vrot.slane %v1485, 1
      %v1507 = vsel %vm1498, %v1504, %v1506
      %v1508 = vrot.slane %v1486, 1
      %v1509 = vsel %vm1498, %v1506, %v1508
      %v1510 = vrot.slane %v1487, 1
      %v1511 = vsel %vm1498, %v1508, %v1510
      %v1512 = vrot.slane %v1488, 1
      %v1513 = vsel %vm1498, %v1510, %v1512
      %v1514 = vrot.slane %v1489, 1
      %v1515 = vsel %vm1498, %v1512, %v1514
      %v1516 = vrot.slane %v1490, 1
      %v1517 = vsel %vm1498, %v1514, %v1516
      %v1518 = vrot.slane %v1491, 1
      %v1519 = vsel %vm1498, %v1516, %v1518
      %v1520 = vrot.slane %v1492, 1
      %v1521 = vsel %vm1498, %v1518, %v1520
      %v1522 = vrot.slane %v1493, 1
      %v1523 = vsel %vm1498, %v1520, %v1522
      %v1524 = vrot.slane %v1494, 1
      %v1525 = vsel %vm1498, %v1522, %v1524
      %v1526 = vrot.slane %v1495, 1
      %v1527 = vsel %vm1498, %v1524, %v1526
      %v1528 = vrot.slane %v1496, 1
      %v1529 = vsel %vm1498, %v1526, %v1528
      %v1530 = vrot.slane %v1497, 1
      %v1531 = vsel %vm1498, %v1528, %v1530
      %v1564 = vunpack.c.l.b16 %v1399
      %v1565 = vunpack.c.l.b16 %v1400
      %v1566 = vunpack.c.l.b16 %v1401
      %v1567 = vunpack.c.l.b16 %v1402
      %v1568 = vunpack.c.l.b16 %v1403
      %v1569 = vunpack.c.l.b16 %v1404
      %v1570 = vunpack.c.l.b16 %v1405
      %v1571 = vunpack.c.l.b16 %v1406
      %v1572 = vunpack.c.l.b16 %v1407
      %v1573 = vunpack.c.l.b16 %v1408
      %v1574 = vunpack.c.l.b16 %v1409
      %v1575 = vunpack.c.l.b16 %v1410
      %v1576 = vunpack.c.l.b16 %v1411
      %v1577 = vunpack.c.l.b16 %v1412
      %v1578 = vunpack.c.l.b16 %v1413
      %v1579 = vunpack.c.l.b16 %v1414
      %v1580 = vpack.c.b16 %v1565, %v1564
      %v1581 = vpack.c.b16 %v1567, %v1566
      %v1582 = vpack.c.b16 %v1569, %v1568
      %v1583 = vpack.c.b16 %v1571, %v1570
      %v1584 = vpack.c.b16 %v1573, %v1572
      %v1585 = vpack.c.b16 %v1575, %v1574
      %v1586 = vpack.c.b16 %v1577, %v1576
      %v1587 = vpack.c.b16 %v1579, %v1578
      %1596 = vmatprep.subr.bf16.mxu0 0
      %1597 = vmatpush1.bf16.msra.mxu0 %v1580
      %1598 = vmatprep.subr.bf16.mxu0 0
      %1599 = vmatpush1.bf16.msra.mxu0 %v1581
      %1600 = vmatprep.subr.bf16.mxu0 0
      %1601 = vmatpush1.bf16.msra.mxu0 %v1582
      %1602 = vmatprep.subr.bf16.mxu0 0
      %1603 = vmatpush1.bf16.msra.mxu0 %v1583
      %1604 = vmatprep.subr.bf16.mxu0 0
      %1605 = vmatpush1.bf16.msra.mxu0 %v1584
      %1606 = vmatprep.subr.bf16.mxu0 0
      %1607 = vmatpush1.bf16.msra.mxu0 %v1585
      %1608 = vmatprep.subr.bf16.mxu0 0
      %1609 = vmatpush1.bf16.msra.mxu0 %v1586
      %1610 = vmatprep.subr.bf16.mxu0 0
      %1611 = vmatpush1.bf16.msra.mxu0 %v1587
      %1612 = vmatprep.subr.bf16.mxu0 0
      %1613 = vmatpush1.bf16.msra.mxu0 0
      %1614 = vmatprep.subr.bf16.mxu0 0
      %1615 = vmatpush1.bf16.msra.mxu0 0
      %1616 = vmatprep.subr.bf16.mxu0 0
      %1617 = vmatpush1.bf16.msra.mxu0 0
      %1618 = vmatprep.subr.bf16.mxu0 0
      %1619 = vmatpush1.bf16.msra.mxu0 0
      %1620 = vmatprep.subr.bf16.mxu0 0
      %1621 = vmatpush1.bf16.msra.mxu0 0
      %1622 = vmatprep.subr.bf16.mxu0 0
      %1623 = vmatpush1.bf16.msra.mxu0 0
      %1624 = vmatprep.subr.bf16.mxu0 0
      %1625 = vmatpush1.bf16.msra.mxu0 0
      %1626 = vmatprep.subr.bf16.mxu0 0
      %1627 = vmatpush1.bf16.msra.mxu0 0
      %1628 = vmatprep.mubr.bf16.mxu0 0
      %1629 = vmatmul.mubr.bf16.gmra.mrb[0].mxu0 %v1501
      %v1630 = vpop.f32.mrb[0].mxu0
      %v1631 = vadd.f32 0.0, %v1630
      %v1632 = vpop.f32.mrb[0].mxu0
      %v1633 = vpop.f32.mrb[0].mxu0
      %v1634 = vadd.f32 0.0, %v1633
      %v1635 = vpop.f32.mrb[0].mxu0
      %1636 = vmatprep.mubr.bf16.mxu0 0
      %1637 = vmatmul.mubr.bf16.gmra.mrb[0].mxu0 %v1503
      %v1638 = vpop.f32.mrb[0].mxu0
      %v1639 = vadd.f32 0.0, %v1638
      %v1640 = vpop.f32.mrb[0].mxu0
      %v1641 = vpop.f32.mrb[0].mxu0
      %v1642 = vadd.f32 0.0, %v1641
      %v1643 = vpop.f32.mrb[0].mxu0
      %1644 = vmatprep.mubr.bf16.mxu0 0
      %1645 = vmatmul.mubr.bf16.gmra.mrb[0].mxu0 %v1505
      %v1646 = vpop.f32.mrb[0].mxu0
      %v1647 = vadd.f32 0.0, %v1646
      %v1648 = vpop.f32.mrb[0].mxu0
      %v1649 = vpop.f32.mrb[0].mxu0
      %v1650 = vadd.f32 0.0, %v1649
      %v1651 = vpop.f32.mrb[0].mxu0
      %1652 = vmatprep.mubr.bf16.mxu0 0
      %1653 = vmatmul.mubr.bf16.gmra.mrb[0].mxu0 %v1507
      %v1654 = vpop.f32.mrb[0].mxu0
      %v1655 = vadd.f32 0.0, %v1654
      %v1656 = vpop.f32.mrb[0].mxu0
      %v1657 = vpop.f32.mrb[0].mxu0
      %v1658 = vadd.f32 0.0, %v1657
      %v1659 = vpop.f32.mrb[0].mxu0
      %1660 = vmatprep.mubr.bf16.mxu0 0
      %1661 = vmatmul.mubr.bf16.gmra.mrb[0].mxu0 %v1509
      %v1662 = vpop.f32.mrb[0].mxu0
      %v1663 = vadd.f32 0.0, %v1662
      %v1664 = vpop.f32.mrb[0].mxu0
      %v1665 = vpop.f32.mrb[0].mxu0
      %v1666 = vadd.f32 0.0, %v1665
      %v1667 = vpop.f32.mrb[0].mxu0
      %1668 = vmatprep.mubr.bf16.mxu0 0
      %1669 = vmatmul.mubr.bf16.gmra.mrb[0].mxu0 %v1511
      %v1670 = vpop.f32.mrb[0].mxu0
      %v1671 = vadd.f32 0.0, %v1670
      %v1672 = vpop.f32.mrb[0].mxu0
      %v1673 = vpop.f32.mrb[0].mxu0
      %v1674 = vadd.f32 0.0, %v1673
      %v1675 = vpop.f32.mrb[0].mxu0
      %1676 = vmatprep.mubr.bf16.mxu0 0
      %1677 = vmatmul.mubr.bf16.gmra.mrb[0].mxu0 %v1513
      %v1678 = vpop.f32.mrb[0].mxu0
      %v1679 = vadd.f32 0.0, %v1678
      %v1680 = vpop.f32.mrb[0].mxu0
      %v1681 = vpop.f32.mrb[0].mxu0
      %v1682 = vadd.f32 0.0, %v1681
      %v1683 = vpop.f32.mrb[0].mxu0
      %1684 = vmatprep.mubr.bf16.mxu0 0
      %1685 = vmatmul.mubr.bf16.gmra.mrb[0].mxu0 %v1515
      %v1686 = vpop.f32.mrb[0].mxu0
      %v1687 = vadd.f32 0.0, %v1686
      %v1688 = vpop.f32.mrb[0].mxu0
      %v1689 = vpop.f32.mrb[0].mxu0
      %v1690 = vadd.f32 0.0, %v1689
      %v1691 = vpop.f32.mrb[0].mxu0
      %1692 = vmatprep.mubr.bf16.mxu0 0
      %1693 = vmatmul.mubr.bf16.gmra.mrb[0].mxu0 %v1517
      %v1694 = vpop.f32.mrb[0].mxu0
      %v1695 = vadd.f32 0.0, %v1694
      %v1696 = vpop.f32.mrb[0].mxu0
      %v1697 = vpop.f32.mrb[0].mxu0
      %v1698 = vadd.f32 0.0, %v1697
      %v1699 = vpop.f32.mrb[0].mxu0
      %1700 = vmatprep.mubr.bf16.mxu0 0
      %1701 = vmatmul.mubr.bf16.gmra.mrb[0].mxu0 %v1519
      %v1702 = vpop.f32.mrb[0].mxu0
      %v1703 = vadd.f32 0.0, %v1702
      %v1704 = vpop.f32.mrb[0].mxu0
      %v1705 = vpop.f32.mrb[0].mxu0
      %v1706 = vadd.f32 0.0, %v1705
      %v1707 = vpop.f32.mrb[0].mxu0
      %1708 = vmatprep.mubr.bf16.mxu0 0
      %1709 = vmatmul.mubr.bf16.gmra.mrb[0].mxu0 %v1521
      %v1710 = vpop.f32.mrb[0].mxu0
      %v1711 = vadd.f32 0.0, %v1710
      %v1712 = vpop.f32.mrb[0].mxu0
      %v1713 = vpop.f32.mrb[0].mxu0
      %v1714 = vadd.f32 0.0, %v1713
      %v1715 = vpop.f32.mrb[0].mxu0
      %1716 = vmatprep.mubr.bf16.mxu0 0
      %1717 = vmatmul.mubr.bf16.gmra.mrb[0].mxu0 %v1523
      %v1718 = vpop.f32.mrb[0].mxu0
      %v1719 = vadd.f32 0.0, %v1718
      %v1720 = vpop.f32.mrb[0].mxu0
      %v1721 = vpop.f32.mrb[0].mxu0
      %v1722 = vadd.f32 0.0, %v1721
      %v1723 = vpop.f32.mrb[0].mxu0
      %1724 = vmatprep.mubr.bf16.mxu0 0
      %1725 = vmatmul.mubr.bf16.gmra.mrb[0].mxu0 %v1525
      %v1726 = vpop.f32.mrb[0].mxu0
      %v1727 = vadd.f32 0.0, %v1726
      %v1728 = vpop.f32.mrb[0].mxu0
      %v1729 = vpop.f32.mrb[0].mxu0
      %v1730 = vadd.f32 0.0, %v1729
      %v1731 = vpop.f32.mrb[0].mxu0
      %1732 = vmatprep.mubr.bf16.mxu0 0
      %1733 = vmatmul.mubr.bf16.gmra.mrb[0].mxu0 %v1527
      %v1734 = vpop.f32.mrb[0].mxu0
      %v1735 = vadd.f32 0.0, %v1734
      %v1736 = vpop.f32.mrb[0].mxu0
      %v1737 = vpop.f32.mrb[0].mxu0
      %v1738 = vadd.f32 0.0, %v1737
      %v1739 = vpop.f32.mrb[0].mxu0
      %1740 = vmatprep.mubr.bf16.mxu0 0
      %1741 = vmatmul.mubr.bf16.gmra.mrb[0].mxu0 %v1529
      %v1742 = vpop.f32.mrb[0].mxu0
      %v1743 = vadd.f32 0.0, %v1742
      %v1744 = vpop.f32.mrb[0].mxu0
      %v1745 = vpop.f32.mrb[0].mxu0
      %v1746 = vadd.f32 0.0, %v1745
      %v1747 = vpop.f32.mrb[0].mxu0
      %1748 = vmatprep.mubr.bf16.mxu0 0
      %1749 = vmatmul.mubr.bf16.gmra.mrb[0].mxu0 %v1531
      %v1750 = vpop.f32.mrb[0].mxu0
      %v1751 = vadd.f32 0.0, %v1750
      %v1752 = vpop.f32.mrb[0].mxu0
      %v1753 = vpop.f32.mrb[0].mxu0
      %v1754 = vadd.f32 0.0, %v1753
      %v1755 = vpop.f32.mrb[0].mxu0
      %1756 = vdwg.mxu0
      %v1757 = vadd.f32 %v1333, %v1631
      %v1758 = vadd.f32 %v1334, %v1634
      %v1759 = vadd.f32 %v1335, %v1639
      %v1760 = vadd.f32 %v1336, %v1642
      %v1761 = vadd.f32 %v1337, %v1647
      %v1762 = vadd.f32 %v1338, %v1650
      %v1763 = vadd.f32 %v1339, %v1655
      %v1764 = vadd.f32 %v1340, %v1658
      %v1765 = vadd.f32 %v1341, %v1663
      %v1766 = vadd.f32 %v1342, %v1666
      %v1767 = vadd.f32 %v1343, %v1671
      %v1768 = vadd.f32 %v1344, %v1674
      %v1769 = vadd.f32 %v1345, %v1679
      %v1770 = vadd.f32 %v1346, %v1682
      %v1771 = vadd.f32 %v1347, %v1687
      %v1772 = vadd.f32 %v1348, %v1690
      %v1773 = vadd.f32 %v1349, %v1695
      %v1774 = vadd.f32 %v1350, %v1698
      %v1775 = vadd.f32 %v1351, %v1703
      %v1776 = vadd.f32 %v1352, %v1706
      %v1777 = vadd.f32 %v1353, %v1711
      %v1778 = vadd.f32 %v1354, %v1714
      %v1779 = vadd.f32 %v1355, %v1719
      %v1780 = vadd.f32 %v1356, %v1722
      %v1781 = vadd.f32 %v1357, %v1727
      %v1782 = vadd.f32 %v1358, %v1730
      %v1783 = vadd.f32 %v1359, %v1735
      %v1784 = vadd.f32 %v1360, %v1738
      %v1785 = vadd.f32 %v1361, %v1743
      %v1786 = vadd.f32 %v1362, %v1746
      %v1787 = vadd.f32 %v1363, %v1751
      %v1788 = vadd.f32 %v1364, %v1754
      %1789 = vst [vmem:[#allocation4] sm:$0xff] %v1757
      %1790 = vst [vmem:[#allocation4 + $0x8] sm:$0xff] %v1758
      %1791 = vst [vmem:[#allocation4 + $0x10] sm:$0xff] %v1759
      %1792 = vst [vmem:[#allocation4 + $0x18] sm:$0xff] %v1760
      %1793 = vst [vmem:[#allocation4 + $0x20] sm:$0xff] %v1761
      %1794 = vst [vmem:[#allocation4 + $0x28] sm:$0xff] %v1762
      %1795 = vst [vmem:[#allocation4 + $0x30] sm:$0xff] %v1763
      %1796 = vst [vmem:[#allocation4 + $0x38] sm:$0xff] %v1764
      %1797 = vst [vmem:[#allocation4 + $0x40] sm:$0xff] %v1765
      %1798 = vst [vmem:[#allocation4 + $0x48] sm:$0xff] %v1766
      %1799 = vst [vmem:[#allocation4 + $0x50] sm:$0xff] %v1767
      %1800 = vst [vmem:[#allocation4 + $0x58] sm:$0xff] %v1768
      %1801 = vst [vmem:[#allocation4 + $0x60] sm:$0xff] %v1769
      %1802 = vst [vmem:[#allocation4 + $0x68] sm:$0xff] %v1770
      %1803 = vst [vmem:[#allocation4 + $0x70] sm:$0xff] %v1771
      %1804 = vst [vmem:[#allocation4 + $0x78] sm:$0xff] %v1772
      %1805 = vst [vmem:[#allocation4 + $0x80] sm:$0xff] %v1773
      %1806 = vst [vmem:[#allocation4 + $0x88] sm:$0xff] %v1774
      %1807 = vst [vmem:[#allocation4 + $0x90] sm:$0xff] %v1775
      %1808 = vst [vmem:[#allocation4 + $0x98] sm:$0xff] %v1776
      %1809 = vst [vmem:[#allocation4 + $0xa0] sm:$0xff] %v1777
      %1810 = vst [vmem:[#allocation4 + $0xa8] sm:$0xff] %v1778
      %1811 = vst [vmem:[#allocation4 + $0xb0] sm:$0xff] %v1779
      %1812 = vst [vmem:[#allocation4 + $0xb8] sm:$0xff] %v1780
      %1813 = vst [vmem:[#allocation4 + $0xc0] sm:$0xff] %v1781
      %1814 = vst [vmem:[#allocation4 + $0xc8] sm:$0xff] %v1782
      %1815 = vst [vmem:[#allocation4 + $0xd0] sm:$0xff] %v1783
      %1816 = vst [vmem:[#allocation4 + $0xd8] sm:$0xff] %v1784
      %1817 = vst [vmem:[#allocation4 + $0xe0] sm:$0xff] %v1785
      %1818 = vst [vmem:[#allocation4 + $0xe8] sm:$0xff] %v1786
      %1819 = vst [vmem:[#allocation4 + $0xf0] sm:$0xff] %v1787
      %1820 = vst [vmem:[#allocation4 + $0xf8] sm:$0xff] %v1788
      %v1821 = vld [vmem:[#allocation4] sm:$0xff]
      %v1822 = vld [vmem:[#allocation4 + $0x8] sm:$0xff]
      %v1823 = vld [vmem:[#allocation4 + $0x10] sm:$0xff]
      %v1824 = vld [vmem:[#allocation4 + $0x18] sm:$0xff]
      %v1825 = vld [vmem:[#allocation4 + $0x20] sm:$0xff]
      %v1826 = vld [vmem:[#allocation4 + $0x28] sm:$0xff]
      %v1827 = vld [vmem:[#allocation4 + $0x30] sm:$0xff]
      %v1828 = vld [vmem:[#allocation4 + $0x38] sm:$0xff]
      %v1829 = vld [vmem:[#allocation4 + $0x40] sm:$0xff]
      %v1830 = vld [vmem:[#allocation4 + $0x48] sm:$0xff]
      %v1831 = vld [vmem:[#allocation4 + $0x50] sm:$0xff]
      %v1832 = vld [vmem:[#allocation4 + $0x58] sm:$0xff]
      %v1833 = vld [vmem:[#allocation4 + $0x60] sm:$0xff]
      %v1834 = vld [vmem:[#allocation4 + $0x68] sm:$0xff]
      %v1835 = vld [vmem:[#allocation4 + $0x70] sm:$0xff]
      %v1836 = vld [vmem:[#allocation4 + $0x78] sm:$0xff]
      %v1837 = vld [vmem:[#allocation4 + $0x80] sm:$0xff]
      %v1838 = vld [vmem:[#allocation4 + $0x88] sm:$0xff]
      %v1839 = vld [vmem:[#allocation4 + $0x90] sm:$0xff]
      %v1840 = vld [vmem:[#allocation4 + $0x98] sm:$0xff]
      %v1841 = vld [vmem:[#allocation4 + $0xa0] sm:$0xff]
      %v1842 = vld [vmem:[#allocation4 + $0xa8] sm:$0xff]
      %v1843 = vld [vmem:[#allocation4 + $0xb0] sm:$0xff]
      %v1844 = vld [vmem:[#allocation4 + $0xb8] sm:$0xff]
      %v1845 = vld [vmem:[#allocation4 + $0xc0] sm:$0xff]
      %v1846 = vld [vmem:[#allocation4 + $0xc8] sm:$0xff]
      %v1847 = vld [vmem:[#allocation4 + $0xd0] sm:$0xff]
      %v1848 = vld [vmem:[#allocation4 + $0xd8] sm:$0xff]
      %v1849 = vld [vmem:[#allocation4 + $0xe0] sm:$0xff]
      %v1850 = vld [vmem:[#allocation4 + $0xe8] sm:$0xff]
      %v1851 = vld [vmem:[#allocation4 + $0xf0] sm:$0xff]
      %v1852 = vld [vmem:[#allocation4 + $0xf8] sm:$0xff]
      %v1853 = vld [vmem:[%s2] sm:$0x1]
      %v1855 = vlaneseq
      %v1856 = vshrl.u32 %v1855, 7
      %v1857 = vsub.s32 0, %v1856
      %v1858 = vrot.slane %v1853, %v1857
      %v1860 = vmul.f32 %v1821, %v1858
      %v1861 = vmul.f32 %v1822, %v1858
      %v1862 = vmul.f32 %v1823, %v1858
      %v1863 = vmul.f32 %v1824, %v1858
      %v1864 = vmul.f32 %v1825, %v1858
      %v1865 = vmul.f32 %v1826, %v1858
      %v1866 = vmul.f32 %v1827, %v1858
      %v1867 = vmul.f32 %v1828, %v1858
      %v1868 = vmul.f32 %v1829, %v1858
      %v1869 = vmul.f32 %v1830, %v1858
      %v1870 = vmul.f32 %v1831, %v1858
      %v1871 = vmul.f32 %v1832, %v1858
      %v1872 = vmul.f32 %v1833, %v1858
      %v1873 = vmul.f32 %v1834, %v1858
      %v1874 = vmul.f32 %v1835, %v1858
      %v1875 = vmul.f32 %v1836, %v1858
      %v1876 = vmul.f32 %v1837, %v1858
      %v1877 = vmul.f32 %v1838, %v1858
      %v1878 = vmul.f32 %v1839, %v1858
      %v1879 = vmul.f32 %v1840, %v1858
      %v1880 = vmul.f32 %v1841, %v1858
      %v1881 = vmul.f32 %v1842, %v1858
      %v1882 = vmul.f32 %v1843, %v1858
      %v1883 = vmul.f32 %v1844, %v1858
      %v1884 = vmul.f32 %v1845, %v1858
      %v1885 = vmul.f32 %v1846, %v1858
      %v1886 = vmul.f32 %v1847, %v1858
      %v1887 = vmul.f32 %v1848, %v1858
      %v1888 = vmul.f32 %v1849, %v1858
      %v1889 = vmul.f32 %v1850, %v1858
      %v1890 = vmul.f32 %v1851, %v1858
      %v1891 = vmul.f32 %v1852, %v1858
      %v1892 = vld [vmem:[%s3] sm:$0x1]
      %v1894 = vlaneseq
      %v1895 = vshrl.u32 %v1894, 7
      %v1896 = vsub.s32 0, %v1895
      %v1897 = vrot.slane %v1892, %v1896
      %v1899 = vadd.f32 %v1860, %v1897
      %v1900 = vadd.f32 %v1861, %v1897
      %v1901 = vadd.f32 %v1862, %v1897
      %v1902 = vadd.f32 %v1863, %v1897
      %v1903 = vadd.f32 %v1864, %v1897
      %v1904 = vadd.f32 %v1865, %v1897
      %v1905 = vadd.f32 %v1866, %v1897
      %v1906 = vadd.f32 %v1867, %v1897
      %v1907 = vadd.f32 %v1868, %v1897
      %v1908 = vadd.f32 %v1869, %v1897
      %v1909 = vadd.f32 %v1870, %v1897
      %v1910 = vadd.f32 %v1871, %v1897
      %v1911 = vadd.f32 %v1872, %v1897
      %v1912 = vadd.f32 %v1873, %v1897
      %v1913 = vadd.f32 %v1874, %v1897
      %v1914 = vadd.f32 %v1875, %v1897
      %v1915 = vadd.f32 %v1876, %v1897
      %v1916 = vadd.f32 %v1877, %v1897
      %v1917 = vadd.f32 %v1878, %v1897
      %v1918 = vadd.f32 %v1879, %v1897
      %v1919 = vadd.f32 %v1880, %v1897
      %v1920 = vadd.f32 %v1881, %v1897
      %v1921 = vadd.f32 %v1882, %v1897
      %v1922 = vadd.f32 %v1883, %v1897
      %v1923 = vadd.f32 %v1884, %v1897
      %v1924 = vadd.f32 %v1885, %v1897
      %v1925 = vadd.f32 %v1886, %v1897
      %v1926 = vadd.f32 %v1887, %v1897
      %v1927 = vadd.f32 %v1888, %v1897
      %v1928 = vadd.f32 %v1889, %v1897
      %v1929 = vadd.f32 %v1890, %v1897
      %v1930 = vadd.f32 %v1891, %v1897
      %v1931 = vmax.f32 %v1899, 0.0
      %v1932 = vmax.f32 %v1900, 0.0
      %v1933 = vmax.f32 %v1901, 0.0
      %v1934 = vmax.f32 %v1902, 0.0
      %v1935 = vmax.f32 %v1903, 0.0
      %v1936 = vmax.f32 %v1904, 0.0
      %v1937 = vmax.f32 %v1905, 0.0
      %v1938 = vmax.f32 %v1906, 0.0
      %v1939 = vmax.f32 %v1907, 0.0
      %v1940 = vmax.f32 %v1908, 0.0
      %v1941 = vmax.f32 %v1909, 0.0
      %v1942 = vmax.f32 %v1910, 0.0
      %v1943 = vmax.f32 %v1911, 0.0
      %v1944 = vmax.f32 %v1912, 0.0
      %v1945 = vmax.f32 %v1913, 0.0
      %v1946 = vmax.f32 %v1914, 0.0
      %v1947 = vmax.f32 %v1915, 0.0
      %v1948 = vmax.f32 %v1916, 0.0
      %v1949 = vmax.f32 %v1917, 0.0
      %v1950 = vmax.f32 %v1918, 0.0
      %v1951 = vmax.f32 %v1919, 0.0
      %v1952 = vmax.f32 %v1920, 0.0
      %v1953 = vmax.f32 %v1921, 0.0
      %v1954 = vmax.f32 %v1922, 0.0
      %v1955 = vmax.f32 %v1923, 0.0
      %v1956 = vmax.f32 %v1924, 0.0
      %v1957 = vmax.f32 %v1925, 0.0
      %v1958 = vmax.f32 %v1926, 0.0
      %v1959 = vmax.f32 %v1927, 0.0
      %v1960 = vmax.f32 %v1928, 0.0
      %v1961 = vmax.f32 %v1929, 0.0
      %v1962 = vmax.f32 %v1930, 0.0
      %v1963 = vpack.c.bf16 %v1932, %v1931
      %v1964 = vpack.c.bf16 %v1934, %v1933
      %v1965 = vpack.c.bf16 %v1936, %v1935
      %v1966 = vpack.c.bf16 %v1938, %v1937
      %v1967 = vpack.c.bf16 %v1940, %v1939
      %v1968 = vpack.c.bf16 %v1942, %v1941
      %v1969 = vpack.c.bf16 %v1944, %v1943
      %v1970 = vpack.c.bf16 %v1946, %v1945
      %v1971 = vpack.c.bf16 %v1948, %v1947
      %v1972 = vpack.c.bf16 %v1950, %v1949
      %v1973 = vpack.c.bf16 %v1952, %v1951
      %v1974 = vpack.c.bf16 %v1954, %v1953
      %v1975 = vpack.c.bf16 %v1956, %v1955
      %v1976 = vpack.c.bf16 %v1958, %v1957
      %v1977 = vpack.c.bf16 %v1960, %v1959
      %v1978 = vpack.c.bf16 %v1962, %v1961
      %v1995 = vunpack.c.l.b16 %v1963
      %v1996 = vunpack.c.h.b16 %v1963
      %v1997 = vunpack.c.l.b16 %v1964
      %v1998 = vunpack.c.h.b16 %v1964
      %v1999 = vunpack.c.l.b16 %v1965
      %v2000 = vunpack.c.h.b16 %v1965
      %v2001 = vunpack.c.l.b16 %v1966
      %v2002 = vunpack.c.h.b16 %v1966
      %v2003 = vunpack.c.l.b16 %v1967
      %v2004 = vunpack.c.h.b16 %v1967
      %v2005 = vunpack.c.l.b16 %v1968
      %v2006 = vunpack.c.h.b16 %v1968
      %v2007 = vunpack.c.l.b16 %v1969
      %v2008 = vunpack.c.h.b16 %v1969
      %v2009 = vunpack.c.l.b16 %v1970
      %v2010 = vunpack.c.h.b16 %v1970
      %v2011 = vunpack.c.l.b16 %v1971
      %v2012 = vunpack.c.h.b16 %v1971
      %v2013 = vunpack.c.l.b16 %v1972
      %v2014 = vunpack.c.h.b16 %v1972
      %v2015 = vunpack.c.l.b16 %v1973
      %v2016 = vunpack.c.h.b16 %v1973
      %v2017 = vunpack.c.l.b16 %v1974
      %v2018 = vunpack.c.h.b16 %v1974
      %v2019 = vunpack.c.l.b16 %v1975
      %v2020 = vunpack.c.h.b16 %v1975
      %v2021 = vunpack.c.l.b16 %v1976
      %v2022 = vunpack.c.h.b16 %v1976
      %v2023 = vunpack.c.l.b16 %v1977
      %v2024 = vunpack.c.h.b16 %v1977
      %v2025 = vunpack.c.l.b16 %v1978
      %v2026 = vunpack.c.h.b16 %v1978
      %v2027 = vpack.c.b16 %v1995, %v1995
      %v2028 = vpack.c.b16 %v1996, %v1996
      %v2029 = vpack.c.b16 %v1997, %v1997
      %v2030 = vpack.c.b16 %v1998, %v1998
      %v2031 = vpack.c.b16 %v1999, %v1999
      %v2032 = vpack.c.b16 %v2000, %v2000
      %v2033 = vpack.c.b16 %v2001, %v2001
      %v2034 = vpack.c.b16 %v2002, %v2002
      %v2035 = vpack.c.b16 %v2003, %v2003
      %v2036 = vpack.c.b16 %v2004, %v2004
      %v2037 = vpack.c.b16 %v2005, %v2005
      %v2038 = vpack.c.b16 %v2006, %v2006
      %v2039 = vpack.c.b16 %v2007, %v2007
      %v2040 = vpack.c.b16 %v2008, %v2008
      %v2041 = vpack.c.b16 %v2009, %v2009
      %v2042 = vpack.c.b16 %v2010, %v2010
      %v2043 = vpack.c.b16 %v2011, %v2011
      %v2044 = vpack.c.b16 %v2012, %v2012
      %v2045 = vpack.c.b16 %v2013, %v2013
      %v2046 = vpack.c.b16 %v2014, %v2014
      %v2047 = vpack.c.b16 %v2015, %v2015
      %v2048 = vpack.c.b16 %v2016, %v2016
      %v2049 = vpack.c.b16 %v2017, %v2017
      %v2050 = vpack.c.b16 %v2018, %v2018
      %v2051 = vpack.c.b16 %v2019, %v2019
      %v2052 = vpack.c.b16 %v2020, %v2020
      %v2053 = vpack.c.b16 %v2021, %v2021
      %v2054 = vpack.c.b16 %v2022, %v2022
      %v2055 = vpack.c.b16 %v2023, %v2023
      %v2056 = vpack.c.b16 %v2024, %v2024
      %v2057 = vpack.c.b16 %v2025, %v2025
      %v2058 = vpack.c.b16 %v2026, %v2026
      %2091 = vst [vmem:[%s151] sm:$0xf] %v2027
      %2092 = vst [vmem:[%s151 + $0x4] sm:$0xf] %v2028
      %2093 = vst [vmem:[%s151 + $0x8] sm:$0xf] %v2029
      %2094 = vst [vmem:[%s151 + $0xc] sm:$0xf] %v2030
      %2095 = vst [vmem:[%s151 + $0x10] sm:$0xf] %v2031
      %2096 = vst [vmem:[%s151 + $0x14] sm:$0xf] %v2032
      %2097 = vst [vmem:[%s151 + $0x18] sm:$0xf] %v2033
      %2098 = vst [vmem:[%s151 + $0x1c] sm:$0xf] %v2034
      %2099 = vst [vmem:[%s151 + $0x20] sm:$0xf] %v2035
      %2100 = vst [vmem:[%s151 + $0x24] sm:$0xf] %v2036
      %2101 = vst [vmem:[%s151 + $0x28] sm:$0xf] %v2037
      %2102 = vst [vmem:[%s151 + $0x2c] sm:$0xf] %v2038
      %2103 = vst [vmem:[%s151 + $0x30] sm:$0xf] %v2039
      %2104 = vst [vmem:[%s151 + $0x34] sm:$0xf] %v2040
      %2105 = vst [vmem:[%s151 + $0x38] sm:$0xf] %v2041
      %2106 = vst [vmem:[%s151 + $0x3c] sm:$0xf] %v2042
      %2107 = vst [vmem:[%s151 + $0x40] sm:$0xf] %v2043
      %2108 = vst [vmem:[%s151 + $0x44] sm:$0xf] %v2044
      %2109 = vst [vmem:[%s151 + $0x48] sm:$0xf] %v2045
      %2110 = vst [vmem:[%s151 + $0x4c] sm:$0xf] %v2046
      %2111 = vst [vmem:[%s151 + $0x50] sm:$0xf] %v2047
      %2112 = vst [vmem:[%s151 + $0x54] sm:$0xf] %v2048
      %2113 = vst [vmem:[%s151 + $0x58] sm:$0xf] %v2049
      %2114 = vst [vmem:[%s151 + $0x5c] sm:$0xf] %v2050
      %2115 = vst [vmem:[%s151 + $0x60] sm:$0xf] %v2051
      %2116 = vst [vmem:[%s151 + $0x64] sm:$0xf] %v2052
      %2117 = vst [vmem:[%s151 + $0x68] sm:$0xf] %v2053
      %2118 = vst [vmem:[%s151 + $0x6c] sm:$0xf] %v2054
      %2119 = vst [vmem:[%s151 + $0x70] sm:$0xf] %v2055
      %2120 = vst [vmem:[%s151 + $0x74] sm:$0xf] %v2056
      %2121 = vst [vmem:[%s151 + $0x78] sm:$0xf] %v2057
      %2122 = vst [vmem:[%s151 + $0x7c] sm:$0xf] %v2058
      %s2123 = smul.u32 32, %s15
      %p2124 = scmp.lt.s32.totalorder %s2123, 95
      %s2125 = scalar_select %p2124, %s2123, 95
      %s2126 = smul.addr %s2125, 4
      %s2127 = scalar_lea.vmem %s4, %s2126
      // Predicated region
      $region115: #{inception_c_forward.15} parent=31 // pred_check
        %p2128 = pneg %p96
      $region116: #{inception_c_forward.15} parent=31 // pred_check_branch
        %2130 = sbr.rel (%p2128) target = $region118
      $region117: #{inception_c_forward.15} parent=31 // pred_region
        %s2131 = smul.u32 32, %s15
      $region118: #{inception_c_forward.15} parent=31 // pred_fallthru
        _
    $region32: #{inception_c_forward.15} parent=5 // pred_fallthru
      _
    %p2132 = scmp.le.s32.totalorder 2, %s10
    // Predicated region
    $region119: #{inception_c_forward.15} parent=5 // pred_check
      %p2133 = pneg %p2132
    $region120: #{inception_c_forward.15} parent=5 // pred_check_branch
      %2135 = sbr.rel (%p2133) target = $region122
    $region121: #{inception_c_forward.15} parent=5 // pred_region
      %s2136 = ssub.s32 %s10, 2
      // Predicated region
      $region123: #{inception_c_forward.15} parent=121 // pred_check
        %p2137 = pneg %p102
      $region124: #{inception_c_forward.15} parent=121 // pred_check_branch
        %2139 = sbr.rel (%p2137) target = $region126
      $region125: #{inception_c_forward.15} parent=121 // pred_region
        %s2140 = smul.u32 32, %s16
        %p2141 = scmp.lt.s32.totalorder %s2140, 95
        %s2142 = scalar_select %p2141, %s2140, 95
        %s2143 = smul.addr %s2142, 4
        %s2144 = scalar_lea.vmem %s4, %s2143
      $region126: #{inception_c_forward.15} parent=121 // pred_fallthru
        _
    $region122: #{inception_c_forward.15} parent=5 // pred_fallthru
      _
  $region6: #{inception_c_forward.15} parent=0 // loop_footer
    %s14 = sadd.s32 1, %s10
  $region7: #{inception_c_forward.15} parent=0 // loop_footer_branch
    %9 = sbr.rel target = $region3
  $region8: #{inception_c_forward.15} parent=0 // loop_exit
    _
  %2145 = vsyncmov [#allocation3]
  %s2146 = vpop.sfrf %2145
  %p2147 = scmp.eq.s32.totalorder %s2146, 0
  %p2148 = pneg %p2147
  %2150 = shalt.err (%p2148)
  %s2151 = scalar_lea.sflag [#allocation3], 1
  %2152 = vsyncmov %s2151
  %s2153 = vpop.sfrf %2152
  %p2154 = scmp.eq.s32.totalorder %s2153, 0
  %p2155 = pneg %p2154
  %2157 = shalt.err (%p2155)

// kernel: inception_c_forward.14
$region0: #{inception_c_forward.14}
  #allocation0 [shape = 'u32[]', space=smem, size = 0x4, offset = 0x4, fixed_abs, tag = 'smem constant byte address 0x4 - core index']
  #allocation1 [shape = 'u32[144,128]{1,0:T(1,128)}', space=vmem, size = 0x12000, scoped, tag = 'internal scratch']
  #allocation2 [shape = 'bf16[2,296,128]{2,1,0:T(8,128)(2,1)}', space=vmem, size = 0x25000, scoped, tag = 'scratch operand']
  #allocation3 [shape = 's32[2]{0}', space=sflag, size = 0x8, scoped, tag = 'scratch operand']
  #allocation4 [shape = 'f32[256,128]{1,0:T(8,128)}', space=vmem, size = 0x20000, scoped, tag = 'scratch operand']
  #allocation5 [shape = 's32[]', space=sflag, size = 0x4, offset = 0, fixed_abs, tag = 'sflag constant byte address 0x0 - dummy sync flag']
  #allocation6 [shape = 's32[]', space=sflag, size = 0x4, offset = 0, fixed_abs, tag = 'sflag constant byte address 0x0 - dummy sync flag']
  %s0 = inlined_call_operand.vmem [shape: bf16[808,128], index: 0, kind: input, shape index: {}]
  %s1 = inlined_call_operand.vmem [shape: bf16[9,128,128], index: 1, kind: input, shape index: {}]
  %s2 = inlined_call_operand.vmem [shape: f32[1,128], index: 2, kind: input, shape index: {}]
  %s3 = inlined_call_operand.vmem [shape: f32[1,128], index: 3, kind: input, shape index: {}]
  %s4 = inlined_call_operand.vmem [shape: bf16[768,128], index: 4, kind: output, shape index: {}]
  %s5 = sld [smem:[#allocation0]]
  $region127: #{inception_c_forward.14} parent=0
    _
  %s7 = ssub.s32 1, %s5
  %s8 = scalar_select 0, %s7, %s5
  loop: start=0, step=1, limit=5
  $region2: #{inception_c_forward.14} parent=0 // loop_pre_header
    _
  $region3: #{inception_c_forward.14} parent=0 // loop_header
    %s10 = sphi 0, %s14
    %p11 = scmp.ge.s32.totalorder %s10, 5
    %s18 = sphi 0, %s18
    %s20 = sphi 0, %s18
    %s21 = sphi 0, %s20
    %s35 = sphi 0, %s21
    %s39 = sphi 0, %s39
    %s41 = sphi 0, %s39
    %s42 = sphi 0, %s41
    %s56 = sphi 0, %s42
    %s60 = sphi 0, %s60
    %s62 = sphi 0, %s60
    %s63 = sphi 0, %s62
    %s77 = sphi 0, %s63
    %s83 = sphi 0, %s85
    %s86 = sphi 0, %s83
    %s87 = sphi 0, %s86
    %s103 = sphi 0, %s87
  $region4: #{inception_c_forward.14} parent=0 // loop_header_branch
    %13 = sbr.rel (%p11) target = $region8
  $region5: #{inception_c_forward.14} parent=0 // loop_body
    %s15 = ssub.s32 %s10, 1
    %s16 = ssub.s32 %s10, 2
    %s17 = sadd.s32 %s10, 1
    %s19 = sadd.s32 %s18, 1
    %p22 = scmp.eq.s32.totalorder %s10, 2
    %p23 = scmp.ne.s32.totalorder %s18, %s20
    %p24 = scmp.eq.s32.totalorder %s10, 0
    %p25 = por %p23, %p24
    %p26 = scmp.ne.s32.totalorder %s18, %s20
    %p27 = scmp.eq.s32.totalorder %s15, 2
    %p28 = por %p26, %p27
    %p29 = scmp.ne.s32.totalorder %s20, %s21
    %p30 = scmp.eq.s32.totalorder %s15, 0
    %p31 = por %p29, %p30
    %p32 = scmp.ne.s32.totalorder %s20, %s21
    %p33 = scmp.eq.s32.totalorder %s16, 2
    %p34 = por %p32, %p33
    %p36 = scmp.ne.s32.totalorder %s21, %s35
    %p37 = scmp.eq.s32.totalorder %s16, 0
    %p38 = por %p36, %p37
    %s40 = sadd.s32 %s39, 1
    %p43 = scmp.eq.s32.totalorder %s10, 2
    %p44 = scmp.ne.s32.totalorder %s39, %s41
    %p45 = scmp.eq.s32.totalorder %s10, 0
    %p46 = por %p44, %p45
    %p47 = scmp.ne.s32.totalorder %s39, %s41
    %p48 = scmp.eq.s32.totalorder %s15, 2
    %p49 = por %p47, %p48
    %p50 = scmp.ne.s32.totalorder %s41, %s42
    %p51 = scmp.eq.s32.totalorder %s15, 0
    %p52 = por %p50, %p51
    %p53 = scmp.ne.s32.totalorder %s41, %s42
    %p54 = scmp.eq.s32.totalorder %s16, 2
    %p55 = por %p53, %p54
    %p57 = scmp.ne.s32.totalorder %s42, %s56
    %p58 = scmp.eq.s32.totalorder %s16, 0
    %p59 = por %p57, %p58
    %s61 = sadd.s32 %s60, 1
    %p64 = scmp.eq.s32.totalorder %s10, 2
    %p65 = scmp.ne.s32.totalorder %s60, %s62
    %p66 = scmp.eq.s32.totalorder %s10, 0
    %p67 = por %p65, %p66
    %p68 = scmp.ne.s32.totalorder %s60, %s62
    %p69 = scmp.eq.s32.totalorder %s15, 2
    %p70 = por %p68, %p69
    %p71 = scmp.ne.s32.totalorder %s62, %s63
    %p72 = scmp.eq.s32.totalorder %s15, 0
    %p73 = por %p71, %p72
    %p74 = scmp.ne.s32.totalorder %s62, %s63
    %p75 = scmp.eq.s32.totalorder %s16, 2
    %p76 = por %p74, %p75
    %p78 = scmp.ne.s32.totalorder %s63, %s77
    %p79 = scmp.eq.s32.totalorder %s16, 0
    %p80 = por %p78, %p79
    %s81 = ssub.s32 %s10, %s17
    %p82 = scmp.eq.s32.totalorder %s81, 0
    %s84 = sadd.s32 %s83, 1
    %s85 = scalar_select %p82, %s83, %s84
    %p88 = pneg %p82
    %p89 = scmp.eq.s32.totalorder %s10, 2
    %p90 = por %p88, %p89
    %p91 = scmp.ne.s32.totalorder %s83, %s86
    %p92 = scmp.eq.s32.totalorder %s10, 0
    %p93 = por %p91, %p92
    %p94 = scmp.ne.s32.totalorder %s83, %s86
    %p95 = scmp.eq.s32.totalorder %s15, 2
    %p96 = por %p94, %p95
    %p97 = scmp.ne.s32.totalorder %s86, %s87
    %p98 = scmp.eq.s32.totalorder %s15, 0
    %p99 = por %p97, %p98
    %p100 = scmp.ne.s32.totalorder %s86, %s87
    %p101 = scmp.eq.s32.totalorder %s16, 2
    %p102 = por %p100, %p101
    %p104 = scmp.ne.s32.totalorder %s87, %s103
    %p105 = scmp.eq.s32.totalorder %s16, 0
    %p106 = por %p104, %p105
    %p107 = scmp.le.s32.totalorder 1, %s10
    %p108 = scmp.lt.s32.totalorder %s10, 4
    %p109 = pnand %p107, %p108
    %p110 = pneg %p109
    // Predicated region
    $region9: #{inception_c_forward.14} parent=5 // pred_check
      _
    $region10: #{inception_c_forward.14} parent=5 // pred_check_branch
      %112 = sbr.rel (%p109) target = $region12
    $region11: #{inception_c_forward.14} parent=5 // pred_region
      %s113 = ssub.s32 %s10, 1
      // Predicated region
      $region13: #{inception_c_forward.14} parent=11 // pred_check
        %p114 = pneg %p31
      $region14: #{inception_c_forward.14} parent=11 // pred_check_branch
        %116 = sbr.rel (%p114) target = $region16
      $region15: #{inception_c_forward.14} parent=11 // pred_region
        _
      $region16: #{inception_c_forward.14} parent=11 // pred_fallthru
        _
      // Predicated region
      $region17: #{inception_c_forward.14} parent=11 // pred_check
        %p117 = pneg %p52
      $region18: #{inception_c_forward.14} parent=11 // pred_check_branch
        %119 = sbr.rel (%p117) target = $region20
      $region19: #{inception_c_forward.14} parent=11 // pred_region
        _
      $region20: #{inception_c_forward.14} parent=11 // pred_fallthru
        _
      // Predicated region
      $region21: #{inception_c_forward.14} parent=11 // pred_check
        %p120 = pneg %p73
      $region22: #{inception_c_forward.14} parent=11 // pred_check_branch
        %122 = sbr.rel (%p120) target = $region24
      $region23: #{inception_c_forward.14} parent=11 // pred_region
        _
      $region24: #{inception_c_forward.14} parent=11 // pred_fallthru
        _
    $region12: #{inception_c_forward.14} parent=5 // pred_fallthru
      _
    %p123 = scmp.lt.s32.totalorder %s10, 3
    // Predicated region
    $region25: #{inception_c_forward.14} parent=5 // pred_check
      %p124 = pneg %p123
    $region26: #{inception_c_forward.14} parent=5 // pred_check_branch
      %126 = sbr.rel (%p124) target = $region28
    $region27: #{inception_c_forward.14} parent=5 // pred_region
      _
    $region28: #{inception_c_forward.14} parent=5 // pred_fallthru
      _
    %p127 = scmp.le.s32.totalorder 1, %s10
    %p128 = scmp.lt.s32.totalorder %s10, 4
    %p129 = pnand %p127, %p128
    %p130 = pneg %p129
    // Predicated region
    $region29: #{inception_c_forward.14} parent=5 // pred_check
      _
    $region30: #{inception_c_forward.14} parent=5 // pred_check_branch
      %132 = sbr.rel (%p129) target = $region32
    $region31: #{inception_c_forward.14} parent=5 // pred_region
      %s133 = ssub.s32 %s10, 1
      %p134 = pneg %p31
      %p135 = pneg %p28
      %p136 = pneg %p52
      %p137 = pneg %p49
      %p138 = pneg %p73
      %p139 = pneg %p70
      %p140 = pneg %p99
      %p141 = pneg %p96
      %s142 = smul.u32 32, %s15
      %p143 = scmp.lt.s32.totalorder %s142, 95
      %s144 = scalar_select %p143, %s142, 95
      %s145 = smul.addr %s144, 4
      %s146 = scalar_lea.vmem %s4, %s145
      %s147 = smul.u32 32, %s15
      %p148 = scmp.lt.s32.totalorder %s147, 95
      %s149 = scalar_select %p148, %s147, 95
      %s150 = smul.addr %s149, 4
      %s151 = scalar_lea.vmem %s4, %s150
      %s152 = smul.u32 32, %s15
      %p154 = scmp.lt.s32.totalorder %s15, 0
      %s155 = ssub.s32 0, %s15
      %s156 = scalar_select %p154, %s155, %s15
      %s157 = sand.u32 %s156, 1
      %s158 = ssub.s32 0, %s157
      %s159 = scalar_select %p154, %s158, %s157
      %p160 = scmp.ne.s32.totalorder %s159, 0
      %p161 = scmp.lt.s32.totalorder %s159, 0
      %p162 = pnand %p161, %p160
      %p163 = pneg %p162
      %s164 = sadd.s32 %s159, 2
      %s165 = scalar_select %p163, %s164, %s159
      %p166 = scmp.eq.s32.totalorder %s15, 0
      // Predicated region
      $region33: #{inception_c_forward.14} parent=31 // pred_check
        %p167 = pneg %p166
      $region34: #{inception_c_forward.14} parent=31 // pred_check_branch
        %169 = sbr.rel (%p167) target = $region36
      $region35: #{inception_c_forward.14} parent=31 // pred_region
        %p171 = scmp.lt.u32.totalorder 148, 8
        %p172 = pneg %p171
        // Predicated region
        $region37: #{inception_c_forward.14} parent=35 // pred_check
          _
        $region38: #{inception_c_forward.14} parent=35 // pred_check_branch
          %174 = sbr.rel (%p171) target = $region40
        $region39: #{inception_c_forward.14} parent=35 // pred_region
          %s189 = sand.u32 148, 7
          %p190 = scmp.eq.s32.totalorder %s189, 0
          %p191 = pneg %p190
          // Predicated region
          $region52: #{inception_c_forward.14} parent=39 // pred_check
            _
          $region53: #{inception_c_forward.14} parent=39 // pred_check_branch
            %193 = sbr.rel (%p190) target = $region55
          $region54: #{inception_c_forward.14} parent=39 // pred_region
            %s194 = sand.u32 148, 7
            %s195 = ssub.s32 148, %s194
            %s196 = scalar_lea.vmem %s0, %s195
            %s197 = ssub.s32 148, %s194
            %s198 = scalar_lea.vmem [#allocation2], %s197
            loop: start=0, step=1, limit=1
            $region56: #{inception_c_forward.14} parent=54 // loop_pre_header
              _
            $region57: #{inception_c_forward.14} parent=54 // loop_header
              %s200 = sphi 0, %s204
              %p201 = scmp.ge.s32.totalorder %s200, 1
              %s205 = sphi %s0, %s0
              %s206 = sphi [#allocation2], [#allocation2]
            $region58: #{inception_c_forward.14} parent=54 // loop_header_branch
              %203 = sbr.rel (%p201) target = $region62
            $region59: #{inception_c_forward.14} parent=54 // loop_body
              %v207 = vld [vmem:[%s205] sm:$0xff]
              %208 = vst [vmem:[%s206] sm:$0xff] %v207
              %v209 = vld [vmem:[%s205 + $0x8] sm:$0xff]
              %210 = vst [vmem:[%s206 + $0x8] sm:$0xff] %v209
              %v211 = vld [vmem:[%s205 + $0x10] sm:$0xff]
              %212 = vst [vmem:[%s206 + $0x10] sm:$0xff] %v211
              %v213 = vld [vmem:[%s205 + $0x18] sm:$0xff]
              %214 = vst [vmem:[%s206 + $0x18] sm:$0xff] %v213
              %v215 = vld [vmem:[%s205 + $0x20] sm:$0xff]
              %216 = vst [vmem:[%s206 + $0x20] sm:$0xff] %v215
              %v217 = vld [vmem:[%s205 + $0x28] sm:$0xff]
              %218 = vst [vmem:[%s206 + $0x28] sm:$0xff] %v217
              %v219 = vld [vmem:[%s205 + $0x30] sm:$0xff]
              %220 = vst [vmem:[%s206 + $0x30] sm:$0xff] %v219
              %v221 = vld [vmem:[%s205 + $0x38] sm:$0xff]
              %222 = vst [vmem:[%s206 + $0x38] sm:$0xff] %v221
              %v223 = vld [vmem:[%s205 + $0x40] sm:$0xff]
              %224 = vst [vmem:[%s206 + $0x40] sm:$0xff] %v223
              %v225 = vld [vmem:[%s205 + $0x48] sm:$0xff]
              %226 = vst [vmem:[%s206 + $0x48] sm:$0xff] %v225
              %v227 = vld [vmem:[%s205 + $0x50] sm:$0xff]
              %228 = vst [vmem:[%s206 + $0x50] sm:$0xff] %v227
              %v229 = vld [vmem:[%s205 + $0x58] sm:$0xff]
              %230 = vst [vmem:[%s206 + $0x58] sm:$0xff] %v229
              %v231 = vld [vmem:[%s205 + $0x60] sm:$0xff]
              %232 = vst [vmem:[%s206 + $0x60] sm:$0xff] %v231
              %v233 = vld [vmem:[%s205 + $0x68] sm:$0xff]
              %234 = vst [vmem:[%s206 + $0x68] sm:$0xff] %v233
              %v235 = vld [vmem:[%s205 + $0x70] sm:$0xff]
              %236 = vst [vmem:[%s206 + $0x70] sm:$0xff] %v235
              %v237 = vld [vmem:[%s205 + $0x78] sm:$0xff]
              %238 = vst [vmem:[%s206 + $0x78] sm:$0xff] %v237
              %v239 = vld [vmem:[%s205 + $0x80] sm:$0xff]
              %240 = vst [vmem:[%s206 + $0x80] sm:$0xff] %v239
              %v241 = vld [vmem:[%s205 + $0x88] sm:$0xff]
              %242 = vst [vmem:[%s206 + $0x88] sm:$0xff] %v241
            $region60: #{inception_c_forward.14} parent=54 // loop_footer
              %s204 = sadd.s32 1, %s200
            $region61: #{inception_c_forward.14} parent=54 // loop_footer_branch
              %199 = sbr.rel target = $region57
            $region62: #{inception_c_forward.14} parent=54 // loop_exit
              _
            %s243 = sshllo.u32 0, %s194
            loop: start=0, step=1, limit=1
            $region63: #{inception_c_forward.14} parent=54 // loop_pre_header
              _
            $region64: #{inception_c_forward.14} parent=54 // loop_header
              %s245 = sphi 0, %s249
              %p246 = scmp.ge.s32.totalorder %s245, 1
              %s250 = sphi %s196, %s196
              %s251 = sphi %s198, %s198
            $region65: #{inception_c_forward.14} parent=54 // loop_header_branch
              %248 = sbr.rel (%p246) target = $region69
            $region66: #{inception_c_forward.14} parent=54 // loop_body
              %v252 = vld [vmem:[%s250] sm:%s243]
              %253 = vst [vmem:[%s251] sm:%s243] %v252
            $region67: #{inception_c_forward.14} parent=54 // loop_footer
              %s249 = sadd.s32 1, %s245
            $region68: #{inception_c_forward.14} parent=54 // loop_footer_branch
              %244 = sbr.rel target = $region64
            $region69: #{inception_c_forward.14} parent=54 // loop_exit
              _
          $region55: #{inception_c_forward.14} parent=39 // pred_fallthru
            _
        $region40: #{inception_c_forward.14} parent=35 // pred_fallthru
          _
        // Predicated region
        $region41: #{inception_c_forward.14} parent=35 // pred_check
          %p175 = pneg %p171
        $region42: #{inception_c_forward.14} parent=35 // pred_check_branch
          %177 = sbr.rel (%p175) target = $region44
        $region43: #{inception_c_forward.14} parent=35 // pred_region
          %s178 = sshllo.u32 0, 148
          loop: start=0, step=1, limit=1
          $region45: #{inception_c_forward.14} parent=43 // loop_pre_header
            _
          $region46: #{inception_c_forward.14} parent=43 // loop_header
            %s180 = sphi 0, %s184
            %p181 = scmp.ge.s32.totalorder %s180, 1
            %s185 = sphi %s0, %s0
            %s186 = sphi [#allocation2], [#allocation2]
          $region47: #{inception_c_forward.14} parent=43 // loop_header_branch
            %183 = sbr.rel (%p181) target = $region51
          $region48: #{inception_c_forward.14} parent=43 // loop_body
            %v187 = vld [vmem:[%s185] sm:%s178]
            %188 = vst [vmem:[%s186] sm:%s178] %v187
          $region49: #{inception_c_forward.14} parent=43 // loop_footer
            %s184 = sadd.s32 1, %s180
          $region50: #{inception_c_forward.14} parent=43 // loop_footer_branch
            %179 = sbr.rel target = $region46
          $region51: #{inception_c_forward.14} parent=43 // loop_exit
            _
        $region44: #{inception_c_forward.14} parent=35 // pred_fallthru
          _
        // Predicated region
        $region70: #{inception_c_forward.14} parent=35 // pred_check
          _
        $region71: #{inception_c_forward.14} parent=35 // pred_check_branch
          %256 = sbr.rel (0) target = $region73
        $region72: #{inception_c_forward.14} parent=35 // pred_region
          %257 = vsyncadd [#allocation3], 2368
        $region73: #{inception_c_forward.14} parent=35 // pred_fallthru
          _
      $region36: #{inception_c_forward.14} parent=31 // pred_fallthru
        _
      %s258 = sadd.s32 %s15, 1
      %p259 = scmp.lt.s32.totalorder %s258, 3
      // Predicated region
      $region74: #{inception_c_forward.14} parent=31 // pred_check
        %p260 = pneg %p259
      $region75: #{inception_c_forward.14} parent=31 // pred_check_branch
        %262 = sbr.rel (%p260) target = $region77
      $region76: #{inception_c_forward.14} parent=31 // pred_region
        %s263 = ssub.s32 1, %s165
        %s264 = smul.u32 %s258, 256
        %s265 = sshra.s32 %s264, 3
        %s266 = sand.u32 %s264, 7
        %s267 = smul.addr %s265, 4
        %s268 = scalar_lea.vmem %s0, %s267
        %s269 = smul.u32 %s263, 37
        %s270 = smul.addr %s269, 4
        %s271 = scalar_lea.vmem [#allocation2], %s270
        %s272 = scalar_lea.sflag [#allocation3], %s263
        %p274 = scmp.lt.u32.totalorder 148, 8
        %p275 = pneg %p274
        // Predicated region
        $region78: #{inception_c_forward.14} parent=76 // pred_check
          _
        $region79: #{inception_c_forward.14} parent=76 // pred_check_branch
          %277 = sbr.rel (%p274) target = $region81
        $region80: #{inception_c_forward.14} parent=76 // pred_region
          %s292 = sand.u32 148, 7
          %p293 = scmp.eq.s32.totalorder %s292, 0
          %p294 = pneg %p293
          // Predicated region
          $region93: #{inception_c_forward.14} parent=80 // pred_check
            _
          $region94: #{inception_c_forward.14} parent=80 // pred_check_branch
            %296 = sbr.rel (%p293) target = $region96
          $region95: #{inception_c_forward.14} parent=80 // pred_region
            %s297 = sand.u32 148, 7
            %s298 = ssub.s32 148, %s297
            %s299 = scalar_lea.vmem %s268, %s298
            %s300 = ssub.s32 148, %s297
            %s301 = scalar_lea.vmem %s271, %s300 [#allocation2]
            loop: start=0, step=1, limit=1
            $region97: #{inception_c_forward.14} parent=95 // loop_pre_header
              _
            $region98: #{inception_c_forward.14} parent=95 // loop_header
              %s303 = sphi 0, %s307
              %p304 = scmp.ge.s32.totalorder %s303, 1
              %s308 = sphi %s268, %s268
              %s309 = sphi %s271, %s271
            $region99: #{inception_c_forward.14} parent=95 // loop_header_branch
              %306 = sbr.rel (%p304) target = $region103
            $region100: #{inception_c_forward.14} parent=95 // loop_body
              %v310 = vld [vmem:[%s308] sm:$0xff]
              %311 = vst [vmem:[%s309] sm:$0xff] %v310
              %v312 = vld [vmem:[%s308 + $0x8] sm:$0xff]
              %313 = vst [vmem:[%s309 + $0x8] sm:$0xff] %v312
              %v314 = vld [vmem:[%s308 + $0x10] sm:$0xff]
              %315 = vst [vmem:[%s309 + $0x10] sm:$0xff] %v314
              %v316 = vld [vmem:[%s308 + $0x18] sm:$0xff]
              %317 = vst [vmem:[%s309 + $0x18] sm:$0xff] %v316
              %v318 = vld [vmem:[%s308 + $0x20] sm:$0xff]
              %319 = vst [vmem:[%s309 + $0x20] sm:$0xff] %v318
              %v320 = vld [vmem:[%s308 + $0x28] sm:$0xff]
              %321 = vst [vmem:[%s309 + $0x28] sm:$0xff] %v320
              %v322 = vld [vmem:[%s308 + $0x30] sm:$0xff]
              %323 = vst [vmem:[%s309 + $0x30] sm:$0xff] %v322
              %v324 = vld [vmem:[%s308 + $0x38] sm:$0xff]
              %325 = vst [vmem:[%s309 + $0x38] sm:$0xff] %v324
              %v326 = vld [vmem:[%s308 + $0x40] sm:$0xff]
              %327 = vst [vmem:[%s309 + $0x40] sm:$0xff] %v326
              %v328 = vld [vmem:[%s308 + $0x48] sm:$0xff]
              %329 = vst [vmem:[%s309 + $0x48] sm:$0xff] %v328
              %v330 = vld [vmem:[%s308 + $0x50] sm:$0xff]
              %331 = vst [vmem:[%s309 + $0x50] sm:$0xff] %v330
              %v332 = vld [vmem:[%s308 + $0x58] sm:$0xff]
              %333 = vst [vmem:[%s309 + $0x58] sm:$0xff] %v332
              %v334 = vld [vmem:[%s308 + $0x60] sm:$0xff]
              %335 = vst [vmem:[%s309 + $0x60] sm:$0xff] %v334
              %v336 = vld [vmem:[%s308 + $0x68] sm:$0xff]
              %337 = vst [vmem:[%s309 + $0x68] sm:$0xff] %v336
              %v338 = vld [vmem:[%s308 + $0x70] sm:$0xff]
              %339 = vst [vmem:[%s309 + $0x70] sm:$0xff] %v338
              %v340 = vld [vmem:[%s308 + $0x78] sm:$0xff]
              %341 = vst [vmem:[%s309 + $0x78] sm:$0xff] %v340
              %v342 = vld [vmem:[%s308 + $0x80] sm:$0xff]
              %343 = vst [vmem:[%s309 + $0x80] sm:$0xff] %v342
              %v344 = vld [vmem:[%s308 + $0x88] sm:$0xff]
              %345 = vst [vmem:[%s309 + $0x88] sm:$0xff] %v344
            $region101: #{inception_c_forward.14} parent=95 // loop_footer
              %s307 = sadd.s32 1, %s303
            $region102: #{inception_c_forward.14} parent=95 // loop_footer_branch
              %302 = sbr.rel target = $region98
            $region103: #{inception_c_forward.14} parent=95 // loop_exit
              _
            %s346 = sshllo.u32 0, %s297
            loop: start=0, step=1, limit=1
            $region104: #{inception_c_forward.14} parent=95 // loop_pre_header
              _
            $region105: #{inception_c_forward.14} parent=95 // loop_header
              %s348 = sphi 0, %s352
              %p349 = scmp.ge.s32.totalorder %s348, 1
              %s353 = sphi %s299, %s299
              %s354 = sphi %s301, %s301
            $region106: #{inception_c_forward.14} parent=95 // loop_header_branch
              %351 = sbr.rel (%p349) target = $region110
            $region107: #{inception_c_forward.14} parent=95 // loop_body
              %v355 = vld [vmem:[%s353] sm:%s346]
              %356 = vst [vmem:[%s354] sm:%s346] %v355
            $region108: #{inception_c_forward.14} parent=95 // loop_footer
              %s352 = sadd.s32 1, %s348
            $region109: #{inception_c_forward.14} parent=95 // loop_footer_branch
              %347 = sbr.rel target = $region105
            $region110: #{inception_c_forward.14} parent=95 // loop_exit
              _
          $region96: #{inception_c_forward.14} parent=80 // pred_fallthru
            _
        $region81: #{inception_c_forward.14} parent=76 // pred_fallthru
          _
        // Predicated region
        $region82: #{inception_c_forward.14} parent=76 // pred_check
          %p278 = pneg %p274
        $region83: #{inception_c_forward.14} parent=76 // pred_check_branch
          %280 = sbr.rel (%p278) target = $region85
        $region84: #{inception_c_forward.14} parent=76 // pred_region
          %s281 = sshllo.u32 0, 148
          loop: start=0, step=1, limit=1
          $region86: #{inception_c_forward.14} parent=84 // loop_pre_header
            _
          $region87: #{inception_c_forward.14} parent=84 // loop_header
            %s283 = sphi 0, %s287
            %p284 = scmp.ge.s32.totalorder %s283, 1
            %s288 = sphi %s268, %s268
            %s289 = sphi %s271, %s271
          $region88: #{inception_c_forward.14} parent=84 // loop_header_branch
            %286 = sbr.rel (%p284) target = $region92
          $region89: #{inception_c_forward.14} parent=84 // loop_body
            %v290 = vld [vmem:[%s288] sm:%s281]
            %291 = vst [vmem:[%s289] sm:%s281] %v290
          $region90: #{inception_c_forward.14} parent=84 // loop_footer
            %s287 = sadd.s32 1, %s283
          $region91: #{inception_c_forward.14} parent=84 // loop_footer_branch
            %282 = sbr.rel target = $region87
          $region92: #{inception_c_forward.14} parent=84 // loop_exit
            _
        $region85: #{inception_c_forward.14} parent=76 // pred_fallthru
          _
        // Predicated region
        $region111: #{inception_c_forward.14} parent=76 // pred_check
          _
        $region112: #{inception_c_forward.14} parent=76 // pred_check_branch
          %359 = sbr.rel (0) target = $region114
        $region113: #{inception_c_forward.14} parent=76 // pred_region
          %360 = vsyncadd %s272, 2368
        $region114: #{inception_c_forward.14} parent=76 // pred_fallthru
          _
      $region77: #{inception_c_forward.14} parent=31 // pred_fallthru
        _
      %s361 = smul.u32 %s165, 37
      %s362 = smul.addr %s361, 4
      %s363 = scalar_lea.vmem [#allocation2], %s362
      %s364 = scalar_lea.sflag [#allocation3], %s165
      %s365 = smul.u32 4, 37
      %s366 = smul.u32 %s365, 1
      %s367 = sshll.u32 %s366, 4
      %368 = dma.done %s364, %s367
      %v369 = vld [vmem:[%s363] sm:$0xf]
      %v370 = vld [vmem:[%s363 + $0x4] sm:$0xf]
      %v371 = vld [vmem:[%s363 + $0x8] sm:$0xf]
      %v372 = vld [vmem:[%s363 + $0xc] sm:$0xf]
      %v373 = vld [vmem:[%s363 + $0x10] sm:$0xf]
      %v374 = vld [vmem:[%s363 + $0x14] sm:$0xf]
      %v375 = vld [vmem:[%s363 + $0x18] sm:$0xf]
      %v376 = vld [vmem:[%s363 + $0x1c] sm:$0xf]
      %v377 = vld [vmem:[%s363 + $0x20] sm:$0xf]
      %v378 = vld [vmem:[%s363 + $0x24] sm:$0xf]
      %v379 = vld [vmem:[%s363 + $0x28] sm:$0xf]
      %v380 = vld [vmem:[%s363 + $0x2c] sm:$0xf]
      %v381 = vld [vmem:[%s363 + $0x30] sm:$0xf]
      %v382 = vld [vmem:[%s363 + $0x34] sm:$0xf]
      %v383 = vld [vmem:[%s363 + $0x38] sm:$0xf]
      %v384 = vld [vmem:[%s363 + $0x3c] sm:$0xf]
      %v385 = vld [vmem:[%s363 + $0x40] sm:$0xf]
      %v386 = vld [vmem:[%s363 + $0x44] sm:$0xf]
      %v387 = vld [vmem:[%s363 + $0x48] sm:$0xf]
      %v388 = vld [vmem:[%s363 + $0x4c] sm:$0xf]
      %v389 = vld [vmem:[%s363 + $0x50] sm:$0xf]
      %v390 = vld [vmem:[%s363 + $0x54] sm:$0xf]
      %v391 = vld [vmem:[%s363 + $0x58] sm:$0xf]
      %v392 = vld [vmem:[%s363 + $0x5c] sm:$0xf]
      %v393 = vld [vmem:[%s363 + $0x60] sm:$0xf]
      %v394 = vld [vmem:[%s363 + $0x64] sm:$0xf]
      %v395 = vld [vmem:[%s363 + $0x68] sm:$0xf]
      %v396 = vld [vmem:[%s363 + $0x6c] sm:$0xf]
      %v397 = vld [vmem:[%s363 + $0x70] sm:$0xf]
      %v398 = vld [vmem:[%s363 + $0x74] sm:$0xf]
      %v399 = vld [vmem:[%s363 + $0x78] sm:$0xf]
      %v400 = vld [vmem:[%s363 + $0x7c] sm:$0xf]
      %v401 = vld [vmem:[%s1] sm:$0xf]
      %v402 = vld [vmem:[%s1 + $0x4] sm:$0xf]
      %v403 = vld [vmem:[%s1 + $0x8] sm:$0xf]
      %v404 = vld [vmem:[%s1 + $0xc] sm:$0xf]
      %v405 = vld [vmem:[%s1 + $0x10] sm:$0xf]
      %v406 = vld [vmem:[%s1 + $0x14] sm:$0xf]
      %v407 = vld [vmem:[%s1 + $0x18] sm:$0xf]
      %v408 = vld [vmem:[%s1 + $0x1c] sm:$0xf]
      %v409 = vld [vmem:[%s1 + $0x20] sm:$0xf]
      %v410 = vld [vmem:[%s1 + $0x24] sm:$0xf]
      %v411 = vld [vmem:[%s1 + $0x28] sm:$0xf]
      %v412 = vld [vmem:[%s1 + $0x2c] sm:$0xf]
      %v413 = vld [vmem:[%s1 + $0x30] sm:$0xf]
      %v414 = vld [vmem:[%s1 + $0x34] sm:$0xf]
      %v415 = vld [vmem:[%s1 + $0x38] sm:$0xf]
      %v416 = vld [vmem:[%s1 + $0x3c] sm:$0xf]
      %v449 = vunpack.c.l.b16 %v369
      %v450 = vunpack.c.l.b16 %v370
      %v451 = vunpack.c.l.b16 %v371
      %v452 = vunpack.c.l.b16 %v372
      %v453 = vunpack.c.l.b16 %v373
      %v454 = vunpack.c.l.b16 %v374
      %v455 = vunpack.c.l.b16 %v375
      %v456 = vunpack.c.l.b16 %v376
      %v457 = vunpack.c.l.b16 %v377
      %v458 = vunpack.c.l.b16 %v378
      %v459 = vunpack.c.l.b16 %v379
      %v460 = vunpack.c.l.b16 %v380
      %v461 = vunpack.c.l.b16 %v381
      %v462 = vunpack.c.l.b16 %v382
      %v463 = vunpack.c.l.b16 %v383
      %v464 = vunpack.c.l.b16 %v384
      %v465 = vunpack.c.l.b16 %v385
      %v466 = vunpack.c.l.b16 %v386
      %v467 = vunpack.c.l.b16 %v387
      %v468 = vunpack.c.l.b16 %v388
      %v469 = vunpack.c.l.b16 %v389
      %v470 = vunpack.c.l.b16 %v390
      %v471 = vunpack.c.l.b16 %v391
      %v472 = vunpack.c.l.b16 %v392
      %v473 = vunpack.c.l.b16 %v393
      %v474 = vunpack.c.l.b16 %v394
      %v475 = vunpack.c.l.b16 %v395
      %v476 = vunpack.c.l.b16 %v396
      %v477 = vunpack.c.l.b16 %v397
      %v478 = vunpack.c.l.b16 %v398
      %v479 = vunpack.c.l.b16 %v399
      %v480 = vunpack.c.l.b16 %v400
      %v481 = vpack.c.b16 %v450, %v449
      %v482 = vpack.c.b16 %v452, %v451
      %v483 = vpack.c.b16 %v454, %v453
      %v484 = vpack.c.b16 %v456, %v455
      %v485 = vpack.c.b16 %v458, %v457
      %v486 = vpack.c.b16 %v460, %v459
      %v487 = vpack.c.b16 %v462, %v461
      %v488 = vpack.c.b16 %v464, %v463
      %v489 = vpack.c.b16 %v466, %v465
      %v490 = vpack.c.b16 %v468, %v467
      %v491 = vpack.c.b16 %v470, %v469
      %v492 = vpack.c.b16 %v472, %v471
      %v493 = vpack.c.b16 %v474, %v473
      %v494 = vpack.c.b16 %v476, %v475
      %v495 = vpack.c.b16 %v478, %v477
      %v496 = vpack.c.b16 %v480, %v479
      %v529 = vunpack.c.l.b16 %v401
      %v530 = vunpack.c.l.b16 %v402
      %v531 = vunpack.c.l.b16 %v403
      %v532 = vunpack.c.l.b16 %v404
      %v533 = vunpack.c.l.b16 %v405
      %v534 = vunpack.c.l.b16 %v406
      %v535 = vunpack.c.l.b16 %v407
      %v536 = vunpack.c.l.b16 %v408
      %v537 = vunpack.c.l.b16 %v409
      %v538 = vunpack.c.l.b16 %v410
      %v539 = vunpack.c.l.b16 %v411
      %v540 = vunpack.c.l.b16 %v412
      %v541 = vunpack.c.l.b16 %v413
      %v542 = vunpack.c.l.b16 %v414
      %v543 = vunpack.c.l.b16 %v415
      %v544 = vunpack.c.l.b16 %v416
      %v545 = vpack.c.b16 %v530, %v529
      %v546 = vpack.c.b16 %v532, %v531
      %v547 = vpack.c.b16 %v534, %v533
      %v548 = vpack.c.b16 %v536, %v535
      %v549 = vpack.c.b16 %v538, %v537
      %v550 = vpack.c.b16 %v540, %v539
      %v551 = vpack.c.b16 %v542, %v541
      %v552 = vpack.c.b16 %v544, %v543
      %561 = vmatprep.subr.bf16.mxu0 0
      %562 = vmatpush1.bf16.msra.mxu0 %v545
      %563 = vmatprep.subr.bf16.mxu0 0
      %564 = vmatpush1.bf16.msra.mxu0 %v546
      %565 = vmatprep.subr.bf16.mxu0 0
      %566 = vmatpush1.bf16.msra.mxu0 %v547
      %567 = vmatprep.subr.bf16.mxu0 0
      %568 = vmatpush1.bf16.msra.mxu0 %v548
      %569 = vmatprep.subr.bf16.mxu0 0
      %570 = vmatpush1.bf16.msra.mxu0 %v549
      %571 = vmatprep.subr.bf16.mxu0 0
      %572 = vmatpush1.bf16.msra.mxu0 %v550
      %573 = vmatprep.subr.bf16.mxu0 0
      %574 = vmatpush1.bf16.msra.mxu0 %v551
      %575 = vmatprep.subr.bf16.mxu0 0
      %576 = vmatpush1.bf16.msra.mxu0 %v552
      %577 = vmatprep.subr.bf16.mxu0 0
      %578 = vmatpush1.bf16.msra.mxu0 0
      %579 = vmatprep.subr.bf16.mxu0 0
      %580 = vmatpush1.bf16.msra.mxu0 0
      %581 = vmatprep.subr.bf16.mxu0 0
      %582 = vmatpush1.bf16.msra.mxu0 0
      %583 = vmatprep.subr.bf16.mxu0 0
      %584 = vmatpush1.bf16.msra.mxu0 0
      %585 = vmatprep.subr.bf16.mxu0 0
      %586 = vmatpush1.bf16.msra.mxu0 0
      %587 = vmatprep.subr.bf16.mxu0 0
      %588 = vmatpush1.bf16.msra.mxu0 0
      %589 = vmatprep.subr.bf16.mxu0 0
      %590 = vmatpush1.bf16.msra.mxu0 0
      %591 = vmatprep.subr.bf16.mxu0 0
      %592 = vmatpush1.bf16.msra.mxu0 0
      %593 = vmatprep.mubr.bf16.mxu0 0
      %594 = vmatmul.mubr.bf16.gmra.mrb[0].mxu0 %v481
      %v595 = vpop.f32.mrb[0].mxu0
      %v596 = vadd.f32 0.0, %v595
      %v597 = vpop.f32.mrb[0].mxu0
      %v598 = vpop.f32.mrb[0].mxu0
      %v599 = vadd.f32 0.0, %v598
      %v600 = vpop.f32.mrb[0].mxu0
      %601 = vmatprep.mubr.bf16.mxu0 0
      %602 = vmatmul.mubr.bf16.gmra.mrb[0].mxu0 %v482
      %v603 = vpop.f32.mrb[0].mxu0
      %v604 = vadd.f32 0.0, %v603
      %v605 = vpop.f32.mrb[0].mxu0
      %v606 = vpop.f32.mrb[0].mxu0
      %v607 = vadd.f32 0.0, %v606
      %v608 = vpop.f32.mrb[0].mxu0
      %609 = vmatprep.mubr.bf16.mxu0 0
      %610 = vmatmul.mubr.bf16.gmra.mrb[0].mxu0 %v483
      %v611 = vpop.f32.mrb[0].mxu0
      %v612 = vadd.f32 0.0, %v611
      %v613 = vpop.f32.mrb[0].mxu0
      %v614 = vpop.f32.mrb[0].mxu0
      %v615 = vadd.f32 0.0, %v614
      %v616 = vpop.f32.mrb[0].mxu0
      %617 = vmatprep.mubr.bf16.mxu0 0
      %618 = vmatmul.mubr.bf16.gmra.mrb[0].mxu0 %v484
      %v619 = vpop.f32.mrb[0].mxu0
      %v620 = vadd.f32 0.0, %v619
      %v621 = vpop.f32.mrb[0].mxu0
      %v622 = vpop.f32.mrb[0].mxu0
      %v623 = vadd.f32 0.0, %v622
      %v624 = vpop.f32.mrb[0].mxu0
      %625 = vmatprep.mubr.bf16.mxu0 0
      %626 = vmatmul.mubr.bf16.gmra.mrb[0].mxu0 %v485
      %v627 = vpop.f32.mrb[0].mxu0
      %v628 = vadd.f32 0.0, %v627
      %v629 = vpop.f32.mrb[0].mxu0
      %v630 = vpop.f32.mrb[0].mxu0
      %v631 = vadd.f32 0.0, %v630
      %v632 = vpop.f32.mrb[0].mxu0
      %633 = vmatprep.mubr.bf16.mxu0 0
      %634 = vmatmul.mubr.bf16.gmra.mrb[0].mxu0 %v486
      %v635 = vpop.f32.mrb[0].mxu0
      %v636 = vadd.f32 0.0, %v635
      %v637 = vpop.f32.mrb[0].mxu0
      %v638 = vpop.f32.mrb[0].mxu0
      %v639 = vadd.f32 0.0, %v638
      %v640 = vpop.f32.mrb[0].mxu0
      %641 = vmatprep.mubr.bf16.mxu0 0
      %642 = vmatmul.mubr.bf16.gmra.mrb[0].mxu0 %v487
      %v643 = vpop.f32.mrb[0].mxu0
      %v644 = vadd.f32 0.0, %v643
      %v645 = vpop.f32.mrb[0].mxu0
      %v646 = vpop.f32.mrb[0].mxu0
      %v647 = vadd.f32 0.0, %v646
      %v648 = vpop.f32.mrb[0].mxu0
      %649 = vmatprep.mubr.bf16.mxu0 0
      %650 = vmatmul.mubr.bf16.gmra.mrb[0].mxu0 %v488
      %v651 = vpop.f32.mrb[0].mxu0
      %v652 = vadd.f32 0.0, %v651
      %v653 = vpop.f32.mrb[0].mxu0
      %v654 = vpop.f32.mrb[0].mxu0
      %v655 = vadd.f32 0.0, %v654
      %v656 = vpop.f32.mrb[0].mxu0
      %657 = vmatprep.mubr.bf16.mxu0 0
      %658 = vmatmul.mubr.bf16.gmra.mrb[0].mxu0 %v489
      %v659 = vpop.f32.mrb[0].mxu0
      %v660 = vadd.f32 0.0, %v659
      %v661 = vpop.f32.mrb[0].mxu0
      %v662 = vpop.f32.mrb[0].mxu0
      %v663 = vadd.f32 0.0, %v662
      %v664 = vpop.f32.mrb[0].mxu0
      %665 = vmatprep.mubr.bf16.mxu0 0
      %666 = vmatmul.mubr.bf16.gmra.mrb[0].mxu0 %v490
      %v667 = vpop.f32.mrb[0].mxu0
      %v668 = vadd.f32 0.0, %v667
      %v669 = vpop.f32.mrb[0].mxu0
      %v670 = vpop.f32.mrb[0].mxu0
      %v671 = vadd.f32 0.0, %v670
      %v672 = vpop.f32.mrb[0].mxu0
      %673 = vmatprep.mubr.bf16.mxu0 0
      %674 = vmatmul.mubr.bf16.gmra.mrb[0].mxu0 %v491
      %v675 = vpop.f32.mrb[0].mxu0
      %v676 = vadd.f32 0.0, %v675
      %v677 = vpop.f32.mrb[0].mxu0
      %v678 = vpop.f32.mrb[0].mxu0
      %v679 = vadd.f32 0.0, %v678
      %v680 = vpop.f32.mrb[0].mxu0
      %681 = vmatprep.mubr.bf16.mxu0 0
      %682 = vmatmul.mubr.bf16.gmra.mrb[0].mxu0 %v492
      %v683 = vpop.f32.mrb[0].mxu0
      %v684 = vadd.f32 0.0, %v683
      %v685 = vpop.f32.mrb[0].mxu0
      %v686 = vpop.f32.mrb[0].mxu0
      %v687 = vadd.f32 0.0, %v686
      %v688 = vpop.f32.mrb[0].mxu0
      %689 = vmatprep.mubr.bf16.mxu0 0
      %690 = vmatmul.mubr.bf16.gmra.mrb[0].mxu0 %v493
      %v691 = vpop.f32.mrb[0].mxu0
      %v692 = vadd.f32 0.0, %v691
      %v693 = vpop.f32.mrb[0].mxu0
      %v694 = vpop.f32.mrb[0].mxu0
      %v695 = vadd.f32 0.0, %v694
      %v696 = vpop.f32.mrb[0].mxu0
      %697 = vmatprep.mubr.bf16.mxu0 0
      %698 = vmatmul.mubr.bf16.gmra.mrb[0].mxu0 %v494
      %v699 = vpop.f32.mrb[0].mxu0
      %v700 = vadd.f32 0.0, %v699
      %v701 = vpop.f32.mrb[0].mxu0
      %v702 = vpop.f32.mrb[0].mxu0
      %v703 = vadd.f32 0.0, %v702
      %v704 = vpop.f32.mrb[0].mxu0
      %705 = vmatprep.mubr.bf16.mxu0 0
      %706 = vmatmul.mubr.bf16.gmra.mrb[0].mxu0 %v495
      %v707 = vpop.f32.mrb[0].mxu0
      %v708 = vadd.f32 0.0, %v707
      %v709 = vpop.f32.mrb[0].mxu0
      %v710 = vpop.f32.mrb[0].mxu0
      %v711 = vadd.f32 0.0, %v710
      %v712 = vpop.f32.mrb[0].mxu0
      %713 = vmatprep.mubr.bf16.mxu0 0
      %714 = vmatmul.mubr.bf16.gmra.mrb[0].mxu0 %v496
      %v715 = vpop.f32.mrb[0].mxu0
      %v716 = vadd.f32 0.0, %v715
      %v717 = vpop.f32.mrb[0].mxu0
      %v718 = vpop.f32.mrb[0].mxu0
      %v719 = vadd.f32 0.0, %v718
      %v720 = vpop.f32.mrb[0].mxu0
      %721 = vdwg.mxu0
      %722 = vst [vmem:[#allocation4] sm:$0xff] %v596
      %723 = vst [vmem:[#allocation4 + $0x8] sm:$0xff] %v599
      %724 = vst [vmem:[#allocation4 + $0x10] sm:$0xff] %v604
      %725 = vst [vmem:[#allocation4 + $0x18] sm:$0xff] %v607
      %726 = vst [vmem:[#allocation4 + $0x20] sm:$0xff] %v612
      %727 = vst [vmem:[#allocation4 + $0x28] sm:$0xff] %v615
      %728 = vst [vmem:[#allocation4 + $0x30] sm:$0xff] %v620
      %729 = vst [vmem:[#allocation4 + $0x38] sm:$0xff] %v623
      %730 = vst [vmem:[#allocation4 + $0x40] sm:$0xff] %v628
      %731 = vst [vmem:[#allocation4 + $0x48] sm:$0xff] %v631
      %732 = vst [vmem:[#allocation4 + $0x50] sm:$0xff] %v636
      %733 = vst [vmem:[#allocation4 + $0x58] sm:$0xff] %v639
      %734 = vst [vmem:[#allocation4 + $0x60] sm:$0xff] %v644
      %735 = vst [vmem:[#allocation4 + $0x68] sm:$0xff] %v647
      %736 = vst [vmem:[#allocation4 + $0x70] sm:$0xff] %v652
      %737 = vst [vmem:[#allocation4 + $0x78] sm:$0xff] %v655
      %738 = vst [vmem:[#allocation4 + $0x80] sm:$0xff] %v660
      %739 = vst [vmem:[#allocation4 + $0x88] sm:$0xff] %v663
      %740 = vst [vmem:[#allocation4 + $0x90] sm:$0xff] %v668
      %741 = vst [vmem:[#allocation4 + $0x98] sm:$0xff] %v671
      %742 = vst [vmem:[#allocation4 + $0xa0] sm:$0xff] %v676
      %743 = vst [vmem:[#allocation4 + $0xa8] sm:$0xff] %v679
      %744 = vst [vmem:[#allocation4 + $0xb0] sm:$0xff] %v684
      %745 = vst [vmem:[#allocation4 + $0xb8] sm:$0xff] %v687
      %746 = vst [vmem:[#allocation4 + $0xc0] sm:$0xff] %v692
      %747 = vst [vmem:[#allocation4 + $0xc8] sm:$0xff] %v695
      %748 = vst [vmem:[#allocation4 + $0xd0] sm:$0xff] %v700
      %749 = vst [vmem:[#allocation4 + $0xd8] sm:$0xff] %v703
      %750 = vst [vmem:[#allocation4 + $0xe0] sm:$0xff] %v708
      %751 = vst [vmem:[#allocation4 + $0xe8] sm:$0xff] %v711
      %752 = vst [vmem:[#allocation4 + $0xf0] sm:$0xff] %v716
      %753 = vst [vmem:[#allocation4 + $0xf8] sm:$0xff] %v719
      %v754 = vld [vmem:[#allocation4] sm:$0xff]
      %v755 = vld [vmem:[#allocation4 + $0x8] sm:$0xff]
      %v756 = vld [vmem:[#allocation4 + $0x10] sm:$0xff]
      %v757 = vld [vmem:[#allocation4 + $0x18] sm:$0xff]
      %v758 = vld [vmem:[#allocation4 + $0x20] sm:$0xff]
      %v759 = vld [vmem:[#allocation4 + $0x28] sm:$0xff]
      %v760 = vld [vmem:[#allocation4 + $0x30] sm:$0xff]
      %v761 = vld [vmem:[#allocation4 + $0x38] sm:$0xff]
      %v762 = vld [vmem:[#allocation4 + $0x40] sm:$0xff]
      %v763 = vld [vmem:[#allocation4 + $0x48] sm:$0xff]
      %v764 = vld [vmem:[#allocation4 + $0x50] sm:$0xff]
      %v765 = vld [vmem:[#allocation4 + $0x58] sm:$0xff]
      %v766 = vld [vmem:[#allocation4 + $0x60] sm:$0xff]
      %v767 = vld [vmem:[#allocation4 + $0x68] sm:$0xff]
      %v768 = vld [vmem:[#allocation4 + $0x70] sm:$0xff]
      %v769 = vld [vmem:[#allocation4 + $0x78] sm:$0xff]
      %v770 = vld [vmem:[#allocation4 + $0x80] sm:$0xff]
      %v771 = vld [vmem:[#allocation4 + $0x88] sm:$0xff]
      %v772 = vld [vmem:[#allocation4 + $0x90] sm:$0xff]
      %v773 = vld [vmem:[#allocation4 + $0x98] sm:$0xff]
      %v774 = vld [vmem:[#allocation4 + $0xa0] sm:$0xff]
      %v775 = vld [vmem:[#allocation4 + $0xa8] sm:$0xff]
      %v776 = vld [vmem:[#allocation4 + $0xb0] sm:$0xff]
      %v777 = vld [vmem:[#allocation4 + $0xb8] sm:$0xff]
      %v778 = vld [vmem:[#allocation4 + $0xc0] sm:$0xff]
      %v779 = vld [vmem:[#allocation4 + $0xc8] sm:$0xff]
      %v780 = vld [vmem:[#allocation4 + $0xd0] sm:$0xff]
      %v781 = vld [vmem:[#allocation4 + $0xd8] sm:$0xff]
      %v782 = vld [vmem:[#allocation4 + $0xe0] sm:$0xff]
      %v783 = vld [vmem:[#allocation4 + $0xe8] sm:$0xff]
      %v784 = vld [vmem:[#allocation4 + $0xf0] sm:$0xff]
      %v785 = vld [vmem:[#allocation4 + $0xf8] sm:$0xff]
      %v786 = vld [vmem:[%s363] sm:$0xf]
      %v787 = vld [vmem:[%s363 + $0x4] sm:$0xf]
      %v788 = vld [vmem:[%s363 + $0x8] sm:$0xf]
      %v789 = vld [vmem:[%s363 + $0xc] sm:$0xf]
      %v790 = vld [vmem:[%s363 + $0x10] sm:$0xf]
      %v791 = vld [vmem:[%s363 + $0x14] sm:$0xf]
      %v792 = vld [vmem:[%s363 + $0x18] sm:$0xf]
      %v793 = vld [vmem:[%s363 + $0x1c] sm:$0xf]
      %v794 = vld [vmem:[%s363 + $0x20] sm:$0xf]
      %v795 = vld [vmem:[%s363 + $0x24] sm:$0xf]
      %v796 = vld [vmem:[%s363 + $0x28] sm:$0xf]
      %v797 = vld [vmem:[%s363 + $0x2c] sm:$0xf]
      %v798 = vld [vmem:[%s363 + $0x30] sm:$0xf]
      %v799 = vld [vmem:[%s363 + $0x34] sm:$0xf]
      %v800 = vld [vmem:[%s363 + $0x38] sm:$0xf]
      %v801 = vld [vmem:[%s363 + $0x3c] sm:$0xf]
      %v802 = vld [vmem:[%s363 + $0x40] sm:$0xf]
      %v803 = vld [vmem:[%s363 + $0x44] sm:$0xf]
      %v804 = vld [vmem:[%s363 + $0x48] sm:$0xf]
      %v805 = vld [vmem:[%s363 + $0x4c] sm:$0xf]
      %v806 = vld [vmem:[%s363 + $0x50] sm:$0xf]
      %v807 = vld [vmem:[%s363 + $0x54] sm:$0xf]
      %v808 = vld [vmem:[%s363 + $0x58] sm:$0xf]
      %v809 = vld [vmem:[%s363 + $0x5c] sm:$0xf]
      %v810 = vld [vmem:[%s363 + $0x60] sm:$0xf]
      %v811 = vld [vmem:[%s363 + $0x64] sm:$0xf]
      %v812 = vld [vmem:[%s363 + $0x68] sm:$0xf]
      %v813 = vld [vmem:[%s363 + $0x6c] sm:$0xf]
      %v814 = vld [vmem:[%s363 + $0x70] sm:$0xf]
      %v815 = vld [vmem:[%s363 + $0x74] sm:$0xf]
      %v816 = vld [vmem:[%s363 + $0x78] sm:$0xf]
      %v817 = vld [vmem:[%s363 + $0x7c] sm:$0xf]
      %v818 = vld [vmem:[%s363 + $0x80] sm:$0x1]
      %s819 = scalar_lea.vmem %s1, 64
      %v820 = vld [vmem:[%s819] sm:$0xf]
      %v821 = vld [vmem:[%s819 + $0x4] sm:$0xf]
      %v822 = vld [vmem:[%s819 + $0x8] sm:$0xf]
      %v823 = vld [vmem:[%s819 + $0xc] sm:$0xf]
      %v824 = vld [vmem:[%s819 + $0x10] sm:$0xf]
      %v825 = vld [vmem:[%s819 + $0x14] sm:$0xf]
      %v826 = vld [vmem:[%s819 + $0x18] sm:$0xf]
      %v827 = vld [vmem:[%s819 + $0x1c] sm:$0xf]
      %v828 = vld [vmem:[%s819 + $0x20] sm:$0xf]
      %v829 = vld [vmem:[%s819 + $0x24] sm:$0xf]
      %v830 = vld [vmem:[%s819 + $0x28] sm:$0xf]
      %v831 = vld [vmem:[%s819 + $0x2c] sm:$0xf]
      %v832 = vld [vmem:[%s819 + $0x30] sm:$0xf]
      %v833 = vld [vmem:[%s819 + $0x34] sm:$0xf]
      %v834 = vld [vmem:[%s819 + $0x38] sm:$0xf]
      %v835 = vld [vmem:[%s819 + $0x3c] sm:$0xf]
      %v869 = vunpack.c.l.b16 %v786
      %v870 = vunpack.c.l.b16 %v787
      %v871 = vunpack.c.l.b16 %v788
      %v872 = vunpack.c.l.b16 %v789
      %v873 = vunpack.c.l.b16 %v790
      %v874 = vunpack.c.l.b16 %v791
      %v875 = vunpack.c.l.b16 %v792
      %v876 = vunpack.c.l.b16 %v793
      %v877 = vunpack.c.l.b16 %v794
      %v878 = vunpack.c.l.b16 %v795
      %v879 = vunpack.c.l.b16 %v796
      %v880 = vunpack.c.l.b16 %v797
      %v881 = vunpack.c.l.b16 %v798
      %v882 = vunpack.c.l.b16 %v799
      %v883 = vunpack.c.l.b16 %v800
      %v884 = vunpack.c.l.b16 %v801
      %v885 = vunpack.c.l.b16 %v802
      %v886 = vunpack.c.l.b16 %v803
      %v887 = vunpack.c.l.b16 %v804
      %v888 = vunpack.c.l.b16 %v805
      %v889 = vunpack.c.l.b16 %v806
      %v890 = vunpack.c.l.b16 %v807
      %v891 = vunpack.c.l.b16 %v808
      %v892 = vunpack.c.l.b16 %v809
      %v893 = vunpack.c.l.b16 %v810
      %v894 = vunpack.c.l.b16 %v811
      %v895 = vunpack.c.l.b16 %v812
      %v896 = vunpack.c.l.b16 %v813
      %v897 = vunpack.c.l.b16 %v814
      %v898 = vunpack.c.l.b16 %v815
      %v899 = vunpack.c.l.b16 %v816
      %v900 = vunpack.c.l.b16 %v817
      %v901 = vunpack.c.l.b16 %v818
      %v902 = vpack.c.b16 %v870, %v869
      %v903 = vpack.c.b16 %v872, %v871
      %v904 = vpack.c.b16 %v874, %v873
      %v905 = vpack.c.b16 %v876, %v875
      %v906 = vpack.c.b16 %v878, %v877
      %v907 = vpack.c.b16 %v880, %v879
      %v908 = vpack.c.b16 %v882, %v881
      %v909 = vpack.c.b16 %v884, %v883
      %v910 = vpack.c.b16 %v886, %v885
      %v911 = vpack.c.b16 %v888, %v887
      %v912 = vpack.c.b16 %v890, %v889
      %v913 = vpack.c.b16 %v892, %v891
      %v914 = vpack.c.b16 %v894, %v893
      %v915 = vpack.c.b16 %v896, %v895
      %v916 = vpack.c.b16 %v898, %v897
      %v917 = vpack.c.b16 %v900, %v899
      %v918 = vpack.c.b16 %v901, %v901
      %vm919 = vsmask.f32 7424
      %v921 = vshrl.u32 %v902, 16
      %v923 = vshll.u32 %v902, 16
      %v925 = vrot.slane %v923, 1
      %v926 = vor.u32 %v921, %v925
      %v928 = vshll.u32 %v903, 16
      %v930 = vrot.slane %v928, 1
      %v931 = vsel %vm919, %v926, %v930
      %v932 = vshrl.u32 %v903, 16
      %v934 = vor.u32 %v932, %v930
      %v936 = vshll.u32 %v904, 16
      %v938 = vrot.slane %v936, 1
      %v939 = vsel %vm919, %v934, %v938
      %v940 = vshrl.u32 %v904, 16
      %v942 = vor.u32 %v940, %v938
      %v944 = vshll.u32 %v905, 16
      %v946 = vrot.slane %v944, 1
      %v947 = vsel %vm919, %v942, %v946
      %v948 = vshrl.u32 %v905, 16
      %v950 = vor.u32 %v948, %v946
      %v952 = vshll.u32 %v906, 16
      %v954 = vrot.slane %v952, 1
      %v955 = vsel %vm919, %v950, %v954
      %v956 = vshrl.u32 %v906, 16
      %v958 = vor.u32 %v956, %v954
      %v960 = vshll.u32 %v907, 16
      %v962 = vrot.slane %v960, 1
      %v963 = vsel %vm919, %v958, %v962
      %v964 = vshrl.u32 %v907, 16
      %v966 = vor.u32 %v964, %v962
      %v968 = vshll.u32 %v908, 16
      %v970 = vrot.slane %v968, 1
      %v971 = vsel %vm919, %v966, %v970
      %v972 = vshrl.u32 %v908, 16
      %v974 = vor.u32 %v972, %v970
      %v976 = vshll.u32 %v909, 16
      %v978 = vrot.slane %v976, 1
      %v979 = vsel %vm919, %v974, %v978
      %v980 = vshrl.u32 %v909, 16
      %v982 = vor.u32 %v980, %v978
      %v984 = vshll.u32 %v910, 16
      %v986 = vrot.slane %v984, 1
      %v987 = vsel %vm919, %v982, %v986
      %v988 = vshrl.u32 %v910, 16
      %v990 = vor.u32 %v988, %v986
      %v992 = vshll.u32 %v911, 16
      %v994 = vrot.slane %v992, 1
      %v995 = vsel %vm919, %v990, %v994
      %v996 = vshrl.u32 %v911, 16
      %v998 = vor.u32 %v996, %v994
      %v1000 = vshll.u32 %v912, 16
      %v1002 = vrot.slane %v1000, 1
      %v1003 = vsel %vm919, %v998, %v1002
      %v1004 = vshrl.u32 %v912, 16
      %v1006 = vor.u32 %v1004, %v1002
      %v1008 = vshll.u32 %v913, 16
      %v1010 = vrot.slane %v1008, 1
      %v1011 = vsel %vm919, %v1006, %v1010
      %v1012 = vshrl.u32 %v913, 16
      %v1014 = vor.u32 %v1012, %v1010
      %v1016 = vshll.u32 %v914, 16
      %v1018 = vrot.slane %v1016, 1
      %v1019 = vsel %vm919, %v1014, %v1018
      %v1020 = vshrl.u32 %v914, 16
      %v1022 = vor.u32 %v1020, %v1018
      %v1024 = vshll.u32 %v915, 16
      %v1026 = vrot.slane %v1024, 1
      %v1027 = vsel %vm919, %v1022, %v1026
      %v1028 = vshrl.u32 %v915, 16
      %v1030 = vor.u32 %v1028, %v1026
      %v1032 = vshll.u32 %v916, 16
      %v1034 = vrot.slane %v1032, 1
      %v1035 = vsel %vm919, %v1030, %v1034
      %v1036 = vshrl.u32 %v916, 16
      %v1038 = vor.u32 %v1036, %v1034
      %v1040 = vshll.u32 %v917, 16
      %v1042 = vrot.slane %v1040, 1
      %v1043 = vsel %vm919, %v1038, %v1042
      %v1044 = vshrl.u32 %v917, 16
      %v1046 = vor.u32 %v1044, %v1042
      %v1048 = vshll.u32 %v918, 16
      %v1050 = vrot.slane %v1048, 1
      %v1051 = vsel %vm919, %v1046, %v1050
      %v1084 = vunpack.c.l.b16 %v820
      %v1085 = vunpack.c.l.b16 %v821
      %v1086 = vunpack.c.l.b16 %v822
      %v1087 = vunpack.c.l.b16 %v823
      %v1088 = vunpack.c.l.b16 %v824
      %v1089 = vunpack.c.l.b16 %v825
      %v1090 = vunpack.c.l.b16 %v826
      %v1091 = vunpack.c.l.b16 %v827
      %v1092 = vunpack.c.l.b16 %v828
      %v1093 = vunpack.c.l.b16 %v829
      %v1094 = vunpack.c.l.b16 %v830
      %v1095 = vunpack.c.l.b16 %v831
      %v1096 = vunpack.c.l.b16 %v832
      %v1097 = vunpack.c.l.b16 %v833
      %v1098 = vunpack.c.l.b16 %v834
      %v1099 = vunpack.c.l.b16 %v835
      %v1100 = vpack.c.b16 %v1085, %v1084
      %v1101 = vpack.c.b16 %v1087, %v1086
      %v1102 = vpack.c.b16 %v1089, %v1088
      %v1103 = vpack.c.b16 %v1091, %v1090
      %v1104 = vpack.c.b16 %v1093, %v1092
      %v1105 = vpack.c.b16 %v1095, %v1094
      %v1106 = vpack.c.b16 %v1097, %v1096
      %v1107 = vpack.c.b16 %v1099, %v1098
      %1116 = vmatprep.subr.bf16.mxu0 0
      %1117 = vmatpush1.bf16.msra.mxu0 %v1100
      %1118 = vmatprep.subr.bf16.mxu0 0
      %1119 = vmatpush1.bf16.msra.mxu0 %v1101
      %1120 = vmatprep.subr.bf16.mxu0 0
      %1121 = vmatpush1.bf16.msra.mxu0 %v1102
      %1122 = vmatprep.subr.bf16.mxu0 0
      %1123 = vmatpush1.bf16.msra.mxu0 %v1103
      %1124 = vmatprep.subr.bf16.mxu0 0
      %1125 = vmatpush1.bf16.msra.mxu0 %v1104
      %1126 = vmatprep.subr.bf16.mxu0 0
      %1127 = vmatpush1.bf16.msra.mxu0 %v1105
      %1128 = vmatprep.subr.bf16.mxu0 0
      %1129 = vmatpush1.bf16.msra.mxu0 %v1106
      %1130 = vmatprep.subr.bf16.mxu0 0
      %1131 = vmatpush1.bf16.msra.mxu0 %v1107
      %1132 = vmatprep.subr.bf16.mxu0 0
      %1133 = vmatpush1.bf16.msra.mxu0 0
      %1134 = vmatprep.subr.bf16.mxu0 0
      %1135 = vmatpush1.bf16.msra.mxu0 0
      %1136 = vmatprep.subr.bf16.mxu0 0
      %1137 = vmatpush1.bf16.msra.mxu0 0
      %1138 = vmatprep.subr.bf16.mxu0 0
      %1139 = vmatpush1.bf16.msra.mxu0 0
      %1140 = vmatprep.subr.bf16.mxu0 0
      %1141 = vmatpush1.bf16.msra.mxu0 0
      %1142 = vmatprep.subr.bf16.mxu0 0
      %1143 = vmatpush1.bf16.msra.mxu0 0
      %1144 = vmatprep.subr.bf16.mxu0 0
      %1145 = vmatpush1.bf16.msra.mxu0 0
      %1146 = vmatprep.subr.bf16.mxu0 0
      %1147 = vmatpush1.bf16.msra.mxu0 0
      %1148 = vmatprep.mubr.bf16.mxu0 0
      %1149 = vmatmul.mubr.bf16.gmra.mrb[0].mxu0 %v931
      %v1150 = vpop.f32.mrb[0].mxu0
      %v1151 = vadd.f32 0.0, %v1150
      %v1152 = vpop.f32.mrb[0].mxu0
      %v1153 = vpop.f32.mrb[0].mxu0
      %v1154 = vadd.f32 0.0, %v1153
      %v1155 = vpop.f32.mrb[0].mxu0
      %1156 = vmatprep.mubr.bf16.mxu0 0
      %1157 = vmatmul.mubr.bf16.gmra.mrb[0].mxu0 %v939
      %v1158 = vpop.f32.mrb[0].mxu0
      %v1159 = vadd.f32 0.0, %v1158
      %v1160 = vpop.f32.mrb[0].mxu0
      %v1161 = vpop.f32.mrb[0].mxu0
      %v1162 = vadd.f32 0.0, %v1161
      %v1163 = vpop.f32.mrb[0].mxu0
      %1164 = vmatprep.mubr.bf16.mxu0 0
      %1165 = vmatmul.mubr.bf16.gmra.mrb[0].mxu0 %v947
      %v1166 = vpop.f32.mrb[0].mxu0
      %v1167 = vadd.f32 0.0, %v1166
      %v1168 = vpop.f32.mrb[0].mxu0
      %v1169 = vpop.f32.mrb[0].mxu0
      %v1170 = vadd.f32 0.0, %v1169
      %v1171 = vpop.f32.mrb[0].mxu0
      %1172 = vmatprep.mubr.bf16.mxu0 0
      %1173 = vmatmul.mubr.bf16.gmra.mrb[0].mxu0 %v955
      %v1174 = vpop.f32.mrb[0].mxu0
      %v1175 = vadd.f32 0.0, %v1174
      %v1176 = vpop.f32.mrb[0].mxu0
      %v1177 = vpop.f32.mrb[0].mxu0
      %v1178 = vadd.f32 0.0, %v1177
      %v1179 = vpop.f32.mrb[0].mxu0
      %1180 = vmatprep.mubr.bf16.mxu0 0
      %1181 = vmatmul.mubr.bf16.gmra.mrb[0].mxu0 %v963
      %v1182 = vpop.f32.mrb[0].mxu0
      %v1183 = vadd.f32 0.0, %v1182
      %v1184 = vpop.f32.mrb[0].mxu0
      %v1185 = vpop.f32.mrb[0].mxu0
      %v1186 = vadd.f32 0.0, %v1185
      %v1187 = vpop.f32.mrb[0].mxu0
      %1188 = vmatprep.mubr.bf16.mxu0 0
      %1189 = vmatmul.mubr.bf16.gmra.mrb[0].mxu0 %v971
      %v1190 = vpop.f32.mrb[0].mxu0
      %v1191 = vadd.f32 0.0, %v1190
      %v1192 = vpop.f32.mrb[0].mxu0
      %v1193 = vpop.f32.mrb[0].mxu0
      %v1194 = vadd.f32 0.0, %v1193
      %v1195 = vpop.f32.mrb[0].mxu0
      %1196 = vmatprep.mubr.bf16.mxu0 0
      %1197 = vmatmul.mubr.bf16.gmra.mrb[0].mxu0 %v979
      %v1198 = vpop.f32.mrb[0].mxu0
      %v1199 = vadd.f32 0.0, %v1198
      %v1200 = vpop.f32.mrb[0].mxu0
      %v1201 = vpop.f32.mrb[0].mxu0
      %v1202 = vadd.f32 0.0, %v1201
      %v1203 = vpop.f32.mrb[0].mxu0
      %1204 = vmatprep.mubr.bf16.mxu0 0
      %1205 = vmatmul.mubr.bf16.gmra.mrb[0].mxu0 %v987
      %v1206 = vpop.f32.mrb[0].mxu0
      %v1207 = vadd.f32 0.0, %v1206
      %v1208 = vpop.f32.mrb[0].mxu0
      %v1209 = vpop.f32.mrb[0].mxu0
      %v1210 = vadd.f32 0.0, %v1209
      %v1211 = vpop.f32.mrb[0].mxu0
      %1212 = vmatprep.mubr.bf16.mxu0 0
      %1213 = vmatmul.mubr.bf16.gmra.mrb[0].mxu0 %v995
      %v1214 = vpop.f32.mrb[0].mxu0
      %v1215 = vadd.f32 0.0, %v1214
      %v1216 = vpop.f32.mrb[0].mxu0
      %v1217 = vpop.f32.mrb[0].mxu0
      %v1218 = vadd.f32 0.0, %v1217
      %v1219 = vpop.f32.mrb[0].mxu0
      %1220 = vmatprep.mubr.bf16.mxu0 0
      %1221 = vmatmul.mubr.bf16.gmra.mrb[0].mxu0 %v1003
      %v1222 = vpop.f32.mrb[0].mxu0
      %v1223 = vadd.f32 0.0, %v1222
      %v1224 = vpop.f32.mrb[0].mxu0
      %v1225 = vpop.f32.mrb[0].mxu0
      %v1226 = vadd.f32 0.0, %v1225
      %v1227 = vpop.f32.mrb[0].mxu0
      %1228 = vmatprep.mubr.bf16.mxu0 0
      %1229 = vmatmul.mubr.bf16.gmra.mrb[0].mxu0 %v1011
      %v1230 = vpop.f32.mrb[0].mxu0
      %v1231 = vadd.f32 0.0, %v1230
      %v1232 = vpop.f32.mrb[0].mxu0
      %v1233 = vpop.f32.mrb[0].mxu0
      %v1234 = vadd.f32 0.0, %v1233
      %v1235 = vpop.f32.mrb[0].mxu0
      %1236 = vmatprep.mubr.bf16.mxu0 0
      %1237 = vmatmul.mubr.bf16.gmra.mrb[0].mxu0 %v1019
      %v1238 = vpop.f32.mrb[0].mxu0
      %v1239 = vadd.f32 0.0, %v1238
      %v1240 = vpop.f32.mrb[0].mxu0
      %v1241 = vpop.f32.mrb[0].mxu0
      %v1242 = vadd.f32 0.0, %v1241
      %v1243 = vpop.f32.mrb[0].mxu0
      %1244 = vmatprep.mubr.bf16.mxu0 0
      %1245 = vmatmul.mubr.bf16.gmra.mrb[0].mxu0 %v1027
      %v1246 = vpop.f32.mrb[0].mxu0
      %v1247 = vadd.f32 0.0, %v1246
      %v1248 = vpop.f32.mrb[0].mxu0
      %v1249 = vpop.f32.mrb[0].mxu0
      %v1250 = vadd.f32 0.0, %v1249
      %v1251 = vpop.f32.mrb[0].mxu0
      %1252 = vmatprep.mubr.bf16.mxu0 0
      %1253 = vmatmul.mubr.bf16.gmra.mrb[0].mxu0 %v1035
      %v1254 = vpop.f32.mrb[0].mxu0
      %v1255 = vadd.f32 0.0, %v1254
      %v1256 = vpop.f32.mrb[0].mxu0
      %v1257 = vpop.f32.mrb[0].mxu0
      %v1258 = vadd.f32 0.0, %v1257
      %v1259 = vpop.f32.mrb[0].mxu0
      %1260 = vmatprep.mubr.bf16.mxu0 0
      %1261 = vmatmul.mubr.bf16.gmra.mrb[0].mxu0 %v1043
      %v1262 = vpop.f32.mrb[0].mxu0
      %v1263 = vadd.f32 0.0, %v1262
      %v1264 = vpop.f32.mrb[0].mxu0
      %v1265 = vpop.f32.mrb[0].mxu0
      %v1266 = vadd.f32 0.0, %v1265
      %v1267 = vpop.f32.mrb[0].mxu0
      %1268 = vmatprep.mubr.bf16.mxu0 0
      %1269 = vmatmul.mubr.bf16.gmra.mrb[0].mxu0 %v1051
      %v1270 = vpop.f32.mrb[0].mxu0
      %v1271 = vadd.f32 0.0, %v1270
      %v1272 = vpop.f32.mrb[0].mxu0
      %v1273 = vpop.f32.mrb[0].mxu0
      %v1274 = vadd.f32 0.0, %v1273
      %v1275 = vpop.f32.mrb[0].mxu0
      %1276 = vdwg.mxu0
      %v1277 = vadd.f32 %v754, %v1151
      %v1278 = vadd.f32 %v755, %v1154
      %v1279 = vadd.f32 %v756, %v1159
      %v1280 = vadd.f32 %v757, %v1162
      %v1281 = vadd.f32 %v758, %v1167
      %v1282 = vadd.f32 %v759, %v1170
      %v1283 = vadd.f32 %v760, %v1175
      %v1284 = vadd.f32 %v761, %v1178
      %v1285 = vadd.f32 %v762, %v1183
      %v1286 = vadd.f32 %v763, %v1186
      %v1287 = vadd.f32 %v764, %v1191
      %v1288 = vadd.f32 %v765, %v1194
      %v1289 = vadd.f32 %v766, %v1199
      %v1290 = vadd.f32 %v767, %v1202
      %v1291 = vadd.f32 %v768, %v1207
      %v1292 = vadd.f32 %v769, %v1210
      %v1293 = vadd.f32 %v770, %v1215
      %v1294 = vadd.f32 %v771, %v1218
      %v1295 = vadd.f32 %v772, %v1223
      %v1296 = vadd.f32 %v773, %v1226
      %v1297 = vadd.f32 %v774, %v1231
      %v1298 = vadd.f32 %v775, %v1234
      %v1299 = vadd.f32 %v776, %v1239
      %v1300 = vadd.f32 %v777, %v1242
      %v1301 = vadd.f32 %v778, %v1247
      %v1302 = vadd.f32 %v779, %v1250
      %v1303 = vadd.f32 %v780, %v1255
      %v1304 = vadd.f32 %v781, %v1258
      %v1305 = vadd.f32 %v782, %v1263
      %v1306 = vadd.f32 %v783, %v1266
      %v1307 = vadd.f32 %v784, %v1271
      %v1308 = vadd.f32 %v785, %v1274
      %1309 = vst [vmem:[#allocation4] sm:$0xff] %v1277
      %1310 = vst [vmem:[#allocation4 + $0x8] sm:$0xff] %v1278
      %1311 = vst [vmem:[#allocation4 + $0x10] sm:$0xff] %v1279
      %1312 = vst [vmem:[#allocation4 + $0x18] sm:$0xff] %v1280
      %1313 = vst [vmem:[#allocation4 + $0x20] sm:$0xff] %v1281
      %1314 = vst [vmem:[#allocation4 + $0x28] sm:$0xff] %v1282
      %1315 = vst [vmem:[#allocation4 + $0x30] sm:$0xff] %v1283
      %1316 = vst [vmem:[#allocation4 + $0x38] sm:$0xff] %v1284
      %1317 = vst [vmem:[#allocation4 + $0x40] sm:$0xff] %v1285
      %1318 = vst [vmem:[#allocation4 + $0x48] sm:$0xff] %v1286
      %1319 = vst [vmem:[#allocation4 + $0x50] sm:$0xff] %v1287
      %1320 = vst [vmem:[#allocation4 + $0x58] sm:$0xff] %v1288
      %1321 = vst [vmem:[#allocation4 + $0x60] sm:$0xff] %v1289
      %1322 = vst [vmem:[#allocation4 + $0x68] sm:$0xff] %v1290
      %1323 = vst [vmem:[#allocation4 + $0x70] sm:$0xff] %v1291
      %1324 = vst [vmem:[#allocation4 + $0x78] sm:$0xff] %v1292
      %1325 = vst [vmem:[#allocation4 + $0x80] sm:$0xff] %v1293
      %1326 = vst [vmem:[#allocation4 + $0x88] sm:$0xff] %v1294
      %1327 = vst [vmem:[#allocation4 + $0x90] sm:$0xff] %v1295
      %1328 = vst [vmem:[#allocation4 + $0x98] sm:$0xff] %v1296
      %1329 = vst [vmem:[#allocation4 + $0xa0] sm:$0xff] %v1297
      %1330 = vst [vmem:[#allocation4 + $0xa8] sm:$0xff] %v1298
      %1331 = vst [vmem:[#allocation4 + $0xb0] sm:$0xff] %v1299
      %1332 = vst [vmem:[#allocation4 + $0xb8] sm:$0xff] %v1300
      %1333 = vst [vmem:[#allocation4 + $0xc0] sm:$0xff] %v1301
      %1334 = vst [vmem:[#allocation4 + $0xc8] sm:$0xff] %v1302
      %1335 = vst [vmem:[#allocation4 + $0xd0] sm:$0xff] %v1303
      %1336 = vst [vmem:[#allocation4 + $0xd8] sm:$0xff] %v1304
      %1337 = vst [vmem:[#allocation4 + $0xe0] sm:$0xff] %v1305
      %1338 = vst [vmem:[#allocation4 + $0xe8] sm:$0xff] %v1306
      %1339 = vst [vmem:[#allocation4 + $0xf0] sm:$0xff] %v1307
      %1340 = vst [vmem:[#allocation4 + $0xf8] sm:$0xff] %v1308
      %v1341 = vld [vmem:[#allocation4] sm:$0xff]
      %v1342 = vld [vmem:[#allocation4 + $0x8] sm:$0xff]
      %v1343 = vld [vmem:[#allocation4 + $0x10] sm:$0xff]
      %v1344 = vld [vmem:[#allocation4 + $0x18] sm:$0xff]
      %v1345 = vld [vmem:[#allocation4 + $0x20] sm:$0xff]
      %v1346 = vld [vmem:[#allocation4 + $0x28] sm:$0xff]
      %v1347 = vld [vmem:[#allocation4 + $0x30] sm:$0xff]
      %v1348 = vld [vmem:[#allocation4 + $0x38] sm:$0xff]
      %v1349 = vld [vmem:[#allocation4 + $0x40] sm:$0xff]
      %v1350 = vld [vmem:[#allocation4 + $0x48] sm:$0xff]
      %v1351 = vld [vmem:[#allocation4 + $0x50] sm:$0xff]
      %v1352 = vld [vmem:[#allocation4 + $0x58] sm:$0xff]
      %v1353 = vld [vmem:[#allocation4 + $0x60] sm:$0xff]
      %v1354 = vld [vmem:[#allocation4 + $0x68] sm:$0xff]
      %v1355 = vld [vmem:[#allocation4 + $0x70] sm:$0xff]
      %v1356 = vld [vmem:[#allocation4 + $0x78] sm:$0xff]
      %v1357 = vld [vmem:[#allocation4 + $0x80] sm:$0xff]
      %v1358 = vld [vmem:[#allocation4 + $0x88] sm:$0xff]
      %v1359 = vld [vmem:[#allocation4 + $0x90] sm:$0xff]
      %v1360 = vld [vmem:[#allocation4 + $0x98] sm:$0xff]
      %v1361 = vld [vmem:[#allocation4 + $0xa0] sm:$0xff]
      %v1362 = vld [vmem:[#allocation4 + $0xa8] sm:$0xff]
      %v1363 = vld [vmem:[#allocation4 + $0xb0] sm:$0xff]
      %v1364 = vld [vmem:[#allocation4 + $0xb8] sm:$0xff]
      %v1365 = vld [vmem:[#allocation4 + $0xc0] sm:$0xff]
      %v1366 = vld [vmem:[#allocation4 + $0xc8] sm:$0xff]
      %v1367 = vld [vmem:[#allocation4 + $0xd0] sm:$0xff]
      %v1368 = vld [vmem:[#allocation4 + $0xd8] sm:$0xff]
      %v1369 = vld [vmem:[#allocation4 + $0xe0] sm:$0xff]
      %v1370 = vld [vmem:[#allocation4 + $0xe8] sm:$0xff]
      %v1371 = vld [vmem:[#allocation4 + $0xf0] sm:$0xff]
      %v1372 = vld [vmem:[#allocation4 + $0xf8] sm:$0xff]
      %v1373 = vld [vmem:[%s363] sm:$0xe]
      %v1374 = vld [vmem:[%s363 + $0x4] sm:$0xf]
      %v1375 = vld [vmem:[%s363 + $0x8] sm:$0xf]
      %v1376 = vld [vmem:[%s363 + $0xc] sm:$0xf]
      %v1377 = vld [vmem:[%s363 + $0x10] sm:$0xf]
      %v1378 = vld [vmem:[%s363 + $0x14] sm:$0xf]
      %v1379 = vld [vmem:[%s363 + $0x18] sm:$0xf]
      %v1380 = vld [vmem:[%s363 + $0x1c] sm:$0xf]
      %v1381 = vld [vmem:[%s363 + $0x20] sm:$0xf]
      %v1382 = vld [vmem:[%s363 + $0x24] sm:$0xf]
      %v1383 = vld [vmem:[%s363 + $0x28] sm:$0xf]
      %v1384 = vld [vmem:[%s363 + $0x2c] sm:$0xf]
      %v1385 = vld [vmem:[%s363 + $0x30] sm:$0xf]
      %v1386 = vld [vmem:[%s363 + $0x34] sm:$0xf]
      %v1387 = vld [vmem:[%s363 + $0x38] sm:$0xf]
      %v1388 = vld [vmem:[%s363 + $0x3c] sm:$0xf]
      %v1389 = vld [vmem:[%s363 + $0x40] sm:$0xf]
      %v1390 = vld [vmem:[%s363 + $0x44] sm:$0xf]
      %v1391 = vld [vmem:[%s363 + $0x48] sm:$0xf]
      %v1392 = vld [vmem:[%s363 + $0x4c] sm:$0xf]
      %v1393 = vld [vmem:[%s363 + $0x50] sm:$0xf]
      %v1394 = vld [vmem:[%s363 + $0x54] sm:$0xf]
      %v1395 = vld [vmem:[%s363 + $0x58] sm:$0xf]
      %v1396 = vld [vmem:[%s363 + $0x5c] sm:$0xf]
      %v1397 = vld [vmem:[%s363 + $0x60] sm:$0xf]
      %v1398 = vld [vmem:[%s363 + $0x64] sm:$0xf]
      %v1399 = vld [vmem:[%s363 + $0x68] sm:$0xf]
      %v1400 = vld [vmem:[%s363 + $0x6c] sm:$0xf]
      %v1401 = vld [vmem:[%s363 + $0x70] sm:$0xf]
      %v1402 = vld [vmem:[%s363 + $0x74] sm:$0xf]
      %v1403 = vld [vmem:[%s363 + $0x78] sm:$0xf]
      %v1404 = vld [vmem:[%s363 + $0x7c] sm:$0xf]
      %v1405 = vld [vmem:[%s363 + $0x80] sm:$0x1]
      %s1406 = scalar_lea.vmem %s1, 128
      %v1407 = vld [vmem:[%s1406] sm:$0xf]
      %v1408 = vld [vmem:[%s1406 + $0x4] sm:$0xf]
      %v1409 = vld [vmem:[%s1406 + $0x8] sm:$0xf]
      %v1410 = vld [vmem:[%s1406 + $0xc] sm:$0xf]
      %v1411 = vld [vmem:[%s1406 + $0x10] sm:$0xf]
      %v1412 = vld [vmem:[%s1406 + $0x14] sm:$0xf]
      %v1413 = vld [vmem:[%s1406 + $0x18] sm:$0xf]
      %v1414 = vld [vmem:[%s1406 + $0x1c] sm:$0xf]
      %v1415 = vld [vmem:[%s1406 + $0x20] sm:$0xf]
      %v1416 = vld [vmem:[%s1406 + $0x24] sm:$0xf]
      %v1417 = vld [vmem:[%s1406 + $0x28] sm:$0xf]
      %v1418 = vld [vmem:[%s1406 + $0x2c] sm:$0xf]
      %v1419 = vld [vmem:[%s1406 + $0x30] sm:$0xf]
      %v1420 = vld [vmem:[%s1406 + $0x34] sm:$0xf]
      %v1421 = vld [vmem:[%s1406 + $0x38] sm:$0xf]
      %v1422 = vld [vmem:[%s1406 + $0x3c] sm:$0xf]
      %v1456 = vunpack.c.l.b16 %v1373
      %v1457 = vunpack.c.l.b16 %v1374
      %v1458 = vunpack.c.l.b16 %v1375
      %v1459 = vunpack.c.l.b16 %v1376
      %v1460 = vunpack.c.l.b16 %v1377
      %v1461 = vunpack.c.l.b16 %v1378
      %v1462 = vunpack.c.l.b16 %v1379
      %v1463 = vunpack.c.l.b16 %v1380
      %v1464 = vunpack.c.l.b16 %v1381
      %v1465 = vunpack.c.l.b16 %v1382
      %v1466 = vunpack.c.l.b16 %v1383
      %v1467 = vunpack.c.l.b16 %v1384
      %v1468 = vunpack.c.l.b16 %v1385
      %v1469 = vunpack.c.l.b16 %v1386
      %v1470 = vunpack.c.l.b16 %v1387
      %v1471 = vunpack.c.l.b16 %v1388
      %v1472 = vunpack.c.l.b16 %v1389
      %v1473 = vunpack.c.l.b16 %v1390
      %v1474 = vunpack.c.l.b16 %v1391
      %v1475 = vunpack.c.l.b16 %v1392
      %v1476 = vunpack.c.l.b16 %v1393
      %v1477 = vunpack.c.l.b16 %v1394
      %v1478 = vunpack.c.l.b16 %v1395
      %v1479 = vunpack.c.l.b16 %v1396
      %v1480 = vunpack.c.l.b16 %v1397
      %v1481 = vunpack.c.l.b16 %v1398
      %v1482 = vunpack.c.l.b16 %v1399
      %v1483 = vunpack.c.l.b16 %v1400
      %v1484 = vunpack.c.l.b16 %v1401
      %v1485 = vunpack.c.l.b16 %v1402
      %v1486 = vunpack.c.l.b16 %v1403
      %v1487 = vunpack.c.l.b16 %v1404
      %v1488 = vunpack.c.l.b16 %v1405
      %v1489 = vpack.c.b16 %v1457, %v1456
      %v1490 = vpack.c.b16 %v1459, %v1458
      %v1491 = vpack.c.b16 %v1461, %v1460
      %v1492 = vpack.c.b16 %v1463, %v1462
      %v1493 = vpack.c.b16 %v1465, %v1464
      %v1494 = vpack.c.b16 %v1467, %v1466
      %v1495 = vpack.c.b16 %v1469, %v1468
      %v1496 = vpack.c.b16 %v1471, %v1470
      %v1497 = vpack.c.b16 %v1473, %v1472
      %v1498 = vpack.c.b16 %v1475, %v1474
      %v1499 = vpack.c.b16 %v1477, %v1476
      %v1500 = vpack.c.b16 %v1479, %v1478
      %v1501 = vpack.c.b16 %v1481, %v1480
      %v1502 = vpack.c.b16 %v1483, %v1482
      %v1503 = vpack.c.b16 %v1485, %v1484
      %v1504 = vpack.c.b16 %v1487, %v1486
      %v1505 = vpack.c.b16 %v1488, %v1488
      %vm1506 = vcmask 1046528
      %v1507 = vrot.slane %v1489, 1
      %v1508 = vrot.slane %v1490, 1
      %v1509 = vsel %vm1506, %v1507, %v1508
      %v1510 = vrot.slane %v1491, 1
      %v1511 = vsel %vm1506, %v1508, %v1510
      %v1512 = vrot.slane %v1492, 1
      %v1513 = vsel %vm1506, %v1510, %v1512
      %v1514 = vrot.slane %v1493, 1
      %v1515 = vsel %vm1506, %v1512, %v1514
      %v1516 = vrot.slane %v1494, 1
      %v1517 = vsel %vm1506, %v1514, %v1516
      %v1518 = vrot.slane %v1495, 1
      %v1519 = vsel %vm1506, %v1516, %v1518
      %v1520 = vrot.slane %v1496, 1
      %v1521 = vsel %vm1506, %v1518, %v1520
      %v1522 = vrot.slane %v1497, 1
      %v1523 = vsel %vm1506, %v1520, %v1522
      %v1524 = vrot.slane %v1498, 1
      %v1525 = vsel %vm1506, %v1522, %v1524
      %v1526 = vrot.slane %v1499, 1
      %v1527 = vsel %vm1506, %v1524, %v1526
      %v1528 = vrot.slane %v1500, 1
      %v1529 = vsel %vm1506, %v1526, %v1528
      %v1530 = vrot.slane %v1501, 1
      %v1531 = vsel %vm1506, %v1528, %v1530
      %v1532 = vrot.slane %v1502, 1
      %v1533 = vsel %vm1506, %v1530, %v1532
      %v1534 = vrot.slane %v1503, 1
      %v1535 = vsel %vm1506, %v1532, %v1534
      %v1536 = vrot.slane %v1504, 1
      %v1537 = vsel %vm1506, %v1534, %v1536
      %v1538 = vrot.slane %v1505, 1
      %v1539 = vsel %vm1506, %v1536, %v1538
      %v1572 = vunpack.c.l.b16 %v1407
      %v1573 = vunpack.c.l.b16 %v1408
      %v1574 = vunpack.c.l.b16 %v1409
      %v1575 = vunpack.c.l.b16 %v1410
      %v1576 = vunpack.c.l.b16 %v1411
      %v1577 = vunpack.c.l.b16 %v1412
      %v1578 = vunpack.c.l.b16 %v1413
      %v1579 = vunpack.c.l.b16 %v1414
      %v1580 = vunpack.c.l.b16 %v1415
      %v1581 = vunpack.c.l.b16 %v1416
      %v1582 = vunpack.c.l.b16 %v1417
      %v1583 = vunpack.c.l.b16 %v1418
      %v1584 = vunpack.c.l.b16 %v1419
      %v1585 = vunpack.c.l.b16 %v1420
      %v1586 = vunpack.c.l.b16 %v1421
      %v1587 = vunpack.c.l.b16 %v1422
      %v1588 = vpack.c.b16 %v1573, %v1572
      %v1589 = vpack.c.b16 %v1575, %v1574
      %v1590 = vpack.c.b16 %v1577, %v1576
      %v1591 = vpack.c.b16 %v1579, %v1578
      %v1592 = vpack.c.b16 %v1581, %v1580
      %v1593 = vpack.c.b16 %v1583, %v1582
      %v1594 = vpack.c.b16 %v1585, %v1584
      %v1595 = vpack.c.b16 %v1587, %v1586
      %1604 = vmatprep.subr.bf16.mxu0 0
      %1605 = vmatpush1.bf16.msra.mxu0 %v1588
      %1606 = vmatprep.subr.bf16.mxu0 0
      %1607 = vmatpush1.bf16.msra.mxu0 %v1589
      %1608 = vmatprep.subr.bf16.mxu0 0
      %1609 = vmatpush1.bf16.msra.mxu0 %v1590
      %1610 = vmatprep.subr.bf16.mxu0 0
      %1611 = vmatpush1.bf16.msra.mxu0 %v1591
      %1612 = vmatprep.subr.bf16.mxu0 0
      %1613 = vmatpush1.bf16.msra.mxu0 %v1592
      %1614 = vmatprep.subr.bf16.mxu0 0
      %1615 = vmatpush1.bf16.msra.mxu0 %v1593
      %1616 = vmatprep.subr.bf16.mxu0 0
      %1617 = vmatpush1.bf16.msra.mxu0 %v1594
      %1618 = vmatprep.subr.bf16.mxu0 0
      %1619 = vmatpush1.bf16.msra.mxu0 %v1595
      %1620 = vmatprep.subr.bf16.mxu0 0
      %1621 = vmatpush1.bf16.msra.mxu0 0
      %1622 = vmatprep.subr.bf16.mxu0 0
      %1623 = vmatpush1.bf16.msra.mxu0 0
      %1624 = vmatprep.subr.bf16.mxu0 0
      %1625 = vmatpush1.bf16.msra.mxu0 0
      %1626 = vmatprep.subr.bf16.mxu0 0
      %1627 = vmatpush1.bf16.msra.mxu0 0
      %1628 = vmatprep.subr.bf16.mxu0 0
      %1629 = vmatpush1.bf16.msra.mxu0 0
      %1630 = vmatprep.subr.bf16.mxu0 0
      %1631 = vmatpush1.bf16.msra.mxu0 0
      %1632 = vmatprep.subr.bf16.mxu0 0
      %1633 = vmatpush1.bf16.msra.mxu0 0
      %1634 = vmatprep.subr.bf16.mxu0 0
      %1635 = vmatpush1.bf16.msra.mxu0 0
      %1636 = vmatprep.mubr.bf16.mxu0 0
      %1637 = vmatmul.mubr.bf16.gmra.mrb[0].mxu0 %v1509
      %v1638 = vpop.f32.mrb[0].mxu0
      %v1639 = vadd.f32 0.0, %v1638
      %v1640 = vpop.f32.mrb[0].mxu0
      %v1641 = vpop.f32.mrb[0].mxu0
      %v1642 = vadd.f32 0.0, %v1641
      %v1643 = vpop.f32.mrb[0].mxu0
      %1644 = vmatprep.mubr.bf16.mxu0 0
      %1645 = vmatmul.mubr.bf16.gmra.mrb[0].mxu0 %v1511
      %v1646 = vpop.f32.mrb[0].mxu0
      %v1647 = vadd.f32 0.0, %v1646
      %v1648 = vpop.f32.mrb[0].mxu0
      %v1649 = vpop.f32.mrb[0].mxu0
      %v1650 = vadd.f32 0.0, %v1649
      %v1651 = vpop.f32.mrb[0].mxu0
      %1652 = vmatprep.mubr.bf16.mxu0 0
      %1653 = vmatmul.mubr.bf16.gmra.mrb[0].mxu0 %v1513
      %v1654 = vpop.f32.mrb[0].mxu0
      %v1655 = vadd.f32 0.0, %v1654
      %v1656 = vpop.f32.mrb[0].mxu0
      %v1657 = vpop.f32.mrb[0].mxu0
      %v1658 = vadd.f32 0.0, %v1657
      %v1659 = vpop.f32.mrb[0].mxu0
      %1660 = vmatprep.mubr.bf16.mxu0 0
      %1661 = vmatmul.mubr.bf16.gmra.mrb[0].mxu0 %v1515
      %v1662 = vpop.f32.mrb[0].mxu0
      %v1663 = vadd.f32 0.0, %v1662
      %v1664 = vpop.f32.mrb[0].mxu0
      %v1665 = vpop.f32.mrb[0].mxu0
      %v1666 = vadd.f32 0.0, %v1665
      %v1667 = vpop.f32.mrb[0].mxu0
      %1668 = vmatprep.mubr.bf16.mxu0 0
      %1669 = vmatmul.mubr.bf16.gmra.mrb[0].mxu0 %v1517
      %v1670 = vpop.f32.mrb[0].mxu0
      %v1671 = vadd.f32 0.0, %v1670
      %v1672 = vpop.f32.mrb[0].mxu0
      %v1673 = vpop.f32.mrb[0].mxu0
      %v1674 = vadd.f32 0.0, %v1673
      %v1675 = vpop.f32.mrb[0].mxu0
      %1676 = vmatprep.mubr.bf16.mxu0 0
      %1677 = vmatmul.mubr.bf16.gmra.mrb[0].mxu0 %v1519
      %v1678 = vpop.f32.mrb[0].mxu0
      %v1679 = vadd.f32 0.0, %v1678
      %v1680 = vpop.f32.mrb[0].mxu0
      %v1681 = vpop.f32.mrb[0].mxu0
      %v1682 = vadd.f32 0.0, %v1681
      %v1683 = vpop.f32.mrb[0].mxu0
      %1684 = vmatprep.mubr.bf16.mxu0 0
      %1685 = vmatmul.mubr.bf16.gmra.mrb[0].mxu0 %v1521
      %v1686 = vpop.f32.mrb[0].mxu0
      %v1687 = vadd.f32 0.0, %v1686
      %v1688 = vpop.f32.mrb[0].mxu0
      %v1689 = vpop.f32.mrb[0].mxu0
      %v1690 = vadd.f32 0.0, %v1689
      %v1691 = vpop.f32.mrb[0].mxu0
      %1692 = vmatprep.mubr.bf16.mxu0 0
      %1693 = vmatmul.mubr.bf16.gmra.mrb[0].mxu0 %v1523
      %v1694 = vpop.f32.mrb[0].mxu0
      %v1695 = vadd.f32 0.0, %v1694
      %v1696 = vpop.f32.mrb[0].mxu0
      %v1697 = vpop.f32.mrb[0].mxu0
      %v1698 = vadd.f32 0.0, %v1697
      %v1699 = vpop.f32.mrb[0].mxu0
      %1700 = vmatprep.mubr.bf16.mxu0 0
      %1701 = vmatmul.mubr.bf16.gmra.mrb[0].mxu0 %v1525
      %v1702 = vpop.f32.mrb[0].mxu0
      %v1703 = vadd.f32 0.0, %v1702
      %v1704 = vpop.f32.mrb[0].mxu0
      %v1705 = vpop.f32.mrb[0].mxu0
      %v1706 = vadd.f32 0.0, %v1705
      %v1707 = vpop.f32.mrb[0].mxu0
      %1708 = vmatprep.mubr.bf16.mxu0 0
      %1709 = vmatmul.mubr.bf16.gmra.mrb[0].mxu0 %v1527
      %v1710 = vpop.f32.mrb[0].mxu0
      %v1711 = vadd.f32 0.0, %v1710
      %v1712 = vpop.f32.mrb[0].mxu0
      %v1713 = vpop.f32.mrb[0].mxu0
      %v1714 = vadd.f32 0.0, %v1713
      %v1715 = vpop.f32.mrb[0].mxu0
      %1716 = vmatprep.mubr.bf16.mxu0 0
      %1717 = vmatmul.mubr.bf16.gmra.mrb[0].mxu0 %v1529
      %v1718 = vpop.f32.mrb[0].mxu0
      %v1719 = vadd.f32 0.0, %v1718
      %v1720 = vpop.f32.mrb[0].mxu0
      %v1721 = vpop.f32.mrb[0].mxu0
      %v1722 = vadd.f32 0.0, %v1721
      %v1723 = vpop.f32.mrb[0].mxu0
      %1724 = vmatprep.mubr.bf16.mxu0 0
      %1725 = vmatmul.mubr.bf16.gmra.mrb[0].mxu0 %v1531
      %v1726 = vpop.f32.mrb[0].mxu0
      %v1727 = vadd.f32 0.0, %v1726
      %v1728 = vpop.f32.mrb[0].mxu0
      %v1729 = vpop.f32.mrb[0].mxu0
      %v1730 = vadd.f32 0.0, %v1729
      %v1731 = vpop.f32.mrb[0].mxu0
      %1732 = vmatprep.mubr.bf16.mxu0 0
      %1733 = vmatmul.mubr.bf16.gmra.mrb[0].mxu0 %v1533
      %v1734 = vpop.f32.mrb[0].mxu0
      %v1735 = vadd.f32 0.0, %v1734
      %v1736 = vpop.f32.mrb[0].mxu0
      %v1737 = vpop.f32.mrb[0].mxu0
      %v1738 = vadd.f32 0.0, %v1737
      %v1739 = vpop.f32.mrb[0].mxu0
      %1740 = vmatprep.mubr.bf16.mxu0 0
      %1741 = vmatmul.mubr.bf16.gmra.mrb[0].mxu0 %v1535
      %v1742 = vpop.f32.mrb[0].mxu0
      %v1743 = vadd.f32 0.0, %v1742
      %v1744 = vpop.f32.mrb[0].mxu0
      %v1745 = vpop.f32.mrb[0].mxu0
      %v1746 = vadd.f32 0.0, %v1745
      %v1747 = vpop.f32.mrb[0].mxu0
      %1748 = vmatprep.mubr.bf16.mxu0 0
      %1749 = vmatmul.mubr.bf16.gmra.mrb[0].mxu0 %v1537
      %v1750 = vpop.f32.mrb[0].mxu0
      %v1751 = vadd.f32 0.0, %v1750
      %v1752 = vpop.f32.mrb[0].mxu0
      %v1753 = vpop.f32.mrb[0].mxu0
      %v1754 = vadd.f32 0.0, %v1753
      %v1755 = vpop.f32.mrb[0].mxu0
      %1756 = vmatprep.mubr.bf16.mxu0 0
      %1757 = vmatmul.mubr.bf16.gmra.mrb[0].mxu0 %v1539
      %v1758 = vpop.f32.mrb[0].mxu0
      %v1759 = vadd.f32 0.0, %v1758
      %v1760 = vpop.f32.mrb[0].mxu0
      %v1761 = vpop.f32.mrb[0].mxu0
      %v1762 = vadd.f32 0.0, %v1761
      %v1763 = vpop.f32.mrb[0].mxu0
      %1764 = vdwg.mxu0
      %v1765 = vadd.f32 %v1341, %v1639
      %v1766 = vadd.f32 %v1342, %v1642
      %v1767 = vadd.f32 %v1343, %v1647
      %v1768 = vadd.f32 %v1344, %v1650
      %v1769 = vadd.f32 %v1345, %v1655
      %v1770 = vadd.f32 %v1346, %v1658
      %v1771 = vadd.f32 %v1347, %v1663
      %v1772 = vadd.f32 %v1348, %v1666
      %v1773 = vadd.f32 %v1349, %v1671
      %v1774 = vadd.f32 %v1350, %v1674
      %v1775 = vadd.f32 %v1351, %v1679
      %v1776 = vadd.f32 %v1352, %v1682
      %v1777 = vadd.f32 %v1353, %v1687
      %v1778 = vadd.f32 %v1354, %v1690
      %v1779 = vadd.f32 %v1355, %v1695
      %v1780 = vadd.f32 %v1356, %v1698
      %v1781 = vadd.f32 %v1357, %v1703
      %v1782 = vadd.f32 %v1358, %v1706
      %v1783 = vadd.f32 %v1359, %v1711
      %v1784 = vadd.f32 %v1360, %v1714
      %v1785 = vadd.f32 %v1361, %v1719
      %v1786 = vadd.f32 %v1362, %v1722
      %v1787 = vadd.f32 %v1363, %v1727
      %v1788 = vadd.f32 %v1364, %v1730
      %v1789 = vadd.f32 %v1365, %v1735
      %v1790 = vadd.f32 %v1366, %v1738
      %v1791 = vadd.f32 %v1367, %v1743
      %v1792 = vadd.f32 %v1368, %v1746
      %v1793 = vadd.f32 %v1369, %v1751
      %v1794 = vadd.f32 %v1370, %v1754
      %v1795 = vadd.f32 %v1371, %v1759
      %v1796 = vadd.f32 %v1372, %v1762
      %1797 = vst [vmem:[#allocation4] sm:$0xff] %v1765
      %1798 = vst [vmem:[#allocation4 + $0x8] sm:$0xff] %v1766
      %1799 = vst [vmem:[#allocation4 + $0x10] sm:$0xff] %v1767
      %1800 = vst [vmem:[#allocation4 + $0x18] sm:$0xff] %v1768
      %1801 = vst [vmem:[#allocation4 + $0x20] sm:$0xff] %v1769
      %1802 = vst [vmem:[#allocation4 + $0x28] sm:$0xff] %v1770
      %1803 = vst [vmem:[#allocation4 + $0x30] sm:$0xff] %v1771
      %1804 = vst [vmem:[#allocation4 + $0x38] sm:$0xff] %v1772
      %1805 = vst [vmem:[#allocation4 + $0x40] sm:$0xff] %v1773
      %1806 = vst [vmem:[#allocation4 + $0x48] sm:$0xff] %v1774
      %1807 = vst [vmem:[#allocation4 + $0x50] sm:$0xff] %v1775
      %1808 = vst [vmem:[#allocation4 + $0x58] sm:$0xff] %v1776
      %1809 = vst [vmem:[#allocation4 + $0x60] sm:$0xff] %v1777
      %1810 = vst [vmem:[#allocation4 + $0x68] sm:$0xff] %v1778
      %1811 = vst [vmem:[#allocation4 + $0x70] sm:$0xff] %v1779
      %1812 = vst [vmem:[#allocation4 + $0x78] sm:$0xff] %v1780
      %1813 = vst [vmem:[#allocation4 + $0x80] sm:$0xff] %v1781
      %1814 = vst [vmem:[#allocation4 + $0x88] sm:$0xff] %v1782
      %1815 = vst [vmem:[#allocation4 + $0x90] sm:$0xff] %v1783
      %1816 = vst [vmem:[#allocation4 + $0x98] sm:$0xff] %v1784
      %1817 = vst [vmem:[#allocation4 + $0xa0] sm:$0xff] %v1785
      %1818 = vst [vmem:[#allocation4 + $0xa8] sm:$0xff] %v1786
      %1819 = vst [vmem:[#allocation4 + $0xb0] sm:$0xff] %v1787
      %1820 = vst [vmem:[#allocation4 + $0xb8] sm:$0xff] %v1788
      %1821 = vst [vmem:[#allocation4 + $0xc0] sm:$0xff] %v1789
      %1822 = vst [vmem:[#allocation4 + $0xc8] sm:$0xff] %v1790
      %1823 = vst [vmem:[#allocation4 + $0xd0] sm:$0xff] %v1791
      %1824 = vst [vmem:[#allocation4 + $0xd8] sm:$0xff] %v1792
      %1825 = vst [vmem:[#allocation4 + $0xe0] sm:$0xff] %v1793
      %1826 = vst [vmem:[#allocation4 + $0xe8] sm:$0xff] %v1794
      %1827 = vst [vmem:[#allocation4 + $0xf0] sm:$0xff] %v1795
      %1828 = vst [vmem:[#allocation4 + $0xf8] sm:$0xff] %v1796
      %v1829 = vld [vmem:[#allocation4] sm:$0xff]
      %v1830 = vld [vmem:[#allocation4 + $0x8] sm:$0xff]
      %v1831 = vld [vmem:[#allocation4 + $0x10] sm:$0xff]
      %v1832 = vld [vmem:[#allocation4 + $0x18] sm:$0xff]
      %v1833 = vld [vmem:[#allocation4 + $0x20] sm:$0xff]
      %v1834 = vld [vmem:[#allocation4 + $0x28] sm:$0xff]
      %v1835 = vld [vmem:[#allocation4 + $0x30] sm:$0xff]
      %v1836 = vld [vmem:[#allocation4 + $0x38] sm:$0xff]
      %v1837 = vld [vmem:[#allocation4 + $0x40] sm:$0xff]
      %v1838 = vld [vmem:[#allocation4 + $0x48] sm:$0xff]
      %v1839 = vld [vmem:[#allocation4 + $0x50] sm:$0xff]
      %v1840 = vld [vmem:[#allocation4 + $0x58] sm:$0xff]
      %v1841 = vld [vmem:[#allocation4 + $0x60] sm:$0xff]
      %v1842 = vld [vmem:[#allocation4 + $0x68] sm:$0xff]
      %v1843 = vld [vmem:[#allocation4 + $0x70] sm:$0xff]
      %v1844 = vld [vmem:[#allocation4 + $0x78] sm:$0xff]
      %v1845 = vld [vmem:[#allocation4 + $0x80] sm:$0xff]
      %v1846 = vld [vmem:[#allocation4 + $0x88] sm:$0xff]
      %v1847 = vld [vmem:[#allocation4 + $0x90] sm:$0xff]
      %v1848 = vld [vmem:[#allocation4 + $0x98] sm:$0xff]
      %v1849 = vld [vmem:[#allocation4 + $0xa0] sm:$0xff]
      %v1850 = vld [vmem:[#allocation4 + $0xa8] sm:$0xff]
      %v1851 = vld [vmem:[#allocation4 + $0xb0] sm:$0xff]
      %v1852 = vld [vmem:[#allocation4 + $0xb8] sm:$0xff]
      %v1853 = vld [vmem:[#allocation4 + $0xc0] sm:$0xff]
      %v1854 = vld [vmem:[#allocation4 + $0xc8] sm:$0xff]
      %v1855 = vld [vmem:[#allocation4 + $0xd0] sm:$0xff]
      %v1856 = vld [vmem:[#allocation4 + $0xd8] sm:$0xff]
      %v1857 = vld [vmem:[#allocation4 + $0xe0] sm:$0xff]
      %v1858 = vld [vmem:[#allocation4 + $0xe8] sm:$0xff]
      %v1859 = vld [vmem:[#allocation4 + $0xf0] sm:$0xff]
      %v1860 = vld [vmem:[#allocation4 + $0xf8] sm:$0xff]
      %v1861 = vld [vmem:[%s363 + $0x8] sm:$0xe]
      %v1862 = vld [vmem:[%s363 + $0xc] sm:$0xf]
      %v1863 = vld [vmem:[%s363 + $0x10] sm:$0xf]
      %v1864 = vld [vmem:[%s363 + $0x14] sm:$0xf]
      %v1865 = vld [vmem:[%s363 + $0x18] sm:$0xf]
      %v1866 = vld [vmem:[%s363 + $0x1c] sm:$0xf]
      %v1867 = vld [vmem:[%s363 + $0x20] sm:$0xf]
      %v1868 = vld [vmem:[%s363 + $0x24] sm:$0xf]
      %v1869 = vld [vmem:[%s363 + $0x28] sm:$0xf]
      %v1870 = vld [vmem:[%s363 + $0x2c] sm:$0xf]
      %v1871 = vld [vmem:[%s363 + $0x30] sm:$0xf]
      %v1872 = vld [vmem:[%s363 + $0x34] sm:$0xf]
      %v1873 = vld [vmem:[%s363 + $0x38] sm:$0xf]
      %v1874 = vld [vmem:[%s363 + $0x3c] sm:$0xf]
      %v1875 = vld [vmem:[%s363 + $0x40] sm:$0xf]
      %v1876 = vld [vmem:[%s363 + $0x44] sm:$0xf]
      %v1877 = vld [vmem:[%s363 + $0x48] sm:$0xf]
      %v1878 = vld [vmem:[%s363 + $0x4c] sm:$0xf]
      %v1879 = vld [vmem:[%s363 + $0x50] sm:$0xf]
      %v1880 = vld [vmem:[%s363 + $0x54] sm:$0xf]
      %v1881 = vld [vmem:[%s363 + $0x58] sm:$0xf]
      %v1882 = vld [vmem:[%s363 + $0x5c] sm:$0xf]
      %v1883 = vld [vmem:[%s363 + $0x60] sm:$0xf]
      %v1884 = vld [vmem:[%s363 + $0x64] sm:$0xf]
      %v1885 = vld [vmem:[%s363 + $0x68] sm:$0xf]
      %v1886 = vld [vmem:[%s363 + $0x6c] sm:$0xf]
      %v1887 = vld [vmem:[%s363 + $0x70] sm:$0xf]
      %v1888 = vld [vmem:[%s363 + $0x74] sm:$0xf]
      %v1889 = vld [vmem:[%s363 + $0x78] sm:$0xf]
      %v1890 = vld [vmem:[%s363 + $0x7c] sm:$0xf]
      %v1891 = vld [vmem:[%s363 + $0x80] sm:$0xf]
      %v1892 = vld [vmem:[%s363 + $0x84] sm:$0xf]
      %v1893 = vld [vmem:[%s363 + $0x88] sm:$0x1]
      %s1894 = scalar_lea.vmem %s1, 192
      %v1895 = vld [vmem:[%s1894] sm:$0xf]
      %v1896 = vld [vmem:[%s1894 + $0x4] sm:$0xf]
      %v1897 = vld [vmem:[%s1894 + $0x8] sm:$0xf]
      %v1898 = vld [vmem:[%s1894 + $0xc] sm:$0xf]
      %v1899 = vld [vmem:[%s1894 + $0x10] sm:$0xf]
      %v1900 = vld [vmem:[%s1894 + $0x14] sm:$0xf]
      %v1901 = vld [vmem:[%s1894 + $0x18] sm:$0xf]
      %v1902 = vld [vmem:[%s1894 + $0x1c] sm:$0xf]
      %v1903 = vld [vmem:[%s1894 + $0x20] sm:$0xf]
      %v1904 = vld [vmem:[%s1894 + $0x24] sm:$0xf]
      %v1905 = vld [vmem:[%s1894 + $0x28] sm:$0xf]
      %v1906 = vld [vmem:[%s1894 + $0x2c] sm:$0xf]
      %v1907 = vld [vmem:[%s1894 + $0x30] sm:$0xf]
      %v1908 = vld [vmem:[%s1894 + $0x34] sm:$0xf]
      %v1909 = vld [vmem:[%s1894 + $0x38] sm:$0xf]
      %v1910 = vld [vmem:[%s1894 + $0x3c] sm:$0xf]
      %v1944 = vunpack.c.l.b16 %v1861
      %v1945 = vunpack.c.l.b16 %v1862
      %v1946 = vunpack.c.l.b16 %v1863
      %v1947 = vunpack.c.l.b16 %v1864
      %v1948 = vunpack.c.l.b16 %v1865
      %v1949 = vunpack.c.l.b16 %v1866
      %v1950 = vunpack.c.l.b16 %v1867
      %v1951 = vunpack.c.l.b16 %v1868
      %v1952 = vunpack.c.l.b16 %v1869
      %v1953 = vunpack.c.l.b16 %v1870
      %v1954 = vunpack.c.l.b16 %v1871
      %v1955 = vunpack.c.l.b16 %v1872
      %v1956 = vunpack.c.l.b16 %v1873
      %v1957 = vunpack.c.l.b16 %v1874
      %v1958 = vunpack.c.l.b16 %v1875
      %v1959 = vunpack.c.l.b16 %v1876
      %v1960 = vunpack.c.l.b16 %v1877
      %v1961 = vunpack.c.l.b16 %v1878
      %v1962 = vunpack.c.l.b16 %v1879
      %v1963 = vunpack.c.l.b16 %v1880
      %v1964 = vunpack.c.l.b16 %v1881
      %v1965 = vunpack.c.l.b16 %v1882
      %v1966 = vunpack.c.l.b16 %v1883
      %v1967 = vunpack.c.l.b16 %v1884
      %v1968 = vunpack.c.l.b16 %v1885
      %v1969 = vunpack.c.l.b16 %v1886
      %v1970 = vunpack.c.l.b16 %v1887
      %v1971 = vunpack.c.l.b16 %v1888
      %v1972 = vunpack.c.l.b16 %v1889
      %v1973 = vunpack.c.l.b16 %v1890
      %v1974 = vunpack.c.l.b16 %v1891
      %v1975 = vunpack.c.l.b16 %v1892
      %v1976 = vunpack.c.l.b16 %v1893
      %v1977 = vpack.c.b16 %v1945, %v1944
      %v1978 = vpack.c.b16 %v1947, %v1946
      %v1979 = vpack.c.b16 %v1949, %v1948
      %v1980 = vpack.c.b16 %v1951, %v1950
      %v1981 = vpack.c.b16 %v1953, %v1952
      %v1982 = vpack.c.b16 %v1955, %v1954
      %v1983 = vpack.c.b16 %v1957, %v1956
      %v1984 = vpack.c.b16 %v1959, %v1958
      %v1985 = vpack.c.b16 %v1961, %v1960
      %v1986 = vpack.c.b16 %v1963, %v1962
      %v1987 = vpack.c.b16 %v1965, %v1964
      %v1988 = vpack.c.b16 %v1967, %v1966
      %v1989 = vpack.c.b16 %v1969, %v1968
      %v1990 = vpack.c.b16 %v1971, %v1970
      %v1991 = vpack.c.b16 %v1973, %v1972
      %v1992 = vpack.c.b16 %v1975, %v1974
      %v1993 = vpack.c.b16 %v1976, %v1976
      %v1994 = vrot.slane %v1977, 1
      %v1995 = vrot.slane %v1978, 1
      %v1996 = vsel %vm1506, %v1994, %v1995
      %v1997 = vrot.slane %v1979, 1
      %v1998 = vsel %vm1506, %v1995, %v1997
      %v1999 = vrot.slane %v1980, 1
      %v2000 = vsel %vm1506, %v1997, %v1999
      %v2001 = vrot.slane %v1981, 1
      %v2002 = vsel %vm1506, %v1999, %v2001
      %v2003 = vrot.slane %v1982, 1
      %v2004 = vsel %vm1506, %v2001, %v2003
      %v2005 = vrot.slane %v1983, 1
      %v2006 = vsel %vm1506, %v2003, %v2005
      %v2007 = vrot.slane %v1984, 1
      %v2008 = vsel %vm1506, %v2005, %v2007
      %v2009 = vrot.slane %v1985, 1
      %v2010 = vsel %vm1506, %v2007, %v2009
      %v2011 = vrot.slane %v1986, 1
      %v2012 = vsel %vm1506, %v2009, %v2011
      %v2013 = vrot.slane %v1987, 1
      %v2014 = vsel %vm1506, %v2011, %v2013
      %v2015 = vrot.slane %v1988, 1
      %v2016 = vsel %vm1506, %v2013, %v2015
      %v2017 = vrot.slane %v1989, 1
      %v2018 = vsel %vm1506, %v2015, %v2017
      %v2019 = vrot.slane %v1990, 1
      %v2020 = vsel %vm1506, %v2017, %v2019
      %v2021 = vrot.slane %v1991, 1
      %v2022 = vsel %vm1506, %v2019, %v2021
      %v2023 = vrot.slane %v1992, 1
      %v2024 = vsel %vm1506, %v2021, %v2023
      %v2025 = vrot.slane %v1993, 1
      %v2026 = vsel %vm1506, %v2023, %v2025
      %v2059 = vunpack.c.l.b16 %v1895
      %v2060 = vunpack.c.l.b16 %v1896
      %v2061 = vunpack.c.l.b16 %v1897
      %v2062 = vunpack.c.l.b16 %v1898
      %v2063 = vunpack.c.l.b16 %v1899
      %v2064 = vunpack.c.l.b16 %v1900
      %v2065 = vunpack.c.l.b16 %v1901
      %v2066 = vunpack.c.l.b16 %v1902
      %v2067 = vunpack.c.l.b16 %v1903
      %v2068 = vunpack.c.l.b16 %v1904
      %v2069 = vunpack.c.l.b16 %v1905
      %v2070 = vunpack.c.l.b16 %v1906
      %v2071 = vunpack.c.l.b16 %v1907
      %v2072 = vunpack.c.l.b16 %v1908
      %v2073 = vunpack.c.l.b16 %v1909
      %v2074 = vunpack.c.l.b16 %v1910
      %v2075 = vpack.c.b16 %v2060, %v2059
      %v2076 = vpack.c.b16 %v2062, %v2061
      %v2077 = vpack.c.b16 %v2064, %v2063
      %v2078 = vpack.c.b16 %v2066, %v2065
      %v2079 = vpack.c.b16 %v2068, %v2067
      %v2080 = vpack.c.b16 %v2070, %v2069
      %v2081 = vpack.c.b16 %v2072, %v2071
      %v2082 = vpack.c.b16 %v2074, %v2073
      %2091 = vmatprep.subr.bf16.mxu0 0
      %2092 = vmatpush1.bf16.msra.mxu0 %v2075
      %2093 = vmatprep.subr.bf16.mxu0 0
      %2094 = vmatpush1.bf16.msra.mxu0 %v2076
      %2095 = vmatprep.subr.bf16.mxu0 0
      %2096 = vmatpush1.bf16.msra.mxu0 %v2077
      %2097 = vmatprep.subr.bf16.mxu0 0
      %2098 = vmatpush1.bf16.msra.mxu0 %v2078
      %2099 = vmatprep.subr.bf16.mxu0 0
      %2100 = vmatpush1.bf16.msra.mxu0 %v2079
      %2101 = vmatprep.subr.bf16.mxu0 0
      %2102 = vmatpush1.bf16.msra.mxu0 %v2080
      %2103 = vmatprep.subr.bf16.mxu0 0
      %2104 = vmatpush1.bf16.msra.mxu0 %v2081
      %2105 = vmatprep.subr.bf16.mxu0 0
      %2106 = vmatpush1.bf16.msra.mxu0 %v2082
      %2107 = vmatprep.subr.bf16.mxu0 0
      %2108 = vmatpush1.bf16.msra.mxu0 0
      %2109 = vmatprep.subr.bf16.mxu0 0
      %2110 = vmatpush1.bf16.msra.mxu0 0
      %2111 = vmatprep.subr.bf16.mxu0 0
      %2112 = vmatpush1.bf16.msra.mxu0 0
      %2113 = vmatprep.subr.bf16.mxu0 0
      %2114 = vmatpush1.bf16.msra.mxu0 0
      %2115 = vmatprep.subr.bf16.mxu0 0
      %2116 = vmatpush1.bf16.msra.mxu0 0
      %2117 = vmatprep.subr.bf16.mxu0 0
      %2118 = vmatpush1.bf16.msra.mxu0 0
      %2119 = vmatprep.subr.bf16.mxu0 0
      %2120 = vmatpush1.bf16.msra.mxu0 0
      %2121 = vmatprep.subr.bf16.mxu0 0
      %2122 = vmatpush1.bf16.msra.mxu0 0
      %2123 = vmatprep.mubr.bf16.mxu0 0
      %2124 = vmatmul.mubr.bf16.gmra.mrb[0].mxu0 %v1996
      %v2125 = vpop.f32.mrb[0].mxu0
      %v2126 = vadd.f32 0.0, %v2125
      %v2127 = vpop.f32.mrb[0].mxu0
      %v2128 = vpop.f32.mrb[0].mxu0
      %v2129 = vadd.f32 0.0, %v2128
      %v2130 = vpop.f32.mrb[0].mxu0
      %2131 = vmatprep.mubr.bf16.mxu0 0
      %2132 = vmatmul.mubr.bf16.gmra.mrb[0].mxu0 %v1998
      %v2133 = vpop.f32.mrb[0].mxu0
      %v2134 = vadd.f32 0.0, %v2133
      %v2135 = vpop.f32.mrb[0].mxu0
      %v2136 = vpop.f32.mrb[0].mxu0
      %v2137 = vadd.f32 0.0, %v2136
      %v2138 = vpop.f32.mrb[0].mxu0
      %2139 = vmatprep.mubr.bf16.mxu0 0
      %2140 = vmatmul.mubr.bf16.gmra.mrb[0].mxu0 %v2000
      %v2141 = vpop.f32.mrb[0].mxu0
      %v2142 = vadd.f32 0.0, %v2141
      %v2143 = vpop.f32.mrb[0].mxu0
      %v2144 = vpop.f32.mrb[0].mxu0
      %v2145 = vadd.f32 0.0, %v2144
      %v2146 = vpop.f32.mrb[0].mxu0
      %2147 = vmatprep.mubr.bf16.mxu0 0
      %2148 = vmatmul.mubr.bf16.gmra.mrb[0].mxu0 %v2002
      %v2149 = vpop.f32.mrb[0].mxu0
      %v2150 = vadd.f32 0.0, %v2149
      %v2151 = vpop.f32.mrb[0].mxu0
      %v2152 = vpop.f32.mrb[0].mxu0
      %v2153 = vadd.f32 0.0, %v2152
      %v2154 = vpop.f32.mrb[0].mxu0
      %2155 = vmatprep.mubr.bf16.mxu0 0
      %2156 = vmatmul.mubr.bf16.gmra.mrb[0].mxu0 %v2004
      %v2157 = vpop.f32.mrb[0].mxu0
      %v2158 = vadd.f32 0.0, %v2157
      %v2159 = vpop.f32.mrb[0].mxu0
      %v2160 = vpop.f32.mrb[0].mxu0
      %v2161 = vadd.f32 0.0, %v2160
      %v2162 = vpop.f32.mrb[0].mxu0
      %2163 = vmatprep.mubr.bf16.mxu0 0
      %2164 = vmatmul.mubr.bf16.gmra.mrb[0].mxu0 %v2006
      %v2165 = vpop.f32.mrb[0].mxu0
      %v2166 = vadd.f32 0.0, %v2165
      %v2167 = vpop.f32.mrb[0].mxu0
      %v2168 = vpop.f32.mrb[0].mxu0
      %v2169 = vadd.f32 0.0, %v2168
      %v2170 = vpop.f32.mrb[0].mxu0
      %2171 = vmatprep.mubr.bf16.mxu0 0
      %2172 = vmatmul.mubr.bf16.gmra.mrb[0].mxu0 %v2008
      %v2173 = vpop.f32.mrb[0].mxu0
      %v2174 = vadd.f32 0.0, %v2173
      %v2175 = vpop.f32.mrb[0].mxu0
      %v2176 = vpop.f32.mrb[0].mxu0
      %v2177 = vadd.f32 0.0, %v2176
      %v2178 = vpop.f32.mrb[0].mxu0
      %2179 = vmatprep.mubr.bf16.mxu0 0
      %2180 = vmatmul.mubr.bf16.gmra.mrb[0].mxu0 %v2010
      %v2181 = vpop.f32.mrb[0].mxu0
      %v2182 = vadd.f32 0.0, %v2181
      %v2183 = vpop.f32.mrb[0].mxu0
      %v2184 = vpop.f32.mrb[0].mxu0
      %v2185 = vadd.f32 0.0, %v2184
      %v2186 = vpop.f32.mrb[0].mxu0
      %2187 = vmatprep.mubr.bf16.mxu0 0
      %2188 = vmatmul.mubr.bf16.gmra.mrb[0].mxu0 %v2012
      %v2189 = vpop.f32.mrb[0].mxu0
      %v2190 = vadd.f32 0.0, %v2189
      %v2191 = vpop.f32.mrb[0].mxu0
      %v2192 = vpop.f32.mrb[0].mxu0
      %v2193 = vadd.f32 0.0, %v2192
      %v2194 = vpop.f32.mrb[0].mxu0
      %2195 = vmatprep.mubr.bf16.mxu0 0
      %2196 = vmatmul.mubr.bf16.gmra.mrb[0].mxu0 %v2014
      %v2197 = vpop.f32.mrb[0].mxu0
      %v2198 = vadd.f32 0.0, %v2197
      %v2199 = vpop.f32.mrb[0].mxu0
      %v2200 = vpop.f32.mrb[0].mxu0
      %v2201 = vadd.f32 0.0, %v2200
      %v2202 = vpop.f32.mrb[0].mxu0
      %2203 = vmatprep.mubr.bf16.mxu0 0
      %2204 = vmatmul.mubr.bf16.gmra.mrb[0].mxu0 %v2016
      %v2205 = vpop.f32.mrb[0].mxu0
      %v2206 = vadd.f32 0.0, %v2205
      %v2207 = vpop.f32.mrb[0].mxu0
      %v2208 = vpop.f32.mrb[0].mxu0
      %v2209 = vadd.f32 0.0, %v2208
      %v2210 = vpop.f32.mrb[0].mxu0
      %2211 = vmatprep.mubr.bf16.mxu0 0
      %2212 = vmatmul.mubr.bf16.gmra.mrb[0].mxu0 %v2018
      %v2213 = vpop.f32.mrb[0].mxu0
      %v2214 = vadd.f32 0.0, %v2213
      %v2215 = vpop.f32.mrb[0].mxu0
      %v2216 = vpop.f32.mrb[0].mxu0
      %v2217 = vadd.f32 0.0, %v2216
      %v2218 = vpop.f32.mrb[0].mxu0
      %2219 = vmatprep.mubr.bf16.mxu0 0
      %2220 = vmatmul.mubr.bf16.gmra.mrb[0].mxu0 %v2020
      %v2221 = vpop.f32.mrb[0].mxu0
      %v2222 = vadd.f32 0.0, %v2221
      %v2223 = vpop.f32.mrb[0].mxu0
      %v2224 = vpop.f32.mrb[0].mxu0
      %v2225 = vadd.f32 0.0, %v2224
      %v2226 = vpop.f32.mrb[0].mxu0
      %2227 = vmatprep.mubr.bf16.mxu0 0
      %2228 = vmatmul.mubr.bf16.gmra.mrb[0].mxu0 %v2022
      %v2229 = vpop.f32.mrb[0].mxu0
      %v2230 = vadd.f32 0.0, %v2229
      %v2231 = vpop.f32.mrb[0].mxu0
      %v2232 = vpop.f32.mrb[0].mxu0
      %v2233 = vadd.f32 0.0, %v2232
      %v2234 = vpop.f32.mrb[0].mxu0
      %2235 = vmatprep.mubr.bf16.mxu0 0
      %2236 = vmatmul.mubr.bf16.gmra.mrb[0].mxu0 %v2024
      %v2237 = vpop.f32.mrb[0].mxu0
      %v2238 = vadd.f32 0.0, %v2237
      %v2239 = vpop.f32.mrb[0].mxu0
      %v2240 = vpop.f32.mrb[0].mxu0
      %v2241 = vadd.f32 0.0, %v2240
      %v2242 = vpop.f32.mrb[0].mxu0
      %2243 = vmatprep.mubr.bf16.mxu0 0
      %2244 = vmatmul.mubr.bf16.gmra.mrb[0].mxu0 %v2026
      %v2245 = vpop.f32.mrb[0].mxu0
      %v2246 = vadd.f32 0.0, %v2245
      %v2247 = vpop.f32.mrb[0].mxu0
      %v2248 = vpop.f32.mrb[0].mxu0
      %v2249 = vadd.f32 0.0, %v2248
      %v2250 = vpop.f32.mrb[0].mxu0
      %2251 = vdwg.mxu0
      %v2252 = vadd.f32 %v1829, %v2126
      %v2253 = vadd.f32 %v1830, %v2129
      %v2254 = vadd.f32 %v1831, %v2134
      %v2255 = vadd.f32 %v1832, %v2137
      %v2256 = vadd.f32 %v1833, %v2142
      %v2257 = vadd.f32 %v1834, %v2145
      %v2258 = vadd.f32 %v1835, %v2150
      %v2259 = vadd.f32 %v1836, %v2153
      %v2260 = vadd.f32 %v1837, %v2158
      %v2261 = vadd.f32 %v1838, %v2161
      %v2262 = vadd.f32 %v1839, %v2166
      %v2263 = vadd.f32 %v1840, %v2169
      %v2264 = vadd.f32 %v1841, %v2174
      %v2265 = vadd.f32 %v1842, %v2177
      %v2266 = vadd.f32 %v1843, %v2182
      %v2267 = vadd.f32 %v1844, %v2185
      %v2268 = vadd.f32 %v1845, %v2190
      %v2269 = vadd.f32 %v1846, %v2193
      %v2270 = vadd.f32 %v1847, %v2198
      %v2271 = vadd.f32 %v1848, %v2201
      %v2272 = vadd.f32 %v1849, %v2206
      %v2273 = vadd.f32 %v1850, %v2209
      %v2274 = vadd.f32 %v1851, %v2214
      %v2275 = vadd.f32 %v1852, %v2217
      %v2276 = vadd.f32 %v1853, %v2222
      %v2277 = vadd.f32 %v1854, %v2225
      %v2278 = vadd.f32 %v1855, %v2230
      %v2279 = vadd.f32 %v1856, %v2233
      %v2280 = vadd.f32 %v1857, %v2238
      %v2281 = vadd.f32 %v1858, %v2241
      %v2282 = vadd.f32 %v1859, %v2246
      %v2283 = vadd.f32 %v1860, %v2249
      %2284 = vst [vmem:[#allocation4] sm:$0xff] %v2252
      %2285 = vst [vmem:[#allocation4 + $0x8] sm:$0xff] %v2253
      %2286 = vst [vmem:[#allocation4 + $0x10] sm:$0xff] %v2254
      %2287 = vst [vmem:[#allocation4 + $0x18] sm:$0xff] %v2255
      %2288 = vst [vmem:[#allocation4 + $0x20] sm:$0xff] %v2256
      %2289 = vst [vmem:[#allocation4 + $0x28] sm:$0xff] %v2257
      %2290 = vst [vmem:[#allocation4 + $0x30] sm:$0xff] %v2258
      %2291 = vst [vmem:[#allocation4 + $0x38] sm:$0xff] %v2259
      %2292 = vst [vmem:[#allocation4 + $0x40] sm:$0xff] %v2260
      %2293 = vst [vmem:[#allocation4 + $0x48] sm:$0xff] %v2261
      %2294 = vst [vmem:[#allocation4 + $0x50] sm:$0xff] %v2262
      %2295 = vst [vmem:[#allocation4 + $0x58] sm:$0xff] %v2263
      %2296 = vst [vmem:[#allocation4 + $0x60] sm:$0xff] %v2264
      %2297 = vst [vmem:[#allocation4 + $0x68] sm:$0xff] %v2265
      %2298 = vst [vmem:[#allocation4 + $0x70] sm:$0xff] %v2266
      %2299 = vst [vmem:[#allocation4 + $0x78] sm:$0xff] %v2267
      %2300 = vst [vmem:[#allocation4 + $0x80] sm:$0xff] %v2268
      %2301 = vst [vmem:[#allocation4 + $0x88] sm:$0xff] %v2269
      %2302 = vst [vmem:[#allocation4 + $0x90] sm:$0xff] %v2270
      %2303 = vst [vmem:[#allocation4 + $0x98] sm:$0xff] %v2271
      %2304 = vst [vmem:[#allocation4 + $0xa0] sm:$0xff] %v2272
      %2305 = vst [vmem:[#allocation4 + $0xa8] sm:$0xff] %v2273
      %2306 = vst [vmem:[#allocation4 + $0xb0] sm:$0xff] %v2274
      %2307 = vst [vmem:[#allocation4 + $0xb8] sm:$0xff] %v2275
      %2308 = vst [vmem:[#allocation4 + $0xc0] sm:$0xff] %v2276
      %2309 = vst [vmem:[#allocation4 + $0xc8] sm:$0xff] %v2277
      %2310 = vst [vmem:[#allocation4 + $0xd0] sm:$0xff] %v2278
      %2311 = vst [vmem:[#allocation4 + $0xd8] sm:$0xff] %v2279
      %2312 = vst [vmem:[#allocation4 + $0xe0] sm:$0xff] %v2280
      %2313 = vst [vmem:[#allocation4 + $0xe8] sm:$0xff] %v2281
      %2314 = vst [vmem:[#allocation4 + $0xf0] sm:$0xff] %v2282
      %2315 = vst [vmem:[#allocation4 + $0xf8] sm:$0xff] %v2283
      %v2316 = vld [vmem:[#allocation4] sm:$0xff]
      %v2317 = vld [vmem:[#allocation4 + $0x8] sm:$0xff]
      %v2318 = vld [vmem:[#allocation4 + $0x10] sm:$0xff]
      %v2319 = vld [vmem:[#allocation4 + $0x18] sm:$0xff]
      %v2320 = vld [vmem:[#allocation4 + $0x20] sm:$0xff]
      %v2321 = vld [vmem:[#allocation4 + $0x28] sm:$0xff]
      %v2322 = vld [vmem:[#allocation4 + $0x30] sm:$0xff]
      %v2323 = vld [vmem:[#allocation4 + $0x38] sm:$0xff]
      %v2324 = vld [vmem:[#allocation4 + $0x40] sm:$0xff]
      %v2325 = vld [vmem:[#allocation4 + $0x48] sm:$0xff]
      %v2326 = vld [vmem:[#allocation4 + $0x50] sm:$0xff]
      %v2327 = vld [vmem:[#allocation4 + $0x58] sm:$0xff]
      %v2328 = vld [vmem:[#allocation4 + $0x60] sm:$0xff]
      %v2329 = vld [vmem:[#allocation4 + $0x68] sm:$0xff]
      %v2330 = vld [vmem:[#allocation4 + $0x70] sm:$0xff]
      %v2331 = vld [vmem:[#allocation4 + $0x78] sm:$0xff]
      %v2332 = vld [vmem:[#allocation4 + $0x80] sm:$0xff]
      %v2333 = vld [vmem:[#allocation4 + $0x88] sm:$0xff]
      %v2334 = vld [vmem:[#allocation4 + $0x90] sm:$0xff]
      %v2335 = vld [vmem:[#allocation4 + $0x98] sm:$0xff]
      %v2336 = vld [vmem:[#allocation4 + $0xa0] sm:$0xff]
      %v2337 = vld [vmem:[#allocation4 + $0xa8] sm:$0xff]
      %v2338 = vld [vmem:[#allocation4 + $0xb0] sm:$0xff]
      %v2339 = vld [vmem:[#allocation4 + $0xb8] sm:$0xff]
      %v2340 = vld [vmem:[#allocation4 + $0xc0] sm:$0xff]
      %v2341 = vld [vmem:[#allocation4 + $0xc8] sm:$0xff]
      %v2342 = vld [vmem:[#allocation4 + $0xd0] sm:$0xff]
      %v2343 = vld [vmem:[#allocation4 + $0xd8] sm:$0xff]
      %v2344 = vld [vmem:[#allocation4 + $0xe0] sm:$0xff]
      %v2345 = vld [vmem:[#allocation4 + $0xe8] sm:$0xff]
      %v2346 = vld [vmem:[#allocation4 + $0xf0] sm:$0xff]
      %v2347 = vld [vmem:[#allocation4 + $0xf8] sm:$0xff]
      %v2348 = vld [vmem:[%s363 + $0x8] sm:$0xe]
      %v2349 = vld [vmem:[%s363 + $0xc] sm:$0xf]
      %v2350 = vld [vmem:[%s363 + $0x10] sm:$0xf]
      %v2351 = vld [vmem:[%s363 + $0x14] sm:$0xf]
      %v2352 = vld [vmem:[%s363 + $0x18] sm:$0xf]
      %v2353 = vld [vmem:[%s363 + $0x1c] sm:$0xf]
      %v2354 = vld [vmem:[%s363 + $0x20] sm:$0xf]
      %v2355 = vld [vmem:[%s363 + $0x24] sm:$0xf]
      %v2356 = vld [vmem:[%s363 + $0x28] sm:$0xf]
      %v2357 = vld [vmem:[%s363 + $0x2c] sm:$0xf]
      %v2358 = vld [vmem:[%s363 + $0x30] sm:$0xf]
      %v2359 = vld [vmem:[%s363 + $0x34] sm:$0xf]
      %v2360 = vld [vmem:[%s363 + $0x38] sm:$0xf]
      %v2361 = vld [vmem:[%s363 + $0x3c] sm:$0xf]
      %v2362 = vld [vmem:[%s363 + $0x40] sm:$0xf]
      %v2363 = vld [vmem:[%s363 + $0x44] sm:$0xf]
      %v2364 = vld [vmem:[%s363 + $0x48] sm:$0xf]
      %v2365 = vld [vmem:[%s363 + $0x4c] sm:$0xf]
      %v2366 = vld [vmem:[%s363 + $0x50] sm:$0xf]
      %v2367 = vld [vmem:[%s363 + $0x54] sm:$0xf]
      %v2368 = vld [vmem:[%s363 + $0x58] sm:$0xf]
      %v2369 = vld [vmem:[%s363 + $0x5c] sm:$0xf]
      %v2370 = vld [vmem:[%s363 + $0x60] sm:$0xf]
      %v2371 = vld [vmem:[%s363 + $0x64] sm:$0xf]
      %v2372 = vld [vmem:[%s363 + $0x68] sm:$0xf]
      %v2373 = vld [vmem:[%s363 + $0x6c] sm:$0xf]
      %v2374 = vld [vmem:[%s363 + $0x70] sm:$0xf]
      %v2375 = vld [vmem:[%s363 + $0x74] sm:$0xf]
      %v2376 = vld [vmem:[%s363 + $0x78] sm:$0xf]
      %v2377 = vld [vmem:[%s363 + $0x7c] sm:$0xf]
      %v2378 = vld [vmem:[%s363 + $0x80] sm:$0xf]
      %v2379 = vld [vmem:[%s363 + $0x84] sm:$0xf]
      %v2380 = vld [vmem:[%s363 + $0x88] sm:$0x3]
      %s2381 = scalar_lea.vmem %s1, 256
      %v2382 = vld [vmem:[%s2381] sm:$0xf]
      %v2383 = vld [vmem:[%s2381 + $0x4] sm:$0xf]
      %v2384 = vld [vmem:[%s2381 + $0x8] sm:$0xf]
      %v2385 = vld [vmem:[%s2381 + $0xc] sm:$0xf]
      %v2386 = vld [vmem:[%s2381 + $0x10] sm:$0xf]
      %v2387 = vld [vmem:[%s2381 + $0x14] sm:$0xf]
      %v2388 = vld [vmem:[%s2381 + $0x18] sm:$0xf]
      %v2389 = vld [vmem:[%s2381 + $0x1c] sm:$0xf]
      %v2390 = vld [vmem:[%s2381 + $0x20] sm:$0xf]
      %v2391 = vld [vmem:[%s2381 + $0x24] sm:$0xf]
      %v2392 = vld [vmem:[%s2381 + $0x28] sm:$0xf]
      %v2393 = vld [vmem:[%s2381 + $0x2c] sm:$0xf]
      %v2394 = vld [vmem:[%s2381 + $0x30] sm:$0xf]
      %v2395 = vld [vmem:[%s2381 + $0x34] sm:$0xf]
      %v2396 = vld [vmem:[%s2381 + $0x38] sm:$0xf]
      %v2397 = vld [vmem:[%s2381 + $0x3c] sm:$0xf]
      %v2431 = vunpack.c.l.b16 %v2348
      %v2432 = vunpack.c.l.b16 %v2349
      %v2433 = vunpack.c.l.b16 %v2350
      %v2434 = vunpack.c.l.b16 %v2351
      %v2435 = vunpack.c.l.b16 %v2352
      %v2436 = vunpack.c.l.b16 %v2353
      %v2437 = vunpack.c.l.b16 %v2354
      %v2438 = vunpack.c.l.b16 %v2355
      %v2439 = vunpack.c.l.b16 %v2356
      %v2440 = vunpack.c.l.b16 %v2357
      %v2441 = vunpack.c.l.b16 %v2358
      %v2442 = vunpack.c.l.b16 %v2359
      %v2443 = vunpack.c.l.b16 %v2360
      %v2444 = vunpack.c.l.b16 %v2361
      %v2445 = vunpack.c.l.b16 %v2362
      %v2446 = vunpack.c.l.b16 %v2363
      %v2447 = vunpack.c.l.b16 %v2364
      %v2448 = vunpack.c.l.b16 %v2365
      %v2449 = vunpack.c.l.b16 %v2366
      %v2450 = vunpack.c.l.b16 %v2367
      %v2451 = vunpack.c.l.b16 %v2368
      %v2452 = vunpack.c.l.b16 %v2369
      %v2453 = vunpack.c.l.b16 %v2370
      %v2454 = vunpack.c.l.b16 %v2371
      %v2455 = vunpack.c.l.b16 %v2372
      %v2456 = vunpack.c.l.b16 %v2373
      %v2457 = vunpack.c.l.b16 %v2374
      %v2458 = vunpack.c.l.b16 %v2375
      %v2459 = vunpack.c.l.b16 %v2376
      %v2460 = vunpack.c.l.b16 %v2377
      %v2461 = vunpack.c.l.b16 %v2378
      %v2462 = vunpack.c.l.b16 %v2379
      %v2463 = vunpack.c.l.b16 %v2380
      %v2464 = vpack.c.b16 %v2432, %v2431
      %v2465 = vpack.c.b16 %v2434, %v2433
      %v2466 = vpack.c.b16 %v2436, %v2435
      %v2467 = vpack.c.b16 %v2438, %v2437
      %v2468 = vpack.c.b16 %v2440, %v2439
      %v2469 = vpack.c.b16 %v2442, %v2441
      %v2470 = vpack.c.b16 %v2444, %v2443
      %v2471 = vpack.c.b16 %v2446, %v2445
      %v2472 = vpack.c.b16 %v2448, %v2447
      %v2473 = vpack.c.b16 %v2450, %v2449
      %v2474 = vpack.c.b16 %v2452, %v2451
      %v2475 = vpack.c.b16 %v2454, %v2453
      %v2476 = vpack.c.b16 %v2456, %v2455
      %v2477 = vpack.c.b16 %v2458, %v2457
      %v2478 = vpack.c.b16 %v2460, %v2459
      %v2479 = vpack.c.b16 %v2462, %v2461
      %v2480 = vpack.c.b16 %v2463, %v2463
      %vm2481 = vsmask.f32 6400
      %v2483 = vshrl.u32 %v2464, 16
      %v2485 = vrot.slane %v2483, 1
      %v2486 = vshll.u32 %v2464, 16
      %v2488 = vrot.slane %v2486, 2
      %v2489 = vor.u32 %v2485, %v2488
      %v2491 = vshrl.u32 %v2465, 16
      %v2493 = vrot.slane %v2491, 1
      %v2494 = vshll.u32 %v2465, 16
      %v2496 = vrot.slane %v2494, 2
      %v2497 = vor.u32 %v2493, %v2496
      %v2498 = vsel %vm2481, %v2489, %v2497
      %v2500 = vshrl.u32 %v2466, 16
      %v2502 = vrot.slane %v2500, 1
      %v2503 = vshll.u32 %v2466, 16
      %v2505 = vrot.slane %v2503, 2
      %v2506 = vor.u32 %v2502, %v2505
      %v2507 = vsel %vm2481, %v2497, %v2506
      %v2509 = vshrl.u32 %v2467, 16
      %v2511 = vrot.slane %v2509, 1
      %v2512 = vshll.u32 %v2467, 16
      %v2514 = vrot.slane %v2512, 2
      %v2515 = vor.u32 %v2511, %v2514
      %v2516 = vsel %vm2481, %v2506, %v2515
      %v2518 = vshrl.u32 %v2468, 16
      %v2520 = vrot.slane %v2518, 1
      %v2521 = vshll.u32 %v2468, 16
      %v2523 = vrot.slane %v2521, 2
      %v2524 = vor.u32 %v2520, %v2523
      %v2525 = vsel %vm2481, %v2515, %v2524
      %v2527 = vshrl.u32 %v2469, 16
      %v2529 = vrot.slane %v2527, 1
      %v2530 = vshll.u32 %v2469, 16
      %v2532 = vrot.slane %v2530, 2
      %v2533 = vor.u32 %v2529, %v2532
      %v2534 = vsel %vm2481, %v2524, %v2533
      %v2536 = vshrl.u32 %v2470, 16
      %v2538 = vrot.slane %v2536, 1
      %v2539 = vshll.u32 %v2470, 16
      %v2541 = vrot.slane %v2539, 2
      %v2542 = vor.u32 %v2538, %v2541
      %v2543 = vsel %vm2481, %v2533, %v2542
      %v2545 = vshrl.u32 %v2471, 16
      %v2547 = vrot.slane %v2545, 1
      %v2548 = vshll.u32 %v2471, 16
      %v2550 = vrot.slane %v2548, 2
      %v2551 = vor.u32 %v2547, %v2550
      %v2552 = vsel %vm2481, %v2542, %v2551
      %v2554 = vshrl.u32 %v2472, 16
      %v2556 = vrot.slane %v2554, 1
      %v2557 = vshll.u32 %v2472, 16
      %v2559 = vrot.slane %v2557, 2
      %v2560 = vor.u32 %v2556, %v2559
      %v2561 = vsel %vm2481, %v2551, %v2560
      %v2563 = vshrl.u32 %v2473, 16
      %v2565 = vrot.slane %v2563, 1
      %v2566 = vshll.u32 %v2473, 16
      %v2568 = vrot.slane %v2566, 2
      %v2569 = vor.u32 %v2565, %v2568
      %v2570 = vsel %vm2481, %v2560, %v2569
      %v2572 = vshrl.u32 %v2474, 16
      %v2574 = vrot.slane %v2572, 1
      %v2575 = vshll.u32 %v2474, 16
      %v2577 = vrot.slane %v2575, 2
      %v2578 = vor.u32 %v2574, %v2577
      %v2579 = vsel %vm2481, %v2569, %v2578
      %v2581 = vshrl.u32 %v2475, 16
      %v2583 = vrot.slane %v2581, 1
      %v2584 = vshll.u32 %v2475, 16
      %v2586 = vrot.slane %v2584, 2
      %v2587 = vor.u32 %v2583, %v2586
      %v2588 = vsel %vm2481, %v2578, %v2587
      %v2590 = vshrl.u32 %v2476, 16
      %v2592 = vrot.slane %v2590, 1
      %v2593 = vshll.u32 %v2476, 16
      %v2595 = vrot.slane %v2593, 2
      %v2596 = vor.u32 %v2592, %v2595
      %v2597 = vsel %vm2481, %v2587, %v2596
      %v2599 = vshrl.u32 %v2477, 16
      %v2601 = vrot.slane %v2599, 1
      %v2602 = vshll.u32 %v2477, 16
      %v2604 = vrot.slane %v2602, 2
      %v2605 = vor.u32 %v2601, %v2604
      %v2606 = vsel %vm2481, %v2596, %v2605
      %v2608 = vshrl.u32 %v2478, 16
      %v2610 = vrot.slane %v2608, 1
      %v2611 = vshll.u32 %v2478, 16
      %v2613 = vrot.slane %v2611, 2
      %v2614 = vor.u32 %v2610, %v2613
      %v2615 = vsel %vm2481, %v2605, %v2614
      %v2617 = vshrl.u32 %v2479, 16
      %v2619 = vrot.slane %v2617, 1
      %v2620 = vshll.u32 %v2479, 16
      %v2622 = vrot.slane %v2620, 2
      %v2623 = vor.u32 %v2619, %v2622
      %v2624 = vsel %vm2481, %v2614, %v2623
      %v2626 = vshrl.u32 %v2480, 16
      %v2628 = vrot.slane %v2626, 1
      %v2629 = vshll.u32 %v2480, 16
      %v2631 = vrot.slane %v2629, 2
      %v2632 = vor.u32 %v2628, %v2631
      %v2633 = vsel %vm2481, %v2623, %v2632
      %v2666 = vunpack.c.l.b16 %v2382
      %v2667 = vunpack.c.l.b16 %v2383
      %v2668 = vunpack.c.l.b16 %v2384
      %v2669 = vunpack.c.l.b16 %v2385
      %v2670 = vunpack.c.l.b16 %v2386
      %v2671 = vunpack.c.l.b16 %v2387
      %v2672 = vunpack.c.l.b16 %v2388
      %v2673 = vunpack.c.l.b16 %v2389
      %v2674 = vunpack.c.l.b16 %v2390
      %v2675 = vunpack.c.l.b16 %v2391
      %v2676 = vunpack.c.l.b16 %v2392
      %v2677 = vunpack.c.l.b16 %v2393
      %v2678 = vunpack.c.l.b16 %v2394
      %v2679 = vunpack.c.l.b16 %v2395
      %v2680 = vunpack.c.l.b16 %v2396
      %v2681 = vunpack.c.l.b16 %v2397
      %v2682 = vpack.c.b16 %v2667, %v2666
      %v2683 = vpack.c.b16 %v2669, %v2668
      %v2684 = vpack.c.b16 %v2671, %v2670
      %v2685 = vpack.c.b16 %v2673, %v2672
      %v2686 = vpack.c.b16 %v2675, %v2674
      %v2687 = vpack.c.b16 %v2677, %v2676
      %v2688 = vpack.c.b16 %v2679, %v2678
      %v2689 = vpack.c.b16 %v2681, %v2680
      %2698 = vmatprep.subr.bf16.mxu0 0
      %2699 = vmatpush1.bf16.msra.mxu0 %v2682
      %2700 = vmatprep.subr.bf16.mxu0 0
      %2701 = vmatpush1.bf16.msra.mxu0 %v2683
      %2702 = vmatprep.subr.bf16.mxu0 0
      %2703 = vmatpush1.bf16.msra.mxu0 %v2684
      %2704 = vmatprep.subr.bf16.mxu0 0
      %2705 = vmatpush1.bf16.msra.mxu0 %v2685
      %2706 = vmatprep.subr.bf16.mxu0 0
      %2707 = vmatpush1.bf16.msra.mxu0 %v2686
      %2708 = vmatprep.subr.bf16.mxu0 0
      %2709 = vmatpush1.bf16.msra.mxu0 %v2687
      %2710 = vmatprep.subr.bf16.mxu0 0
      %2711 = vmatpush1.bf16.msra.mxu0 %v2688
      %2712 = vmatprep.subr.bf16.mxu0 0
      %2713 = vmatpush1.bf16.msra.mxu0 %v2689
      %2714 = vmatprep.subr.bf16.mxu0 0
      %2715 = vmatpush1.bf16.msra.mxu0 0
      %2716 = vmatprep.subr.bf16.mxu0 0
      %2717 = vmatpush1.bf16.msra.mxu0 0
      %2718 = vmatprep.subr.bf16.mxu0 0
      %2719 = vmatpush1.bf16.msra.mxu0 0
      %2720 = vmatprep.subr.bf16.mxu0 0
      %2721 = vmatpush1.bf16.msra.mxu0 0
      %2722 = vmatprep.subr.bf16.mxu0 0
      %2723 = vmatpush1.bf16.msra.mxu0 0
      %2724 = vmatprep.subr.bf16.mxu0 0
      %2725 = vmatpush1.bf16.msra.mxu0 0
      %2726 = vmatprep.subr.bf16.mxu0 0
      %2727 = vmatpush1.bf16.msra.mxu0 0
      %2728 = vmatprep.subr.bf16.mxu0 0
      %2729 = vmatpush1.bf16.msra.mxu0 0
      %2730 = vmatprep.mubr.bf16.mxu0 0
      %2731 = vmatmul.mubr.bf16.gmra.mrb[0].mxu0 %v2498
      %v2732 = vpop.f32.mrb[0].mxu0
      %v2733 = vadd.f32 0.0, %v2732
      %v2734 = vpop.f32.mrb[0].mxu0
      %v2735 = vpop.f32.mrb[0].mxu0
      %v2736 = vadd.f32 0.0, %v2735
      %v2737 = vpop.f32.mrb[0].mxu0
      %2738 = vmatprep.mubr.bf16.mxu0 0
      %2739 = vmatmul.mubr.bf16.gmra.mrb[0].mxu0 %v2507
      %v2740 = vpop.f32.mrb[0].mxu0
      %v2741 = vadd.f32 0.0, %v2740
      %v2742 = vpop.f32.mrb[0].mxu0
      %v2743 = vpop.f32.mrb[0].mxu0
      %v2744 = vadd.f32 0.0, %v2743
      %v2745 = vpop.f32.mrb[0].mxu0
      %2746 = vmatprep.mubr.bf16.mxu0 0
      %2747 = vmatmul.mubr.bf16.gmra.mrb[0].mxu0 %v2516
      %v2748 = vpop.f32.mrb[0].mxu0
      %v2749 = vadd.f32 0.0, %v2748
      %v2750 = vpop.f32.mrb[0].mxu0
      %v2751 = vpop.f32.mrb[0].mxu0
      %v2752 = vadd.f32 0.0, %v2751
      %v2753 = vpop.f32.mrb[0].mxu0
      %2754 = vmatprep.mubr.bf16.mxu0 0
      %2755 = vmatmul.mubr.bf16.gmra.mrb[0].mxu0 %v2525
      %v2756 = vpop.f32.mrb[0].mxu0
      %v2757 = vadd.f32 0.0, %v2756
      %v2758 = vpop.f32.mrb[0].mxu0
      %v2759 = vpop.f32.mrb[0].mxu0
      %v2760 = vadd.f32 0.0, %v2759
      %v2761 = vpop.f32.mrb[0].mxu0
      %2762 = vmatprep.mubr.bf16.mxu0 0
      %2763 = vmatmul.mubr.bf16.gmra.mrb[0].mxu0 %v2534
      %v2764 = vpop.f32.mrb[0].mxu0
      %v2765 = vadd.f32 0.0, %v2764
      %v2766 = vpop.f32.mrb[0].mxu0
      %v2767 = vpop.f32.mrb[0].mxu0
      %v2768 = vadd.f32 0.0, %v2767
      %v2769 = vpop.f32.mrb[0].mxu0
      %2770 = vmatprep.mubr.bf16.mxu0 0
      %2771 = vmatmul.mubr.bf16.gmra.mrb[0].mxu0 %v2543
      %v2772 = vpop.f32.mrb[0].mxu0
      %v2773 = vadd.f32 0.0, %v2772
      %v2774 = vpop.f32.mrb[0].mxu0
      %v2775 = vpop.f32.mrb[0].mxu0
      %v2776 = vadd.f32 0.0, %v2775
      %v2777 = vpop.f32.mrb[0].mxu0
      %2778 = vmatprep.mubr.bf16.mxu0 0
      %2779 = vmatmul.mubr.bf16.gmra.mrb[0].mxu0 %v2552
      %v2780 = vpop.f32.mrb[0].mxu0
      %v2781 = vadd.f32 0.0, %v2780
      %v2782 = vpop.f32.mrb[0].mxu0
      %v2783 = vpop.f32.mrb[0].mxu0
      %v2784 = vadd.f32 0.0, %v2783
      %v2785 = vpop.f32.mrb[0].mxu0
      %2786 = vmatprep.mubr.bf16.mxu0 0
      %2787 = vmatmul.mubr.bf16.gmra.mrb[0].mxu0 %v2561
      %v2788 = vpop.f32.mrb[0].mxu0
      %v2789 = vadd.f32 0.0, %v2788
      %v2790 = vpop.f32.mrb[0].mxu0
      %v2791 = vpop.f32.mrb[0].mxu0
      %v2792 = vadd.f32 0.0, %v2791
      %v2793 = vpop.f32.mrb[0].mxu0
      %2794 = vmatprep.mubr.bf16.mxu0 0
      %2795 = vmatmul.mubr.bf16.gmra.mrb[0].mxu0 %v2570
      %v2796 = vpop.f32.mrb[0].mxu0
      %v2797 = vadd.f32 0.0, %v2796
      %v2798 = vpop.f32.mrb[0].mxu0
      %v2799 = vpop.f32.mrb[0].mxu0
      %v2800 = vadd.f32 0.0, %v2799
      %v2801 = vpop.f32.mrb[0].mxu0
      %2802 = vmatprep.mubr.bf16.mxu0 0
      %2803 = vmatmul.mubr.bf16.gmra.mrb[0].mxu0 %v2579
      %v2804 = vpop.f32.mrb[0].mxu0
      %v2805 = vadd.f32 0.0, %v2804
      %v2806 = vpop.f32.mrb[0].mxu0
      %v2807 = vpop.f32.mrb[0].mxu0
      %v2808 = vadd.f32 0.0, %v2807
      %v2809 = vpop.f32.mrb[0].mxu0
      %2810 = vmatprep.mubr.bf16.mxu0 0
      %2811 = vmatmul.mubr.bf16.gmra.mrb[0].mxu0 %v2588
      %v2812 = vpop.f32.mrb[0].mxu0
      %v2813 = vadd.f32 0.0, %v2812
      %v2814 = vpop.f32.mrb[0].mxu0
      %v2815 = vpop.f32.mrb[0].mxu0
      %v2816 = vadd.f32 0.0, %v2815
      %v2817 = vpop.f32.mrb[0].mxu0
      %2818 = vmatprep.mubr.bf16.mxu0 0
      %2819 = vmatmul.mubr.bf16.gmra.mrb[0].mxu0 %v2597
      %v2820 = vpop.f32.mrb[0].mxu0
      %v2821 = vadd.f32 0.0, %v2820
      %v2822 = vpop.f32.mrb[0].mxu0
      %v2823 = vpop.f32.mrb[0].mxu0
      %v2824 = vadd.f32 0.0, %v2823
      %v2825 = vpop.f32.mrb[0].mxu0
      %2826 = vmatprep.mubr.bf16.mxu0 0
      %2827 = vmatmul.mubr.bf16.gmra.mrb[0].mxu0 %v2606
      %v2828 = vpop.f32.mrb[0].mxu0
      %v2829 = vadd.f32 0.0, %v2828
      %v2830 = vpop.f32.mrb[0].mxu0
      %v2831 = vpop.f32.mrb[0].mxu0
      %v2832 = vadd.f32 0.0, %v2831
      %v2833 = vpop.f32.mrb[0].mxu0
      %2834 = vmatprep.mubr.bf16.mxu0 0
      %2835 = vmatmul.mubr.bf16.gmra.mrb[0].mxu0 %v2615
      %v2836 = vpop.f32.mrb[0].mxu0
      %v2837 = vadd.f32 0.0, %v2836
      %v2838 = vpop.f32.mrb[0].mxu0
      %v2839 = vpop.f32.mrb[0].mxu0
      %v2840 = vadd.f32 0.0, %v2839
      %v2841 = vpop.f32.mrb[0].mxu0
      %2842 = vmatprep.mubr.bf16.mxu0 0
      %2843 = vmatmul.mubr.bf16.gmra.mrb[0].mxu0 %v2624
      %v2844 = vpop.f32.mrb[0].mxu0
      %v2845 = vadd.f32 0.0, %v2844
      %v2846 = vpop.f32.mrb[0].mxu0
      %v2847 = vpop.f32.mrb[0].mxu0
      %v2848 = vadd.f32 0.0, %v2847
      %v2849 = vpop.f32.mrb[0].mxu0
      %2850 = vmatprep.mubr.bf16.mxu0 0
      %2851 = vmatmul.mubr.bf16.gmra.mrb[0].mxu0 %v2633
      %v2852 = vpop.f32.mrb[0].mxu0
      %v2853 = vadd.f32 0.0, %v2852
      %v2854 = vpop.f32.mrb[0].mxu0
      %v2855 = vpop.f32.mrb[0].mxu0
      %v2856 = vadd.f32 0.0, %v2855
      %v2857 = vpop.f32.mrb[0].mxu0
      %2858 = vdwg.mxu0
      %v2859 = vadd.f32 %v2316, %v2733
      %v2860 = vadd.f32 %v2317, %v2736
      %v2861 = vadd.f32 %v2318, %v2741
      %v2862 = vadd.f32 %v2319, %v2744
      %v2863 = vadd.f32 %v2320, %v2749
      %v2864 = vadd.f32 %v2321, %v2752
      %v2865 = vadd.f32 %v2322, %v2757
      %v2866 = vadd.f32 %v2323, %v2760
      %v2867 = vadd.f32 %v2324, %v2765
      %v2868 = vadd.f32 %v2325, %v2768
      %v2869 = vadd.f32 %v2326, %v2773
      %v2870 = vadd.f32 %v2327, %v2776
      %v2871 = vadd.f32 %v2328, %v2781
      %v2872 = vadd.f32 %v2329, %v2784
      %v2873 = vadd.f32 %v2330, %v2789
      %v2874 = vadd.f32 %v2331, %v2792
      %v2875 = vadd.f32 %v2332, %v2797
      %v2876 = vadd.f32 %v2333, %v2800
      %v2877 = vadd.f32 %v2334, %v2805
      %v2878 = vadd.f32 %v2335, %v2808
      %v2879 = vadd.f32 %v2336, %v2813
      %v2880 = vadd.f32 %v2337, %v2816
      %v2881 = vadd.f32 %v2338, %v2821
      %v2882 = vadd.f32 %v2339, %v2824
      %v2883 = vadd.f32 %v2340, %v2829
      %v2884 = vadd.f32 %v2341, %v2832
      %v2885 = vadd.f32 %v2342, %v2837
      %v2886 = vadd.f32 %v2343, %v2840
      %v2887 = vadd.f32 %v2344, %v2845
      %v2888 = vadd.f32 %v2345, %v2848
      %v2889 = vadd.f32 %v2346, %v2853
      %v2890 = vadd.f32 %v2347, %v2856
      %2891 = vst [vmem:[#allocation4] sm:$0xff] %v2859
      %2892 = vst [vmem:[#allocation4 + $0x8] sm:$0xff] %v2860
      %2893 = vst [vmem:[#allocation4 + $0x10] sm:$0xff] %v2861
      %2894 = vst [vmem:[#allocation4 + $0x18] sm:$0xff] %v2862
      %2895 = vst [vmem:[#allocation4 + $0x20] sm:$0xff] %v2863
      %2896 = vst [vmem:[#allocation4 + $0x28] sm:$0xff] %v2864
      %2897 = vst [vmem:[#allocation4 + $0x30] sm:$0xff] %v2865
      %2898 = vst [vmem:[#allocation4 + $0x38] sm:$0xff] %v2866
      %2899 = vst [vmem:[#allocation4 + $0x40] sm:$0xff] %v2867
      %2900 = vst [vmem:[#allocation4 + $0x48] sm:$0xff] %v2868
      %2901 = vst [vmem:[#allocation4 + $0x50] sm:$0xff] %v2869
      %2902 = vst [vmem:[#allocation4 + $0x58] sm:$0xff] %v2870
      %2903 = vst [vmem:[#allocation4 + $0x60] sm:$0xff] %v2871
      %2904 = vst [vmem:[#allocation4 + $0x68] sm:$0xff] %v2872
      %2905 = vst [vmem:[#allocation4 + $0x70] sm:$0xff] %v2873
      %2906 = vst [vmem:[#allocation4 + $0x78] sm:$0xff] %v2874
      %2907 = vst [vmem:[#allocation4 + $0x80] sm:$0xff] %v2875
      %2908 = vst [vmem:[#allocation4 + $0x88] sm:$0xff] %v2876
      %2909 = vst [vmem:[#allocation4 + $0x90] sm:$0xff] %v2877
      %2910 = vst [vmem:[#allocation4 + $0x98] sm:$0xff] %v2878
      %2911 = vst [vmem:[#allocation4 + $0xa0] sm:$0xff] %v2879
      %2912 = vst [vmem:[#allocation4 + $0xa8] sm:$0xff] %v2880
      %2913 = vst [vmem:[#allocation4 + $0xb0] sm:$0xff] %v2881
      %2914 = vst [vmem:[#allocation4 + $0xb8] sm:$0xff] %v2882
      %2915 = vst [vmem:[#allocation4 + $0xc0] sm:$0xff] %v2883
      %2916 = vst [vmem:[#allocation4 + $0xc8] sm:$0xff] %v2884
      %2917 = vst [vmem:[#allocation4 + $0xd0] sm:$0xff] %v2885
      %2918 = vst [vmem:[#allocation4 + $0xd8] sm:$0xff] %v2886
      %2919 = vst [vmem:[#allocation4 + $0xe0] sm:$0xff] %v2887
      %2920 = vst [vmem:[#allocation4 + $0xe8] sm:$0xff] %v2888
      %2921 = vst [vmem:[#allocation4 + $0xf0] sm:$0xff] %v2889
      %2922 = vst [vmem:[#allocation4 + $0xf8] sm:$0xff] %v2890
      %v2923 = vld [vmem:[#allocation4] sm:$0xff]
      %v2924 = vld [vmem:[#allocation4 + $0x8] sm:$0xff]
      %v2925 = vld [vmem:[#allocation4 + $0x10] sm:$0xff]
      %v2926 = vld [vmem:[#allocation4 + $0x18] sm:$0xff]
      %v2927 = vld [vmem:[#allocation4 + $0x20] sm:$0xff]
      %v2928 = vld [vmem:[#allocation4 + $0x28] sm:$0xff]
      %v2929 = vld [vmem:[#allocation4 + $0x30] sm:$0xff]
      %v2930 = vld [vmem:[#allocation4 + $0x38] sm:$0xff]
      %v2931 = vld [vmem:[#allocation4 + $0x40] sm:$0xff]
      %v2932 = vld [vmem:[#allocation4 + $0x48] sm:$0xff]
      %v2933 = vld [vmem:[#allocation4 + $0x50] sm:$0xff]
      %v2934 = vld [vmem:[#allocation4 + $0x58] sm:$0xff]
      %v2935 = vld [vmem:[#allocation4 + $0x60] sm:$0xff]
      %v2936 = vld [vmem:[#allocation4 + $0x68] sm:$0xff]
      %v2937 = vld [vmem:[#allocation4 + $0x70] sm:$0xff]
      %v2938 = vld [vmem:[#allocation4 + $0x78] sm:$0xff]
      %v2939 = vld [vmem:[#allocation4 + $0x80] sm:$0xff]
      %v2940 = vld [vmem:[#allocation4 + $0x88] sm:$0xff]
      %v2941 = vld [vmem:[#allocation4 + $0x90] sm:$0xff]
      %v2942 = vld [vmem:[#allocation4 + $0x98] sm:$0xff]
      %v2943 = vld [vmem:[#allocation4 + $0xa0] sm:$0xff]
      %v2944 = vld [vmem:[#allocation4 + $0xa8] sm:$0xff]
      %v2945 = vld [vmem:[#allocation4 + $0xb0] sm:$0xff]
      %v2946 = vld [vmem:[#allocation4 + $0xb8] sm:$0xff]
      %v2947 = vld [vmem:[#allocation4 + $0xc0] sm:$0xff]
      %v2948 = vld [vmem:[#allocation4 + $0xc8] sm:$0xff]
      %v2949 = vld [vmem:[#allocation4 + $0xd0] sm:$0xff]
      %v2950 = vld [vmem:[#allocation4 + $0xd8] sm:$0xff]
      %v2951 = vld [vmem:[#allocation4 + $0xe0] sm:$0xff]
      %v2952 = vld [vmem:[#allocation4 + $0xe8] sm:$0xff]
      %v2953 = vld [vmem:[#allocation4 + $0xf0] sm:$0xff]
      %v2954 = vld [vmem:[#allocation4 + $0xf8] sm:$0xff]
      %v2955 = vld [vmem:[%s363 + $0x8] sm:$0xc]
      %v2956 = vld [vmem:[%s363 + $0xc] sm:$0xf]
      %v2957 = vld [vmem:[%s363 + $0x10] sm:$0xf]
      %v2958 = vld [vmem:[%s363 + $0x14] sm:$0xf]
      %v2959 = vld [vmem:[%s363 + $0x18] sm:$0xf]
      %v2960 = vld [vmem:[%s363 + $0x1c] sm:$0xf]
      %v2961 = vld [vmem:[%s363 + $0x20] sm:$0xf]
      %v2962 = vld [vmem:[%s363 + $0x24] sm:$0xf]
      %v2963 = vld [vmem:[%s363 + $0x28] sm:$0xf]
      %v2964 = vld [vmem:[%s363 + $0x2c] sm:$0xf]
      %v2965 = vld [vmem:[%s363 + $0x30] sm:$0xf]
      %v2966 = vld [vmem:[%s363 + $0x34] sm:$0xf]
      %v2967 = vld [vmem:[%s363 + $0x38] sm:$0xf]
      %v2968 = vld [vmem:[%s363 + $0x3c] sm:$0xf]
      %v2969 = vld [vmem:[%s363 + $0x40] sm:$0xf]
      %v2970 = vld [vmem:[%s363 + $0x44] sm:$0xf]
      %v2971 = vld [vmem:[%s363 + $0x48] sm:$0xf]
      %v2972 = vld [vmem:[%s363 + $0x4c] sm:$0xf]
      %v2973 = vld [vmem:[%s363 + $0x50] sm:$0xf]
      %v2974 = vld [vmem:[%s363 + $0x54] sm:$0xf]
      %v2975 = vld [vmem:[%s363 + $0x58] sm:$0xf]
      %v2976 = vld [vmem:[%s363 + $0x5c] sm:$0xf]
      %v2977 = vld [vmem:[%s363 + $0x60] sm:$0xf]
      %v2978 = vld [vmem:[%s363 + $0x64] sm:$0xf]
      %v2979 = vld [vmem:[%s363 + $0x68] sm:$0xf]
      %v2980 = vld [vmem:[%s363 + $0x6c] sm:$0xf]
      %v2981 = vld [vmem:[%s363 + $0x70] sm:$0xf]
      %v2982 = vld [vmem:[%s363 + $0x74] sm:$0xf]
      %v2983 = vld [vmem:[%s363 + $0x78] sm:$0xf]
      %v2984 = vld [vmem:[%s363 + $0x7c] sm:$0xf]
      %v2985 = vld [vmem:[%s363 + $0x80] sm:$0xf]
      %v2986 = vld [vmem:[%s363 + $0x84] sm:$0xf]
      %v2987 = vld [vmem:[%s363 + $0x88] sm:$0x3]
      %s2988 = scalar_lea.vmem %s1, 320
      %v2989 = vld [vmem:[%s2988] sm:$0xf]
      %v2990 = vld [vmem:[%s2988 + $0x4] sm:$0xf]
      %v2991 = vld [vmem:[%s2988 + $0x8] sm:$0xf]
      %v2992 = vld [vmem:[%s2988 + $0xc] sm:$0xf]
      %v2993 = vld [vmem:[%s2988 + $0x10] sm:$0xf]
      %v2994 = vld [vmem:[%s2988 + $0x14] sm:$0xf]
      %v2995 = vld [vmem:[%s2988 + $0x18] sm:$0xf]
      %v2996 = vld [vmem:[%s2988 + $0x1c] sm:$0xf]
      %v2997 = vld [vmem:[%s2988 + $0x20] sm:$0xf]
      %v2998 = vld [vmem:[%s2988 + $0x24] sm:$0xf]
      %v2999 = vld [vmem:[%s2988 + $0x28] sm:$0xf]
      %v3000 = vld [vmem:[%s2988 + $0x2c] sm:$0xf]
      %v3001 = vld [vmem:[%s2988 + $0x30] sm:$0xf]
      %v3002 = vld [vmem:[%s2988 + $0x34] sm:$0xf]
      %v3003 = vld [vmem:[%s2988 + $0x38] sm:$0xf]
      %v3004 = vld [vmem:[%s2988 + $0x3c] sm:$0xf]
      %v3038 = vunpack.c.l.b16 %v2955
      %v3039 = vunpack.c.l.b16 %v2956
      %v3040 = vunpack.c.l.b16 %v2957
      %v3041 = vunpack.c.l.b16 %v2958
      %v3042 = vunpack.c.l.b16 %v2959
      %v3043 = vunpack.c.l.b16 %v2960
      %v3044 = vunpack.c.l.b16 %v2961
      %v3045 = vunpack.c.l.b16 %v2962
      %v3046 = vunpack.c.l.b16 %v2963
      %v3047 = vunpack.c.l.b16 %v2964
      %v3048 = vunpack.c.l.b16 %v2965
      %v3049 = vunpack.c.l.b16 %v2966
      %v3050 = vunpack.c.l.b16 %v2967
      %v3051 = vunpack.c.l.b16 %v2968
      %v3052 = vunpack.c.l.b16 %v2969
      %v3053 = vunpack.c.l.b16 %v2970
      %v3054 = vunpack.c.l.b16 %v2971
      %v3055 = vunpack.c.l.b16 %v2972
      %v3056 = vunpack.c.l.b16 %v2973
      %v3057 = vunpack.c.l.b16 %v2974
      %v3058 = vunpack.c.l.b16 %v2975
      %v3059 = vunpack.c.l.b16 %v2976
      %v3060 = vunpack.c.l.b16 %v2977
      %v3061 = vunpack.c.l.b16 %v2978
      %v3062 = vunpack.c.l.b16 %v2979
      %v3063 = vunpack.c.l.b16 %v2980
      %v3064 = vunpack.c.l.b16 %v2981
      %v3065 = vunpack.c.l.b16 %v2982
      %v3066 = vunpack.c.l.b16 %v2983
      %v3067 = vunpack.c.l.b16 %v2984
      %v3068 = vunpack.c.l.b16 %v2985
      %v3069 = vunpack.c.l.b16 %v2986
      %v3070 = vunpack.c.l.b16 %v2987
      %v3071 = vpack.c.b16 %v3039, %v3038
      %v3072 = vpack.c.b16 %v3041, %v3040
      %v3073 = vpack.c.b16 %v3043, %v3042
      %v3074 = vpack.c.b16 %v3045, %v3044
      %v3075 = vpack.c.b16 %v3047, %v3046
      %v3076 = vpack.c.b16 %v3049, %v3048
      %v3077 = vpack.c.b16 %v3051, %v3050
      %v3078 = vpack.c.b16 %v3053, %v3052
      %v3079 = vpack.c.b16 %v3055, %v3054
      %v3080 = vpack.c.b16 %v3057, %v3056
      %v3081 = vpack.c.b16 %v3059, %v3058
      %v3082 = vpack.c.b16 %v3061, %v3060
      %v3083 = vpack.c.b16 %v3063, %v3062
      %v3084 = vpack.c.b16 %v3065, %v3064
      %v3085 = vpack.c.b16 %v3067, %v3066
      %v3086 = vpack.c.b16 %v3069, %v3068
      %v3087 = vpack.c.b16 %v3070, %v3070
      %vm3088 = vcmask 1045504
      %v3089 = vrot.slane %v3071, 2
      %v3090 = vrot.slane %v3072, 2
      %v3091 = vsel %vm3088, %v3089, %v3090
      %v3092 = vrot.slane %v3073, 2
      %v3093 = vsel %vm3088, %v3090, %v3092
      %v3094 = vrot.slane %v3074, 2
      %v3095 = vsel %vm3088, %v3092, %v3094
      %v3096 = vrot.slane %v3075, 2
      %v3097 = vsel %vm3088, %v3094, %v3096
      %v3098 = vrot.slane %v3076, 2
      %v3099 = vsel %vm3088, %v3096, %v3098
      %v3100 = vrot.slane %v3077, 2
      %v3101 = vsel %vm3088, %v3098, %v3100
      %v3102 = vrot.slane %v3078, 2
      %v3103 = vsel %vm3088, %v3100, %v3102
      %v3104 = vrot.slane %v3079, 2
      %v3105 = vsel %vm3088, %v3102, %v3104
      %v3106 = vrot.slane %v3080, 2
      %v3107 = vsel %vm3088, %v3104, %v3106
      %v3108 = vrot.slane %v3081, 2
      %v3109 = vsel %vm3088, %v3106, %v3108
      %v3110 = vrot.slane %v3082, 2
      %v3111 = vsel %vm3088, %v3108, %v3110
      %v3112 = vrot.slane %v3083, 2
      %v3113 = vsel %vm3088, %v3110, %v3112
      %v3114 = vrot.slane %v3084, 2
      %v3115 = vsel %vm3088, %v3112, %v3114
      %v3116 = vrot.slane %v3085, 2
      %v3117 = vsel %vm3088, %v3114, %v3116
      %v3118 = vrot.slane %v3086, 2
      %v3119 = vsel %vm3088, %v3116, %v3118
      %v3120 = vrot.slane %v3087, 2
      %v3121 = vsel %vm3088, %v3118, %v3120
      %v3154 = vunpack.c.l.b16 %v2989
      %v3155 = vunpack.c.l.b16 %v2990
      %v3156 = vunpack.c.l.b16 %v2991
      %v3157 = vunpack.c.l.b16 %v2992
      %v3158 = vunpack.c.l.b16 %v2993
      %v3159 = vunpack.c.l.b16 %v2994
      %v3160 = vunpack.c.l.b16 %v2995
      %v3161 = vunpack.c.l.b16 %v2996
      %v3162 = vunpack.c.l.b16 %v2997
      %v3163 = vunpack.c.l.b16 %v2998
      %v3164 = vunpack.c.l.b16 %v2999
      %v3165 = vunpack.c.l.b16 %v3000
      %v3166 = vunpack.c.l.b16 %v3001
      %v3167 = vunpack.c.l.b16 %v3002
      %v3168 = vunpack.c.l.b16 %v3003
      %v3169 = vunpack.c.l.b16 %v3004
      %v3170 = vpack.c.b16 %v3155, %v3154
      %v3171 = vpack.c.b16 %v3157, %v3156
      %v3172 = vpack.c.b16 %v3159, %v3158
      %v3173 = vpack.c.b16 %v3161, %v3160
      %v3174 = vpack.c.b16 %v3163, %v3162
      %v3175 = vpack.c.b16 %v3165, %v3164
      %v3176 = vpack.c.b16 %v3167, %v3166
      %v3177 = vpack.c.b16 %v3169, %v3168
      %3186 = vmatprep.subr.bf16.mxu0 0
      %3187 = vmatpush1.bf16.msra.mxu0 %v3170
      %3188 = vmatprep.subr.bf16.mxu0 0
      %3189 = vmatpush1.bf16.msra.mxu0 %v3171
      %3190 = vmatprep.subr.bf16.mxu0 0
      %3191 = vmatpush1.bf16.msra.mxu0 %v3172
      %3192 = vmatprep.subr.bf16.mxu0 0
      %3193 = vmatpush1.bf16.msra.mxu0 %v3173
      %3194 = vmatprep.subr.bf16.mxu0 0
      %3195 = vmatpush1.bf16.msra.mxu0 %v3174
      %3196 = vmatprep.subr.bf16.mxu0 0
      %3197 = vmatpush1.bf16.msra.mxu0 %v3175
      %3198 = vmatprep.subr.bf16.mxu0 0
      %3199 = vmatpush1.bf16.msra.mxu0 %v3176
      %3200 = vmatprep.subr.bf16.mxu0 0
      %3201 = vmatpush1.bf16.msra.mxu0 %v3177
      %3202 = vmatprep.subr.bf16.mxu0 0
      %3203 = vmatpush1.bf16.msra.mxu0 0
      %3204 = vmatprep.subr.bf16.mxu0 0
      %3205 = vmatpush1.bf16.msra.mxu0 0
      %3206 = vmatprep.subr.bf16.mxu0 0
      %3207 = vmatpush1.bf16.msra.mxu0 0
      %3208 = vmatprep.subr.bf16.mxu0 0
      %3209 = vmatpush1.bf16.msra.mxu0 0
      %3210 = vmatprep.subr.bf16.mxu0 0
      %3211 = vmatpush1.bf16.msra.mxu0 0
      %3212 = vmatprep.subr.bf16.mxu0 0
      %3213 = vmatpush1.bf16.msra.mxu0 0
      %3214 = vmatprep.subr.bf16.mxu0 0
      %3215 = vmatpush1.bf16.msra.mxu0 0
      %3216 = vmatprep.subr.bf16.mxu0 0
      %3217 = vmatpush1.bf16.msra.mxu0 0
      %3218 = vmatprep.mubr.bf16.mxu0 0
      %3219 = vmatmul.mubr.bf16.gmra.mrb[0].mxu0 %v3091
      %v3220 = vpop.f32.mrb[0].mxu0
      %v3221 = vadd.f32 0.0, %v3220
      %v3222 = vpop.f32.mrb[0].mxu0
      %v3223 = vpop.f32.mrb[0].mxu0
      %v3224 = vadd.f32 0.0, %v3223
      %v3225 = vpop.f32.mrb[0].mxu0
      %3226 = vmatprep.mubr.bf16.mxu0 0
      %3227 = vmatmul.mubr.bf16.gmra.mrb[0].mxu0 %v3093
      %v3228 = vpop.f32.mrb[0].mxu0
      %v3229 = vadd.f32 0.0, %v3228
      %v3230 = vpop.f32.mrb[0].mxu0
      %v3231 = vpop.f32.mrb[0].mxu0
      %v3232 = vadd.f32 0.0, %v3231
      %v3233 = vpop.f32.mrb[0].mxu0
      %3234 = vmatprep.mubr.bf16.mxu0 0
      %3235 = vmatmul.mubr.bf16.gmra.mrb[0].mxu0 %v3095
      %v3236 = vpop.f32.mrb[0].mxu0
      %v3237 = vadd.f32 0.0, %v3236
      %v3238 = vpop.f32.mrb[0].mxu0
      %v3239 = vpop.f32.mrb[0].mxu0
      %v3240 = vadd.f32 0.0, %v3239
      %v3241 = vpop.f32.mrb[0].mxu0
      %3242 = vmatprep.mubr.bf16.mxu0 0
      %3243 = vmatmul.mubr.bf16.gmra.mrb[0].mxu0 %v3097
      %v3244 = vpop.f32.mrb[0].mxu0
      %v3245 = vadd.f32 0.0, %v3244
      %v3246 = vpop.f32.mrb[0].mxu0
      %v3247 = vpop.f32.mrb[0].mxu0
      %v3248 = vadd.f32 0.0, %v3247
      %v3249 = vpop.f32.mrb[0].mxu0
      %3250 = vmatprep.mubr.bf16.mxu0 0
      %3251 = vmatmul.mubr.bf16.gmra.mrb[0].mxu0 %v3099
      %v3252 = vpop.f32.mrb[0].mxu0
      %v3253 = vadd.f32 0.0, %v3252
      %v3254 = vpop.f32.mrb[0].mxu0
      %v3255 = vpop.f32.mrb[0].mxu0
      %v3256 = vadd.f32 0.0, %v3255
      %v3257 = vpop.f32.mrb[0].mxu0
      %3258 = vmatprep.mubr.bf16.mxu0 0
      %3259 = vmatmul.mubr.bf16.gmra.mrb[0].mxu0 %v3101
      %v3260 = vpop.f32.mrb[0].mxu0
      %v3261 = vadd.f32 0.0, %v3260
      %v3262 = vpop.f32.mrb[0].mxu0
      %v3263 = vpop.f32.mrb[0].mxu0
      %v3264 = vadd.f32 0.0, %v3263
      %v3265 = vpop.f32.mrb[0].mxu0
      %3266 = vmatprep.mubr.bf16.mxu0 0
      %3267 = vmatmul.mubr.bf16.gmra.mrb[0].mxu0 %v3103
      %v3268 = vpop.f32.mrb[0].mxu0
      %v3269 = vadd.f32 0.0, %v3268
      %v3270 = vpop.f32.mrb[0].mxu0
      %v3271 = vpop.f32.mrb[0].mxu0
      %v3272 = vadd.f32 0.0, %v3271
      %v3273 = vpop.f32.mrb[0].mxu0
      %3274 = vmatprep.mubr.bf16.mxu0 0
      %3275 = vmatmul.mubr.bf16.gmra.mrb[0].mxu0 %v3105
      %v3276 = vpop.f32.mrb[0].mxu0
      %v3277 = vadd.f32 0.0, %v3276
      %v3278 = vpop.f32.mrb[0].mxu0
      %v3279 = vpop.f32.mrb[0].mxu0
      %v3280 = vadd.f32 0.0, %v3279
      %v3281 = vpop.f32.mrb[0].mxu0
      %3282 = vmatprep.mubr.bf16.mxu0 0
      %3283 = vmatmul.mubr.bf16.gmra.mrb[0].mxu0 %v3107
      %v3284 = vpop.f32.mrb[0].mxu0
      %v3285 = vadd.f32 0.0, %v3284
      %v3286 = vpop.f32.mrb[0].mxu0
      %v3287 = vpop.f32.mrb[0].mxu0
      %v3288 = vadd.f32 0.0, %v3287
      %v3289 = vpop.f32.mrb[0].mxu0
      %3290 = vmatprep.mubr.bf16.mxu0 0
      %3291 = vmatmul.mubr.bf16.gmra.mrb[0].mxu0 %v3109
      %v3292 = vpop.f32.mrb[0].mxu0
      %v3293 = vadd.f32 0.0, %v3292
      %v3294 = vpop.f32.mrb[0].mxu0
      %v3295 = vpop.f32.mrb[0].mxu0
      %v3296 = vadd.f32 0.0, %v3295
      %v3297 = vpop.f32.mrb[0].mxu0
      %3298 = vmatprep.mubr.bf16.mxu0 0
      %3299 = vmatmul.mubr.bf16.gmra.mrb[0].mxu0 %v3111
      %v3300 = vpop.f32.mrb[0].mxu0
      %v3301 = vadd.f32 0.0, %v3300
      %v3302 = vpop.f32.mrb[0].mxu0
      %v3303 = vpop.f32.mrb[0].mxu0
      %v3304 = vadd.f32 0.0, %v3303
      %v3305 = vpop.f32.mrb[0].mxu0
      %3306 = vmatprep.mubr.bf16.mxu0 0
      %3307 = vmatmul.mubr.bf16.gmra.mrb[0].mxu0 %v3113
      %v3308 = vpop.f32.mrb[0].mxu0
      %v3309 = vadd.f32 0.0, %v3308
      %v3310 = vpop.f32.mrb[0].mxu0
      %v3311 = vpop.f32.mrb[0].mxu0
      %v3312 = vadd.f32 0.0, %v3311
      %v3313 = vpop.f32.mrb[0].mxu0
      %3314 = vmatprep.mubr.bf16.mxu0 0
      %3315 = vmatmul.mubr.bf16.gmra.mrb[0].mxu0 %v3115
      %v3316 = vpop.f32.mrb[0].mxu0
      %v3317 = vadd.f32 0.0, %v3316
      %v3318 = vpop.f32.mrb[0].mxu0
      %v3319 = vpop.f32.mrb[0].mxu0
      %v3320 = vadd.f32 0.0, %v3319
      %v3321 = vpop.f32.mrb[0].mxu0
      %3322 = vmatprep.mubr.bf16.mxu0 0
      %3323 = vmatmul.mubr.bf16.gmra.mrb[0].mxu0 %v3117
      %v3324 = vpop.f32.mrb[0].mxu0
      %v3325 = vadd.f32 0.0, %v3324
      %v3326 = vpop.f32.mrb[0].mxu0
      %v3327 = vpop.f32.mrb[0].mxu0
      %v3328 = vadd.f32 0.0, %v3327
      %v3329 = vpop.f32.mrb[0].mxu0
      %3330 = vmatprep.mubr.bf16.mxu0 0
      %3331 = vmatmul.mubr.bf16.gmra.mrb[0].mxu0 %v3119
      %v3332 = vpop.f32.mrb[0].mxu0
      %v3333 = vadd.f32 0.0, %v3332
      %v3334 = vpop.f32.mrb[0].mxu0
      %v3335 = vpop.f32.mrb[0].mxu0
      %v3336 = vadd.f32 0.0, %v3335
      %v3337 = vpop.f32.mrb[0].mxu0
      %3338 = vmatprep.mubr.bf16.mxu0 0
      %3339 = vmatmul.mubr.bf16.gmra.mrb[0].mxu0 %v3121
      %v3340 = vpop.f32.mrb[0].mxu0
      %v3341 = vadd.f32 0.0, %v3340
      %v3342 = vpop.f32.mrb[0].mxu0
      %v3343 = vpop.f32.mrb[0].mxu0
      %v3344 = vadd.f32 0.0, %v3343
      %v3345 = vpop.f32.mrb[0].mxu0
      %3346 = vdwg.mxu0
      %v3347 = vadd.f32 %v2923, %v3221
      %v3348 = vadd.f32 %v2924, %v3224
      %v3349 = vadd.f32 %v2925, %v3229
      %v3350 = vadd.f32 %v2926, %v3232
      %v3351 = vadd.f32 %v2927, %v3237
      %v3352 = vadd.f32 %v2928, %v3240
      %v3353 = vadd.f32 %v2929, %v3245
      %v3354 = vadd.f32 %v2930, %v3248
      %v3355 = vadd.f32 %v2931, %v3253
      %v3356 = vadd.f32 %v2932, %v3256
      %v3357 = vadd.f32 %v2933, %v3261
      %v3358 = vadd.f32 %v2934, %v3264
      %v3359 = vadd.f32 %v2935, %v3269
      %v3360 = vadd.f32 %v2936, %v3272
      %v3361 = vadd.f32 %v2937, %v3277
      %v3362 = vadd.f32 %v2938, %v3280
      %v3363 = vadd.f32 %v2939, %v3285
      %v3364 = vadd.f32 %v2940, %v3288
      %v3365 = vadd.f32 %v2941, %v3293
      %v3366 = vadd.f32 %v2942, %v3296
      %v3367 = vadd.f32 %v2943, %v3301
      %v3368 = vadd.f32 %v2944, %v3304
      %v3369 = vadd.f32 %v2945, %v3309
      %v3370 = vadd.f32 %v2946, %v3312
      %v3371 = vadd.f32 %v2947, %v3317
      %v3372 = vadd.f32 %v2948, %v3320
      %v3373 = vadd.f32 %v2949, %v3325
      %v3374 = vadd.f32 %v2950, %v3328
      %v3375 = vadd.f32 %v2951, %v3333
      %v3376 = vadd.f32 %v2952, %v3336
      %v3377 = vadd.f32 %v2953, %v3341
      %v3378 = vadd.f32 %v2954, %v3344
      %3379 = vst [vmem:[#allocation4] sm:$0xff] %v3347
      %3380 = vst [vmem:[#allocation4 + $0x8] sm:$0xff] %v3348
      %3381 = vst [vmem:[#allocation4 + $0x10] sm:$0xff] %v3349
      %3382 = vst [vmem:[#allocation4 + $0x18] sm:$0xff] %v3350
      %3383 = vst [vmem:[#allocation4 + $0x20] sm:$0xff] %v3351
      %3384 = vst [vmem:[#allocation4 + $0x28] sm:$0xff] %v3352
      %3385 = vst [vmem:[#allocation4 + $0x30] sm:$0xff] %v3353
      %3386 = vst [vmem:[#allocation4 + $0x38] sm:$0xff] %v3354
      %3387 = vst [vmem:[#allocation4 + $0x40] sm:$0xff] %v3355
      %3388 = vst [vmem:[#allocation4 + $0x48] sm:$0xff] %v3356
      %3389 = vst [vmem:[#allocation4 + $0x50] sm:$0xff] %v3357
      %3390 = vst [vmem:[#allocation4 + $0x58] sm:$0xff] %v3358
      %3391 = vst [vmem:[#allocation4 + $0x60] sm:$0xff] %v3359
      %3392 = vst [vmem:[#allocation4 + $0x68] sm:$0xff] %v3360
      %3393 = vst [vmem:[#allocation4 + $0x70] sm:$0xff] %v3361
      %3394 = vst [vmem:[#allocation4 + $0x78] sm:$0xff] %v3362
      %3395 = vst [vmem:[#allocation4 + $0x80] sm:$0xff] %v3363
      %3396 = vst [vmem:[#allocation4 + $0x88] sm:$0xff] %v3364
      %3397 = vst [vmem:[#allocation4 + $0x90] sm:$0xff] %v3365
      %3398 = vst [vmem:[#allocation4 + $0x98] sm:$0xff] %v3366
      %3399 = vst [vmem:[#allocation4 + $0xa0] sm:$0xff] %v3367
      %3400 = vst [vmem:[#allocation4 + $0xa8] sm:$0xff] %v3368
      %3401 = vst [vmem:[#allocation4 + $0xb0] sm:$0xff] %v3369
      %3402 = vst [vmem:[#allocation4 + $0xb8] sm:$0xff] %v3370
      %3403 = vst [vmem:[#allocation4 + $0xc0] sm:$0xff] %v3371
      %3404 = vst [vmem:[#allocation4 + $0xc8] sm:$0xff] %v3372
      %3405 = vst [vmem:[#allocation4 + $0xd0] sm:$0xff] %v3373
      %3406 = vst [vmem:[#allocation4 + $0xd8] sm:$0xff] %v3374
      %3407 = vst [vmem:[#allocation4 + $0xe0] sm:$0xff] %v3375
      %3408 = vst [vmem:[#allocation4 + $0xe8] sm:$0xff] %v3376
      %3409 = vst [vmem:[#allocation4 + $0xf0] sm:$0xff] %v3377
      %3410 = vst [vmem:[#allocation4 + $0xf8] sm:$0xff] %v3378
      %v3411 = vld [vmem:[#allocation4] sm:$0xff]
      %v3412 = vld [vmem:[#allocation4 + $0x8] sm:$0xff]
      %v3413 = vld [vmem:[#allocation4 + $0x10] sm:$0xff]
      %v3414 = vld [vmem:[#allocation4 + $0x18] sm:$0xff]
      %v3415 = vld [vmem:[#allocation4 + $0x20] sm:$0xff]
      %v3416 = vld [vmem:[#allocation4 + $0x28] sm:$0xff]
      %v3417 = vld [vmem:[#allocation4 + $0x30] sm:$0xff]
      %v3418 = vld [vmem:[#allocation4 + $0x38] sm:$0xff]
      %v3419 = vld [vmem:[#allocation4 + $0x40] sm:$0xff]
      %v3420 = vld [vmem:[#allocation4 + $0x48] sm:$0xff]
      %v3421 = vld [vmem:[#allocation4 + $0x50] sm:$0xff]
      %v3422 = vld [vmem:[#allocation4 + $0x58] sm:$0xff]
      %v3423 = vld [vmem:[#allocation4 + $0x60] sm:$0xff]
      %v3424 = vld [vmem:[#allocation4 + $0x68] sm:$0xff]
      %v3425 = vld [vmem:[#allocation4 + $0x70] sm:$0xff]
      %v3426 = vld [vmem:[#allocation4 + $0x78] sm:$0xff]
      %v3427 = vld [vmem:[#allocation4 + $0x80] sm:$0xff]
      %v3428 = vld [vmem:[#allocation4 + $0x88] sm:$0xff]
      %v3429 = vld [vmem:[#allocation4 + $0x90] sm:$0xff]
      %v3430 = vld [vmem:[#allocation4 + $0x98] sm:$0xff]
      %v3431 = vld [vmem:[#allocation4 + $0xa0] sm:$0xff]
      %v3432 = vld [vmem:[#allocation4 + $0xa8] sm:$0xff]
      %v3433 = vld [vmem:[#allocation4 + $0xb0] sm:$0xff]
      %v3434 = vld [vmem:[#allocation4 + $0xb8] sm:$0xff]
      %v3435 = vld [vmem:[#allocation4 + $0xc0] sm:$0xff]
      %v3436 = vld [vmem:[#allocation4 + $0xc8] sm:$0xff]
      %v3437 = vld [vmem:[#allocation4 + $0xd0] sm:$0xff]
      %v3438 = vld [vmem:[#allocation4 + $0xd8] sm:$0xff]
      %v3439 = vld [vmem:[#allocation4 + $0xe0] sm:$0xff]
      %v3440 = vld [vmem:[#allocation4 + $0xe8] sm:$0xff]
      %v3441 = vld [vmem:[#allocation4 + $0xf0] sm:$0xff]
      %v3442 = vld [vmem:[#allocation4 + $0xf8] sm:$0xff]
      %v3443 = vld [vmem:[%s363 + $0x10] sm:$0xc]
      %v3444 = vld [vmem:[%s363 + $0x14] sm:$0xf]
      %v3445 = vld [vmem:[%s363 + $0x18] sm:$0xf]
      %v3446 = vld [vmem:[%s363 + $0x1c] sm:$0xf]
      %v3447 = vld [vmem:[%s363 + $0x20] sm:$0xf]
      %v3448 = vld [vmem:[%s363 + $0x24] sm:$0xf]
      %v3449 = vld [vmem:[%s363 + $0x28] sm:$0xf]
      %v3450 = vld [vmem:[%s363 + $0x2c] sm:$0xf]
      %v3451 = vld [vmem:[%s363 + $0x30] sm:$0xf]
      %v3452 = vld [vmem:[%s363 + $0x34] sm:$0xf]
      %v3453 = vld [vmem:[%s363 + $0x38] sm:$0xf]
      %v3454 = vld [vmem:[%s363 + $0x3c] sm:$0xf]
      %v3455 = vld [vmem:[%s363 + $0x40] sm:$0xf]
      %v3456 = vld [vmem:[%s363 + $0x44] sm:$0xf]
      %v3457 = vld [vmem:[%s363 + $0x48] sm:$0xf]
      %v3458 = vld [vmem:[%s363 + $0x4c] sm:$0xf]
      %v3459 = vld [vmem:[%s363 + $0x50] sm:$0xf]
      %v3460 = vld [vmem:[%s363 + $0x54] sm:$0xf]
      %v3461 = vld [vmem:[%s363 + $0x58] sm:$0xf]
      %v3462 = vld [vmem:[%s363 + $0x5c] sm:$0xf]
      %v3463 = vld [vmem:[%s363 + $0x60] sm:$0xf]
      %v3464 = vld [vmem:[%s363 + $0x64] sm:$0xf]
      %v3465 = vld [vmem:[%s363 + $0x68] sm:$0xf]
      %v3466 = vld [vmem:[%s363 + $0x6c] sm:$0xf]
      %v3467 = vld [vmem:[%s363 + $0x70] sm:$0xf]
      %v3468 = vld [vmem:[%s363 + $0x74] sm:$0xf]
      %v3469 = vld [vmem:[%s363 + $0x78] sm:$0xf]
      %v3470 = vld [vmem:[%s363 + $0x7c] sm:$0xf]
      %v3471 = vld [vmem:[%s363 + $0x80] sm:$0xf]
      %v3472 = vld [vmem:[%s363 + $0x84] sm:$0xf]
      %v3473 = vld [vmem:[%s363 + $0x88] sm:$0xf]
      %v3474 = vld [vmem:[%s363 + $0x8c] sm:$0xf]
      %v3475 = vld [vmem:[%s363 + $0x90] sm:$0x3]
      %s3476 = scalar_lea.vmem %s1, 384
      %v3477 = vld [vmem:[%s3476] sm:$0xf]
      %v3478 = vld [vmem:[%s3476 + $0x4] sm:$0xf]
      %v3479 = vld [vmem:[%s3476 + $0x8] sm:$0xf]
      %v3480 = vld [vmem:[%s3476 + $0xc] sm:$0xf]
      %v3481 = vld [vmem:[%s3476 + $0x10] sm:$0xf]
      %v3482 = vld [vmem:[%s3476 + $0x14] sm:$0xf]
      %v3483 = vld [vmem:[%s3476 + $0x18] sm:$0xf]
      %v3484 = vld [vmem:[%s3476 + $0x1c] sm:$0xf]
      %v3485 = vld [vmem:[%s3476 + $0x20] sm:$0xf]
      %v3486 = vld [vmem:[%s3476 + $0x24] sm:$0xf]
      %v3487 = vld [vmem:[%s3476 + $0x28] sm:$0xf]
      %v3488 = vld [vmem:[%s3476 + $0x2c] sm:$0xf]
      %v3489 = vld [vmem:[%s3476 + $0x30] sm:$0xf]
      %v3490 = vld [vmem:[%s3476 + $0x34] sm:$0xf]
      %v3491 = vld [vmem:[%s3476 + $0x38] sm:$0xf]
      %v3492 = vld [vmem:[%s3476 + $0x3c] sm:$0xf]
      %v3526 = vunpack.c.l.b16 %v3443
      %v3527 = vunpack.c.l.b16 %v3444
      %v3528 = vunpack.c.l.b16 %v3445
      %v3529 = vunpack.c.l.b16 %v3446
      %v3530 = vunpack.c.l.b16 %v3447
      %v3531 = vunpack.c.l.b16 %v3448
      %v3532 = vunpack.c.l.b16 %v3449
      %v3533 = vunpack.c.l.b16 %v3450
      %v3534 = vunpack.c.l.b16 %v3451
      %v3535 = vunpack.c.l.b16 %v3452
      %v3536 = vunpack.c.l.b16 %v3453
      %v3537 = vunpack.c.l.b16 %v3454
      %v3538 = vunpack.c.l.b16 %v3455
      %v3539 = vunpack.c.l.b16 %v3456
      %v3540 = vunpack.c.l.b16 %v3457
      %v3541 = vunpack.c.l.b16 %v3458
      %v3542 = vunpack.c.l.b16 %v3459
      %v3543 = vunpack.c.l.b16 %v3460
      %v3544 = vunpack.c.l.b16 %v3461
      %v3545 = vunpack.c.l.b16 %v3462
      %v3546 = vunpack.c.l.b16 %v3463
      %v3547 = vunpack.c.l.b16 %v3464
      %v3548 = vunpack.c.l.b16 %v3465
      %v3549 = vunpack.c.l.b16 %v3466
      %v3550 = vunpack.c.l.b16 %v3467
      %v3551 = vunpack.c.l.b16 %v3468
      %v3552 = vunpack.c.l.b16 %v3469
      %v3553 = vunpack.c.l.b16 %v3470
      %v3554 = vunpack.c.l.b16 %v3471
      %v3555 = vunpack.c.l.b16 %v3472
      %v3556 = vunpack.c.l.b16 %v3473
      %v3557 = vunpack.c.l.b16 %v3474
      %v3558 = vunpack.c.l.b16 %v3475
      %v3559 = vpack.c.b16 %v3527, %v3526
      %v3560 = vpack.c.b16 %v3529, %v3528
      %v3561 = vpack.c.b16 %v3531, %v3530
      %v3562 = vpack.c.b16 %v3533, %v3532
      %v3563 = vpack.c.b16 %v3535, %v3534
      %v3564 = vpack.c.b16 %v3537, %v3536
      %v3565 = vpack.c.b16 %v3539, %v3538
      %v3566 = vpack.c.b16 %v3541, %v3540
      %v3567 = vpack.c.b16 %v3543, %v3542
      %v3568 = vpack.c.b16 %v3545, %v3544
      %v3569 = vpack.c.b16 %v3547, %v3546
      %v3570 = vpack.c.b16 %v3549, %v3548
      %v3571 = vpack.c.b16 %v3551, %v3550
      %v3572 = vpack.c.b16 %v3553, %v3552
      %v3573 = vpack.c.b16 %v3555, %v3554
      %v3574 = vpack.c.b16 %v3557, %v3556
      %v3575 = vpack.c.b16 %v3558, %v3558
      %v3576 = vrot.slane %v3559, 2
      %v3577 = vrot.slane %v3560, 2
      %v3578 = vsel %vm3088, %v3576, %v3577
      %v3579 = vrot.slane %v3561, 2
      %v3580 = vsel %vm3088, %v3577, %v3579
      %v3581 = vrot.slane %v3562, 2
      %v3582 = vsel %vm3088, %v3579, %v3581
      %v3583 = vrot.slane %v3563, 2
      %v3584 = vsel %vm3088, %v3581, %v3583
      %v3585 = vrot.slane %v3564, 2
      %v3586 = vsel %vm3088, %v3583, %v3585
      %v3587 = vrot.slane %v3565, 2
      %v3588 = vsel %vm3088, %v3585, %v3587
      %v3589 = vrot.slane %v3566, 2
      %v3590 = vsel %vm3088, %v3587, %v3589
      %v3591 = vrot.slane %v3567, 2
      %v3592 = vsel %vm3088, %v3589, %v3591
      %v3593 = vrot.slane %v3568, 2
      %v3594 = vsel %vm3088, %v3591, %v3593
      %v3595 = vrot.slane %v3569, 2
      %v3596 = vsel %vm3088, %v3593, %v3595
      %v3597 = vrot.slane %v3570, 2
      %v3598 = vsel %vm3088, %v3595, %v3597
      %v3599 = vrot.slane %v3571, 2
      %v3600 = vsel %vm3088, %v3597, %v3599
      %v3601 = vrot.slane %v3572, 2
      %v3602 = vsel %vm3088, %v3599, %v3601
      %v3603 = vrot.slane %v3573, 2
      %v3604 = vsel %vm3088, %v3601, %v3603
      %v3605 = vrot.slane %v3574, 2
      %v3606 = vsel %vm3088, %v3603, %v3605
      %v3607 = vrot.slane %v3575, 2
      %v3608 = vsel %vm3088, %v3605, %v3607
      %v3641 = vunpack.c.l.b16 %v3477
      %v3642 = vunpack.c.l.b16 %v3478
      %v3643 = vunpack.c.l.b16 %v3479
      %v3644 = vunpack.c.l.b16 %v3480
      %v3645 = vunpack.c.l.b16 %v3481
      %v3646 = vunpack.c.l.b16 %v3482
      %v3647 = vunpack.c.l.b16 %v3483
      %v3648 = vunpack.c.l.b16 %v3484
      %v3649 = vunpack.c.l.b16 %v3485
      %v3650 = vunpack.c.l.b16 %v3486
      %v3651 = vunpack.c.l.b16 %v3487
      %v3652 = vunpack.c.l.b16 %v3488
      %v3653 = vunpack.c.l.b16 %v3489
      %v3654 = vunpack.c.l.b16 %v3490
      %v3655 = vunpack.c.l.b16 %v3491
      %v3656 = vunpack.c.l.b16 %v3492
      %v3657 = vpack.c.b16 %v3642, %v3641
      %v3658 = vpack.c.b16 %v3644, %v3643
      %v3659 = vpack.c.b16 %v3646, %v3645
      %v3660 = vpack.c.b16 %v3648, %v3647
      %v3661 = vpack.c.b16 %v3650, %v3649
      %v3662 = vpack.c.b16 %v3652, %v3651
      %v3663 = vpack.c.b16 %v3654, %v3653
      %v3664 = vpack.c.b16 %v3656, %v3655
      %3673 = vmatprep.subr.bf16.mxu0 0
      %3674 = vmatpush1.bf16.msra.mxu0 %v3657
      %3675 = vmatprep.subr.bf16.mxu0 0
      %3676 = vmatpush1.bf16.msra.mxu0 %v3658
      %3677 = vmatprep.subr.bf16.mxu0 0
      %3678 = vmatpush1.bf16.msra.mxu0 %v3659
      %3679 = vmatprep.subr.bf16.mxu0 0
      %3680 = vmatpush1.bf16.msra.mxu0 %v3660
      %3681 = vmatprep.subr.bf16.mxu0 0
      %3682 = vmatpush1.bf16.msra.mxu0 %v3661
      %3683 = vmatprep.subr.bf16.mxu0 0
      %3684 = vmatpush1.bf16.msra.mxu0 %v3662
      %3685 = vmatprep.subr.bf16.mxu0 0
      %3686 = vmatpush1.bf16.msra.mxu0 %v3663
      %3687 = vmatprep.subr.bf16.mxu0 0
      %3688 = vmatpush1.bf16.msra.mxu0 %v3664
      %3689 = vmatprep.subr.bf16.mxu0 0
      %3690 = vmatpush1.bf16.msra.mxu0 0
      %3691 = vmatprep.subr.bf16.mxu0 0
      %3692 = vmatpush1.bf16.msra.mxu0 0
      %3693 = vmatprep.subr.bf16.mxu0 0
      %3694 = vmatpush1.bf16.msra.mxu0 0
      %3695 = vmatprep.subr.bf16.mxu0 0
      %3696 = vmatpush1.bf16.msra.mxu0 0
      %3697 = vmatprep.subr.bf16.mxu0 0
      %3698 = vmatpush1.bf16.msra.mxu0 0
      %3699 = vmatprep.subr.bf16.mxu0 0
      %3700 = vmatpush1.bf16.msra.mxu0 0
      %3701 = vmatprep.subr.bf16.mxu0 0
      %3702 = vmatpush1.bf16.msra.mxu0 0
      %3703 = vmatprep.subr.bf16.mxu0 0
      %3704 = vmatpush1.bf16.msra.mxu0 0
      %3705 = vmatprep.mubr.bf16.mxu0 0
      %3706 = vmatmul.mubr.bf16.gmra.mrb[0].mxu0 %v3578
      %v3707 = vpop.f32.mrb[0].mxu0
      %v3708 = vadd.f32 0.0, %v3707
      %v3709 = vpop.f32.mrb[0].mxu0
      %v3710 = vpop.f32.mrb[0].mxu0
      %v3711 = vadd.f32 0.0, %v3710
      %v3712 = vpop.f32.mrb[0].mxu0
      %3713 = vmatprep.mubr.bf16.mxu0 0
      %3714 = vmatmul.mubr.bf16.gmra.mrb[0].mxu0 %v3580
      %v3715 = vpop.f32.mrb[0].mxu0
      %v3716 = vadd.f32 0.0, %v3715
      %v3717 = vpop.f32.mrb[0].mxu0
      %v3718 = vpop.f32.mrb[0].mxu0
      %v3719 = vadd.f32 0.0, %v3718
      %v3720 = vpop.f32.mrb[0].mxu0
      %3721 = vmatprep.mubr.bf16.mxu0 0
      %3722 = vmatmul.mubr.bf16.gmra.mrb[0].mxu0 %v3582
      %v3723 = vpop.f32.mrb[0].mxu0
      %v3724 = vadd.f32 0.0, %v3723
      %v3725 = vpop.f32.mrb[0].mxu0
      %v3726 = vpop.f32.mrb[0].mxu0
      %v3727 = vadd.f32 0.0, %v3726
      %v3728 = vpop.f32.mrb[0].mxu0
      %3729 = vmatprep.mubr.bf16.mxu0 0
      %3730 = vmatmul.mubr.bf16.gmra.mrb[0].mxu0 %v3584
      %v3731 = vpop.f32.mrb[0].mxu0
      %v3732 = vadd.f32 0.0, %v3731
      %v3733 = vpop.f32.mrb[0].mxu0
      %v3734 = vpop.f32.mrb[0].mxu0
      %v3735 = vadd.f32 0.0, %v3734
      %v3736 = vpop.f32.mrb[0].mxu0
      %3737 = vmatprep.mubr.bf16.mxu0 0
      %3738 = vmatmul.mubr.bf16.gmra.mrb[0].mxu0 %v3586
      %v3739 = vpop.f32.mrb[0].mxu0
      %v3740 = vadd.f32 0.0, %v3739
      %v3741 = vpop.f32.mrb[0].mxu0
      %v3742 = vpop.f32.mrb[0].mxu0
      %v3743 = vadd.f32 0.0, %v3742
      %v3744 = vpop.f32.mrb[0].mxu0
      %3745 = vmatprep.mubr.bf16.mxu0 0
      %3746 = vmatmul.mubr.bf16.gmra.mrb[0].mxu0 %v3588
      %v3747 = vpop.f32.mrb[0].mxu0
      %v3748 = vadd.f32 0.0, %v3747
      %v3749 = vpop.f32.mrb[0].mxu0
      %v3750 = vpop.f32.mrb[0].mxu0
      %v3751 = vadd.f32 0.0, %v3750
      %v3752 = vpop.f32.mrb[0].mxu0
      %3753 = vmatprep.mubr.bf16.mxu0 0
      %3754 = vmatmul.mubr.bf16.gmra.mrb[0].mxu0 %v3590
      %v3755 = vpop.f32.mrb[0].mxu0
      %v3756 = vadd.f32 0.0, %v3755
      %v3757 = vpop.f32.mrb[0].mxu0
      %v3758 = vpop.f32.mrb[0].mxu0
      %v3759 = vadd.f32 0.0, %v3758
      %v3760 = vpop.f32.mrb[0].mxu0
      %3761 = vmatprep.mubr.bf16.mxu0 0
      %3762 = vmatmul.mubr.bf16.gmra.mrb[0].mxu0 %v3592
      %v3763 = vpop.f32.mrb[0].mxu0
      %v3764 = vadd.f32 0.0, %v3763
      %v3765 = vpop.f32.mrb[0].mxu0
      %v3766 = vpop.f32.mrb[0].mxu0
      %v3767 = vadd.f32 0.0, %v3766
      %v3768 = vpop.f32.mrb[0].mxu0
      %3769 = vmatprep.mubr.bf16.mxu0 0
      %3770 = vmatmul.mubr.bf16.gmra.mrb[0].mxu0 %v3594
      %v3771 = vpop.f32.mrb[0].mxu0
      %v3772 = vadd.f32 0.0, %v3771
      %v3773 = vpop.f32.mrb[0].mxu0
      %v3774 = vpop.f32.mrb[0].mxu0
      %v3775 = vadd.f32 0.0, %v3774
      %v3776 = vpop.f32.mrb[0].mxu0
      %3777 = vmatprep.mubr.bf16.mxu0 0
      %3778 = vmatmul.mubr.bf16.gmra.mrb[0].mxu0 %v3596
      %v3779 = vpop.f32.mrb[0].mxu0
      %v3780 = vadd.f32 0.0, %v3779
      %v3781 = vpop.f32.mrb[0].mxu0
      %v3782 = vpop.f32.mrb[0].mxu0
      %v3783 = vadd.f32 0.0, %v3782
      %v3784 = vpop.f32.mrb[0].mxu0
      %3785 = vmatprep.mubr.bf16.mxu0 0
      %3786 = vmatmul.mubr.bf16.gmra.mrb[0].mxu0 %v3598
      %v3787 = vpop.f32.mrb[0].mxu0
      %v3788 = vadd.f32 0.0, %v3787
      %v3789 = vpop.f32.mrb[0].mxu0
      %v3790 = vpop.f32.mrb[0].mxu0
      %v3791 = vadd.f32 0.0, %v3790
      %v3792 = vpop.f32.mrb[0].mxu0
      %3793 = vmatprep.mubr.bf16.mxu0 0
      %3794 = vmatmul.mubr.bf16.gmra.mrb[0].mxu0 %v3600
      %v3795 = vpop.f32.mrb[0].mxu0
      %v3796 = vadd.f32 0.0, %v3795
      %v3797 = vpop.f32.mrb[0].mxu0
      %v3798 = vpop.f32.mrb[0].mxu0
      %v3799 = vadd.f32 0.0, %v3798
      %v3800 = vpop.f32.mrb[0].mxu0
      %3801 = vmatprep.mubr.bf16.mxu0 0
      %3802 = vmatmul.mubr.bf16.gmra.mrb[0].mxu0 %v3602
      %v3803 = vpop.f32.mrb[0].mxu0
      %v3804 = vadd.f32 0.0, %v3803
      %v3805 = vpop.f32.mrb[0].mxu0
      %v3806 = vpop.f32.mrb[0].mxu0
      %v3807 = vadd.f32 0.0, %v3806
      %v3808 = vpop.f32.mrb[0].mxu0
      %3809 = vmatprep.mubr.bf16.mxu0 0
      %3810 = vmatmul.mubr.bf16.gmra.mrb[0].mxu0 %v3604
      %v3811 = vpop.f32.mrb[0].mxu0
      %v3812 = vadd.f32 0.0, %v3811
      %v3813 = vpop.f32.mrb[0].mxu0
      %v3814 = vpop.f32.mrb[0].mxu0
      %v3815 = vadd.f32 0.0, %v3814
      %v3816 = vpop.f32.mrb[0].mxu0
      %3817 = vmatprep.mubr.bf16.mxu0 0
      %3818 = vmatmul.mubr.bf16.gmra.mrb[0].mxu0 %v3606
      %v3819 = vpop.f32.mrb[0].mxu0
      %v3820 = vadd.f32 0.0, %v3819
      %v3821 = vpop.f32.mrb[0].mxu0
      %v3822 = vpop.f32.mrb[0].mxu0
      %v3823 = vadd.f32 0.0, %v3822
      %v3824 = vpop.f32.mrb[0].mxu0
      %3825 = vmatprep.mubr.bf16.mxu0 0
      %3826 = vmatmul.mubr.bf16.gmra.mrb[0].mxu0 %v3608
      %v3827 = vpop.f32.mrb[0].mxu0
      %v3828 = vadd.f32 0.0, %v3827
      %v3829 = vpop.f32.mrb[0].mxu0
      %v3830 = vpop.f32.mrb[0].mxu0
      %v3831 = vadd.f32 0.0, %v3830
      %v3832 = vpop.f32.mrb[0].mxu0
      %3833 = vdwg.mxu0
      %v3834 = vadd.f32 %v3411, %v3708
      %v3835 = vadd.f32 %v3412, %v3711
      %v3836 = vadd.f32 %v3413, %v3716
      %v3837 = vadd.f32 %v3414, %v3719
      %v3838 = vadd.f32 %v3415, %v3724
      %v3839 = vadd.f32 %v3416, %v3727
      %v3840 = vadd.f32 %v3417, %v3732
      %v3841 = vadd.f32 %v3418, %v3735
      %v3842 = vadd.f32 %v3419, %v3740
      %v3843 = vadd.f32 %v3420, %v3743
      %v3844 = vadd.f32 %v3421, %v3748
      %v3845 = vadd.f32 %v3422, %v3751
      %v3846 = vadd.f32 %v3423, %v3756
      %v3847 = vadd.f32 %v3424, %v3759
      %v3848 = vadd.f32 %v3425, %v3764
      %v3849 = vadd.f32 %v3426, %v3767
      %v3850 = vadd.f32 %v3427, %v3772
      %v3851 = vadd.f32 %v3428, %v3775
      %v3852 = vadd.f32 %v3429, %v3780
      %v3853 = vadd.f32 %v3430, %v3783
      %v3854 = vadd.f32 %v3431, %v3788
      %v3855 = vadd.f32 %v3432, %v3791
      %v3856 = vadd.f32 %v3433, %v3796
      %v3857 = vadd.f32 %v3434, %v3799
      %v3858 = vadd.f32 %v3435, %v3804
      %v3859 = vadd.f32 %v3436, %v3807
      %v3860 = vadd.f32 %v3437, %v3812
      %v3861 = vadd.f32 %v3438, %v3815
      %v3862 = vadd.f32 %v3439, %v3820
      %v3863 = vadd.f32 %v3440, %v3823
      %v3864 = vadd.f32 %v3441, %v3828
      %v3865 = vadd.f32 %v3442, %v3831
      %3866 = vst [vmem:[#allocation4] sm:$0xff] %v3834
      %3867 = vst [vmem:[#allocation4 + $0x8] sm:$0xff] %v3835
      %3868 = vst [vmem:[#allocation4 + $0x10] sm:$0xff] %v3836
      %3869 = vst [vmem:[#allocation4 + $0x18] sm:$0xff] %v3837
      %3870 = vst [vmem:[#allocation4 + $0x20] sm:$0xff] %v3838
      %3871 = vst [vmem:[#allocation4 + $0x28] sm:$0xff] %v3839
      %3872 = vst [vmem:[#allocation4 + $0x30] sm:$0xff] %v3840
      %3873 = vst [vmem:[#allocation4 + $0x38] sm:$0xff] %v3841
      %3874 = vst [vmem:[#allocation4 + $0x40] sm:$0xff] %v3842
      %3875 = vst [vmem:[#allocation4 + $0x48] sm:$0xff] %v3843
      %3876 = vst [vmem:[#allocation4 + $0x50] sm:$0xff] %v3844
      %3877 = vst [vmem:[#allocation4 + $0x58] sm:$0xff] %v3845
      %3878 = vst [vmem:[#allocation4 + $0x60] sm:$0xff] %v3846
      %3879 = vst [vmem:[#allocation4 + $0x68] sm:$0xff] %v3847
      %3880 = vst [vmem:[#allocation4 + $0x70] sm:$0xff] %v3848
      %3881 = vst [vmem:[#allocation4 + $0x78] sm:$0xff] %v3849
      %3882 = vst [vmem:[#allocation4 + $0x80] sm:$0xff] %v3850
      %3883 = vst [vmem:[#allocation4 + $0x88] sm:$0xff] %v3851
      %3884 = vst [vmem:[#allocation4 + $0x90] sm:$0xff] %v3852
      %3885 = vst [vmem:[#allocation4 + $0x98] sm:$0xff] %v3853
      %3886 = vst [vmem:[#allocation4 + $0xa0] sm:$0xff] %v3854
      %3887 = vst [vmem:[#allocation4 + $0xa8] sm:$0xff] %v3855
      %3888 = vst [vmem:[#allocation4 + $0xb0] sm:$0xff] %v3856
      %3889 = vst [vmem:[#allocation4 + $0xb8] sm:$0xff] %v3857
      %3890 = vst [vmem:[#allocation4 + $0xc0] sm:$0xff] %v3858
      %3891 = vst [vmem:[#allocation4 + $0xc8] sm:$0xff] %v3859
      %3892 = vst [vmem:[#allocation4 + $0xd0] sm:$0xff] %v3860
      %3893 = vst [vmem:[#allocation4 + $0xd8] sm:$0xff] %v3861
      %3894 = vst [vmem:[#allocation4 + $0xe0] sm:$0xff] %v3862
      %3895 = vst [vmem:[#allocation4 + $0xe8] sm:$0xff] %v3863
      %3896 = vst [vmem:[#allocation4 + $0xf0] sm:$0xff] %v3864
      %3897 = vst [vmem:[#allocation4 + $0xf8] sm:$0xff] %v3865
      %v3898 = vld [vmem:[#allocation4] sm:$0xff]
      %v3899 = vld [vmem:[#allocation4 + $0x8] sm:$0xff]
      %v3900 = vld [vmem:[#allocation4 + $0x10] sm:$0xff]
      %v3901 = vld [vmem:[#allocation4 + $0x18] sm:$0xff]
      %v3902 = vld [vmem:[#allocation4 + $0x20] sm:$0xff]
      %v3903 = vld [vmem:[#allocation4 + $0x28] sm:$0xff]
      %v3904 = vld [vmem:[#allocation4 + $0x30] sm:$0xff]
      %v3905 = vld [vmem:[#allocation4 + $0x38] sm:$0xff]
      %v3906 = vld [vmem:[#allocation4 + $0x40] sm:$0xff]
      %v3907 = vld [vmem:[#allocation4 + $0x48] sm:$0xff]
      %v3908 = vld [vmem:[#allocation4 + $0x50] sm:$0xff]
      %v3909 = vld [vmem:[#allocation4 + $0x58] sm:$0xff]
      %v3910 = vld [vmem:[#allocation4 + $0x60] sm:$0xff]
      %v3911 = vld [vmem:[#allocation4 + $0x68] sm:$0xff]
      %v3912 = vld [vmem:[#allocation4 + $0x70] sm:$0xff]
      %v3913 = vld [vmem:[#allocation4 + $0x78] sm:$0xff]
      %v3914 = vld [vmem:[#allocation4 + $0x80] sm:$0xff]
      %v3915 = vld [vmem:[#allocation4 + $0x88] sm:$0xff]
      %v3916 = vld [vmem:[#allocation4 + $0x90] sm:$0xff]
      %v3917 = vld [vmem:[#allocation4 + $0x98] sm:$0xff]
      %v3918 = vld [vmem:[#allocation4 + $0xa0] sm:$0xff]
      %v3919 = vld [vmem:[#allocation4 + $0xa8] sm:$0xff]
      %v3920 = vld [vmem:[#allocation4 + $0xb0] sm:$0xff]
      %v3921 = vld [vmem:[#allocation4 + $0xb8] sm:$0xff]
      %v3922 = vld [vmem:[#allocation4 + $0xc0] sm:$0xff]
      %v3923 = vld [vmem:[#allocation4 + $0xc8] sm:$0xff]
      %v3924 = vld [vmem:[#allocation4 + $0xd0] sm:$0xff]
      %v3925 = vld [vmem:[#allocation4 + $0xd8] sm:$0xff]
      %v3926 = vld [vmem:[#allocation4 + $0xe0] sm:$0xff]
      %v3927 = vld [vmem:[#allocation4 + $0xe8] sm:$0xff]
      %v3928 = vld [vmem:[#allocation4 + $0xf0] sm:$0xff]
      %v3929 = vld [vmem:[#allocation4 + $0xf8] sm:$0xff]
      %v3930 = vld [vmem:[%s363 + $0x10] sm:$0xc]
      %v3931 = vld [vmem:[%s363 + $0x14] sm:$0xf]
      %v3932 = vld [vmem:[%s363 + $0x18] sm:$0xf]
      %v3933 = vld [vmem:[%s363 + $0x1c] sm:$0xf]
      %v3934 = vld [vmem:[%s363 + $0x20] sm:$0xf]
      %v3935 = vld [vmem:[%s363 + $0x24] sm:$0xf]
      %v3936 = vld [vmem:[%s363 + $0x28] sm:$0xf]
      %v3937 = vld [vmem:[%s363 + $0x2c] sm:$0xf]
      %v3938 = vld [vmem:[%s363 + $0x30] sm:$0xf]
      %v3939 = vld [vmem:[%s363 + $0x34] sm:$0xf]
      %v3940 = vld [vmem:[%s363 + $0x38] sm:$0xf]
      %v3941 = vld [vmem:[%s363 + $0x3c] sm:$0xf]
      %v3942 = vld [vmem:[%s363 + $0x40] sm:$0xf]
      %v3943 = vld [vmem:[%s363 + $0x44] sm:$0xf]
      %v3944 = vld [vmem:[%s363 + $0x48] sm:$0xf]
      %v3945 = vld [vmem:[%s363 + $0x4c] sm:$0xf]
      %v3946 = vld [vmem:[%s363 + $0x50] sm:$0xf]
      %v3947 = vld [vmem:[%s363 + $0x54] sm:$0xf]
      %v3948 = vld [vmem:[%s363 + $0x58] sm:$0xf]
      %v3949 = vld [vmem:[%s363 + $0x5c] sm:$0xf]
      %v3950 = vld [vmem:[%s363 + $0x60] sm:$0xf]
      %v3951 = vld [vmem:[%s363 + $0x64] sm:$0xf]
      %v3952 = vld [vmem:[%s363 + $0x68] sm:$0xf]
      %v3953 = vld [vmem:[%s363 + $0x6c] sm:$0xf]
      %v3954 = vld [vmem:[%s363 + $0x70] sm:$0xf]
      %v3955 = vld [vmem:[%s363 + $0x74] sm:$0xf]
      %v3956 = vld [vmem:[%s363 + $0x78] sm:$0xf]
      %v3957 = vld [vmem:[%s363 + $0x7c] sm:$0xf]
      %v3958 = vld [vmem:[%s363 + $0x80] sm:$0xf]
      %v3959 = vld [vmem:[%s363 + $0x84] sm:$0xf]
      %v3960 = vld [vmem:[%s363 + $0x88] sm:$0xf]
      %v3961 = vld [vmem:[%s363 + $0x8c] sm:$0xf]
      %v3962 = vld [vmem:[%s363 + $0x90] sm:$0x7]
      %s3963 = scalar_lea.vmem %s1, 448
      %v3964 = vld [vmem:[%s3963] sm:$0xf]
      %v3965 = vld [vmem:[%s3963 + $0x4] sm:$0xf]
      %v3966 = vld [vmem:[%s3963 + $0x8] sm:$0xf]
      %v3967 = vld [vmem:[%s3963 + $0xc] sm:$0xf]
      %v3968 = vld [vmem:[%s3963 + $0x10] sm:$0xf]
      %v3969 = vld [vmem:[%s3963 + $0x14] sm:$0xf]
      %v3970 = vld [vmem:[%s3963 + $0x18] sm:$0xf]
      %v3971 = vld [vmem:[%s3963 + $0x1c] sm:$0xf]
      %v3972 = vld [vmem:[%s3963 + $0x20] sm:$0xf]
      %v3973 = vld [vmem:[%s3963 + $0x24] sm:$0xf]
      %v3974 = vld [vmem:[%s3963 + $0x28] sm:$0xf]
      %v3975 = vld [vmem:[%s3963 + $0x2c] sm:$0xf]
      %v3976 = vld [vmem:[%s3963 + $0x30] sm:$0xf]
      %v3977 = vld [vmem:[%s3963 + $0x34] sm:$0xf]
      %v3978 = vld [vmem:[%s3963 + $0x38] sm:$0xf]
      %v3979 = vld [vmem:[%s3963 + $0x3c] sm:$0xf]
      %v4013 = vunpack.c.l.b16 %v3930
      %v4014 = vunpack.c.l.b16 %v3931
      %v4015 = vunpack.c.l.b16 %v3932
      %v4016 = vunpack.c.l.b16 %v3933
      %v4017 = vunpack.c.l.b16 %v3934
      %v4018 = vunpack.c.l.b16 %v3935
      %v4019 = vunpack.c.l.b16 %v3936
      %v4020 = vunpack.c.l.b16 %v3937
      %v4021 = vunpack.c.l.b16 %v3938
      %v4022 = vunpack.c.l.b16 %v3939
      %v4023 = vunpack.c.l.b16 %v3940
      %v4024 = vunpack.c.l.b16 %v3941
      %v4025 = vunpack.c.l.b16 %v3942
      %v4026 = vunpack.c.l.b16 %v3943
      %v4027 = vunpack.c.l.b16 %v3944
      %v4028 = vunpack.c.l.b16 %v3945
      %v4029 = vunpack.c.l.b16 %v3946
      %v4030 = vunpack.c.l.b16 %v3947
      %v4031 = vunpack.c.l.b16 %v3948
      %v4032 = vunpack.c.l.b16 %v3949
      %v4033 = vunpack.c.l.b16 %v3950
      %v4034 = vunpack.c.l.b16 %v3951
      %v4035 = vunpack.c.l.b16 %v3952
      %v4036 = vunpack.c.l.b16 %v3953
      %v4037 = vunpack.c.l.b16 %v3954
      %v4038 = vunpack.c.l.b16 %v3955
      %v4039 = vunpack.c.l.b16 %v3956
      %v4040 = vunpack.c.l.b16 %v3957
      %v4041 = vunpack.c.l.b16 %v3958
      %v4042 = vunpack.c.l.b16 %v3959
      %v4043 = vunpack.c.l.b16 %v3960
      %v4044 = vunpack.c.l.b16 %v3961
      %v4045 = vunpack.c.l.b16 %v3962
      %v4046 = vpack.c.b16 %v4014, %v4013
      %v4047 = vpack.c.b16 %v4016, %v4015
      %v4048 = vpack.c.b16 %v4018, %v4017
      %v4049 = vpack.c.b16 %v4020, %v4019
      %v4050 = vpack.c.b16 %v4022, %v4021
      %v4051 = vpack.c.b16 %v4024, %v4023
      %v4052 = vpack.c.b16 %v4026, %v4025
      %v4053 = vpack.c.b16 %v4028, %v4027
      %v4054 = vpack.c.b16 %v4030, %v4029
      %v4055 = vpack.c.b16 %v4032, %v4031
      %v4056 = vpack.c.b16 %v4034, %v4033
      %v4057 = vpack.c.b16 %v4036, %v4035
      %v4058 = vpack.c.b16 %v4038, %v4037
      %v4059 = vpack.c.b16 %v4040, %v4039
      %v4060 = vpack.c.b16 %v4042, %v4041
      %v4061 = vpack.c.b16 %v4044, %v4043
      %v4062 = vpack.c.b16 %v4045, %v4045
      %vm4063 = vsmask.f32 5376
      %v4065 = vshrl.u32 %v4046, 16
      %v4067 = vrot.slane %v4065, 2
      %v4068 = vshll.u32 %v4046, 16
      %v4070 = vrot.slane %v4068, 3
      %v4071 = vor.u32 %v4067, %v4070
      %v4073 = vshrl.u32 %v4047, 16
      %v4075 = vrot.slane %v4073, 2
      %v4076 = vshll.u32 %v4047, 16
      %v4078 = vrot.slane %v4076, 3
      %v4079 = vor.u32 %v4075, %v4078
      %v4080 = vsel %vm4063, %v4071, %v4079
      %v4082 = vshrl.u32 %v4048, 16
      %v4084 = vrot.slane %v4082, 2
      %v4085 = vshll.u32 %v4048, 16
      %v4087 = vrot.slane %v4085, 3
      %v4088 = vor.u32 %v4084, %v4087
      %v4089 = vsel %vm4063, %v4079, %v4088
      %v4091 = vshrl.u32 %v4049, 16
      %v4093 = vrot.slane %v4091, 2
      %v4094 = vshll.u32 %v4049, 16
      %v4096 = vrot.slane %v4094, 3
      %v4097 = vor.u32 %v4093, %v4096
      %v4098 = vsel %vm4063, %v4088, %v4097
      %v4100 = vshrl.u32 %v4050, 16
      %v4102 = vrot.slane %v4100, 2
      %v4103 = vshll.u32 %v4050, 16
      %v4105 = vrot.slane %v4103, 3
      %v4106 = vor.u32 %v4102, %v4105
      %v4107 = vsel %vm4063, %v4097, %v4106
      %v4109 = vshrl.u32 %v4051, 16
      %v4111 = vrot.slane %v4109, 2
      %v4112 = vshll.u32 %v4051, 16
      %v4114 = vrot.slane %v4112, 3
      %v4115 = vor.u32 %v4111, %v4114
      %v4116 = vsel %vm4063, %v4106, %v4115
      %v4118 = vshrl.u32 %v4052, 16
      %v4120 = vrot.slane %v4118, 2
      %v4121 = vshll.u32 %v4052, 16
      %v4123 = vrot.slane %v4121, 3
      %v4124 = vor.u32 %v4120, %v4123
      %v4125 = vsel %vm4063, %v4115, %v4124
      %v4127 = vshrl.u32 %v4053, 16
      %v4129 = vrot.slane %v4127, 2
      %v4130 = vshll.u32 %v4053, 16
      %v4132 = vrot.slane %v4130, 3
      %v4133 = vor.u32 %v4129, %v4132
      %v4134 = vsel %vm4063, %v4124, %v4133
      %v4136 = vshrl.u32 %v4054, 16
      %v4138 = vrot.slane %v4136, 2
      %v4139 = vshll.u32 %v4054, 16
      %v4141 = vrot.slane %v4139, 3
      %v4142 = vor.u32 %v4138, %v4141
      %v4143 = vsel %vm4063, %v4133, %v4142
      %v4145 = vshrl.u32 %v4055, 16
      %v4147 = vrot.slane %v4145, 2
      %v4148 = vshll.u32 %v4055, 16
      %v4150 = vrot.slane %v4148, 3
      %v4151 = vor.u32 %v4147, %v4150
      %v4152 = vsel %vm4063, %v4142, %v4151
      %v4154 = vshrl.u32 %v4056, 16
      %v4156 = vrot.slane %v4154, 2
      %v4157 = vshll.u32 %v4056, 16
      %v4159 = vrot.slane %v4157, 3
      %v4160 = vor.u32 %v4156, %v4159
      %v4161 = vsel %vm4063, %v4151, %v4160
      %v4163 = vshrl.u32 %v4057, 16
      %v4165 = vrot.slane %v4163, 2
      %v4166 = vshll.u32 %v4057, 16
      %v4168 = vrot.slane %v4166, 3
      %v4169 = vor.u32 %v4165, %v4168
      %v4170 = vsel %vm4063, %v4160, %v4169
      %v4172 = vshrl.u32 %v4058, 16
      %v4174 = vrot.slane %v4172, 2
      %v4175 = vshll.u32 %v4058, 16
      %v4177 = vrot.slane %v4175, 3
      %v4178 = vor.u32 %v4174, %v4177
      %v4179 = vsel %vm4063, %v4169, %v4178
      %v4181 = vshrl.u32 %v4059, 16
      %v4183 = vrot.slane %v4181, 2
      %v4184 = vshll.u32 %v4059, 16
      %v4186 = vrot.slane %v4184, 3
      %v4187 = vor.u32 %v4183, %v4186
      %v4188 = vsel %vm4063, %v4178, %v4187
      %v4190 = vshrl.u32 %v4060, 16
      %v4192 = vrot.slane %v4190, 2
      %v4193 = vshll.u32 %v4060, 16
      %v4195 = vrot.slane %v4193, 3
      %v4196 = vor.u32 %v4192, %v4195
      %v4197 = vsel %vm4063, %v4187, %v4196
      %v4199 = vshrl.u32 %v4061, 16
      %v4201 = vrot.slane %v4199, 2
      %v4202 = vshll.u32 %v4061, 16
      %v4204 = vrot.slane %v4202, 3
      %v4205 = vor.u32 %v4201, %v4204
      %v4206 = vsel %vm4063, %v4196, %v4205
      %v4208 = vshrl.u32 %v4062, 16
      %v4210 = vrot.slane %v4208, 2
      %v4211 = vshll.u32 %v4062, 16
      %v4213 = vrot.slane %v4211, 3
      %v4214 = vor.u32 %v4210, %v4213
      %v4215 = vsel %vm4063, %v4205, %v4214
      %v4248 = vunpack.c.l.b16 %v3964
      %v4249 = vunpack.c.l.b16 %v3965
      %v4250 = vunpack.c.l.b16 %v3966
      %v4251 = vunpack.c.l.b16 %v3967
      %v4252 = vunpack.c.l.b16 %v3968
      %v4253 = vunpack.c.l.b16 %v3969
      %v4254 = vunpack.c.l.b16 %v3970
      %v4255 = vunpack.c.l.b16 %v3971
      %v4256 = vunpack.c.l.b16 %v3972
      %v4257 = vunpack.c.l.b16 %v3973
      %v4258 = vunpack.c.l.b16 %v3974
      %v4259 = vunpack.c.l.b16 %v3975
      %v4260 = vunpack.c.l.b16 %v3976
      %v4261 = vunpack.c.l.b16 %v3977
      %v4262 = vunpack.c.l.b16 %v3978
      %v4263 = vunpack.c.l.b16 %v3979
      %v4264 = vpack.c.b16 %v4249, %v4248
      %v4265 = vpack.c.b16 %v4251, %v4250
      %v4266 = vpack.c.b16 %v4253, %v4252
      %v4267 = vpack.c.b16 %v4255, %v4254
      %v4268 = vpack.c.b16 %v4257, %v4256
      %v4269 = vpack.c.b16 %v4259, %v4258
      %v4270 = vpack.c.b16 %v4261, %v4260
      %v4271 = vpack.c.b16 %v4263, %v4262
      %4280 = vmatprep.subr.bf16.mxu0 0
      %4281 = vmatpush1.bf16.msra.mxu0 %v4264
      %4282 = vmatprep.subr.bf16.mxu0 0
      %4283 = vmatpush1.bf16.msra.mxu0 %v4265
      %4284 = vmatprep.subr.bf16.mxu0 0
      %4285 = vmatpush1.bf16.msra.mxu0 %v4266
      %4286 = vmatprep.subr.bf16.mxu0 0
      %4287 = vmatpush1.bf16.msra.mxu0 %v4267
      %4288 = vmatprep.subr.bf16.mxu0 0
      %4289 = vmatpush1.bf16.msra.mxu0 %v4268
      %4290 = vmatprep.subr.bf16.mxu0 0
      %4291 = vmatpush1.bf16.msra.mxu0 %v4269
      %4292 = vmatprep.subr.bf16.mxu0 0
      %4293 = vmatpush1.bf16.msra.mxu0 %v4270
      %4294 = vmatprep.subr.bf16.mxu0 0
      %4295 = vmatpush1.bf16.msra.mxu0 %v4271
      %4296 = vmatprep.subr.bf16.mxu0 0
      %4297 = vmatpush1.bf16.msra.mxu0 0
      %4298 = vmatprep.subr.bf16.mxu0 0
      %4299 = vmatpush1.bf16.msra.mxu0 0
      %4300 = vmatprep.subr.bf16.mxu0 0
      %4301 = vmatpush1.bf16.msra.mxu0 0
      %4302 = vmatprep.subr.bf16.mxu0 0
      %4303 = vmatpush1.bf16.msra.mxu0 0
      %4304 = vmatprep.subr.bf16.mxu0 0
      %4305 = vmatpush1.bf16.msra.mxu0 0
      %4306 = vmatprep.subr.bf16.mxu0 0
      %4307 = vmatpush1.bf16.msra.mxu0 0
      %4308 = vmatprep.subr.bf16.mxu0 0
      %4309 = vmatpush1.bf16.msra.mxu0 0
      %4310 = vmatprep.subr.bf16.mxu0 0
      %4311 = vmatpush1.bf16.msra.mxu0 0
      %4312 = vmatprep.mubr.bf16.mxu0 0
      %4313 = vmatmul.mubr.bf16.gmra.mrb[0].mxu0 %v4080
      %v4314 = vpop.f32.mrb[0].mxu0
      %v4315 = vadd.f32 0.0, %v4314
      %v4316 = vpop.f32.mrb[0].mxu0
      %v4317 = vpop.f32.mrb[0].mxu0
      %v4318 = vadd.f32 0.0, %v4317
      %v4319 = vpop.f32.mrb[0].mxu0
      %4320 = vmatprep.mubr.bf16.mxu0 0
      %4321 = vmatmul.mubr.bf16.gmra.mrb[0].mxu0 %v4089
      %v4322 = vpop.f32.mrb[0].mxu0
      %v4323 = vadd.f32 0.0, %v4322
      %v4324 = vpop.f32.mrb[0].mxu0
      %v4325 = vpop.f32.mrb[0].mxu0
      %v4326 = vadd.f32 0.0, %v4325
      %v4327 = vpop.f32.mrb[0].mxu0
      %4328 = vmatprep.mubr.bf16.mxu0 0
      %4329 = vmatmul.mubr.bf16.gmra.mrb[0].mxu0 %v4098
      %v4330 = vpop.f32.mrb[0].mxu0
      %v4331 = vadd.f32 0.0, %v4330
      %v4332 = vpop.f32.mrb[0].mxu0
      %v4333 = vpop.f32.mrb[0].mxu0
      %v4334 = vadd.f32 0.0, %v4333
      %v4335 = vpop.f32.mrb[0].mxu0
      %4336 = vmatprep.mubr.bf16.mxu0 0
      %4337 = vmatmul.mubr.bf16.gmra.mrb[0].mxu0 %v4107
      %v4338 = vpop.f32.mrb[0].mxu0
      %v4339 = vadd.f32 0.0, %v4338
      %v4340 = vpop.f32.mrb[0].mxu0
      %v4341 = vpop.f32.mrb[0].mxu0
      %v4342 = vadd.f32 0.0, %v4341
      %v4343 = vpop.f32.mrb[0].mxu0
      %4344 = vmatprep.mubr.bf16.mxu0 0
      %4345 = vmatmul.mubr.bf16.gmra.mrb[0].mxu0 %v4116
      %v4346 = vpop.f32.mrb[0].mxu0
      %v4347 = vadd.f32 0.0, %v4346
      %v4348 = vpop.f32.mrb[0].mxu0
      %v4349 = vpop.f32.mrb[0].mxu0
      %v4350 = vadd.f32 0.0, %v4349
      %v4351 = vpop.f32.mrb[0].mxu0
      %4352 = vmatprep.mubr.bf16.mxu0 0
      %4353 = vmatmul.mubr.bf16.gmra.mrb[0].mxu0 %v4125
      %v4354 = vpop.f32.mrb[0].mxu0
      %v4355 = vadd.f32 0.0, %v4354
      %v4356 = vpop.f32.mrb[0].mxu0
      %v4357 = vpop.f32.mrb[0].mxu0
      %v4358 = vadd.f32 0.0, %v4357
      %v4359 = vpop.f32.mrb[0].mxu0
      %4360 = vmatprep.mubr.bf16.mxu0 0
      %4361 = vmatmul.mubr.bf16.gmra.mrb[0].mxu0 %v4134
      %v4362 = vpop.f32.mrb[0].mxu0
      %v4363 = vadd.f32 0.0, %v4362
      %v4364 = vpop.f32.mrb[0].mxu0
      %v4365 = vpop.f32.mrb[0].mxu0
      %v4366 = vadd.f32 0.0, %v4365
      %v4367 = vpop.f32.mrb[0].mxu0
      %4368 = vmatprep.mubr.bf16.mxu0 0
      %4369 = vmatmul.mubr.bf16.gmra.mrb[0].mxu0 %v4143
      %v4370 = vpop.f32.mrb[0].mxu0
      %v4371 = vadd.f32 0.0, %v4370
      %v4372 = vpop.f32.mrb[0].mxu0
      %v4373 = vpop.f32.mrb[0].mxu0
      %v4374 = vadd.f32 0.0, %v4373
      %v4375 = vpop.f32.mrb[0].mxu0
      %4376 = vmatprep.mubr.bf16.mxu0 0
      %4377 = vmatmul.mubr.bf16.gmra.mrb[0].mxu0 %v4152
      %v4378 = vpop.f32.mrb[0].mxu0
      %v4379 = vadd.f32 0.0, %v4378
      %v4380 = vpop.f32.mrb[0].mxu0
      %v4381 = vpop.f32.mrb[0].mxu0
      %v4382 = vadd.f32 0.0, %v4381
      %v4383 = vpop.f32.mrb[0].mxu0
      %4384 = vmatprep.mubr.bf16.mxu0 0
      %4385 = vmatmul.mubr.bf16.gmra.mrb[0].mxu0 %v4161
      %v4386 = vpop.f32.mrb[0].mxu0
      %v4387 = vadd.f32 0.0, %v4386
      %v4388 = vpop.f32.mrb[0].mxu0
      %v4389 = vpop.f32.mrb[0].mxu0
      %v4390 = vadd.f32 0.0, %v4389
      %v4391 = vpop.f32.mrb[0].mxu0
      %4392 = vmatprep.mubr.bf16.mxu0 0
      %4393 = vmatmul.mubr.bf16.gmra.mrb[0].mxu0 %v4170
      %v4394 = vpop.f32.mrb[0].mxu0
      %v4395 = vadd.f32 0.0, %v4394
      %v4396 = vpop.f32.mrb[0].mxu0
      %v4397 = vpop.f32.mrb[0].mxu0
      %v4398 = vadd.f32 0.0, %v4397
      %v4399 = vpop.f32.mrb[0].mxu0
      %4400 = vmatprep.mubr.bf16.mxu0 0
      %4401 = vmatmul.mubr.bf16.gmra.mrb[0].mxu0 %v4179
      %v4402 = vpop.f32.mrb[0].mxu0
      %v4403 = vadd.f32 0.0, %v4402
      %v4404 = vpop.f32.mrb[0].mxu0
      %v4405 = vpop.f32.mrb[0].mxu0
      %v4406 = vadd.f32 0.0, %v4405
      %v4407 = vpop.f32.mrb[0].mxu0
      %4408 = vmatprep.mubr.bf16.mxu0 0
      %4409 = vmatmul.mubr.bf16.gmra.mrb[0].mxu0 %v4188
      %v4410 = vpop.f32.mrb[0].mxu0
      %v4411 = vadd.f32 0.0, %v4410
      %v4412 = vpop.f32.mrb[0].mxu0
      %v4413 = vpop.f32.mrb[0].mxu0
      %v4414 = vadd.f32 0.0, %v4413
      %v4415 = vpop.f32.mrb[0].mxu0
      %4416 = vmatprep.mubr.bf16.mxu0 0
      %4417 = vmatmul.mubr.bf16.gmra.mrb[0].mxu0 %v4197
      %v4418 = vpop.f32.mrb[0].mxu0
      %v4419 = vadd.f32 0.0, %v4418
      %v4420 = vpop.f32.mrb[0].mxu0
      %v4421 = vpop.f32.mrb[0].mxu0
      %v4422 = vadd.f32 0.0, %v4421
      %v4423 = vpop.f32.mrb[0].mxu0
      %4424 = vmatprep.mubr.bf16.mxu0 0
      %4425 = vmatmul.mubr.bf16.gmra.mrb[0].mxu0 %v4206
      %v4426 = vpop.f32.mrb[0].mxu0
      %v4427 = vadd.f32 0.0, %v4426
      %v4428 = vpop.f32.mrb[0].mxu0
      %v4429 = vpop.f32.mrb[0].mxu0
      %v4430 = vadd.f32 0.0, %v4429
      %v4431 = vpop.f32.mrb[0].mxu0
      %4432 = vmatprep.mubr.bf16.mxu0 0
      %4433 = vmatmul.mubr.bf16.gmra.mrb[0].mxu0 %v4215
      %v4434 = vpop.f32.mrb[0].mxu0
      %v4435 = vadd.f32 0.0, %v4434
      %v4436 = vpop.f32.mrb[0].mxu0
      %v4437 = vpop.f32.mrb[0].mxu0
      %v4438 = vadd.f32 0.0, %v4437
      %v4439 = vpop.f32.mrb[0].mxu0
      %4440 = vdwg.mxu0
      %v4441 = vadd.f32 %v3898, %v4315
      %v4442 = vadd.f32 %v3899, %v4318
      %v4443 = vadd.f32 %v3900, %v4323
      %v4444 = vadd.f32 %v3901, %v4326
      %v4445 = vadd.f32 %v3902, %v4331
      %v4446 = vadd.f32 %v3903, %v4334
      %v4447 = vadd.f32 %v3904, %v4339
      %v4448 = vadd.f32 %v3905, %v4342
      %v4449 = vadd.f32 %v3906, %v4347
      %v4450 = vadd.f32 %v3907, %v4350
      %v4451 = vadd.f32 %v3908, %v4355
      %v4452 = vadd.f32 %v3909, %v4358
      %v4453 = vadd.f32 %v3910, %v4363
      %v4454 = vadd.f32 %v3911, %v4366
      %v4455 = vadd.f32 %v3912, %v4371
      %v4456 = vadd.f32 %v3913, %v4374
      %v4457 = vadd.f32 %v3914, %v4379
      %v4458 = vadd.f32 %v3915, %v4382
      %v4459 = vadd.f32 %v3916, %v4387
      %v4460 = vadd.f32 %v3917, %v4390
      %v4461 = vadd.f32 %v3918, %v4395
      %v4462 = vadd.f32 %v3919, %v4398
      %v4463 = vadd.f32 %v3920, %v4403
      %v4464 = vadd.f32 %v3921, %v4406
      %v4465 = vadd.f32 %v3922, %v4411
      %v4466 = vadd.f32 %v3923, %v4414
      %v4467 = vadd.f32 %v3924, %v4419
      %v4468 = vadd.f32 %v3925, %v4422
      %v4469 = vadd.f32 %v3926, %v4427
      %v4470 = vadd.f32 %v3927, %v4430
      %v4471 = vadd.f32 %v3928, %v4435
      %v4472 = vadd.f32 %v3929, %v4438
      %4473 = vst [vmem:[#allocation4] sm:$0xff] %v4441
      %4474 = vst [vmem:[#allocation4 + $0x8] sm:$0xff] %v4442
      %4475 = vst [vmem:[#allocation4 + $0x10] sm:$0xff] %v4443
      %4476 = vst [vmem:[#allocation4 + $0x18] sm:$0xff] %v4444
      %4477 = vst [vmem:[#allocation4 + $0x20] sm:$0xff] %v4445
      %4478 = vst [vmem:[#allocation4 + $0x28] sm:$0xff] %v4446
      %4479 = vst [vmem:[#allocation4 + $0x30] sm:$0xff] %v4447
      %4480 = vst [vmem:[#allocation4 + $0x38] sm:$0xff] %v4448
      %4481 = vst [vmem:[#allocation4 + $0x40] sm:$0xff] %v4449
      %4482 = vst [vmem:[#allocation4 + $0x48] sm:$0xff] %v4450
      %4483 = vst [vmem:[#allocation4 + $0x50] sm:$0xff] %v4451
      %4484 = vst [vmem:[#allocation4 + $0x58] sm:$0xff] %v4452
      %4485 = vst [vmem:[#allocation4 + $0x60] sm:$0xff] %v4453
      %4486 = vst [vmem:[#allocation4 + $0x68] sm:$0xff] %v4454
      %4487 = vst [vmem:[#allocation4 + $0x70] sm:$0xff] %v4455
      %4488 = vst [vmem:[#allocation4 + $0x78] sm:$0xff] %v4456
      %4489 = vst [vmem:[#allocation4 + $0x80] sm:$0xff] %v4457
      %4490 = vst [vmem:[#allocation4 + $0x88] sm:$0xff] %v4458
      %4491 = vst [vmem:[#allocation4 + $0x90] sm:$0xff] %v4459
      %4492 = vst [vmem:[#allocation4 + $0x98] sm:$0xff] %v4460
      %4493 = vst [vmem:[#allocation4 + $0xa0] sm:$0xff] %v4461
      %4494 = vst [vmem:[#allocation4 + $0xa8] sm:$0xff] %v4462
      %4495 = vst [vmem:[#allocation4 + $0xb0] sm:$0xff] %v4463
      %4496 = vst [vmem:[#allocation4 + $0xb8] sm:$0xff] %v4464
      %4497 = vst [vmem:[#allocation4 + $0xc0] sm:$0xff] %v4465
      %4498 = vst [vmem:[#allocation4 + $0xc8] sm:$0xff] %v4466
      %4499 = vst [vmem:[#allocation4 + $0xd0] sm:$0xff] %v4467
      %4500 = vst [vmem:[#allocation4 + $0xd8] sm:$0xff] %v4468
      %4501 = vst [vmem:[#allocation4 + $0xe0] sm:$0xff] %v4469
      %4502 = vst [vmem:[#allocation4 + $0xe8] sm:$0xff] %v4470
      %4503 = vst [vmem:[#allocation4 + $0xf0] sm:$0xff] %v4471
      %4504 = vst [vmem:[#allocation4 + $0xf8] sm:$0xff] %v4472
      %v4505 = vld [vmem:[#allocation4] sm:$0xff]
      %v4506 = vld [vmem:[#allocation4 + $0x8] sm:$0xff]
      %v4507 = vld [vmem:[#allocation4 + $0x10] sm:$0xff]
      %v4508 = vld [vmem:[#allocation4 + $0x18] sm:$0xff]
      %v4509 = vld [vmem:[#allocation4 + $0x20] sm:$0xff]
      %v4510 = vld [vmem:[#allocation4 + $0x28] sm:$0xff]
      %v4511 = vld [vmem:[#allocation4 + $0x30] sm:$0xff]
      %v4512 = vld [vmem:[#allocation4 + $0x38] sm:$0xff]
      %v4513 = vld [vmem:[#allocation4 + $0x40] sm:$0xff]
      %v4514 = vld [vmem:[#allocation4 + $0x48] sm:$0xff]
      %v4515 = vld [vmem:[#allocation4 + $0x50] sm:$0xff]
      %v4516 = vld [vmem:[#allocation4 + $0x58] sm:$0xff]
      %v4517 = vld [vmem:[#allocation4 + $0x60] sm:$0xff]
      %v4518 = vld [vmem:[#allocation4 + $0x68] sm:$0xff]
      %v4519 = vld [vmem:[#allocation4 + $0x70] sm:$0xff]
      %v4520 = vld [vmem:[#allocation4 + $0x78] sm:$0xff]
      %v4521 = vld [vmem:[#allocation4 + $0x80] sm:$0xff]
      %v4522 = vld [vmem:[#allocation4 + $0x88] sm:$0xff]
      %v4523 = vld [vmem:[#allocation4 + $0x90] sm:$0xff]
      %v4524 = vld [vmem:[#allocation4 + $0x98] sm:$0xff]
      %v4525 = vld [vmem:[#allocation4 + $0xa0] sm:$0xff]
      %v4526 = vld [vmem:[#allocation4 + $0xa8] sm:$0xff]
      %v4527 = vld [vmem:[#allocation4 + $0xb0] sm:$0xff]
      %v4528 = vld [vmem:[#allocation4 + $0xb8] sm:$0xff]
      %v4529 = vld [vmem:[#allocation4 + $0xc0] sm:$0xff]
      %v4530 = vld [vmem:[#allocation4 + $0xc8] sm:$0xff]
      %v4531 = vld [vmem:[#allocation4 + $0xd0] sm:$0xff]
      %v4532 = vld [vmem:[#allocation4 + $0xd8] sm:$0xff]
      %v4533 = vld [vmem:[#allocation4 + $0xe0] sm:$0xff]
      %v4534 = vld [vmem:[#allocation4 + $0xe8] sm:$0xff]
      %v4535 = vld [vmem:[#allocation4 + $0xf0] sm:$0xff]
      %v4536 = vld [vmem:[#allocation4 + $0xf8] sm:$0xff]
      %v4537 = vld [vmem:[%s363 + $0x10] sm:$0x8]
      %v4538 = vld [vmem:[%s363 + $0x14] sm:$0xf]
      %v4539 = vld [vmem:[%s363 + $0x18] sm:$0xf]
      %v4540 = vld [vmem:[%s363 + $0x1c] sm:$0xf]
      %v4541 = vld [vmem:[%s363 + $0x20] sm:$0xf]
      %v4542 = vld [vmem:[%s363 + $0x24] sm:$0xf]
      %v4543 = vld [vmem:[%s363 + $0x28] sm:$0xf]
      %v4544 = vld [vmem:[%s363 + $0x2c] sm:$0xf]
      %v4545 = vld [vmem:[%s363 + $0x30] sm:$0xf]
      %v4546 = vld [vmem:[%s363 + $0x34] sm:$0xf]
      %v4547 = vld [vmem:[%s363 + $0x38] sm:$0xf]
      %v4548 = vld [vmem:[%s363 + $0x3c] sm:$0xf]
      %v4549 = vld [vmem:[%s363 + $0x40] sm:$0xf]
      %v4550 = vld [vmem:[%s363 + $0x44] sm:$0xf]
      %v4551 = vld [vmem:[%s363 + $0x48] sm:$0xf]
      %v4552 = vld [vmem:[%s363 + $0x4c] sm:$0xf]
      %v4553 = vld [vmem:[%s363 + $0x50] sm:$0xf]
      %v4554 = vld [vmem:[%s363 + $0x54] sm:$0xf]
      %v4555 = vld [vmem:[%s363 + $0x58] sm:$0xf]
      %v4556 = vld [vmem:[%s363 + $0x5c] sm:$0xf]
      %v4557 = vld [vmem:[%s363 + $0x60] sm:$0xf]
      %v4558 = vld [vmem:[%s363 + $0x64] sm:$0xf]
      %v4559 = vld [vmem:[%s363 + $0x68] sm:$0xf]
      %v4560 = vld [vmem:[%s363 + $0x6c] sm:$0xf]
      %v4561 = vld [vmem:[%s363 + $0x70] sm:$0xf]
      %v4562 = vld [vmem:[%s363 + $0x74] sm:$0xf]
      %v4563 = vld [vmem:[%s363 + $0x78] sm:$0xf]
      %v4564 = vld [vmem:[%s363 + $0x7c] sm:$0xf]
      %v4565 = vld [vmem:[%s363 + $0x80] sm:$0xf]
      %v4566 = vld [vmem:[%s363 + $0x84] sm:$0xf]
      %v4567 = vld [vmem:[%s363 + $0x88] sm:$0xf]
      %v4568 = vld [vmem:[%s363 + $0x8c] sm:$0xf]
      %v4569 = vld [vmem:[%s363 + $0x90] sm:$0x7]
      %s4570 = scalar_lea.vmem %s1, 512
      %v4571 = vld [vmem:[%s4570] sm:$0xf]
      %v4572 = vld [vmem:[%s4570 + $0x4] sm:$0xf]
      %v4573 = vld [vmem:[%s4570 + $0x8] sm:$0xf]
      %v4574 = vld [vmem:[%s4570 + $0xc] sm:$0xf]
      %v4575 = vld [vmem:[%s4570 + $0x10] sm:$0xf]
      %v4576 = vld [vmem:[%s4570 + $0x14] sm:$0xf]
      %v4577 = vld [vmem:[%s4570 + $0x18] sm:$0xf]
      %v4578 = vld [vmem:[%s4570 + $0x1c] sm:$0xf]
      %v4579 = vld [vmem:[%s4570 + $0x20] sm:$0xf]
      %v4580 = vld [vmem:[%s4570 + $0x24] sm:$0xf]
      %v4581 = vld [vmem:[%s4570 + $0x28] sm:$0xf]
      %v4582 = vld [vmem:[%s4570 + $0x2c] sm:$0xf]
      %v4583 = vld [vmem:[%s4570 + $0x30] sm:$0xf]
      %v4584 = vld [vmem:[%s4570 + $0x34] sm:$0xf]
      %v4585 = vld [vmem:[%s4570 + $0x38] sm:$0xf]
      %v4586 = vld [vmem:[%s4570 + $0x3c] sm:$0xf]
      %v4620 = vunpack.c.l.b16 %v4537
      %v4621 = vunpack.c.l.b16 %v4538
      %v4622 = vunpack.c.l.b16 %v4539
      %v4623 = vunpack.c.l.b16 %v4540
      %v4624 = vunpack.c.l.b16 %v4541
      %v4625 = vunpack.c.l.b16 %v4542
      %v4626 = vunpack.c.l.b16 %v4543
      %v4627 = vunpack.c.l.b16 %v4544
      %v4628 = vunpack.c.l.b16 %v4545
      %v4629 = vunpack.c.l.b16 %v4546
      %v4630 = vunpack.c.l.b16 %v4547
      %v4631 = vunpack.c.l.b16 %v4548
      %v4632 = vunpack.c.l.b16 %v4549
      %v4633 = vunpack.c.l.b16 %v4550
      %v4634 = vunpack.c.l.b16 %v4551
      %v4635 = vunpack.c.l.b16 %v4552
      %v4636 = vunpack.c.l.b16 %v4553
      %v4637 = vunpack.c.l.b16 %v4554
      %v4638 = vunpack.c.l.b16 %v4555
      %v4639 = vunpack.c.l.b16 %v4556
      %v4640 = vunpack.c.l.b16 %v4557
      %v4641 = vunpack.c.l.b16 %v4558
      %v4642 = vunpack.c.l.b16 %v4559
      %v4643 = vunpack.c.l.b16 %v4560
      %v4644 = vunpack.c.l.b16 %v4561
      %v4645 = vunpack.c.l.b16 %v4562
      %v4646 = vunpack.c.l.b16 %v4563
      %v4647 = vunpack.c.l.b16 %v4564
      %v4648 = vunpack.c.l.b16 %v4565
      %v4649 = vunpack.c.l.b16 %v4566
      %v4650 = vunpack.c.l.b16 %v4567
      %v4651 = vunpack.c.l.b16 %v4568
      %v4652 = vunpack.c.l.b16 %v4569
      %v4653 = vpack.c.b16 %v4621, %v4620
      %v4654 = vpack.c.b16 %v4623, %v4622
      %v4655 = vpack.c.b16 %v4625, %v4624
      %v4656 = vpack.c.b16 %v4627, %v4626
      %v4657 = vpack.c.b16 %v4629, %v4628
      %v4658 = vpack.c.b16 %v4631, %v4630
      %v4659 = vpack.c.b16 %v4633, %v4632
      %v4660 = vpack.c.b16 %v4635, %v4634
      %v4661 = vpack.c.b16 %v4637, %v4636
      %v4662 = vpack.c.b16 %v4639, %v4638
      %v4663 = vpack.c.b16 %v4641, %v4640
      %v4664 = vpack.c.b16 %v4643, %v4642
      %v4665 = vpack.c.b16 %v4645, %v4644
      %v4666 = vpack.c.b16 %v4647, %v4646
      %v4667 = vpack.c.b16 %v4649, %v4648
      %v4668 = vpack.c.b16 %v4651, %v4650
      %v4669 = vpack.c.b16 %v4652, %v4652
      %vm4670 = vcmask 1044480
      %v4671 = vrot.slane %v4653, 3
      %v4672 = vrot.slane %v4654, 3
      %v4673 = vsel %vm4670, %v4671, %v4672
      %v4674 = vrot.slane %v4655, 3
      %v4675 = vsel %vm4670, %v4672, %v4674
      %v4676 = vrot.slane %v4656, 3
      %v4677 = vsel %vm4670, %v4674, %v4676
      %v4678 = vrot.slane %v4657, 3
      %v4679 = vsel %vm4670, %v4676, %v4678
      %v4680 = vrot.slane %v4658, 3
      %v4681 = vsel %vm4670, %v4678, %v4680
      %v4682 = vrot.slane %v4659, 3
      %v4683 = vsel %vm4670, %v4680, %v4682
      %v4684 = vrot.slane %v4660, 3
      %v4685 = vsel %vm4670, %v4682, %v4684
      %v4686 = vrot.slane %v4661, 3
      %v4687 = vsel %vm4670, %v4684, %v4686
      %v4688 = vrot.slane %v4662, 3
      %v4689 = vsel %vm4670, %v4686, %v4688
      %v4690 = vrot.slane %v4663, 3
      %v4691 = vsel %vm4670, %v4688, %v4690
      %v4692 = vrot.slane %v4664, 3
      %v4693 = vsel %vm4670, %v4690, %v4692
      %v4694 = vrot.slane %v4665, 3
      %v4695 = vsel %vm4670, %v4692, %v4694
      %v4696 = vrot.slane %v4666, 3
      %v4697 = vsel %vm4670, %v4694, %v4696
      %v4698 = vrot.slane %v4667, 3
      %v4699 = vsel %vm4670, %v4696, %v4698
      %v4700 = vrot.slane %v4668, 3
      %v4701 = vsel %vm4670, %v4698, %v4700
      %v4702 = vrot.slane %v4669, 3
      %v4703 = vsel %vm4670, %v4700, %v4702
      %v4736 = vunpack.c.l.b16 %v4571
      %v4737 = vunpack.c.l.b16 %v4572
      %v4738 = vunpack.c.l.b16 %v4573
      %v4739 = vunpack.c.l.b16 %v4574
      %v4740 = vunpack.c.l.b16 %v4575
      %v4741 = vunpack.c.l.b16 %v4576
      %v4742 = vunpack.c.l.b16 %v4577
      %v4743 = vunpack.c.l.b16 %v4578
      %v4744 = vunpack.c.l.b16 %v4579
      %v4745 = vunpack.c.l.b16 %v4580
      %v4746 = vunpack.c.l.b16 %v4581
      %v4747 = vunpack.c.l.b16 %v4582
      %v4748 = vunpack.c.l.b16 %v4583
      %v4749 = vunpack.c.l.b16 %v4584
      %v4750 = vunpack.c.l.b16 %v4585
      %v4751 = vunpack.c.l.b16 %v4586
      %v4752 = vpack.c.b16 %v4737, %v4736
      %v4753 = vpack.c.b16 %v4739, %v4738
      %v4754 = vpack.c.b16 %v4741, %v4740
      %v4755 = vpack.c.b16 %v4743, %v4742
      %v4756 = vpack.c.b16 %v4745, %v4744
      %v4757 = vpack.c.b16 %v4747, %v4746
      %v4758 = vpack.c.b16 %v4749, %v4748
      %v4759 = vpack.c.b16 %v4751, %v4750
      %4768 = vmatprep.subr.bf16.mxu0 0
      %4769 = vmatpush1.bf16.msra.mxu0 %v4752
      %4770 = vmatprep.subr.bf16.mxu0 0
      %4771 = vmatpush1.bf16.msra.mxu0 %v4753
      %4772 = vmatprep.subr.bf16.mxu0 0
      %4773 = vmatpush1.bf16.msra.mxu0 %v4754
      %4774 = vmatprep.subr.bf16.mxu0 0
      %4775 = vmatpush1.bf16.msra.mxu0 %v4755
      %4776 = vmatprep.subr.bf16.mxu0 0
      %4777 = vmatpush1.bf16.msra.mxu0 %v4756
      %4778 = vmatprep.subr.bf16.mxu0 0
      %4779 = vmatpush1.bf16.msra.mxu0 %v4757
      %4780 = vmatprep.subr.bf16.mxu0 0
      %4781 = vmatpush1.bf16.msra.mxu0 %v4758
      %4782 = vmatprep.subr.bf16.mxu0 0
      %4783 = vmatpush1.bf16.msra.mxu0 %v4759
      %4784 = vmatprep.subr.bf16.mxu0 0
      %4785 = vmatpush1.bf16.msra.mxu0 0
      %4786 = vmatprep.subr.bf16.mxu0 0
      %4787 = vmatpush1.bf16.msra.mxu0 0
      %4788 = vmatprep.subr.bf16.mxu0 0
      %4789 = vmatpush1.bf16.msra.mxu0 0
      %4790 = vmatprep.subr.bf16.mxu0 0
      %4791 = vmatpush1.bf16.msra.mxu0 0
      %4792 = vmatprep.subr.bf16.mxu0 0
      %4793 = vmatpush1.bf16.msra.mxu0 0
      %4794 = vmatprep.subr.bf16.mxu0 0
      %4795 = vmatpush1.bf16.msra.mxu0 0
      %4796 = vmatprep.subr.bf16.mxu0 0
      %4797 = vmatpush1.bf16.msra.mxu0 0
      %4798 = vmatprep.subr.bf16.mxu0 0
      %4799 = vmatpush1.bf16.msra.mxu0 0
      %4800 = vmatprep.mubr.bf16.mxu0 0
      %4801 = vmatmul.mubr.bf16.gmra.mrb[0].mxu0 %v4673
      %v4802 = vpop.f32.mrb[0].mxu0
      %v4803 = vadd.f32 0.0, %v4802
      %v4804 = vpop.f32.mrb[0].mxu0
      %v4805 = vpop.f32.mrb[0].mxu0
      %v4806 = vadd.f32 0.0, %v4805
      %v4807 = vpop.f32.mrb[0].mxu0
      %4808 = vmatprep.mubr.bf16.mxu0 0
      %4809 = vmatmul.mubr.bf16.gmra.mrb[0].mxu0 %v4675
      %v4810 = vpop.f32.mrb[0].mxu0
      %v4811 = vadd.f32 0.0, %v4810
      %v4812 = vpop.f32.mrb[0].mxu0
      %v4813 = vpop.f32.mrb[0].mxu0
      %v4814 = vadd.f32 0.0, %v4813
      %v4815 = vpop.f32.mrb[0].mxu0
      %4816 = vmatprep.mubr.bf16.mxu0 0
      %4817 = vmatmul.mubr.bf16.gmra.mrb[0].mxu0 %v4677
      %v4818 = vpop.f32.mrb[0].mxu0
      %v4819 = vadd.f32 0.0, %v4818
      %v4820 = vpop.f32.mrb[0].mxu0
      %v4821 = vpop.f32.mrb[0].mxu0
      %v4822 = vadd.f32 0.0, %v4821
      %v4823 = vpop.f32.mrb[0].mxu0
      %4824 = vmatprep.mubr.bf16.mxu0 0
      %4825 = vmatmul.mubr.bf16.gmra.mrb[0].mxu0 %v4679
      %v4826 = vpop.f32.mrb[0].mxu0
      %v4827 = vadd.f32 0.0, %v4826
      %v4828 = vpop.f32.mrb[0].mxu0
      %v4829 = vpop.f32.mrb[0].mxu0
      %v4830 = vadd.f32 0.0, %v4829
      %v4831 = vpop.f32.mrb[0].mxu0
      %4832 = vmatprep.mubr.bf16.mxu0 0
      %4833 = vmatmul.mubr.bf16.gmra.mrb[0].mxu0 %v4681
      %v4834 = vpop.f32.mrb[0].mxu0
      %v4835 = vadd.f32 0.0, %v4834
      %v4836 = vpop.f32.mrb[0].mxu0
      %v4837 = vpop.f32.mrb[0].mxu0
      %v4838 = vadd.f32 0.0, %v4837
      %v4839 = vpop.f32.mrb[0].mxu0
      %4840 = vmatprep.mubr.bf16.mxu0 0
      %4841 = vmatmul.mubr.bf16.gmra.mrb[0].mxu0 %v4683
      %v4842 = vpop.f32.mrb[0].mxu0
      %v4843 = vadd.f32 0.0, %v4842
      %v4844 = vpop.f32.mrb[0].mxu0
      %v4845 = vpop.f32.mrb[0].mxu0
      %v4846 = vadd.f32 0.0, %v4845
      %v4847 = vpop.f32.mrb[0].mxu0
      %4848 = vmatprep.mubr.bf16.mxu0 0
      %4849 = vmatmul.mubr.bf16.gmra.mrb[0].mxu0 %v4685
      %v4850 = vpop.f32.mrb[0].mxu0
      %v4851 = vadd.f32 0.0, %v4850
      %v4852 = vpop.f32.mrb[0].mxu0
      %v4853 = vpop.f32.mrb[0].mxu0
      %v4854 = vadd.f32 0.0, %v4853
      %v4855 = vpop.f32.mrb[0].mxu0
      %4856 = vmatprep.mubr.bf16.mxu0 0
      %4857 = vmatmul.mubr.bf16.gmra.mrb[0].mxu0 %v4687
      %v4858 = vpop.f32.mrb[0].mxu0
      %v4859 = vadd.f32 0.0, %v4858
      %v4860 = vpop.f32.mrb[0].mxu0
      %v4861 = vpop.f32.mrb[0].mxu0
      %v4862 = vadd.f32 0.0, %v4861
      %v4863 = vpop.f32.mrb[0].mxu0
      %4864 = vmatprep.mubr.bf16.mxu0 0
      %4865 = vmatmul.mubr.bf16.gmra.mrb[0].mxu0 %v4689
      %v4866 = vpop.f32.mrb[0].mxu0
      %v4867 = vadd.f32 0.0, %v4866
      %v4868 = vpop.f32.mrb[0].mxu0
      %v4869 = vpop.f32.mrb[0].mxu0
      %v4870 = vadd.f32 0.0, %v4869
      %v4871 = vpop.f32.mrb[0].mxu0
      %4872 = vmatprep.mubr.bf16.mxu0 0
      %4873 = vmatmul.mubr.bf16.gmra.mrb[0].mxu0 %v4691
      %v4874 = vpop.f32.mrb[0].mxu0
      %v4875 = vadd.f32 0.0, %v4874
      %v4876 = vpop.f32.mrb[0].mxu0
      %v4877 = vpop.f32.mrb[0].mxu0
      %v4878 = vadd.f32 0.0, %v4877
      %v4879 = vpop.f32.mrb[0].mxu0
      %4880 = vmatprep.mubr.bf16.mxu0 0
      %4881 = vmatmul.mubr.bf16.gmra.mrb[0].mxu0 %v4693
      %v4882 = vpop.f32.mrb[0].mxu0
      %v4883 = vadd.f32 0.0, %v4882
      %v4884 = vpop.f32.mrb[0].mxu0
      %v4885 = vpop.f32.mrb[0].mxu0
      %v4886 = vadd.f32 0.0, %v4885
      %v4887 = vpop.f32.mrb[0].mxu0
      %4888 = vmatprep.mubr.bf16.mxu0 0
      %4889 = vmatmul.mubr.bf16.gmra.mrb[0].mxu0 %v4695
      %v4890 = vpop.f32.mrb[0].mxu0
      %v4891 = vadd.f32 0.0, %v4890
      %v4892 = vpop.f32.mrb[0].mxu0
      %v4893 = vpop.f32.mrb[0].mxu0
      %v4894 = vadd.f32 0.0, %v4893
      %v4895 = vpop.f32.mrb[0].mxu0
      %4896 = vmatprep.mubr.bf16.mxu0 0
      %4897 = vmatmul.mubr.bf16.gmra.mrb[0].mxu0 %v4697
      %v4898 = vpop.f32.mrb[0].mxu0
      %v4899 = vadd.f32 0.0, %v4898
      %v4900 = vpop.f32.mrb[0].mxu0
      %v4901 = vpop.f32.mrb[0].mxu0
      %v4902 = vadd.f32 0.0, %v4901
      %v4903 = vpop.f32.mrb[0].mxu0
      %4904 = vmatprep.mubr.bf16.mxu0 0
      %4905 = vmatmul.mubr.bf16.gmra.mrb[0].mxu0 %v4699
      %v4906 = vpop.f32.mrb[0].mxu0
      %v4907 = vadd.f32 0.0, %v4906
      %v4908 = vpop.f32.mrb[0].mxu0
      %v4909 = vpop.f32.mrb[0].mxu0
      %v4910 = vadd.f32 0.0, %v4909
      %v4911 = vpop.f32.mrb[0].mxu0
      %4912 = vmatprep.mubr.bf16.mxu0 0
      %4913 = vmatmul.mubr.bf16.gmra.mrb[0].mxu0 %v4701
      %v4914 = vpop.f32.mrb[0].mxu0
      %v4915 = vadd.f32 0.0, %v4914
      %v4916 = vpop.f32.mrb[0].mxu0
      %v4917 = vpop.f32.mrb[0].mxu0
      %v4918 = vadd.f32 0.0, %v4917
      %v4919 = vpop.f32.mrb[0].mxu0
      %4920 = vmatprep.mubr.bf16.mxu0 0
      %4921 = vmatmul.mubr.bf16.gmra.mrb[0].mxu0 %v4703
      %v4922 = vpop.f32.mrb[0].mxu0
      %v4923 = vadd.f32 0.0, %v4922
      %v4924 = vpop.f32.mrb[0].mxu0
      %v4925 = vpop.f32.mrb[0].mxu0
      %v4926 = vadd.f32 0.0, %v4925
      %v4927 = vpop.f32.mrb[0].mxu0
      %4928 = vdwg.mxu0
      %v4929 = vadd.f32 %v4505, %v4803
      %v4930 = vadd.f32 %v4506, %v4806
      %v4931 = vadd.f32 %v4507, %v4811
      %v4932 = vadd.f32 %v4508, %v4814
      %v4933 = vadd.f32 %v4509, %v4819
      %v4934 = vadd.f32 %v4510, %v4822
      %v4935 = vadd.f32 %v4511, %v4827
      %v4936 = vadd.f32 %v4512, %v4830
      %v4937 = vadd.f32 %v4513, %v4835
      %v4938 = vadd.f32 %v4514, %v4838
      %v4939 = vadd.f32 %v4515, %v4843
      %v4940 = vadd.f32 %v4516, %v4846
      %v4941 = vadd.f32 %v4517, %v4851
      %v4942 = vadd.f32 %v4518, %v4854
      %v4943 = vadd.f32 %v4519, %v4859
      %v4944 = vadd.f32 %v4520, %v4862
      %v4945 = vadd.f32 %v4521, %v4867
      %v4946 = vadd.f32 %v4522, %v4870
      %v4947 = vadd.f32 %v4523, %v4875
      %v4948 = vadd.f32 %v4524, %v4878
      %v4949 = vadd.f32 %v4525, %v4883
      %v4950 = vadd.f32 %v4526, %v4886
      %v4951 = vadd.f32 %v4527, %v4891
      %v4952 = vadd.f32 %v4528, %v4894
      %v4953 = vadd.f32 %v4529, %v4899
      %v4954 = vadd.f32 %v4530, %v4902
      %v4955 = vadd.f32 %v4531, %v4907
      %v4956 = vadd.f32 %v4532, %v4910
      %v4957 = vadd.f32 %v4533, %v4915
      %v4958 = vadd.f32 %v4534, %v4918
      %v4959 = vadd.f32 %v4535, %v4923
      %v4960 = vadd.f32 %v4536, %v4926
      %4961 = vst [vmem:[#allocation4] sm:$0xff] %v4929
      %4962 = vst [vmem:[#allocation4 + $0x8] sm:$0xff] %v4930
      %4963 = vst [vmem:[#allocation4 + $0x10] sm:$0xff] %v4931
      %4964 = vst [vmem:[#allocation4 + $0x18] sm:$0xff] %v4932
      %4965 = vst [vmem:[#allocation4 + $0x20] sm:$0xff] %v4933
      %4966 = vst [vmem:[#allocation4 + $0x28] sm:$0xff] %v4934
      %4967 = vst [vmem:[#allocation4 + $0x30] sm:$0xff] %v4935
      %4968 = vst [vmem:[#allocation4 + $0x38] sm:$0xff] %v4936
      %4969 = vst [vmem:[#allocation4 + $0x40] sm:$0xff] %v4937
      %4970 = vst [vmem:[#allocation4 + $0x48] sm:$0xff] %v4938
      %4971 = vst [vmem:[#allocation4 + $0x50] sm:$0xff] %v4939
      %4972 = vst [vmem:[#allocation4 + $0x58] sm:$0xff] %v4940
      %4973 = vst [vmem:[#allocation4 + $0x60] sm:$0xff] %v4941
      %4974 = vst [vmem:[#allocation4 + $0x68] sm:$0xff] %v4942
      %4975 = vst [vmem:[#allocation4 + $0x70] sm:$0xff] %v4943
      %4976 = vst [vmem:[#allocation4 + $0x78] sm:$0xff] %v4944
      %4977 = vst [vmem:[#allocation4 + $0x80] sm:$0xff] %v4945
      %4978 = vst [vmem:[#allocation4 + $0x88] sm:$0xff] %v4946
      %4979 = vst [vmem:[#allocation4 + $0x90] sm:$0xff] %v4947
      %4980 = vst [vmem:[#allocation4 + $0x98] sm:$0xff] %v4948
      %4981 = vst [vmem:[#allocation4 + $0xa0] sm:$0xff] %v4949
      %4982 = vst [vmem:[#allocation4 + $0xa8] sm:$0xff] %v4950
      %4983 = vst [vmem:[#allocation4 + $0xb0] sm:$0xff] %v4951
      %4984 = vst [vmem:[#allocation4 + $0xb8] sm:$0xff] %v4952
      %4985 = vst [vmem:[#allocation4 + $0xc0] sm:$0xff] %v4953
      %4986 = vst [vmem:[#allocation4 + $0xc8] sm:$0xff] %v4954
      %4987 = vst [vmem:[#allocation4 + $0xd0] sm:$0xff] %v4955
      %4988 = vst [vmem:[#allocation4 + $0xd8] sm:$0xff] %v4956
      %4989 = vst [vmem:[#allocation4 + $0xe0] sm:$0xff] %v4957
      %4990 = vst [vmem:[#allocation4 + $0xe8] sm:$0xff] %v4958
      %4991 = vst [vmem:[#allocation4 + $0xf0] sm:$0xff] %v4959
      %4992 = vst [vmem:[#allocation4 + $0xf8] sm:$0xff] %v4960
      %v4993 = vld [vmem:[#allocation4] sm:$0xff]
      %v4994 = vld [vmem:[#allocation4 + $0x8] sm:$0xff]
      %v4995 = vld [vmem:[#allocation4 + $0x10] sm:$0xff]
      %v4996 = vld [vmem:[#allocation4 + $0x18] sm:$0xff]
      %v4997 = vld [vmem:[#allocation4 + $0x20] sm:$0xff]
      %v4998 = vld [vmem:[#allocation4 + $0x28] sm:$0xff]
      %v4999 = vld [vmem:[#allocation4 + $0x30] sm:$0xff]
      %v5000 = vld [vmem:[#allocation4 + $0x38] sm:$0xff]
      %v5001 = vld [vmem:[#allocation4 + $0x40] sm:$0xff]
      %v5002 = vld [vmem:[#allocation4 + $0x48] sm:$0xff]
      %v5003 = vld [vmem:[#allocation4 + $0x50] sm:$0xff]
      %v5004 = vld [vmem:[#allocation4 + $0x58] sm:$0xff]
      %v5005 = vld [vmem:[#allocation4 + $0x60] sm:$0xff]
      %v5006 = vld [vmem:[#allocation4 + $0x68] sm:$0xff]
      %v5007 = vld [vmem:[#allocation4 + $0x70] sm:$0xff]
      %v5008 = vld [vmem:[#allocation4 + $0x78] sm:$0xff]
      %v5009 = vld [vmem:[#allocation4 + $0x80] sm:$0xff]
      %v5010 = vld [vmem:[#allocation4 + $0x88] sm:$0xff]
      %v5011 = vld [vmem:[#allocation4 + $0x90] sm:$0xff]
      %v5012 = vld [vmem:[#allocation4 + $0x98] sm:$0xff]
      %v5013 = vld [vmem:[#allocation4 + $0xa0] sm:$0xff]
      %v5014 = vld [vmem:[#allocation4 + $0xa8] sm:$0xff]
      %v5015 = vld [vmem:[#allocation4 + $0xb0] sm:$0xff]
      %v5016 = vld [vmem:[#allocation4 + $0xb8] sm:$0xff]
      %v5017 = vld [vmem:[#allocation4 + $0xc0] sm:$0xff]
      %v5018 = vld [vmem:[#allocation4 + $0xc8] sm:$0xff]
      %v5019 = vld [vmem:[#allocation4 + $0xd0] sm:$0xff]
      %v5020 = vld [vmem:[#allocation4 + $0xd8] sm:$0xff]
      %v5021 = vld [vmem:[#allocation4 + $0xe0] sm:$0xff]
      %v5022 = vld [vmem:[#allocation4 + $0xe8] sm:$0xff]
      %v5023 = vld [vmem:[#allocation4 + $0xf0] sm:$0xff]
      %v5024 = vld [vmem:[#allocation4 + $0xf8] sm:$0xff]
      %v5025 = vld [vmem:[%s2] sm:$0x1]
      %v5027 = vlaneseq
      %v5028 = vshrl.u32 %v5027, 7
      %v5029 = vsub.s32 0, %v5028
      %v5030 = vrot.slane %v5025, %v5029
      %v5032 = vmul.f32 %v4993, %v5030
      %v5033 = vmul.f32 %v4994, %v5030
      %v5034 = vmul.f32 %v4995, %v5030
      %v5035 = vmul.f32 %v4996, %v5030
      %v5036 = vmul.f32 %v4997, %v5030
      %v5037 = vmul.f32 %v4998, %v5030
      %v5038 = vmul.f32 %v4999, %v5030
      %v5039 = vmul.f32 %v5000, %v5030
      %v5040 = vmul.f32 %v5001, %v5030
      %v5041 = vmul.f32 %v5002, %v5030
      %v5042 = vmul.f32 %v5003, %v5030
      %v5043 = vmul.f32 %v5004, %v5030
      %v5044 = vmul.f32 %v5005, %v5030
      %v5045 = vmul.f32 %v5006, %v5030
      %v5046 = vmul.f32 %v5007, %v5030
      %v5047 = vmul.f32 %v5008, %v5030
      %v5048 = vmul.f32 %v5009, %v5030
      %v5049 = vmul.f32 %v5010, %v5030
      %v5050 = vmul.f32 %v5011, %v5030
      %v5051 = vmul.f32 %v5012, %v5030
      %v5052 = vmul.f32 %v5013, %v5030
      %v5053 = vmul.f32 %v5014, %v5030
      %v5054 = vmul.f32 %v5015, %v5030
      %v5055 = vmul.f32 %v5016, %v5030
      %v5056 = vmul.f32 %v5017, %v5030
      %v5057 = vmul.f32 %v5018, %v5030
      %v5058 = vmul.f32 %v5019, %v5030
      %v5059 = vmul.f32 %v5020, %v5030
      %v5060 = vmul.f32 %v5021, %v5030
      %v5061 = vmul.f32 %v5022, %v5030
      %v5062 = vmul.f32 %v5023, %v5030
      %v5063 = vmul.f32 %v5024, %v5030
      %v5064 = vld [vmem:[%s3] sm:$0x1]
      %v5066 = vlaneseq
      %v5067 = vshrl.u32 %v5066, 7
      %v5068 = vsub.s32 0, %v5067
      %v5069 = vrot.slane %v5064, %v5068
      %v5071 = vadd.f32 %v5032, %v5069
      %v5072 = vadd.f32 %v5033, %v5069
      %v5073 = vadd.f32 %v5034, %v5069
      %v5074 = vadd.f32 %v5035, %v5069
      %v5075 = vadd.f32 %v5036, %v5069
      %v5076 = vadd.f32 %v5037, %v5069
      %v5077 = vadd.f32 %v5038, %v5069
      %v5078 = vadd.f32 %v5039, %v5069
      %v5079 = vadd.f32 %v5040, %v5069
      %v5080 = vadd.f32 %v5041, %v5069
      %v5081 = vadd.f32 %v5042, %v5069
      %v5082 = vadd.f32 %v5043, %v5069
      %v5083 = vadd.f32 %v5044, %v5069
      %v5084 = vadd.f32 %v5045, %v5069
      %v5085 = vadd.f32 %v5046, %v5069
      %v5086 = vadd.f32 %v5047, %v5069
      %v5087 = vadd.f32 %v5048, %v5069
      %v5088 = vadd.f32 %v5049, %v5069
      %v5089 = vadd.f32 %v5050, %v5069
      %v5090 = vadd.f32 %v5051, %v5069
      %v5091 = vadd.f32 %v5052, %v5069
      %v5092 = vadd.f32 %v5053, %v5069
      %v5093 = vadd.f32 %v5054, %v5069
      %v5094 = vadd.f32 %v5055, %v5069
      %v5095 = vadd.f32 %v5056, %v5069
      %v5096 = vadd.f32 %v5057, %v5069
      %v5097 = vadd.f32 %v5058, %v5069
      %v5098 = vadd.f32 %v5059, %v5069
      %v5099 = vadd.f32 %v5060, %v5069
      %v5100 = vadd.f32 %v5061, %v5069
      %v5101 = vadd.f32 %v5062, %v5069
      %v5102 = vadd.f32 %v5063, %v5069
      %v5103 = vmax.f32 %v5071, 0.0
      %v5104 = vmax.f32 %v5072, 0.0
      %v5105 = vmax.f32 %v5073, 0.0
      %v5106 = vmax.f32 %v5074, 0.0
      %v5107 = vmax.f32 %v5075, 0.0
      %v5108 = vmax.f32 %v5076, 0.0
      %v5109 = vmax.f32 %v5077, 0.0
      %v5110 = vmax.f32 %v5078, 0.0
      %v5111 = vmax.f32 %v5079, 0.0
      %v5112 = vmax.f32 %v5080, 0.0
      %v5113 = vmax.f32 %v5081, 0.0
      %v5114 = vmax.f32 %v5082, 0.0
      %v5115 = vmax.f32 %v5083, 0.0
      %v5116 = vmax.f32 %v5084, 0.0
      %v5117 = vmax.f32 %v5085, 0.0
      %v5118 = vmax.f32 %v5086, 0.0
      %v5119 = vmax.f32 %v5087, 0.0
      %v5120 = vmax.f32 %v5088, 0.0
      %v5121 = vmax.f32 %v5089, 0.0
      %v5122 = vmax.f32 %v5090, 0.0
      %v5123 = vmax.f32 %v5091, 0.0
      %v5124 = vmax.f32 %v5092, 0.0
      %v5125 = vmax.f32 %v5093, 0.0
      %v5126 = vmax.f32 %v5094, 0.0
      %v5127 = vmax.f32 %v5095, 0.0
      %v5128 = vmax.f32 %v5096, 0.0
      %v5129 = vmax.f32 %v5097, 0.0
      %v5130 = vmax.f32 %v5098, 0.0
      %v5131 = vmax.f32 %v5099, 0.0
      %v5132 = vmax.f32 %v5100, 0.0
      %v5133 = vmax.f32 %v5101, 0.0
      %v5134 = vmax.f32 %v5102, 0.0
      %v5135 = vpack.c.bf16 %v5104, %v5103
      %v5136 = vpack.c.bf16 %v5106, %v5105
      %v5137 = vpack.c.bf16 %v5108, %v5107
      %v5138 = vpack.c.bf16 %v5110, %v5109
      %v5139 = vpack.c.bf16 %v5112, %v5111
      %v5140 = vpack.c.bf16 %v5114, %v5113
      %v5141 = vpack.c.bf16 %v5116, %v5115
      %v5142 = vpack.c.bf16 %v5118, %v5117
      %v5143 = vpack.c.bf16 %v5120, %v5119
      %v5144 = vpack.c.bf16 %v5122, %v5121
      %v5145 = vpack.c.bf16 %v5124, %v5123
      %v5146 = vpack.c.bf16 %v5126, %v5125
      %v5147 = vpack.c.bf16 %v5128, %v5127
      %v5148 = vpack.c.bf16 %v5130, %v5129
      %v5149 = vpack.c.bf16 %v5132, %v5131
      %v5150 = vpack.c.bf16 %v5134, %v5133
      %v5167 = vunpack.c.l.b16 %v5135
      %v5168 = vunpack.c.h.b16 %v5135
      %v5169 = vunpack.c.l.b16 %v5136
      %v5170 = vunpack.c.h.b16 %v5136
      %v5171 = vunpack.c.l.b16 %v5137
      %v5172 = vunpack.c.h.b16 %v5137
      %v5173 = vunpack.c.l.b16 %v5138
      %v5174 = vunpack.c.h.b16 %v5138
      %v5175 = vunpack.c.l.b16 %v5139
      %v5176 = vunpack.c.h.b16 %v5139
      %v5177 = vunpack.c.l.b16 %v5140
      %v5178 = vunpack.c.h.b16 %v5140
      %v5179 = vunpack.c.l.b16 %v5141
      %v5180 = vunpack.c.h.b16 %v5141
      %v5181 = vunpack.c.l.b16 %v5142
      %v5182 = vunpack.c.h.b16 %v5142
      %v5183 = vunpack.c.l.b16 %v5143
      %v5184 = vunpack.c.h.b16 %v5143
      %v5185 = vunpack.c.l.b16 %v5144
      %v5186 = vunpack.c.h.b16 %v5144
      %v5187 = vunpack.c.l.b16 %v5145
      %v5188 = vunpack.c.h.b16 %v5145
      %v5189 = vunpack.c.l.b16 %v5146
      %v5190 = vunpack.c.h.b16 %v5146
      %v5191 = vunpack.c.l.b16 %v5147
      %v5192 = vunpack.c.h.b16 %v5147
      %v5193 = vunpack.c.l.b16 %v5148
      %v5194 = vunpack.c.h.b16 %v5148
      %v5195 = vunpack.c.l.b16 %v5149
      %v5196 = vunpack.c.h.b16 %v5149
      %v5197 = vunpack.c.l.b16 %v5150
      %v5198 = vunpack.c.h.b16 %v5150
      %v5199 = vpack.c.b16 %v5167, %v5167
      %v5200 = vpack.c.b16 %v5168, %v5168
      %v5201 = vpack.c.b16 %v5169, %v5169
      %v5202 = vpack.c.b16 %v5170, %v5170
      %v5203 = vpack.c.b16 %v5171, %v5171
      %v5204 = vpack.c.b16 %v5172, %v5172
      %v5205 = vpack.c.b16 %v5173, %v5173
      %v5206 = vpack.c.b16 %v5174, %v5174
      %v5207 = vpack.c.b16 %v5175, %v5175
      %v5208 = vpack.c.b16 %v5176, %v5176
      %v5209 = vpack.c.b16 %v5177, %v5177
      %v5210 = vpack.c.b16 %v5178, %v5178
      %v5211 = vpack.c.b16 %v5179, %v5179
      %v5212 = vpack.c.b16 %v5180, %v5180
      %v5213 = vpack.c.b16 %v5181, %v5181
      %v5214 = vpack.c.b16 %v5182, %v5182
      %v5215 = vpack.c.b16 %v5183, %v5183
      %v5216 = vpack.c.b16 %v5184, %v5184
      %v5217 = vpack.c.b16 %v5185, %v5185
      %v5218 = vpack.c.b16 %v5186, %v5186
      %v5219 = vpack.c.b16 %v5187, %v5187
      %v5220 = vpack.c.b16 %v5188, %v5188
      %v5221 = vpack.c.b16 %v5189, %v5189
      %v5222 = vpack.c.b16 %v5190, %v5190
      %v5223 = vpack.c.b16 %v5191, %v5191
      %v5224 = vpack.c.b16 %v5192, %v5192
      %v5225 = vpack.c.b16 %v5193, %v5193
      %v5226 = vpack.c.b16 %v5194, %v5194
      %v5227 = vpack.c.b16 %v5195, %v5195
      %v5228 = vpack.c.b16 %v5196, %v5196
      %v5229 = vpack.c.b16 %v5197, %v5197
      %v5230 = vpack.c.b16 %v5198, %v5198
      %5263 = vst [vmem:[%s151] sm:$0xf] %v5199
      %5264 = vst [vmem:[%s151 + $0x4] sm:$0xf] %v5200
      %5265 = vst [vmem:[%s151 + $0x8] sm:$0xf] %v5201
      %5266 = vst [vmem:[%s151 + $0xc] sm:$0xf] %v5202
      %5267 = vst [vmem:[%s151 + $0x10] sm:$0xf] %v5203
      %5268 = vst [vmem:[%s151 + $0x14] sm:$0xf] %v5204
      %5269 = vst [vmem:[%s151 + $0x18] sm:$0xf] %v5205
      %5270 = vst [vmem:[%s151 + $0x1c] sm:$0xf] %v5206
      %5271 = vst [vmem:[%s151 + $0x20] sm:$0xf] %v5207
      %5272 = vst [vmem:[%s151 + $0x24] sm:$0xf] %v5208
      %5273 = vst [vmem:[%s151 + $0x28] sm:$0xf] %v5209
      %5274 = vst [vmem:[%s151 + $0x2c] sm:$0xf] %v5210
      %5275 = vst [vmem:[%s151 + $0x30] sm:$0xf] %v5211
      %5276 = vst [vmem:[%s151 + $0x34] sm:$0xf] %v5212
      %5277 = vst [vmem:[%s151 + $0x38] sm:$0xf] %v5213
      %5278 = vst [vmem:[%s151 + $0x3c] sm:$0xf] %v5214
      %5279 = vst [vmem:[%s151 + $0x40] sm:$0xf] %v5215
      %5280 = vst [vmem:[%s151 + $0x44] sm:$0xf] %v5216
      %5281 = vst [vmem:[%s151 + $0x48] sm:$0xf] %v5217
      %5282 = vst [vmem:[%s151 + $0x4c] sm:$0xf] %v5218
      %5283 = vst [vmem:[%s151 + $0x50] sm:$0xf] %v5219
      %5284 = vst [vmem:[%s151 + $0x54] sm:$0xf] %v5220
      %5285 = vst [vmem:[%s151 + $0x58] sm:$0xf] %v5221
      %5286 = vst [vmem:[%s151 + $0x5c] sm:$0xf] %v5222
      %5287 = vst [vmem:[%s151 + $0x60] sm:$0xf] %v5223
      %5288 = vst [vmem:[%s151 + $0x64] sm:$0xf] %v5224
      %5289 = vst [vmem:[%s151 + $0x68] sm:$0xf] %v5225
      %5290 = vst [vmem:[%s151 + $0x6c] sm:$0xf] %v5226
      %5291 = vst [vmem:[%s151 + $0x70] sm:$0xf] %v5227
      %5292 = vst [vmem:[%s151 + $0x74] sm:$0xf] %v5228
      %5293 = vst [vmem:[%s151 + $0x78] sm:$0xf] %v5229
      %5294 = vst [vmem:[%s151 + $0x7c] sm:$0xf] %v5230
      %s5295 = smul.u32 32, %s15
      %p5296 = scmp.lt.s32.totalorder %s5295, 95
      %s5297 = scalar_select %p5296, %s5295, 95
      %s5298 = smul.addr %s5297, 4
      %s5299 = scalar_lea.vmem %s4, %s5298
      // Predicated region
      $region115: #{inception_c_forward.14} parent=31 // pred_check
        %p5300 = pneg %p96
      $region116: #{inception_c_forward.14} parent=31 // pred_check_branch
        %5302 = sbr.rel (%p5300) target = $region118
      $region117: #{inception_c_forward.14} parent=31 // pred_region
        %s5303 = smul.u32 32, %s15
      $region118: #{inception_c_forward.14} parent=31 // pred_fallthru
        _
    $region32: #{inception_c_forward.14} parent=5 // pred_fallthru
      _
    %p5304 = scmp.le.s32.totalorder 2, %s10
    // Predicated region
    $region119: #{inception_c_forward.14} parent=5 // pred_check
      %p5305 = pneg %p5304
    $region120: #{inception_c_forward.14} parent=5 // pred_check_branch
      %5307 = sbr.rel (%p5305) target = $region122
    $region121: #{inception_c_forward.14} parent=5 // pred_region
      %s5308 = ssub.s32 %s10, 2
      // Predicated region
      $region123: #{inception_c_forward.14} parent=121 // pred_check
        %p5309 = pneg %p102
      $region124: #{inception_c_forward.14} parent=121 // pred_check_branch
        %5311 = sbr.rel (%p5309) target = $region126
      $region125: #{inception_c_forward.14} parent=121 // pred_region
        %s5312 = smul.u32 32, %s16
        %p5313 = scmp.lt.s32.totalorder %s5312, 95
        %s5314 = scalar_select %p5313, %s5312, 95
        %s5315 = smul.addr %s5314, 4
        %s5316 = scalar_lea.vmem %s4, %s5315
      $region126: #{inception_c_forward.14} parent=121 // pred_fallthru
        _
    $region122: #{inception_c_forward.14} parent=5 // pred_fallthru
      _
  $region6: #{inception_c_forward.14} parent=0 // loop_footer
    %s14 = sadd.s32 1, %s10
  $region7: #{inception_c_forward.14} parent=0 // loop_footer_branch
    %9 = sbr.rel target = $region3
  $region8: #{inception_c_forward.14} parent=0 // loop_exit
    _
  %5317 = vsyncmov [#allocation3]
  %s5318 = vpop.sfrf %5317
  %p5319 = scmp.eq.s32.totalorder %s5318, 0
  %p5320 = pneg %p5319
  %5322 = shalt.err (%p5320)
  %s5323 = scalar_lea.sflag [#allocation3], 1
  %5324 = vsyncmov %s5323
  %s5325 = vpop.sfrf %5324
  %p5326 = scmp.eq.s32.totalorder %s5325, 0
  %p5327 = pneg %p5326
  %5329 = shalt.err (%p5327)

// kernel: inception_c_forward.16
$region0: #{inception_c_forward.16}
  #allocation0 [shape = 'u32[]', space=smem, size = 0x4, offset = 0x4, fixed_abs, tag = 'smem constant byte address 0x4 - core index']
  #allocation1 [shape = 'u32[144,128]{1,0:T(1,128)}', space=vmem, size = 0x12000, scoped, tag = 'internal scratch']
  #allocation2 [shape = 'bf16[2,288,128]{2,1,0:T(16,128)(2,1)}', space=vmem, size = 0x24000, scoped, tag = 'scratch operand']
  #allocation3 [shape = 's32[2]{0}', space=sflag, size = 0x8, scoped, tag = 'scratch operand']
  #allocation4 [shape = 'f32[256,128]{1,0:T(8,128)}', space=vmem, size = 0x20000, scoped, tag = 'scratch operand']
  #allocation5 [shape = 's32[]', space=sflag, size = 0x4, offset = 0, fixed_abs, tag = 'sflag constant byte address 0x0 - dummy sync flag']
  #allocation6 [shape = 's32[]', space=sflag, size = 0x4, offset = 0, fixed_abs, tag = 'sflag constant byte address 0x0 - dummy sync flag']
  %s0 = inlined_call_operand.vmem [shape: bf16[800,128], index: 0, kind: input, shape index: {}]
  %s1 = inlined_call_operand.vmem [shape: bf16[3,128,128], index: 1, kind: input, shape index: {}]
  %s2 = inlined_call_operand.vmem [shape: f32[1,128], index: 2, kind: input, shape index: {}]
  %s3 = inlined_call_operand.vmem [shape: f32[1,128], index: 3, kind: input, shape index: {}]
  %s4 = inlined_call_operand.vmem [shape: f32[768,128], index: 4, kind: output, shape index: {}]
  %s5 = sld [smem:[#allocation0]]
  $region121: #{inception_c_forward.16} parent=0
    _
  %s7 = ssub.s32 1, %s5
  %s8 = scalar_select 0, %s7, %s5
  loop: start=0, step=1, limit=5
  $region2: #{inception_c_forward.16} parent=0 // loop_pre_header
    _
  $region3: #{inception_c_forward.16} parent=0 // loop_header
    %s10 = sphi 0, %s14
    %p11 = scmp.ge.s32.totalorder %s10, 5
    %s18 = sphi 0, %s18
    %s20 = sphi 0, %s18
    %s21 = sphi 0, %s20
    %s35 = sphi 0, %s21
    %s39 = sphi 0, %s39
    %s41 = sphi 0, %s39
    %s42 = sphi 0, %s41
    %s56 = sphi 0, %s42
    %s60 = sphi 0, %s60
    %s62 = sphi 0, %s60
    %s63 = sphi 0, %s62
    %s77 = sphi 0, %s63
    %s83 = sphi 0, %s85
    %s86 = sphi 0, %s83
    %s87 = sphi 0, %s86
    %s103 = sphi 0, %s87
  $region4: #{inception_c_forward.16} parent=0 // loop_header_branch
    %13 = sbr.rel (%p11) target = $region8
  $region5: #{inception_c_forward.16} parent=0 // loop_body
    %s15 = ssub.s32 %s10, 1
    %s16 = ssub.s32 %s10, 2
    %s17 = sadd.s32 %s10, 1
    %s19 = sadd.s32 %s18, 1
    %p22 = scmp.eq.s32.totalorder %s10, 2
    %p23 = scmp.ne.s32.totalorder %s18, %s20
    %p24 = scmp.eq.s32.totalorder %s10, 0
    %p25 = por %p23, %p24
    %p26 = scmp.ne.s32.totalorder %s18, %s20
    %p27 = scmp.eq.s32.totalorder %s15, 2
    %p28 = por %p26, %p27
    %p29 = scmp.ne.s32.totalorder %s20, %s21
    %p30 = scmp.eq.s32.totalorder %s15, 0
    %p31 = por %p29, %p30
    %p32 = scmp.ne.s32.totalorder %s20, %s21
    %p33 = scmp.eq.s32.totalorder %s16, 2
    %p34 = por %p32, %p33
    %p36 = scmp.ne.s32.totalorder %s21, %s35
    %p37 = scmp.eq.s32.totalorder %s16, 0
    %p38 = por %p36, %p37
    %s40 = sadd.s32 %s39, 1
    %p43 = scmp.eq.s32.totalorder %s10, 2
    %p44 = scmp.ne.s32.totalorder %s39, %s41
    %p45 = scmp.eq.s32.totalorder %s10, 0
    %p46 = por %p44, %p45
    %p47 = scmp.ne.s32.totalorder %s39, %s41
    %p48 = scmp.eq.s32.totalorder %s15, 2
    %p49 = por %p47, %p48
    %p50 = scmp.ne.s32.totalorder %s41, %s42
    %p51 = scmp.eq.s32.totalorder %s15, 0
    %p52 = por %p50, %p51
    %p53 = scmp.ne.s32.totalorder %s41, %s42
    %p54 = scmp.eq.s32.totalorder %s16, 2
    %p55 = por %p53, %p54
    %p57 = scmp.ne.s32.totalorder %s42, %s56
    %p58 = scmp.eq.s32.totalorder %s16, 0
    %p59 = por %p57, %p58
    %s61 = sadd.s32 %s60, 1
    %p64 = scmp.eq.s32.totalorder %s10, 2
    %p65 = scmp.ne.s32.totalorder %s60, %s62
    %p66 = scmp.eq.s32.totalorder %s10, 0
    %p67 = por %p65, %p66
    %p68 = scmp.ne.s32.totalorder %s60, %s62
    %p69 = scmp.eq.s32.totalorder %s15, 2
    %p70 = por %p68, %p69
    %p71 = scmp.ne.s32.totalorder %s62, %s63
    %p72 = scmp.eq.s32.totalorder %s15, 0
    %p73 = por %p71, %p72
    %p74 = scmp.ne.s32.totalorder %s62, %s63
    %p75 = scmp.eq.s32.totalorder %s16, 2
    %p76 = por %p74, %p75
    %p78 = scmp.ne.s32.totalorder %s63, %s77
    %p79 = scmp.eq.s32.totalorder %s16, 0
    %p80 = por %p78, %p79
    %s81 = ssub.s32 %s10, %s17
    %p82 = scmp.eq.s32.totalorder %s81, 0
    %s84 = sadd.s32 %s83, 1
    %s85 = scalar_select %p82, %s83, %s84
    %p88 = pneg %p82
    %p89 = scmp.eq.s32.totalorder %s10, 2
    %p90 = por %p88, %p89
    %p91 = scmp.ne.s32.totalorder %s83, %s86
    %p92 = scmp.eq.s32.totalorder %s10, 0
    %p93 = por %p91, %p92
    %p94 = scmp.ne.s32.totalorder %s83, %s86
    %p95 = scmp.eq.s32.totalorder %s15, 2
    %p96 = por %p94, %p95
    %p97 = scmp.ne.s32.totalorder %s86, %s87
    %p98 = scmp.eq.s32.totalorder %s15, 0
    %p99 = por %p97, %p98
    %p100 = scmp.ne.s32.totalorder %s86, %s87
    %p101 = scmp.eq.s32.totalorder %s16, 2
    %p102 = por %p100, %p101
    %p104 = scmp.ne.s32.totalorder %s87, %s103
    %p105 = scmp.eq.s32.totalorder %s16, 0
    %p106 = por %p104, %p105
    %p107 = scmp.le.s32.totalorder 1, %s10
    %p108 = scmp.lt.s32.totalorder %s10, 4
    %p109 = pnand %p107, %p108
    %p110 = pneg %p109
    // Predicated region
    $region9: #{inception_c_forward.16} parent=5 // pred_check
      _
    $region10: #{inception_c_forward.16} parent=5 // pred_check_branch
      %112 = sbr.rel (%p109) target = $region12
    $region11: #{inception_c_forward.16} parent=5 // pred_region
      %s113 = ssub.s32 %s10, 1
      // Predicated region
      $region13: #{inception_c_forward.16} parent=11 // pred_check
        %p114 = pneg %p31
      $region14: #{inception_c_forward.16} parent=11 // pred_check_branch
        %116 = sbr.rel (%p114) target = $region16
      $region15: #{inception_c_forward.16} parent=11 // pred_region
        _
      $region16: #{inception_c_forward.16} parent=11 // pred_fallthru
        _
      // Predicated region
      $region17: #{inception_c_forward.16} parent=11 // pred_check
        %p117 = pneg %p52
      $region18: #{inception_c_forward.16} parent=11 // pred_check_branch
        %119 = sbr.rel (%p117) target = $region20
      $region19: #{inception_c_forward.16} parent=11 // pred_region
        _
      $region20: #{inception_c_forward.16} parent=11 // pred_fallthru
        _
      // Predicated region
      $region21: #{inception_c_forward.16} parent=11 // pred_check
        %p120 = pneg %p73
      $region22: #{inception_c_forward.16} parent=11 // pred_check_branch
        %122 = sbr.rel (%p120) target = $region24
      $region23: #{inception_c_forward.16} parent=11 // pred_region
        _
      $region24: #{inception_c_forward.16} parent=11 // pred_fallthru
        _
    $region12: #{inception_c_forward.16} parent=5 // pred_fallthru
      _
    %p123 = scmp.lt.s32.totalorder %s10, 3
    // Predicated region
    $region25: #{inception_c_forward.16} parent=5 // pred_check
      %p124 = pneg %p123
    $region26: #{inception_c_forward.16} parent=5 // pred_check_branch
      %126 = sbr.rel (%p124) target = $region28
    $region27: #{inception_c_forward.16} parent=5 // pred_region
      _
    $region28: #{inception_c_forward.16} parent=5 // pred_fallthru
      _
    %p127 = scmp.le.s32.totalorder 1, %s10
    %p128 = scmp.lt.s32.totalorder %s10, 4
    %p129 = pnand %p127, %p128
    %p130 = pneg %p129
    // Predicated region
    $region29: #{inception_c_forward.16} parent=5 // pred_check
      _
    $region30: #{inception_c_forward.16} parent=5 // pred_check_branch
      %132 = sbr.rel (%p129) target = $region32
    $region31: #{inception_c_forward.16} parent=5 // pred_region
      %s133 = ssub.s32 %s10, 1
      %p134 = pneg %p31
      %p135 = pneg %p28
      %p136 = pneg %p52
      %p137 = pneg %p49
      %p138 = pneg %p73
      %p139 = pneg %p70
      %p140 = pneg %p99
      %p141 = pneg %p96
      %s142 = smul.u32 32, %s15
      %p143 = scmp.lt.s32.totalorder %s142, 95
      %s144 = scalar_select %p143, %s142, 95
      %s145 = smul.addr %s144, 8
      %s146 = scalar_lea.vmem %s4, %s145
      %s147 = smul.u32 32, %s15
      %p148 = scmp.lt.s32.totalorder %s147, 95
      %s149 = scalar_select %p148, %s147, 95
      %s150 = smul.addr %s149, 8
      %s151 = scalar_lea.vmem %s4, %s150
      %s152 = smul.u32 32, %s15
      %p154 = scmp.lt.s32.totalorder %s15, 0
      %s155 = ssub.s32 0, %s15
      %s156 = scalar_select %p154, %s155, %s15
      %s157 = sand.u32 %s156, 1
      %s158 = ssub.s32 0, %s157
      %s159 = scalar_select %p154, %s158, %s157
      %p160 = scmp.ne.s32.totalorder %s159, 0
      %p161 = scmp.lt.s32.totalorder %s159, 0
      %p162 = pnand %p161, %p160
      %p163 = pneg %p162
      %s164 = sadd.s32 %s159, 2
      %s165 = scalar_select %p163, %s164, %s159
      %p166 = scmp.eq.s32.totalorder %s15, 0
      // Predicated region
      $region33: #{inception_c_forward.16} parent=31 // pred_check
        %p167 = pneg %p166
      $region34: #{inception_c_forward.16} parent=31 // pred_check_branch
        %169 = sbr.rel (%p167) target = $region36
      $region35: #{inception_c_forward.16} parent=31 // pred_region
        %p171 = scmp.lt.u32.totalorder 144, 8
        %p172 = pneg %p171
        // Predicated region
        $region37: #{inception_c_forward.16} parent=35 // pred_check
          _
        $region38: #{inception_c_forward.16} parent=35 // pred_check_branch
          %174 = sbr.rel (%p171) target = $region40
        $region39: #{inception_c_forward.16} parent=35 // pred_region
          %s189 = sand.u32 144, 7
          %p190 = scmp.eq.s32.totalorder %s189, 0
          // Predicated region
          $region52: #{inception_c_forward.16} parent=39 // pred_check
            %p191 = pneg %p190
          $region53: #{inception_c_forward.16} parent=39 // pred_check_branch
            %193 = sbr.rel (%p191) target = $region55
          $region54: #{inception_c_forward.16} parent=39 // pred_region
            loop: start=0, step=1, limit=1
            $region56: #{inception_c_forward.16} parent=54 // loop_pre_header
              _
            $region57: #{inception_c_forward.16} parent=54 // loop_header
              %s195 = sphi 0, %s199
              %p196 = scmp.ge.s32.totalorder %s195, 1
              %s200 = sphi %s0, %s0
              %s201 = sphi [#allocation2], [#allocation2]
            $region58: #{inception_c_forward.16} parent=54 // loop_header_branch
              %198 = sbr.rel (%p196) target = $region62
            $region59: #{inception_c_forward.16} parent=54 // loop_body
              %v202 = vld [vmem:[%s200] sm:$0xff]
              %203 = vst [vmem:[%s201] sm:$0xff] %v202
              %v204 = vld [vmem:[%s200 + $0x8] sm:$0xff]
              %205 = vst [vmem:[%s201 + $0x8] sm:$0xff] %v204
              %v206 = vld [vmem:[%s200 + $0x10] sm:$0xff]
              %207 = vst [vmem:[%s201 + $0x10] sm:$0xff] %v206
              %v208 = vld [vmem:[%s200 + $0x18] sm:$0xff]
              %209 = vst [vmem:[%s201 + $0x18] sm:$0xff] %v208
              %v210 = vld [vmem:[%s200 + $0x20] sm:$0xff]
              %211 = vst [vmem:[%s201 + $0x20] sm:$0xff] %v210
              %v212 = vld [vmem:[%s200 + $0x28] sm:$0xff]
              %213 = vst [vmem:[%s201 + $0x28] sm:$0xff] %v212
              %v214 = vld [vmem:[%s200 + $0x30] sm:$0xff]
              %215 = vst [vmem:[%s201 + $0x30] sm:$0xff] %v214
              %v216 = vld [vmem:[%s200 + $0x38] sm:$0xff]
              %217 = vst [vmem:[%s201 + $0x38] sm:$0xff] %v216
              %v218 = vld [vmem:[%s200 + $0x40] sm:$0xff]
              %219 = vst [vmem:[%s201 + $0x40] sm:$0xff] %v218
              %v220 = vld [vmem:[%s200 + $0x48] sm:$0xff]
              %221 = vst [vmem:[%s201 + $0x48] sm:$0xff] %v220
              %v222 = vld [vmem:[%s200 + $0x50] sm:$0xff]
              %223 = vst [vmem:[%s201 + $0x50] sm:$0xff] %v222
              %v224 = vld [vmem:[%s200 + $0x58] sm:$0xff]
              %225 = vst [vmem:[%s201 + $0x58] sm:$0xff] %v224
              %v226 = vld [vmem:[%s200 + $0x60] sm:$0xff]
              %227 = vst [vmem:[%s201 + $0x60] sm:$0xff] %v226
              %v228 = vld [vmem:[%s200 + $0x68] sm:$0xff]
              %229 = vst [vmem:[%s201 + $0x68] sm:$0xff] %v228
              %v230 = vld [vmem:[%s200 + $0x70] sm:$0xff]
              %231 = vst [vmem:[%s201 + $0x70] sm:$0xff] %v230
              %v232 = vld [vmem:[%s200 + $0x78] sm:$0xff]
              %233 = vst [vmem:[%s201 + $0x78] sm:$0xff] %v232
              %v234 = vld [vmem:[%s200 + $0x80] sm:$0xff]
              %235 = vst [vmem:[%s201 + $0x80] sm:$0xff] %v234
              %v236 = vld [vmem:[%s200 + $0x88] sm:$0xff]
              %237 = vst [vmem:[%s201 + $0x88] sm:$0xff] %v236
            $region60: #{inception_c_forward.16} parent=54 // loop_footer
              %s199 = sadd.s32 1, %s195
            $region61: #{inception_c_forward.16} parent=54 // loop_footer_branch
              %194 = sbr.rel target = $region57
            $region62: #{inception_c_forward.16} parent=54 // loop_exit
              _
          $region55: #{inception_c_forward.16} parent=39 // pred_fallthru
            _
          %p238 = pneg %p190
          // Predicated region
          $region63: #{inception_c_forward.16} parent=39 // pred_check
            _
          $region64: #{inception_c_forward.16} parent=39 // pred_check_branch
            %240 = sbr.rel (%p190) target = $region66
          $region65: #{inception_c_forward.16} parent=39 // pred_region
            %s241 = sand.u32 144, 7
          $region66: #{inception_c_forward.16} parent=39 // pred_fallthru
            _
        $region40: #{inception_c_forward.16} parent=35 // pred_fallthru
          _
        // Predicated region
        $region41: #{inception_c_forward.16} parent=35 // pred_check
          %p175 = pneg %p171
        $region42: #{inception_c_forward.16} parent=35 // pred_check_branch
          %177 = sbr.rel (%p175) target = $region44
        $region43: #{inception_c_forward.16} parent=35 // pred_region
          %s178 = sshllo.u32 0, 144
          loop: start=0, step=1, limit=1
          $region45: #{inception_c_forward.16} parent=43 // loop_pre_header
            _
          $region46: #{inception_c_forward.16} parent=43 // loop_header
            %s180 = sphi 0, %s184
            %p181 = scmp.ge.s32.totalorder %s180, 1
            %s185 = sphi %s0, %s0
            %s186 = sphi [#allocation2], [#allocation2]
          $region47: #{inception_c_forward.16} parent=43 // loop_header_branch
            %183 = sbr.rel (%p181) target = $region51
          $region48: #{inception_c_forward.16} parent=43 // loop_body
            %v187 = vld [vmem:[%s185] sm:%s178]
            %188 = vst [vmem:[%s186] sm:%s178] %v187
          $region49: #{inception_c_forward.16} parent=43 // loop_footer
            %s184 = sadd.s32 1, %s180
          $region50: #{inception_c_forward.16} parent=43 // loop_footer_branch
            %179 = sbr.rel target = $region46
          $region51: #{inception_c_forward.16} parent=43 // loop_exit
            _
        $region44: #{inception_c_forward.16} parent=35 // pred_fallthru
          _
        // Predicated region
        $region67: #{inception_c_forward.16} parent=35 // pred_check
          _
        $region68: #{inception_c_forward.16} parent=35 // pred_check_branch
          %244 = sbr.rel (0) target = $region70
        $region69: #{inception_c_forward.16} parent=35 // pred_region
          %245 = vsyncadd [#allocation3], 2304
        $region70: #{inception_c_forward.16} parent=35 // pred_fallthru
          _
      $region36: #{inception_c_forward.16} parent=31 // pred_fallthru
        _
      %s246 = sadd.s32 %s15, 1
      %p247 = scmp.lt.s32.totalorder %s246, 3
      // Predicated region
      $region71: #{inception_c_forward.16} parent=31 // pred_check
        %p248 = pneg %p247
      $region72: #{inception_c_forward.16} parent=31 // pred_check_branch
        %250 = sbr.rel (%p248) target = $region74
      $region73: #{inception_c_forward.16} parent=31 // pred_region
        %s251 = ssub.s32 1, %s165
        %s252 = smul.u32 %s246, 256
        %s253 = sshra.s32 %s252, 3
        %s254 = sand.u32 %s252, 7
        %s255 = smul.addr %s253, 4
        %s256 = scalar_lea.vmem %s0, %s255
        %s257 = smul.u32 %s251, 18
        %s258 = smul.addr %s257, 8
        %s259 = scalar_lea.vmem [#allocation2], %s258
        %s260 = scalar_lea.sflag [#allocation3], %s251
        %p262 = scmp.lt.u32.totalorder 144, 8
        %p263 = pneg %p262
        // Predicated region
        $region75: #{inception_c_forward.16} parent=73 // pred_check
          _
        $region76: #{inception_c_forward.16} parent=73 // pred_check_branch
          %265 = sbr.rel (%p262) target = $region78
        $region77: #{inception_c_forward.16} parent=73 // pred_region
          %s280 = sand.u32 144, 7
          %p281 = scmp.eq.s32.totalorder %s280, 0
          // Predicated region
          $region90: #{inception_c_forward.16} parent=77 // pred_check
            %p282 = pneg %p281
          $region91: #{inception_c_forward.16} parent=77 // pred_check_branch
            %284 = sbr.rel (%p282) target = $region93
          $region92: #{inception_c_forward.16} parent=77 // pred_region
            loop: start=0, step=1, limit=1
            $region94: #{inception_c_forward.16} parent=92 // loop_pre_header
              _
            $region95: #{inception_c_forward.16} parent=92 // loop_header
              %s286 = sphi 0, %s290
              %p287 = scmp.ge.s32.totalorder %s286, 1
              %s291 = sphi %s256, %s256
              %s292 = sphi %s259, %s259
            $region96: #{inception_c_forward.16} parent=92 // loop_header_branch
              %289 = sbr.rel (%p287) target = $region100
            $region97: #{inception_c_forward.16} parent=92 // loop_body
              %v293 = vld [vmem:[%s291] sm:$0xff]
              %294 = vst [vmem:[%s292] sm:$0xff] %v293
              %v295 = vld [vmem:[%s291 + $0x8] sm:$0xff]
              %296 = vst [vmem:[%s292 + $0x8] sm:$0xff] %v295
              %v297 = vld [vmem:[%s291 + $0x10] sm:$0xff]
              %298 = vst [vmem:[%s292 + $0x10] sm:$0xff] %v297
              %v299 = vld [vmem:[%s291 + $0x18] sm:$0xff]
              %300 = vst [vmem:[%s292 + $0x18] sm:$0xff] %v299
              %v301 = vld [vmem:[%s291 + $0x20] sm:$0xff]
              %302 = vst [vmem:[%s292 + $0x20] sm:$0xff] %v301
              %v303 = vld [vmem:[%s291 + $0x28] sm:$0xff]
              %304 = vst [vmem:[%s292 + $0x28] sm:$0xff] %v303
              %v305 = vld [vmem:[%s291 + $0x30] sm:$0xff]
              %306 = vst [vmem:[%s292 + $0x30] sm:$0xff] %v305
              %v307 = vld [vmem:[%s291 + $0x38] sm:$0xff]
              %308 = vst [vmem:[%s292 + $0x38] sm:$0xff] %v307
              %v309 = vld [vmem:[%s291 + $0x40] sm:$0xff]
              %310 = vst [vmem:[%s292 + $0x40] sm:$0xff] %v309
              %v311 = vld [vmem:[%s291 + $0x48] sm:$0xff]
              %312 = vst [vmem:[%s292 + $0x48] sm:$0xff] %v311
              %v313 = vld [vmem:[%s291 + $0x50] sm:$0xff]
              %314 = vst [vmem:[%s292 + $0x50] sm:$0xff] %v313
              %v315 = vld [vmem:[%s291 + $0x58] sm:$0xff]
              %316 = vst [vmem:[%s292 + $0x58] sm:$0xff] %v315
              %v317 = vld [vmem:[%s291 + $0x60] sm:$0xff]
              %318 = vst [vmem:[%s292 + $0x60] sm:$0xff] %v317
              %v319 = vld [vmem:[%s291 + $0x68] sm:$0xff]
              %320 = vst [vmem:[%s292 + $0x68] sm:$0xff] %v319
              %v321 = vld [vmem:[%s291 + $0x70] sm:$0xff]
              %322 = vst [vmem:[%s292 + $0x70] sm:$0xff] %v321
              %v323 = vld [vmem:[%s291 + $0x78] sm:$0xff]
              %324 = vst [vmem:[%s292 + $0x78] sm:$0xff] %v323
              %v325 = vld [vmem:[%s291 + $0x80] sm:$0xff]
              %326 = vst [vmem:[%s292 + $0x80] sm:$0xff] %v325
              %v327 = vld [vmem:[%s291 + $0x88] sm:$0xff]
              %328 = vst [vmem:[%s292 + $0x88] sm:$0xff] %v327
            $region98: #{inception_c_forward.16} parent=92 // loop_footer
              %s290 = sadd.s32 1, %s286
            $region99: #{inception_c_forward.16} parent=92 // loop_footer_branch
              %285 = sbr.rel target = $region95
            $region100: #{inception_c_forward.16} parent=92 // loop_exit
              _
          $region93: #{inception_c_forward.16} parent=77 // pred_fallthru
            _
          %p329 = pneg %p281
          // Predicated region
          $region101: #{inception_c_forward.16} parent=77 // pred_check
            _
          $region102: #{inception_c_forward.16} parent=77 // pred_check_branch
            %331 = sbr.rel (%p281) target = $region104
          $region103: #{inception_c_forward.16} parent=77 // pred_region
            %s332 = sand.u32 144, 7
          $region104: #{inception_c_forward.16} parent=77 // pred_fallthru
            _
        $region78: #{inception_c_forward.16} parent=73 // pred_fallthru
          _
        // Predicated region
        $region79: #{inception_c_forward.16} parent=73 // pred_check
          %p266 = pneg %p262
        $region80: #{inception_c_forward.16} parent=73 // pred_check_branch
          %268 = sbr.rel (%p266) target = $region82
        $region81: #{inception_c_forward.16} parent=73 // pred_region
          %s269 = sshllo.u32 0, 144
          loop: start=0, step=1, limit=1
          $region83: #{inception_c_forward.16} parent=81 // loop_pre_header
            _
          $region84: #{inception_c_forward.16} parent=81 // loop_header
            %s271 = sphi 0, %s275
            %p272 = scmp.ge.s32.totalorder %s271, 1
            %s276 = sphi %s256, %s256
            %s277 = sphi %s259, %s259
          $region85: #{inception_c_forward.16} parent=81 // loop_header_branch
            %274 = sbr.rel (%p272) target = $region89
          $region86: #{inception_c_forward.16} parent=81 // loop_body
            %v278 = vld [vmem:[%s276] sm:%s269]
            %279 = vst [vmem:[%s277] sm:%s269] %v278
          $region87: #{inception_c_forward.16} parent=81 // loop_footer
            %s275 = sadd.s32 1, %s271
          $region88: #{inception_c_forward.16} parent=81 // loop_footer_branch
            %270 = sbr.rel target = $region84
          $region89: #{inception_c_forward.16} parent=81 // loop_exit
            _
        $region82: #{inception_c_forward.16} parent=73 // pred_fallthru
          _
        // Predicated region
        $region105: #{inception_c_forward.16} parent=73 // pred_check
          _
        $region106: #{inception_c_forward.16} parent=73 // pred_check_branch
          %335 = sbr.rel (0) target = $region108
        $region107: #{inception_c_forward.16} parent=73 // pred_region
          %336 = vsyncadd %s260, 2304
        $region108: #{inception_c_forward.16} parent=73 // pred_fallthru
          _
      $region74: #{inception_c_forward.16} parent=31 // pred_fallthru
        _
      %s337 = smul.u32 %s165, 18
      %s338 = smul.addr %s337, 8
      %s339 = scalar_lea.vmem [#allocation2], %s338
      %s340 = scalar_lea.sflag [#allocation3], %s165
      %s341 = smul.u32 4, 36
      %s342 = smul.u32 %s341, 1
      %s343 = sshll.u32 %s342, 4
      %344 = dma.done %s340, %s343
      %v345 = vld [vmem:[%s339] sm:$0xff]
      %v346 = vld [vmem:[%s339 + $0x8] sm:$0xff]
      %v347 = vld [vmem:[%s339 + $0x10] sm:$0xff]
      %v348 = vld [vmem:[%s339 + $0x18] sm:$0xff]
      %v349 = vld [vmem:[%s339 + $0x20] sm:$0xff]
      %v350 = vld [vmem:[%s339 + $0x28] sm:$0xff]
      %v351 = vld [vmem:[%s339 + $0x30] sm:$0xff]
      %v352 = vld [vmem:[%s339 + $0x38] sm:$0xff]
      %v353 = vld [vmem:[%s339 + $0x40] sm:$0xff]
      %v354 = vld [vmem:[%s339 + $0x48] sm:$0xff]
      %v355 = vld [vmem:[%s339 + $0x50] sm:$0xff]
      %v356 = vld [vmem:[%s339 + $0x58] sm:$0xff]
      %v357 = vld [vmem:[%s339 + $0x60] sm:$0xff]
      %v358 = vld [vmem:[%s339 + $0x68] sm:$0xff]
      %v359 = vld [vmem:[%s339 + $0x70] sm:$0xff]
      %v360 = vld [vmem:[%s339 + $0x78] sm:$0xff]
      %v361 = vld [vmem:[%s1] sm:$0xf]
      %v362 = vld [vmem:[%s1 + $0x4] sm:$0xf]
      %v363 = vld [vmem:[%s1 + $0x8] sm:$0xf]
      %v364 = vld [vmem:[%s1 + $0xc] sm:$0xf]
      %v365 = vld [vmem:[%s1 + $0x10] sm:$0xf]
      %v366 = vld [vmem:[%s1 + $0x14] sm:$0xf]
      %v367 = vld [vmem:[%s1 + $0x18] sm:$0xf]
      %v368 = vld [vmem:[%s1 + $0x1c] sm:$0xf]
      %v369 = vld [vmem:[%s1 + $0x20] sm:$0xf]
      %v370 = vld [vmem:[%s1 + $0x24] sm:$0xf]
      %v371 = vld [vmem:[%s1 + $0x28] sm:$0xf]
      %v372 = vld [vmem:[%s1 + $0x2c] sm:$0xf]
      %v373 = vld [vmem:[%s1 + $0x30] sm:$0xf]
      %v374 = vld [vmem:[%s1 + $0x34] sm:$0xf]
      %v375 = vld [vmem:[%s1 + $0x38] sm:$0xf]
      %v376 = vld [vmem:[%s1 + $0x3c] sm:$0xf]
      %v393 = vunpack.c.l.b16 %v361
      %v394 = vunpack.c.l.b16 %v362
      %v395 = vunpack.c.l.b16 %v363
      %v396 = vunpack.c.l.b16 %v364
      %v397 = vunpack.c.l.b16 %v365
      %v398 = vunpack.c.l.b16 %v366
      %v399 = vunpack.c.l.b16 %v367
      %v400 = vunpack.c.l.b16 %v368
      %v401 = vunpack.c.l.b16 %v369
      %v402 = vunpack.c.l.b16 %v370
      %v403 = vunpack.c.l.b16 %v371
      %v404 = vunpack.c.l.b16 %v372
      %v405 = vunpack.c.l.b16 %v373
      %v406 = vunpack.c.l.b16 %v374
      %v407 = vunpack.c.l.b16 %v375
      %v408 = vunpack.c.l.b16 %v376
      %v409 = vpack.c.b16 %v394, %v393
      %v410 = vpack.c.b16 %v396, %v395
      %v411 = vpack.c.b16 %v398, %v397
      %v412 = vpack.c.b16 %v400, %v399
      %v413 = vpack.c.b16 %v402, %v401
      %v414 = vpack.c.b16 %v404, %v403
      %v415 = vpack.c.b16 %v406, %v405
      %v416 = vpack.c.b16 %v408, %v407
      %425 = vmatprep.subr.bf16.mxu0 0
      %426 = vmatpush1.bf16.msra.mxu0 %v409
      %427 = vmatprep.subr.bf16.mxu0 0
      %428 = vmatpush1.bf16.msra.mxu0 %v410
      %429 = vmatprep.subr.bf16.mxu0 0
      %430 = vmatpush1.bf16.msra.mxu0 %v411
      %431 = vmatprep.subr.bf16.mxu0 0
      %432 = vmatpush1.bf16.msra.mxu0 %v412
      %433 = vmatprep.subr.bf16.mxu0 0
      %434 = vmatpush1.bf16.msra.mxu0 %v413
      %435 = vmatprep.subr.bf16.mxu0 0
      %436 = vmatpush1.bf16.msra.mxu0 %v414
      %437 = vmatprep.subr.bf16.mxu0 0
      %438 = vmatpush1.bf16.msra.mxu0 %v415
      %439 = vmatprep.subr.bf16.mxu0 0
      %440 = vmatpush1.bf16.msra.mxu0 %v416
      %441 = vmatprep.subr.bf16.mxu0 0
      %442 = vmatpush1.bf16.msra.mxu0 0
      %443 = vmatprep.subr.bf16.mxu0 0
      %444 = vmatpush1.bf16.msra.mxu0 0
      %445 = vmatprep.subr.bf16.mxu0 0
      %446 = vmatpush1.bf16.msra.mxu0 0
      %447 = vmatprep.subr.bf16.mxu0 0
      %448 = vmatpush1.bf16.msra.mxu0 0
      %449 = vmatprep.subr.bf16.mxu0 0
      %450 = vmatpush1.bf16.msra.mxu0 0
      %451 = vmatprep.subr.bf16.mxu0 0
      %452 = vmatpush1.bf16.msra.mxu0 0
      %453 = vmatprep.subr.bf16.mxu0 0
      %454 = vmatpush1.bf16.msra.mxu0 0
      %455 = vmatprep.subr.bf16.mxu0 0
      %456 = vmatpush1.bf16.msra.mxu0 0
      %457 = vmatprep.mubr.bf16.mxu0 0
      %458 = vmatmul.mubr.bf16.gmra.mrb[0].mxu0 %v345
      %v459 = vpop.f32.mrb[0].mxu0
      %v460 = vadd.f32 0.0, %v459
      %v461 = vpop.f32.mrb[0].mxu0
      %v462 = vpop.f32.mrb[0].mxu0
      %v463 = vadd.f32 0.0, %v462
      %v464 = vpop.f32.mrb[0].mxu0
      %465 = vmatprep.mubr.bf16.mxu0 0
      %466 = vmatmul.mubr.bf16.gmra.mrb[0].mxu0 %v346
      %v467 = vpop.f32.mrb[0].mxu0
      %v468 = vadd.f32 0.0, %v467
      %v469 = vpop.f32.mrb[0].mxu0
      %v470 = vpop.f32.mrb[0].mxu0
      %v471 = vadd.f32 0.0, %v470
      %v472 = vpop.f32.mrb[0].mxu0
      %473 = vmatprep.mubr.bf16.mxu0 0
      %474 = vmatmul.mubr.bf16.gmra.mrb[0].mxu0 %v347
      %v475 = vpop.f32.mrb[0].mxu0
      %v476 = vadd.f32 0.0, %v475
      %v477 = vpop.f32.mrb[0].mxu0
      %v478 = vpop.f32.mrb[0].mxu0
      %v479 = vadd.f32 0.0, %v478
      %v480 = vpop.f32.mrb[0].mxu0
      %481 = vmatprep.mubr.bf16.mxu0 0
      %482 = vmatmul.mubr.bf16.gmra.mrb[0].mxu0 %v348
      %v483 = vpop.f32.mrb[0].mxu0
      %v484 = vadd.f32 0.0, %v483
      %v485 = vpop.f32.mrb[0].mxu0
      %v486 = vpop.f32.mrb[0].mxu0
      %v487 = vadd.f32 0.0, %v486
      %v488 = vpop.f32.mrb[0].mxu0
      %489 = vmatprep.mubr.bf16.mxu0 0
      %490 = vmatmul.mubr.bf16.gmra.mrb[0].mxu0 %v349
      %v491 = vpop.f32.mrb[0].mxu0
      %v492 = vadd.f32 0.0, %v491
      %v493 = vpop.f32.mrb[0].mxu0
      %v494 = vpop.f32.mrb[0].mxu0
      %v495 = vadd.f32 0.0, %v494
      %v496 = vpop.f32.mrb[0].mxu0
      %497 = vmatprep.mubr.bf16.mxu0 0
      %498 = vmatmul.mubr.bf16.gmra.mrb[0].mxu0 %v350
      %v499 = vpop.f32.mrb[0].mxu0
      %v500 = vadd.f32 0.0, %v499
      %v501 = vpop.f32.mrb[0].mxu0
      %v502 = vpop.f32.mrb[0].mxu0
      %v503 = vadd.f32 0.0, %v502
      %v504 = vpop.f32.mrb[0].mxu0
      %505 = vmatprep.mubr.bf16.mxu0 0
      %506 = vmatmul.mubr.bf16.gmra.mrb[0].mxu0 %v351
      %v507 = vpop.f32.mrb[0].mxu0
      %v508 = vadd.f32 0.0, %v507
      %v509 = vpop.f32.mrb[0].mxu0
      %v510 = vpop.f32.mrb[0].mxu0
      %v511 = vadd.f32 0.0, %v510
      %v512 = vpop.f32.mrb[0].mxu0
      %513 = vmatprep.mubr.bf16.mxu0 0
      %514 = vmatmul.mubr.bf16.gmra.mrb[0].mxu0 %v352
      %v515 = vpop.f32.mrb[0].mxu0
      %v516 = vadd.f32 0.0, %v515
      %v517 = vpop.f32.mrb[0].mxu0
      %v518 = vpop.f32.mrb[0].mxu0
      %v519 = vadd.f32 0.0, %v518
      %v520 = vpop.f32.mrb[0].mxu0
      %521 = vmatprep.mubr.bf16.mxu0 0
      %522 = vmatmul.mubr.bf16.gmra.mrb[0].mxu0 %v353
      %v523 = vpop.f32.mrb[0].mxu0
      %v524 = vadd.f32 0.0, %v523
      %v525 = vpop.f32.mrb[0].mxu0
      %v526 = vpop.f32.mrb[0].mxu0
      %v527 = vadd.f32 0.0, %v526
      %v528 = vpop.f32.mrb[0].mxu0
      %529 = vmatprep.mubr.bf16.mxu0 0
      %530 = vmatmul.mubr.bf16.gmra.mrb[0].mxu0 %v354
      %v531 = vpop.f32.mrb[0].mxu0
      %v532 = vadd.f32 0.0, %v531
      %v533 = vpop.f32.mrb[0].mxu0
      %v534 = vpop.f32.mrb[0].mxu0
      %v535 = vadd.f32 0.0, %v534
      %v536 = vpop.f32.mrb[0].mxu0
      %537 = vmatprep.mubr.bf16.mxu0 0
      %538 = vmatmul.mubr.bf16.gmra.mrb[0].mxu0 %v355
      %v539 = vpop.f32.mrb[0].mxu0
      %v540 = vadd.f32 0.0, %v539
      %v541 = vpop.f32.mrb[0].mxu0
      %v542 = vpop.f32.mrb[0].mxu0
      %v543 = vadd.f32 0.0, %v542
      %v544 = vpop.f32.mrb[0].mxu0
      %545 = vmatprep.mubr.bf16.mxu0 0
      %546 = vmatmul.mubr.bf16.gmra.mrb[0].mxu0 %v356
      %v547 = vpop.f32.mrb[0].mxu0
      %v548 = vadd.f32 0.0, %v547
      %v549 = vpop.f32.mrb[0].mxu0
      %v550 = vpop.f32.mrb[0].mxu0
      %v551 = vadd.f32 0.0, %v550
      %v552 = vpop.f32.mrb[0].mxu0
      %553 = vmatprep.mubr.bf16.mxu0 0
      %554 = vmatmul.mubr.bf16.gmra.mrb[0].mxu0 %v357
      %v555 = vpop.f32.mrb[0].mxu0
      %v556 = vadd.f32 0.0, %v555
      %v557 = vpop.f32.mrb[0].mxu0
      %v558 = vpop.f32.mrb[0].mxu0
      %v559 = vadd.f32 0.0, %v558
      %v560 = vpop.f32.mrb[0].mxu0
      %561 = vmatprep.mubr.bf16.mxu0 0
      %562 = vmatmul.mubr.bf16.gmra.mrb[0].mxu0 %v358
      %v563 = vpop.f32.mrb[0].mxu0
      %v564 = vadd.f32 0.0, %v563
      %v565 = vpop.f32.mrb[0].mxu0
      %v566 = vpop.f32.mrb[0].mxu0
      %v567 = vadd.f32 0.0, %v566
      %v568 = vpop.f32.mrb[0].mxu0
      %569 = vmatprep.mubr.bf16.mxu0 0
      %570 = vmatmul.mubr.bf16.gmra.mrb[0].mxu0 %v359
      %v571 = vpop.f32.mrb[0].mxu0
      %v572 = vadd.f32 0.0, %v571
      %v573 = vpop.f32.mrb[0].mxu0
      %v574 = vpop.f32.mrb[0].mxu0
      %v575 = vadd.f32 0.0, %v574
      %v576 = vpop.f32.mrb[0].mxu0
      %577 = vmatprep.mubr.bf16.mxu0 0
      %578 = vmatmul.mubr.bf16.gmra.mrb[0].mxu0 %v360
      %v579 = vpop.f32.mrb[0].mxu0
      %v580 = vadd.f32 0.0, %v579
      %v581 = vpop.f32.mrb[0].mxu0
      %v582 = vpop.f32.mrb[0].mxu0
      %v583 = vadd.f32 0.0, %v582
      %v584 = vpop.f32.mrb[0].mxu0
      %585 = vdwg.mxu0
      %586 = vst [vmem:[#allocation4] sm:$0xff] %v460
      %587 = vst [vmem:[#allocation4 + $0x8] sm:$0xff] %v463
      %588 = vst [vmem:[#allocation4 + $0x10] sm:$0xff] %v468
      %589 = vst [vmem:[#allocation4 + $0x18] sm:$0xff] %v471
      %590 = vst [vmem:[#allocation4 + $0x20] sm:$0xff] %v476
      %591 = vst [vmem:[#allocation4 + $0x28] sm:$0xff] %v479
      %592 = vst [vmem:[#allocation4 + $0x30] sm:$0xff] %v484
      %593 = vst [vmem:[#allocation4 + $0x38] sm:$0xff] %v487
      %594 = vst [vmem:[#allocation4 + $0x40] sm:$0xff] %v492
      %595 = vst [vmem:[#allocation4 + $0x48] sm:$0xff] %v495
      %596 = vst [vmem:[#allocation4 + $0x50] sm:$0xff] %v500
      %597 = vst [vmem:[#allocation4 + $0x58] sm:$0xff] %v503
      %598 = vst [vmem:[#allocation4 + $0x60] sm:$0xff] %v508
      %599 = vst [vmem:[#allocation4 + $0x68] sm:$0xff] %v511
      %600 = vst [vmem:[#allocation4 + $0x70] sm:$0xff] %v516
      %601 = vst [vmem:[#allocation4 + $0x78] sm:$0xff] %v519
      %602 = vst [vmem:[#allocation4 + $0x80] sm:$0xff] %v524
      %603 = vst [vmem:[#allocation4 + $0x88] sm:$0xff] %v527
      %604 = vst [vmem:[#allocation4 + $0x90] sm:$0xff] %v532
      %605 = vst [vmem:[#allocation4 + $0x98] sm:$0xff] %v535
      %606 = vst [vmem:[#allocation4 + $0xa0] sm:$0xff] %v540
      %607 = vst [vmem:[#allocation4 + $0xa8] sm:$0xff] %v543
      %608 = vst [vmem:[#allocation4 + $0xb0] sm:$0xff] %v548
      %609 = vst [vmem:[#allocation4 + $0xb8] sm:$0xff] %v551
      %610 = vst [vmem:[#allocation4 + $0xc0] sm:$0xff] %v556
      %611 = vst [vmem:[#allocation4 + $0xc8] sm:$0xff] %v559
      %612 = vst [vmem:[#allocation4 + $0xd0] sm:$0xff] %v564
      %613 = vst [vmem:[#allocation4 + $0xd8] sm:$0xff] %v567
      %614 = vst [vmem:[#allocation4 + $0xe0] sm:$0xff] %v572
      %615 = vst [vmem:[#allocation4 + $0xe8] sm:$0xff] %v575
      %616 = vst [vmem:[#allocation4 + $0xf0] sm:$0xff] %v580
      %617 = vst [vmem:[#allocation4 + $0xf8] sm:$0xff] %v583
      %v618 = vld [vmem:[#allocation4] sm:$0xff]
      %v619 = vld [vmem:[#allocation4 + $0x8] sm:$0xff]
      %v620 = vld [vmem:[#allocation4 + $0x10] sm:$0xff]
      %v621 = vld [vmem:[#allocation4 + $0x18] sm:$0xff]
      %v622 = vld [vmem:[#allocation4 + $0x20] sm:$0xff]
      %v623 = vld [vmem:[#allocation4 + $0x28] sm:$0xff]
      %v624 = vld [vmem:[#allocation4 + $0x30] sm:$0xff]
      %v625 = vld [vmem:[#allocation4 + $0x38] sm:$0xff]
      %v626 = vld [vmem:[#allocation4 + $0x40] sm:$0xff]
      %v627 = vld [vmem:[#allocation4 + $0x48] sm:$0xff]
      %v628 = vld [vmem:[#allocation4 + $0x50] sm:$0xff]
      %v629 = vld [vmem:[#allocation4 + $0x58] sm:$0xff]
      %v630 = vld [vmem:[#allocation4 + $0x60] sm:$0xff]
      %v631 = vld [vmem:[#allocation4 + $0x68] sm:$0xff]
      %v632 = vld [vmem:[#allocation4 + $0x70] sm:$0xff]
      %v633 = vld [vmem:[#allocation4 + $0x78] sm:$0xff]
      %v634 = vld [vmem:[#allocation4 + $0x80] sm:$0xff]
      %v635 = vld [vmem:[#allocation4 + $0x88] sm:$0xff]
      %v636 = vld [vmem:[#allocation4 + $0x90] sm:$0xff]
      %v637 = vld [vmem:[#allocation4 + $0x98] sm:$0xff]
      %v638 = vld [vmem:[#allocation4 + $0xa0] sm:$0xff]
      %v639 = vld [vmem:[#allocation4 + $0xa8] sm:$0xff]
      %v640 = vld [vmem:[#allocation4 + $0xb0] sm:$0xff]
      %v641 = vld [vmem:[#allocation4 + $0xb8] sm:$0xff]
      %v642 = vld [vmem:[#allocation4 + $0xc0] sm:$0xff]
      %v643 = vld [vmem:[#allocation4 + $0xc8] sm:$0xff]
      %v644 = vld [vmem:[#allocation4 + $0xd0] sm:$0xff]
      %v645 = vld [vmem:[#allocation4 + $0xd8] sm:$0xff]
      %v646 = vld [vmem:[#allocation4 + $0xe0] sm:$0xff]
      %v647 = vld [vmem:[#allocation4 + $0xe8] sm:$0xff]
      %v648 = vld [vmem:[#allocation4 + $0xf0] sm:$0xff]
      %v649 = vld [vmem:[#allocation4 + $0xf8] sm:$0xff]
      %v650 = vld [vmem:[%s339 + $0x8] sm:$0xff]
      %v651 = vld [vmem:[%s339 + $0x10] sm:$0xff]
      %v652 = vld [vmem:[%s339 + $0x18] sm:$0xff]
      %v653 = vld [vmem:[%s339 + $0x20] sm:$0xff]
      %v654 = vld [vmem:[%s339 + $0x28] sm:$0xff]
      %v655 = vld [vmem:[%s339 + $0x30] sm:$0xff]
      %v656 = vld [vmem:[%s339 + $0x38] sm:$0xff]
      %v657 = vld [vmem:[%s339 + $0x40] sm:$0xff]
      %v658 = vld [vmem:[%s339 + $0x48] sm:$0xff]
      %v659 = vld [vmem:[%s339 + $0x50] sm:$0xff]
      %v660 = vld [vmem:[%s339 + $0x58] sm:$0xff]
      %v661 = vld [vmem:[%s339 + $0x60] sm:$0xff]
      %v662 = vld [vmem:[%s339 + $0x68] sm:$0xff]
      %v663 = vld [vmem:[%s339 + $0x70] sm:$0xff]
      %v664 = vld [vmem:[%s339 + $0x78] sm:$0xff]
      %v665 = vld [vmem:[%s339 + $0x80] sm:$0xff]
      %s666 = scalar_lea.vmem %s1, 64
      %v667 = vld [vmem:[%s666] sm:$0xf]
      %v668 = vld [vmem:[%s666 + $0x4] sm:$0xf]
      %v669 = vld [vmem:[%s666 + $0x8] sm:$0xf]
      %v670 = vld [vmem:[%s666 + $0xc] sm:$0xf]
      %v671 = vld [vmem:[%s666 + $0x10] sm:$0xf]
      %v672 = vld [vmem:[%s666 + $0x14] sm:$0xf]
      %v673 = vld [vmem:[%s666 + $0x18] sm:$0xf]
      %v674 = vld [vmem:[%s666 + $0x1c] sm:$0xf]
      %v675 = vld [vmem:[%s666 + $0x20] sm:$0xf]
      %v676 = vld [vmem:[%s666 + $0x24] sm:$0xf]
      %v677 = vld [vmem:[%s666 + $0x28] sm:$0xf]
      %v678 = vld [vmem:[%s666 + $0x2c] sm:$0xf]
      %v679 = vld [vmem:[%s666 + $0x30] sm:$0xf]
      %v680 = vld [vmem:[%s666 + $0x34] sm:$0xf]
      %v681 = vld [vmem:[%s666 + $0x38] sm:$0xf]
      %v682 = vld [vmem:[%s666 + $0x3c] sm:$0xf]
      %v699 = vunpack.c.l.b16 %v667
      %v700 = vunpack.c.l.b16 %v668
      %v701 = vunpack.c.l.b16 %v669
      %v702 = vunpack.c.l.b16 %v670
      %v703 = vunpack.c.l.b16 %v671
      %v704 = vunpack.c.l.b16 %v672
      %v705 = vunpack.c.l.b16 %v673
      %v706 = vunpack.c.l.b16 %v674
      %v707 = vunpack.c.l.b16 %v675
      %v708 = vunpack.c.l.b16 %v676
      %v709 = vunpack.c.l.b16 %v677
      %v710 = vunpack.c.l.b16 %v678
      %v711 = vunpack.c.l.b16 %v679
      %v712 = vunpack.c.l.b16 %v680
      %v713 = vunpack.c.l.b16 %v681
      %v714 = vunpack.c.l.b16 %v682
      %v715 = vpack.c.b16 %v700, %v699
      %v716 = vpack.c.b16 %v702, %v701
      %v717 = vpack.c.b16 %v704, %v703
      %v718 = vpack.c.b16 %v706, %v705
      %v719 = vpack.c.b16 %v708, %v707
      %v720 = vpack.c.b16 %v710, %v709
      %v721 = vpack.c.b16 %v712, %v711
      %v722 = vpack.c.b16 %v714, %v713
      %731 = vmatprep.subr.bf16.mxu0 0
      %732 = vmatpush1.bf16.msra.mxu0 %v715
      %733 = vmatprep.subr.bf16.mxu0 0
      %734 = vmatpush1.bf16.msra.mxu0 %v716
      %735 = vmatprep.subr.bf16.mxu0 0
      %736 = vmatpush1.bf16.msra.mxu0 %v717
      %737 = vmatprep.subr.bf16.mxu0 0
      %738 = vmatpush1.bf16.msra.mxu0 %v718
      %739 = vmatprep.subr.bf16.mxu0 0
      %740 = vmatpush1.bf16.msra.mxu0 %v719
      %741 = vmatprep.subr.bf16.mxu0 0
      %742 = vmatpush1.bf16.msra.mxu0 %v720
      %743 = vmatprep.subr.bf16.mxu0 0
      %744 = vmatpush1.bf16.msra.mxu0 %v721
      %745 = vmatprep.subr.bf16.mxu0 0
      %746 = vmatpush1.bf16.msra.mxu0 %v722
      %747 = vmatprep.subr.bf16.mxu0 0
      %748 = vmatpush1.bf16.msra.mxu0 0
      %749 = vmatprep.subr.bf16.mxu0 0
      %750 = vmatpush1.bf16.msra.mxu0 0
      %751 = vmatprep.subr.bf16.mxu0 0
      %752 = vmatpush1.bf16.msra.mxu0 0
      %753 = vmatprep.subr.bf16.mxu0 0
      %754 = vmatpush1.bf16.msra.mxu0 0
      %755 = vmatprep.subr.bf16.mxu0 0
      %756 = vmatpush1.bf16.msra.mxu0 0
      %757 = vmatprep.subr.bf16.mxu0 0
      %758 = vmatpush1.bf16.msra.mxu0 0
      %759 = vmatprep.subr.bf16.mxu0 0
      %760 = vmatpush1.bf16.msra.mxu0 0
      %761 = vmatprep.subr.bf16.mxu0 0
      %762 = vmatpush1.bf16.msra.mxu0 0
      %763 = vmatprep.mubr.bf16.mxu0 0
      %764 = vmatmul.mubr.bf16.gmra.mrb[0].mxu0 %v650
      %v765 = vpop.f32.mrb[0].mxu0
      %v766 = vadd.f32 0.0, %v765
      %v767 = vpop.f32.mrb[0].mxu0
      %v768 = vpop.f32.mrb[0].mxu0
      %v769 = vadd.f32 0.0, %v768
      %v770 = vpop.f32.mrb[0].mxu0
      %771 = vmatprep.mubr.bf16.mxu0 0
      %772 = vmatmul.mubr.bf16.gmra.mrb[0].mxu0 %v651
      %v773 = vpop.f32.mrb[0].mxu0
      %v774 = vadd.f32 0.0, %v773
      %v775 = vpop.f32.mrb[0].mxu0
      %v776 = vpop.f32.mrb[0].mxu0
      %v777 = vadd.f32 0.0, %v776
      %v778 = vpop.f32.mrb[0].mxu0
      %779 = vmatprep.mubr.bf16.mxu0 0
      %780 = vmatmul.mubr.bf16.gmra.mrb[0].mxu0 %v652
      %v781 = vpop.f32.mrb[0].mxu0
      %v782 = vadd.f32 0.0, %v781
      %v783 = vpop.f32.mrb[0].mxu0
      %v784 = vpop.f32.mrb[0].mxu0
      %v785 = vadd.f32 0.0, %v784
      %v786 = vpop.f32.mrb[0].mxu0
      %787 = vmatprep.mubr.bf16.mxu0 0
      %788 = vmatmul.mubr.bf16.gmra.mrb[0].mxu0 %v653
      %v789 = vpop.f32.mrb[0].mxu0
      %v790 = vadd.f32 0.0, %v789
      %v791 = vpop.f32.mrb[0].mxu0
      %v792 = vpop.f32.mrb[0].mxu0
      %v793 = vadd.f32 0.0, %v792
      %v794 = vpop.f32.mrb[0].mxu0
      %795 = vmatprep.mubr.bf16.mxu0 0
      %796 = vmatmul.mubr.bf16.gmra.mrb[0].mxu0 %v654
      %v797 = vpop.f32.mrb[0].mxu0
      %v798 = vadd.f32 0.0, %v797
      %v799 = vpop.f32.mrb[0].mxu0
      %v800 = vpop.f32.mrb[0].mxu0
      %v801 = vadd.f32 0.0, %v800
      %v802 = vpop.f32.mrb[0].mxu0
      %803 = vmatprep.mubr.bf16.mxu0 0
      %804 = vmatmul.mubr.bf16.gmra.mrb[0].mxu0 %v655
      %v805 = vpop.f32.mrb[0].mxu0
      %v806 = vadd.f32 0.0, %v805
      %v807 = vpop.f32.mrb[0].mxu0
      %v808 = vpop.f32.mrb[0].mxu0
      %v809 = vadd.f32 0.0, %v808
      %v810 = vpop.f32.mrb[0].mxu0
      %811 = vmatprep.mubr.bf16.mxu0 0
      %812 = vmatmul.mubr.bf16.gmra.mrb[0].mxu0 %v656
      %v813 = vpop.f32.mrb[0].mxu0
      %v814 = vadd.f32 0.0, %v813
      %v815 = vpop.f32.mrb[0].mxu0
      %v816 = vpop.f32.mrb[0].mxu0
      %v817 = vadd.f32 0.0, %v816
      %v818 = vpop.f32.mrb[0].mxu0
      %819 = vmatprep.mubr.bf16.mxu0 0
      %820 = vmatmul.mubr.bf16.gmra.mrb[0].mxu0 %v657
      %v821 = vpop.f32.mrb[0].mxu0
      %v822 = vadd.f32 0.0, %v821
      %v823 = vpop.f32.mrb[0].mxu0
      %v824 = vpop.f32.mrb[0].mxu0
      %v825 = vadd.f32 0.0, %v824
      %v826 = vpop.f32.mrb[0].mxu0
      %827 = vmatprep.mubr.bf16.mxu0 0
      %828 = vmatmul.mubr.bf16.gmra.mrb[0].mxu0 %v658
      %v829 = vpop.f32.mrb[0].mxu0
      %v830 = vadd.f32 0.0, %v829
      %v831 = vpop.f32.mrb[0].mxu0
      %v832 = vpop.f32.mrb[0].mxu0
      %v833 = vadd.f32 0.0, %v832
      %v834 = vpop.f32.mrb[0].mxu0
      %835 = vmatprep.mubr.bf16.mxu0 0
      %836 = vmatmul.mubr.bf16.gmra.mrb[0].mxu0 %v659
      %v837 = vpop.f32.mrb[0].mxu0
      %v838 = vadd.f32 0.0, %v837
      %v839 = vpop.f32.mrb[0].mxu0
      %v840 = vpop.f32.mrb[0].mxu0
      %v841 = vadd.f32 0.0, %v840
      %v842 = vpop.f32.mrb[0].mxu0
      %843 = vmatprep.mubr.bf16.mxu0 0
      %844 = vmatmul.mubr.bf16.gmra.mrb[0].mxu0 %v660
      %v845 = vpop.f32.mrb[0].mxu0
      %v846 = vadd.f32 0.0, %v845
      %v847 = vpop.f32.mrb[0].mxu0
      %v848 = vpop.f32.mrb[0].mxu0
      %v849 = vadd.f32 0.0, %v848
      %v850 = vpop.f32.mrb[0].mxu0
      %851 = vmatprep.mubr.bf16.mxu0 0
      %852 = vmatmul.mubr.bf16.gmra.mrb[0].mxu0 %v661
      %v853 = vpop.f32.mrb[0].mxu0
      %v854 = vadd.f32 0.0, %v853
      %v855 = vpop.f32.mrb[0].mxu0
      %v856 = vpop.f32.mrb[0].mxu0
      %v857 = vadd.f32 0.0, %v856
      %v858 = vpop.f32.mrb[0].mxu0
      %859 = vmatprep.mubr.bf16.mxu0 0
      %860 = vmatmul.mubr.bf16.gmra.mrb[0].mxu0 %v662
      %v861 = vpop.f32.mrb[0].mxu0
      %v862 = vadd.f32 0.0, %v861
      %v863 = vpop.f32.mrb[0].mxu0
      %v864 = vpop.f32.mrb[0].mxu0
      %v865 = vadd.f32 0.0, %v864
      %v866 = vpop.f32.mrb[0].mxu0
      %867 = vmatprep.mubr.bf16.mxu0 0
      %868 = vmatmul.mubr.bf16.gmra.mrb[0].mxu0 %v663
      %v869 = vpop.f32.mrb[0].mxu0
      %v870 = vadd.f32 0.0, %v869
      %v871 = vpop.f32.mrb[0].mxu0
      %v872 = vpop.f32.mrb[0].mxu0
      %v873 = vadd.f32 0.0, %v872
      %v874 = vpop.f32.mrb[0].mxu0
      %875 = vmatprep.mubr.bf16.mxu0 0
      %876 = vmatmul.mubr.bf16.gmra.mrb[0].mxu0 %v664
      %v877 = vpop.f32.mrb[0].mxu0
      %v878 = vadd.f32 0.0, %v877
      %v879 = vpop.f32.mrb[0].mxu0
      %v880 = vpop.f32.mrb[0].mxu0
      %v881 = vadd.f32 0.0, %v880
      %v882 = vpop.f32.mrb[0].mxu0
      %883 = vmatprep.mubr.bf16.mxu0 0
      %884 = vmatmul.mubr.bf16.gmra.mrb[0].mxu0 %v665
      %v885 = vpop.f32.mrb[0].mxu0
      %v886 = vadd.f32 0.0, %v885
      %v887 = vpop.f32.mrb[0].mxu0
      %v888 = vpop.f32.mrb[0].mxu0
      %v889 = vadd.f32 0.0, %v888
      %v890 = vpop.f32.mrb[0].mxu0
      %891 = vdwg.mxu0
      %v892 = vadd.f32 %v618, %v766
      %v893 = vadd.f32 %v619, %v769
      %v894 = vadd.f32 %v620, %v774
      %v895 = vadd.f32 %v621, %v777
      %v896 = vadd.f32 %v622, %v782
      %v897 = vadd.f32 %v623, %v785
      %v898 = vadd.f32 %v624, %v790
      %v899 = vadd.f32 %v625, %v793
      %v900 = vadd.f32 %v626, %v798
      %v901 = vadd.f32 %v627, %v801
      %v902 = vadd.f32 %v628, %v806
      %v903 = vadd.f32 %v629, %v809
      %v904 = vadd.f32 %v630, %v814
      %v905 = vadd.f32 %v631, %v817
      %v906 = vadd.f32 %v632, %v822
      %v907 = vadd.f32 %v633, %v825
      %v908 = vadd.f32 %v634, %v830
      %v909 = vadd.f32 %v635, %v833
      %v910 = vadd.f32 %v636, %v838
      %v911 = vadd.f32 %v637, %v841
      %v912 = vadd.f32 %v638, %v846
      %v913 = vadd.f32 %v639, %v849
      %v914 = vadd.f32 %v640, %v854
      %v915 = vadd.f32 %v641, %v857
      %v916 = vadd.f32 %v642, %v862
      %v917 = vadd.f32 %v643, %v865
      %v918 = vadd.f32 %v644, %v870
      %v919 = vadd.f32 %v645, %v873
      %v920 = vadd.f32 %v646, %v878
      %v921 = vadd.f32 %v647, %v881
      %v922 = vadd.f32 %v648, %v886
      %v923 = vadd.f32 %v649, %v889
      %924 = vst [vmem:[#allocation4] sm:$0xff] %v892
      %925 = vst [vmem:[#allocation4 + $0x8] sm:$0xff] %v893
      %926 = vst [vmem:[#allocation4 + $0x10] sm:$0xff] %v894
      %927 = vst [vmem:[#allocation4 + $0x18] sm:$0xff] %v895
      %928 = vst [vmem:[#allocation4 + $0x20] sm:$0xff] %v896
      %929 = vst [vmem:[#allocation4 + $0x28] sm:$0xff] %v897
      %930 = vst [vmem:[#allocation4 + $0x30] sm:$0xff] %v898
      %931 = vst [vmem:[#allocation4 + $0x38] sm:$0xff] %v899
      %932 = vst [vmem:[#allocation4 + $0x40] sm:$0xff] %v900
      %933 = vst [vmem:[#allocation4 + $0x48] sm:$0xff] %v901
      %934 = vst [vmem:[#allocation4 + $0x50] sm:$0xff] %v902
      %935 = vst [vmem:[#allocation4 + $0x58] sm:$0xff] %v903
      %936 = vst [vmem:[#allocation4 + $0x60] sm:$0xff] %v904
      %937 = vst [vmem:[#allocation4 + $0x68] sm:$0xff] %v905
      %938 = vst [vmem:[#allocation4 + $0x70] sm:$0xff] %v906
      %939 = vst [vmem:[#allocation4 + $0x78] sm:$0xff] %v907
      %940 = vst [vmem:[#allocation4 + $0x80] sm:$0xff] %v908
      %941 = vst [vmem:[#allocation4 + $0x88] sm:$0xff] %v909
      %942 = vst [vmem:[#allocation4 + $0x90] sm:$0xff] %v910
      %943 = vst [vmem:[#allocation4 + $0x98] sm:$0xff] %v911
      %944 = vst [vmem:[#allocation4 + $0xa0] sm:$0xff] %v912
      %945 = vst [vmem:[#allocation4 + $0xa8] sm:$0xff] %v913
      %946 = vst [vmem:[#allocation4 + $0xb0] sm:$0xff] %v914
      %947 = vst [vmem:[#allocation4 + $0xb8] sm:$0xff] %v915
      %948 = vst [vmem:[#allocation4 + $0xc0] sm:$0xff] %v916
      %949 = vst [vmem:[#allocation4 + $0xc8] sm:$0xff] %v917
      %950 = vst [vmem:[#allocation4 + $0xd0] sm:$0xff] %v918
      %951 = vst [vmem:[#allocation4 + $0xd8] sm:$0xff] %v919
      %952 = vst [vmem:[#allocation4 + $0xe0] sm:$0xff] %v920
      %953 = vst [vmem:[#allocation4 + $0xe8] sm:$0xff] %v921
      %954 = vst [vmem:[#allocation4 + $0xf0] sm:$0xff] %v922
      %955 = vst [vmem:[#allocation4 + $0xf8] sm:$0xff] %v923
      %v956 = vld [vmem:[#allocation4] sm:$0xff]
      %v957 = vld [vmem:[#allocation4 + $0x8] sm:$0xff]
      %v958 = vld [vmem:[#allocation4 + $0x10] sm:$0xff]
      %v959 = vld [vmem:[#allocation4 + $0x18] sm:$0xff]
      %v960 = vld [vmem:[#allocation4 + $0x20] sm:$0xff]
      %v961 = vld [vmem:[#allocation4 + $0x28] sm:$0xff]
      %v962 = vld [vmem:[#allocation4 + $0x30] sm:$0xff]
      %v963 = vld [vmem:[#allocation4 + $0x38] sm:$0xff]
      %v964 = vld [vmem:[#allocation4 + $0x40] sm:$0xff]
      %v965 = vld [vmem:[#allocation4 + $0x48] sm:$0xff]
      %v966 = vld [vmem:[#allocation4 + $0x50] sm:$0xff]
      %v967 = vld [vmem:[#allocation4 + $0x58] sm:$0xff]
      %v968 = vld [vmem:[#allocation4 + $0x60] sm:$0xff]
      %v969 = vld [vmem:[#allocation4 + $0x68] sm:$0xff]
      %v970 = vld [vmem:[#allocation4 + $0x70] sm:$0xff]
      %v971 = vld [vmem:[#allocation4 + $0x78] sm:$0xff]
      %v972 = vld [vmem:[#allocation4 + $0x80] sm:$0xff]
      %v973 = vld [vmem:[#allocation4 + $0x88] sm:$0xff]
      %v974 = vld [vmem:[#allocation4 + $0x90] sm:$0xff]
      %v975 = vld [vmem:[#allocation4 + $0x98] sm:$0xff]
      %v976 = vld [vmem:[#allocation4 + $0xa0] sm:$0xff]
      %v977 = vld [vmem:[#allocation4 + $0xa8] sm:$0xff]
      %v978 = vld [vmem:[#allocation4 + $0xb0] sm:$0xff]
      %v979 = vld [vmem:[#allocation4 + $0xb8] sm:$0xff]
      %v980 = vld [vmem:[#allocation4 + $0xc0] sm:$0xff]
      %v981 = vld [vmem:[#allocation4 + $0xc8] sm:$0xff]
      %v982 = vld [vmem:[#allocation4 + $0xd0] sm:$0xff]
      %v983 = vld [vmem:[#allocation4 + $0xd8] sm:$0xff]
      %v984 = vld [vmem:[#allocation4 + $0xe0] sm:$0xff]
      %v985 = vld [vmem:[#allocation4 + $0xe8] sm:$0xff]
      %v986 = vld [vmem:[#allocation4 + $0xf0] sm:$0xff]
      %v987 = vld [vmem:[#allocation4 + $0xf8] sm:$0xff]
      %v988 = vld [vmem:[%s339 + $0x10] sm:$0xff]
      %v989 = vld [vmem:[%s339 + $0x18] sm:$0xff]
      %v990 = vld [vmem:[%s339 + $0x20] sm:$0xff]
      %v991 = vld [vmem:[%s339 + $0x28] sm:$0xff]
      %v992 = vld [vmem:[%s339 + $0x30] sm:$0xff]
      %v993 = vld [vmem:[%s339 + $0x38] sm:$0xff]
      %v994 = vld [vmem:[%s339 + $0x40] sm:$0xff]
      %v995 = vld [vmem:[%s339 + $0x48] sm:$0xff]
      %v996 = vld [vmem:[%s339 + $0x50] sm:$0xff]
      %v997 = vld [vmem:[%s339 + $0x58] sm:$0xff]
      %v998 = vld [vmem:[%s339 + $0x60] sm:$0xff]
      %v999 = vld [vmem:[%s339 + $0x68] sm:$0xff]
      %v1000 = vld [vmem:[%s339 + $0x70] sm:$0xff]
      %v1001 = vld [vmem:[%s339 + $0x78] sm:$0xff]
      %v1002 = vld [vmem:[%s339 + $0x80] sm:$0xff]
      %v1003 = vld [vmem:[%s339 + $0x88] sm:$0xff]
      %s1004 = scalar_lea.vmem %s1, 128
      %v1005 = vld [vmem:[%s1004] sm:$0xf]
      %v1006 = vld [vmem:[%s1004 + $0x4] sm:$0xf]
      %v1007 = vld [vmem:[%s1004 + $0x8] sm:$0xf]
      %v1008 = vld [vmem:[%s1004 + $0xc] sm:$0xf]
      %v1009 = vld [vmem:[%s1004 + $0x10] sm:$0xf]
      %v1010 = vld [vmem:[%s1004 + $0x14] sm:$0xf]
      %v1011 = vld [vmem:[%s1004 + $0x18] sm:$0xf]
      %v1012 = vld [vmem:[%s1004 + $0x1c] sm:$0xf]
      %v1013 = vld [vmem:[%s1004 + $0x20] sm:$0xf]
      %v1014 = vld [vmem:[%s1004 + $0x24] sm:$0xf]
      %v1015 = vld [vmem:[%s1004 + $0x28] sm:$0xf]
      %v1016 = vld [vmem:[%s1004 + $0x2c] sm:$0xf]
      %v1017 = vld [vmem:[%s1004 + $0x30] sm:$0xf]
      %v1018 = vld [vmem:[%s1004 + $0x34] sm:$0xf]
      %v1019 = vld [vmem:[%s1004 + $0x38] sm:$0xf]
      %v1020 = vld [vmem:[%s1004 + $0x3c] sm:$0xf]
      %v1037 = vunpack.c.l.b16 %v1005
      %v1038 = vunpack.c.l.b16 %v1006
      %v1039 = vunpack.c.l.b16 %v1007
      %v1040 = vunpack.c.l.b16 %v1008
      %v1041 = vunpack.c.l.b16 %v1009
      %v1042 = vunpack.c.l.b16 %v1010
      %v1043 = vunpack.c.l.b16 %v1011
      %v1044 = vunpack.c.l.b16 %v1012
      %v1045 = vunpack.c.l.b16 %v1013
      %v1046 = vunpack.c.l.b16 %v1014
      %v1047 = vunpack.c.l.b16 %v1015
      %v1048 = vunpack.c.l.b16 %v1016
      %v1049 = vunpack.c.l.b16 %v1017
      %v1050 = vunpack.c.l.b16 %v1018
      %v1051 = vunpack.c.l.b16 %v1019
      %v1052 = vunpack.c.l.b16 %v1020
      %v1053 = vpack.c.b16 %v1038, %v1037
      %v1054 = vpack.c.b16 %v1040, %v1039
      %v1055 = vpack.c.b16 %v1042, %v1041
      %v1056 = vpack.c.b16 %v1044, %v1043
      %v1057 = vpack.c.b16 %v1046, %v1045
      %v1058 = vpack.c.b16 %v1048, %v1047
      %v1059 = vpack.c.b16 %v1050, %v1049
      %v1060 = vpack.c.b16 %v1052, %v1051
      %1069 = vmatprep.subr.bf16.mxu0 0
      %1070 = vmatpush1.bf16.msra.mxu0 %v1053
      %1071 = vmatprep.subr.bf16.mxu0 0
      %1072 = vmatpush1.bf16.msra.mxu0 %v1054
      %1073 = vmatprep.subr.bf16.mxu0 0
      %1074 = vmatpush1.bf16.msra.mxu0 %v1055
      %1075 = vmatprep.subr.bf16.mxu0 0
      %1076 = vmatpush1.bf16.msra.mxu0 %v1056
      %1077 = vmatprep.subr.bf16.mxu0 0
      %1078 = vmatpush1.bf16.msra.mxu0 %v1057
      %1079 = vmatprep.subr.bf16.mxu0 0
      %1080 = vmatpush1.bf16.msra.mxu0 %v1058
      %1081 = vmatprep.subr.bf16.mxu0 0
      %1082 = vmatpush1.bf16.msra.mxu0 %v1059
      %1083 = vmatprep.subr.bf16.mxu0 0
      %1084 = vmatpush1.bf16.msra.mxu0 %v1060
      %1085 = vmatprep.subr.bf16.mxu0 0
      %1086 = vmatpush1.bf16.msra.mxu0 0
      %1087 = vmatprep.subr.bf16.mxu0 0
      %1088 = vmatpush1.bf16.msra.mxu0 0
      %1089 = vmatprep.subr.bf16.mxu0 0
      %1090 = vmatpush1.bf16.msra.mxu0 0
      %1091 = vmatprep.subr.bf16.mxu0 0
      %1092 = vmatpush1.bf16.msra.mxu0 0
      %1093 = vmatprep.subr.bf16.mxu0 0
      %1094 = vmatpush1.bf16.msra.mxu0 0
      %1095 = vmatprep.subr.bf16.mxu0 0
      %1096 = vmatpush1.bf16.msra.mxu0 0
      %1097 = vmatprep.subr.bf16.mxu0 0
      %1098 = vmatpush1.bf16.msra.mxu0 0
      %1099 = vmatprep.subr.bf16.mxu0 0
      %1100 = vmatpush1.bf16.msra.mxu0 0
      %1101 = vmatprep.mubr.bf16.mxu0 0
      %1102 = vmatmul.mubr.bf16.gmra.mrb[0].mxu0 %v988
      %v1103 = vpop.f32.mrb[0].mxu0
      %v1104 = vadd.f32 0.0, %v1103
      %v1105 = vpop.f32.mrb[0].mxu0
      %v1106 = vpop.f32.mrb[0].mxu0
      %v1107 = vadd.f32 0.0, %v1106
      %v1108 = vpop.f32.mrb[0].mxu0
      %1109 = vmatprep.mubr.bf16.mxu0 0
      %1110 = vmatmul.mubr.bf16.gmra.mrb[0].mxu0 %v989
      %v1111 = vpop.f32.mrb[0].mxu0
      %v1112 = vadd.f32 0.0, %v1111
      %v1113 = vpop.f32.mrb[0].mxu0
      %v1114 = vpop.f32.mrb[0].mxu0
      %v1115 = vadd.f32 0.0, %v1114
      %v1116 = vpop.f32.mrb[0].mxu0
      %1117 = vmatprep.mubr.bf16.mxu0 0
      %1118 = vmatmul.mubr.bf16.gmra.mrb[0].mxu0 %v990
      %v1119 = vpop.f32.mrb[0].mxu0
      %v1120 = vadd.f32 0.0, %v1119
      %v1121 = vpop.f32.mrb[0].mxu0
      %v1122 = vpop.f32.mrb[0].mxu0
      %v1123 = vadd.f32 0.0, %v1122
      %v1124 = vpop.f32.mrb[0].mxu0
      %1125 = vmatprep.mubr.bf16.mxu0 0
      %1126 = vmatmul.mubr.bf16.gmra.mrb[0].mxu0 %v991
      %v1127 = vpop.f32.mrb[0].mxu0
      %v1128 = vadd.f32 0.0, %v1127
      %v1129 = vpop.f32.mrb[0].mxu0
      %v1130 = vpop.f32.mrb[0].mxu0
      %v1131 = vadd.f32 0.0, %v1130
      %v1132 = vpop.f32.mrb[0].mxu0
      %1133 = vmatprep.mubr.bf16.mxu0 0
      %1134 = vmatmul.mubr.bf16.gmra.mrb[0].mxu0 %v992
      %v1135 = vpop.f32.mrb[0].mxu0
      %v1136 = vadd.f32 0.0, %v1135
      %v1137 = vpop.f32.mrb[0].mxu0
      %v1138 = vpop.f32.mrb[0].mxu0
      %v1139 = vadd.f32 0.0, %v1138
      %v1140 = vpop.f32.mrb[0].mxu0
      %1141 = vmatprep.mubr.bf16.mxu0 0
      %1142 = vmatmul.mubr.bf16.gmra.mrb[0].mxu0 %v993
      %v1143 = vpop.f32.mrb[0].mxu0
      %v1144 = vadd.f32 0.0, %v1143
      %v1145 = vpop.f32.mrb[0].mxu0
      %v1146 = vpop.f32.mrb[0].mxu0
      %v1147 = vadd.f32 0.0, %v1146
      %v1148 = vpop.f32.mrb[0].mxu0
      %1149 = vmatprep.mubr.bf16.mxu0 0
      %1150 = vmatmul.mubr.bf16.gmra.mrb[0].mxu0 %v994
      %v1151 = vpop.f32.mrb[0].mxu0
      %v1152 = vadd.f32 0.0, %v1151
      %v1153 = vpop.f32.mrb[0].mxu0
      %v1154 = vpop.f32.mrb[0].mxu0
      %v1155 = vadd.f32 0.0, %v1154
      %v1156 = vpop.f32.mrb[0].mxu0
      %1157 = vmatprep.mubr.bf16.mxu0 0
      %1158 = vmatmul.mubr.bf16.gmra.mrb[0].mxu0 %v995
      %v1159 = vpop.f32.mrb[0].mxu0
      %v1160 = vadd.f32 0.0, %v1159
      %v1161 = vpop.f32.mrb[0].mxu0
      %v1162 = vpop.f32.mrb[0].mxu0
      %v1163 = vadd.f32 0.0, %v1162
      %v1164 = vpop.f32.mrb[0].mxu0
      %1165 = vmatprep.mubr.bf16.mxu0 0
      %1166 = vmatmul.mubr.bf16.gmra.mrb[0].mxu0 %v996
      %v1167 = vpop.f32.mrb[0].mxu0
      %v1168 = vadd.f32 0.0, %v1167
      %v1169 = vpop.f32.mrb[0].mxu0
      %v1170 = vpop.f32.mrb[0].mxu0
      %v1171 = vadd.f32 0.0, %v1170
      %v1172 = vpop.f32.mrb[0].mxu0
      %1173 = vmatprep.mubr.bf16.mxu0 0
      %1174 = vmatmul.mubr.bf16.gmra.mrb[0].mxu0 %v997
      %v1175 = vpop.f32.mrb[0].mxu0
      %v1176 = vadd.f32 0.0, %v1175
      %v1177 = vpop.f32.mrb[0].mxu0
      %v1178 = vpop.f32.mrb[0].mxu0
      %v1179 = vadd.f32 0.0, %v1178
      %v1180 = vpop.f32.mrb[0].mxu0
      %1181 = vmatprep.mubr.bf16.mxu0 0
      %1182 = vmatmul.mubr.bf16.gmra.mrb[0].mxu0 %v998
      %v1183 = vpop.f32.mrb[0].mxu0
      %v1184 = vadd.f32 0.0, %v1183
      %v1185 = vpop.f32.mrb[0].mxu0
      %v1186 = vpop.f32.mrb[0].mxu0
      %v1187 = vadd.f32 0.0, %v1186
      %v1188 = vpop.f32.mrb[0].mxu0
      %1189 = vmatprep.mubr.bf16.mxu0 0
      %1190 = vmatmul.mubr.bf16.gmra.mrb[0].mxu0 %v999
      %v1191 = vpop.f32.mrb[0].mxu0
      %v1192 = vadd.f32 0.0, %v1191
      %v1193 = vpop.f32.mrb[0].mxu0
      %v1194 = vpop.f32.mrb[0].mxu0
      %v1195 = vadd.f32 0.0, %v1194
      %v1196 = vpop.f32.mrb[0].mxu0
      %1197 = vmatprep.mubr.bf16.mxu0 0
      %1198 = vmatmul.mubr.bf16.gmra.mrb[0].mxu0 %v1000
      %v1199 = vpop.f32.mrb[0].mxu0
      %v1200 = vadd.f32 0.0, %v1199
      %v1201 = vpop.f32.mrb[0].mxu0
      %v1202 = vpop.f32.mrb[0].mxu0
      %v1203 = vadd.f32 0.0, %v1202
      %v1204 = vpop.f32.mrb[0].mxu0
      %1205 = vmatprep.mubr.bf16.mxu0 0
      %1206 = vmatmul.mubr.bf16.gmra.mrb[0].mxu0 %v1001
      %v1207 = vpop.f32.mrb[0].mxu0
      %v1208 = vadd.f32 0.0, %v1207
      %v1209 = vpop.f32.mrb[0].mxu0
      %v1210 = vpop.f32.mrb[0].mxu0
      %v1211 = vadd.f32 0.0, %v1210
      %v1212 = vpop.f32.mrb[0].mxu0
      %1213 = vmatprep.mubr.bf16.mxu0 0
      %1214 = vmatmul.mubr.bf16.gmra.mrb[0].mxu0 %v1002
      %v1215 = vpop.f32.mrb[0].mxu0
      %v1216 = vadd.f32 0.0, %v1215
      %v1217 = vpop.f32.mrb[0].mxu0
      %v1218 = vpop.f32.mrb[0].mxu0
      %v1219 = vadd.f32 0.0, %v1218
      %v1220 = vpop.f32.mrb[0].mxu0
      %1221 = vmatprep.mubr.bf16.mxu0 0
      %1222 = vmatmul.mubr.bf16.gmra.mrb[0].mxu0 %v1003
      %v1223 = vpop.f32.mrb[0].mxu0
      %v1224 = vadd.f32 0.0, %v1223
      %v1225 = vpop.f32.mrb[0].mxu0
      %v1226 = vpop.f32.mrb[0].mxu0
      %v1227 = vadd.f32 0.0, %v1226
      %v1228 = vpop.f32.mrb[0].mxu0
      %1229 = vdwg.mxu0
      %v1230 = vadd.f32 %v956, %v1104
      %v1231 = vadd.f32 %v957, %v1107
      %v1232 = vadd.f32 %v958, %v1112
      %v1233 = vadd.f32 %v959, %v1115
      %v1234 = vadd.f32 %v960, %v1120
      %v1235 = vadd.f32 %v961, %v1123
      %v1236 = vadd.f32 %v962, %v1128
      %v1237 = vadd.f32 %v963, %v1131
      %v1238 = vadd.f32 %v964, %v1136
      %v1239 = vadd.f32 %v965, %v1139
      %v1240 = vadd.f32 %v966, %v1144
      %v1241 = vadd.f32 %v967, %v1147
      %v1242 = vadd.f32 %v968, %v1152
      %v1243 = vadd.f32 %v969, %v1155
      %v1244 = vadd.f32 %v970, %v1160
      %v1245 = vadd.f32 %v971, %v1163
      %v1246 = vadd.f32 %v972, %v1168
      %v1247 = vadd.f32 %v973, %v1171
      %v1248 = vadd.f32 %v974, %v1176
      %v1249 = vadd.f32 %v975, %v1179
      %v1250 = vadd.f32 %v976, %v1184
      %v1251 = vadd.f32 %v977, %v1187
      %v1252 = vadd.f32 %v978, %v1192
      %v1253 = vadd.f32 %v979, %v1195
      %v1254 = vadd.f32 %v980, %v1200
      %v1255 = vadd.f32 %v981, %v1203
      %v1256 = vadd.f32 %v982, %v1208
      %v1257 = vadd.f32 %v983, %v1211
      %v1258 = vadd.f32 %v984, %v1216
      %v1259 = vadd.f32 %v985, %v1219
      %v1260 = vadd.f32 %v986, %v1224
      %v1261 = vadd.f32 %v987, %v1227
      %1262 = vst [vmem:[#allocation4] sm:$0xff] %v1230
      %1263 = vst [vmem:[#allocation4 + $0x8] sm:$0xff] %v1231
      %1264 = vst [vmem:[#allocation4 + $0x10] sm:$0xff] %v1232
      %1265 = vst [vmem:[#allocation4 + $0x18] sm:$0xff] %v1233
      %1266 = vst [vmem:[#allocation4 + $0x20] sm:$0xff] %v1234
      %1267 = vst [vmem:[#allocation4 + $0x28] sm:$0xff] %v1235
      %1268 = vst [vmem:[#allocation4 + $0x30] sm:$0xff] %v1236
      %1269 = vst [vmem:[#allocation4 + $0x38] sm:$0xff] %v1237
      %1270 = vst [vmem:[#allocation4 + $0x40] sm:$0xff] %v1238
      %1271 = vst [vmem:[#allocation4 + $0x48] sm:$0xff] %v1239
      %1272 = vst [vmem:[#allocation4 + $0x50] sm:$0xff] %v1240
      %1273 = vst [vmem:[#allocation4 + $0x58] sm:$0xff] %v1241
      %1274 = vst [vmem:[#allocation4 + $0x60] sm:$0xff] %v1242
      %1275 = vst [vmem:[#allocation4 + $0x68] sm:$0xff] %v1243
      %1276 = vst [vmem:[#allocation4 + $0x70] sm:$0xff] %v1244
      %1277 = vst [vmem:[#allocation4 + $0x78] sm:$0xff] %v1245
      %1278 = vst [vmem:[#allocation4 + $0x80] sm:$0xff] %v1246
      %1279 = vst [vmem:[#allocation4 + $0x88] sm:$0xff] %v1247
      %1280 = vst [vmem:[#allocation4 + $0x90] sm:$0xff] %v1248
      %1281 = vst [vmem:[#allocation4 + $0x98] sm:$0xff] %v1249
      %1282 = vst [vmem:[#allocation4 + $0xa0] sm:$0xff] %v1250
      %1283 = vst [vmem:[#allocation4 + $0xa8] sm:$0xff] %v1251
      %1284 = vst [vmem:[#allocation4 + $0xb0] sm:$0xff] %v1252
      %1285 = vst [vmem:[#allocation4 + $0xb8] sm:$0xff] %v1253
      %1286 = vst [vmem:[#allocation4 + $0xc0] sm:$0xff] %v1254
      %1287 = vst [vmem:[#allocation4 + $0xc8] sm:$0xff] %v1255
      %1288 = vst [vmem:[#allocation4 + $0xd0] sm:$0xff] %v1256
      %1289 = vst [vmem:[#allocation4 + $0xd8] sm:$0xff] %v1257
      %1290 = vst [vmem:[#allocation4 + $0xe0] sm:$0xff] %v1258
      %1291 = vst [vmem:[#allocation4 + $0xe8] sm:$0xff] %v1259
      %1292 = vst [vmem:[#allocation4 + $0xf0] sm:$0xff] %v1260
      %1293 = vst [vmem:[#allocation4 + $0xf8] sm:$0xff] %v1261
      %v1294 = vld [vmem:[#allocation4] sm:$0xff]
      %v1295 = vld [vmem:[#allocation4 + $0x8] sm:$0xff]
      %v1296 = vld [vmem:[#allocation4 + $0x10] sm:$0xff]
      %v1297 = vld [vmem:[#allocation4 + $0x18] sm:$0xff]
      %v1298 = vld [vmem:[#allocation4 + $0x20] sm:$0xff]
      %v1299 = vld [vmem:[#allocation4 + $0x28] sm:$0xff]
      %v1300 = vld [vmem:[#allocation4 + $0x30] sm:$0xff]
      %v1301 = vld [vmem:[#allocation4 + $0x38] sm:$0xff]
      %v1302 = vld [vmem:[#allocation4 + $0x40] sm:$0xff]
      %v1303 = vld [vmem:[#allocation4 + $0x48] sm:$0xff]
      %v1304 = vld [vmem:[#allocation4 + $0x50] sm:$0xff]
      %v1305 = vld [vmem:[#allocation4 + $0x58] sm:$0xff]
      %v1306 = vld [vmem:[#allocation4 + $0x60] sm:$0xff]
      %v1307 = vld [vmem:[#allocation4 + $0x68] sm:$0xff]
      %v1308 = vld [vmem:[#allocation4 + $0x70] sm:$0xff]
      %v1309 = vld [vmem:[#allocation4 + $0x78] sm:$0xff]
      %v1310 = vld [vmem:[#allocation4 + $0x80] sm:$0xff]
      %v1311 = vld [vmem:[#allocation4 + $0x88] sm:$0xff]
      %v1312 = vld [vmem:[#allocation4 + $0x90] sm:$0xff]
      %v1313 = vld [vmem:[#allocation4 + $0x98] sm:$0xff]
      %v1314 = vld [vmem:[#allocation4 + $0xa0] sm:$0xff]
      %v1315 = vld [vmem:[#allocation4 + $0xa8] sm:$0xff]
      %v1316 = vld [vmem:[#allocation4 + $0xb0] sm:$0xff]
      %v1317 = vld [vmem:[#allocation4 + $0xb8] sm:$0xff]
      %v1318 = vld [vmem:[#allocation4 + $0xc0] sm:$0xff]
      %v1319 = vld [vmem:[#allocation4 + $0xc8] sm:$0xff]
      %v1320 = vld [vmem:[#allocation4 + $0xd0] sm:$0xff]
      %v1321 = vld [vmem:[#allocation4 + $0xd8] sm:$0xff]
      %v1322 = vld [vmem:[#allocation4 + $0xe0] sm:$0xff]
      %v1323 = vld [vmem:[#allocation4 + $0xe8] sm:$0xff]
      %v1324 = vld [vmem:[#allocation4 + $0xf0] sm:$0xff]
      %v1325 = vld [vmem:[#allocation4 + $0xf8] sm:$0xff]
      %v1326 = vld [vmem:[%s2] sm:$0x1]
      %v1328 = vlaneseq
      %v1329 = vshrl.u32 %v1328, 7
      %v1330 = vsub.s32 0, %v1329
      %v1331 = vrot.slane %v1326, %v1330
      %v1333 = vmul.f32 %v1294, %v1331
      %v1334 = vmul.f32 %v1295, %v1331
      %v1335 = vmul.f32 %v1296, %v1331
      %v1336 = vmul.f32 %v1297, %v1331
      %v1337 = vmul.f32 %v1298, %v1331
      %v1338 = vmul.f32 %v1299, %v1331
      %v1339 = vmul.f32 %v1300, %v1331
      %v1340 = vmul.f32 %v1301, %v1331
      %v1341 = vmul.f32 %v1302, %v1331
      %v1342 = vmul.f32 %v1303, %v1331
      %v1343 = vmul.f32 %v1304, %v1331
      %v1344 = vmul.f32 %v1305, %v1331
      %v1345 = vmul.f32 %v1306, %v1331
      %v1346 = vmul.f32 %v1307, %v1331
      %v1347 = vmul.f32 %v1308, %v1331
      %v1348 = vmul.f32 %v1309, %v1331
      %v1349 = vmul.f32 %v1310, %v1331
      %v1350 = vmul.f32 %v1311, %v1331
      %v1351 = vmul.f32 %v1312, %v1331
      %v1352 = vmul.f32 %v1313, %v1331
      %v1353 = vmul.f32 %v1314, %v1331
      %v1354 = vmul.f32 %v1315, %v1331
      %v1355 = vmul.f32 %v1316, %v1331
      %v1356 = vmul.f32 %v1317, %v1331
      %v1357 = vmul.f32 %v1318, %v1331
      %v1358 = vmul.f32 %v1319, %v1331
      %v1359 = vmul.f32 %v1320, %v1331
      %v1360 = vmul.f32 %v1321, %v1331
      %v1361 = vmul.f32 %v1322, %v1331
      %v1362 = vmul.f32 %v1323, %v1331
      %v1363 = vmul.f32 %v1324, %v1331
      %v1364 = vmul.f32 %v1325, %v1331
      %v1365 = vld [vmem:[%s3] sm:$0x1]
      %v1367 = vlaneseq
      %v1368 = vshrl.u32 %v1367, 7
      %v1369 = vsub.s32 0, %v1368
      %v1370 = vrot.slane %v1365, %v1369
      %v1372 = vadd.f32 %v1333, %v1370
      %v1373 = vadd.f32 %v1334, %v1370
      %v1374 = vadd.f32 %v1335, %v1370
      %v1375 = vadd.f32 %v1336, %v1370
      %v1376 = vadd.f32 %v1337, %v1370
      %v1377 = vadd.f32 %v1338, %v1370
      %v1378 = vadd.f32 %v1339, %v1370
      %v1379 = vadd.f32 %v1340, %v1370
      %v1380 = vadd.f32 %v1341, %v1370
      %v1381 = vadd.f32 %v1342, %v1370
      %v1382 = vadd.f32 %v1343, %v1370
      %v1383 = vadd.f32 %v1344, %v1370
      %v1384 = vadd.f32 %v1345, %v1370
      %v1385 = vadd.f32 %v1346, %v1370
      %v1386 = vadd.f32 %v1347, %v1370
      %v1387 = vadd.f32 %v1348, %v1370
      %v1388 = vadd.f32 %v1349, %v1370
      %v1389 = vadd.f32 %v1350, %v1370
      %v1390 = vadd.f32 %v1351, %v1370
      %v1391 = vadd.f32 %v1352, %v1370
      %v1392 = vadd.f32 %v1353, %v1370
      %v1393 = vadd.f32 %v1354, %v1370
      %v1394 = vadd.f32 %v1355, %v1370
      %v1395 = vadd.f32 %v1356, %v1370
      %v1396 = vadd.f32 %v1357, %v1370
      %v1397 = vadd.f32 %v1358, %v1370
      %v1398 = vadd.f32 %v1359, %v1370
      %v1399 = vadd.f32 %v1360, %v1370
      %v1400 = vadd.f32 %v1361, %v1370
      %v1401 = vadd.f32 %v1362, %v1370
      %v1402 = vadd.f32 %v1363, %v1370
      %v1403 = vadd.f32 %v1364, %v1370
      %v1404 = vmax.f32 %v1372, 0.0
      %v1405 = vmax.f32 %v1373, 0.0
      %v1406 = vmax.f32 %v1374, 0.0
      %v1407 = vmax.f32 %v1375, 0.0
      %v1408 = vmax.f32 %v1376, 0.0
      %v1409 = vmax.f32 %v1377, 0.0
      %v1410 = vmax.f32 %v1378, 0.0
      %v1411 = vmax.f32 %v1379, 0.0
      %v1412 = vmax.f32 %v1380, 0.0
      %v1413 = vmax.f32 %v1381, 0.0
      %v1414 = vmax.f32 %v1382, 0.0
      %v1415 = vmax.f32 %v1383, 0.0
      %v1416 = vmax.f32 %v1384, 0.0
      %v1417 = vmax.f32 %v1385, 0.0
      %v1418 = vmax.f32 %v1386, 0.0
      %v1419 = vmax.f32 %v1387, 0.0
      %v1420 = vmax.f32 %v1388, 0.0
      %v1421 = vmax.f32 %v1389, 0.0
      %v1422 = vmax.f32 %v1390, 0.0
      %v1423 = vmax.f32 %v1391, 0.0
      %v1424 = vmax.f32 %v1392, 0.0
      %v1425 = vmax.f32 %v1393, 0.0
      %v1426 = vmax.f32 %v1394, 0.0
      %v1427 = vmax.f32 %v1395, 0.0
      %v1428 = vmax.f32 %v1396, 0.0
      %v1429 = vmax.f32 %v1397, 0.0
      %v1430 = vmax.f32 %v1398, 0.0
      %v1431 = vmax.f32 %v1399, 0.0
      %v1432 = vmax.f32 %v1400, 0.0
      %v1433 = vmax.f32 %v1401, 0.0
      %v1434 = vmax.f32 %v1402, 0.0
      %v1435 = vmax.f32 %v1403, 0.0
      %1436 = vst [vmem:[%s151] sm:$0xff] %v1404
      %1437 = vst [vmem:[%s151 + $0x8] sm:$0xff] %v1405
      %1438 = vst [vmem:[%s151 + $0x10] sm:$0xff] %v1406
      %1439 = vst [vmem:[%s151 + $0x18] sm:$0xff] %v1407
      %1440 = vst [vmem:[%s151 + $0x20] sm:$0xff] %v1408
      %1441 = vst [vmem:[%s151 + $0x28] sm:$0xff] %v1409
      %1442 = vst [vmem:[%s151 + $0x30] sm:$0xff] %v1410
      %1443 = vst [vmem:[%s151 + $0x38] sm:$0xff] %v1411
      %1444 = vst [vmem:[%s151 + $0x40] sm:$0xff] %v1412
      %1445 = vst [vmem:[%s151 + $0x48] sm:$0xff] %v1413
      %1446 = vst [vmem:[%s151 + $0x50] sm:$0xff] %v1414
      %1447 = vst [vmem:[%s151 + $0x58] sm:$0xff] %v1415
      %1448 = vst [vmem:[%s151 + $0x60] sm:$0xff] %v1416
      %1449 = vst [vmem:[%s151 + $0x68] sm:$0xff] %v1417
      %1450 = vst [vmem:[%s151 + $0x70] sm:$0xff] %v1418
      %1451 = vst [vmem:[%s151 + $0x78] sm:$0xff] %v1419
      %1452 = vst [vmem:[%s151 + $0x80] sm:$0xff] %v1420
      %1453 = vst [vmem:[%s151 + $0x88] sm:$0xff] %v1421
      %1454 = vst [vmem:[%s151 + $0x90] sm:$0xff] %v1422
      %1455 = vst [vmem:[%s151 + $0x98] sm:$0xff] %v1423
      %1456 = vst [vmem:[%s151 + $0xa0] sm:$0xff] %v1424
      %1457 = vst [vmem:[%s151 + $0xa8] sm:$0xff] %v1425
      %1458 = vst [vmem:[%s151 + $0xb0] sm:$0xff] %v1426
      %1459 = vst [vmem:[%s151 + $0xb8] sm:$0xff] %v1427
      %1460 = vst [vmem:[%s151 + $0xc0] sm:$0xff] %v1428
      %1461 = vst [vmem:[%s151 + $0xc8] sm:$0xff] %v1429
      %1462 = vst [vmem:[%s151 + $0xd0] sm:$0xff] %v1430
      %1463 = vst [vmem:[%s151 + $0xd8] sm:$0xff] %v1431
      %1464 = vst [vmem:[%s151 + $0xe0] sm:$0xff] %v1432
      %1465 = vst [vmem:[%s151 + $0xe8] sm:$0xff] %v1433
      %1466 = vst [vmem:[%s151 + $0xf0] sm:$0xff] %v1434
      %1467 = vst [vmem:[%s151 + $0xf8] sm:$0xff] %v1435
      %s1468 = smul.u32 32, %s15
      %p1469 = scmp.lt.s32.totalorder %s1468, 95
      %s1470 = scalar_select %p1469, %s1468, 95
      %s1471 = smul.addr %s1470, 8
      %s1472 = scalar_lea.vmem %s4, %s1471
      // Predicated region
      $region109: #{inception_c_forward.16} parent=31 // pred_check
        %p1473 = pneg %p96
      $region110: #{inception_c_forward.16} parent=31 // pred_check_branch
        %1475 = sbr.rel (%p1473) target = $region112
      $region111: #{inception_c_forward.16} parent=31 // pred_region
        %s1476 = smul.u32 32, %s15
      $region112: #{inception_c_forward.16} parent=31 // pred_fallthru
        _
    $region32: #{inception_c_forward.16} parent=5 // pred_fallthru
      _
    %p1477 = scmp.le.s32.totalorder 2, %s10
    // Predicated region
    $region113: #{inception_c_forward.16} parent=5 // pred_check
      %p1478 = pneg %p1477
    $region114: #{inception_c_forward.16} parent=5 // pred_check_branch
      %1480 = sbr.rel (%p1478) target = $region116
    $region115: #{inception_c_forward.16} parent=5 // pred_region
      %s1481 = ssub.s32 %s10, 2
      // Predicated region
      $region117: #{inception_c_forward.16} parent=115 // pred_check
        %p1482 = pneg %p102
      $region118: #{inception_c_forward.16} parent=115 // pred_check_branch
        %1484 = sbr.rel (%p1482) target = $region120
      $region119: #{inception_c_forward.16} parent=115 // pred_region
        %s1485 = smul.u32 32, %s16
        %p1486 = scmp.lt.s32.totalorder %s1485, 95
        %s1487 = scalar_select %p1486, %s1485, 95
        %s1488 = smul.addr %s1487, 8
        %s1489 = scalar_lea.vmem %s4, %s1488
      $region120: #{inception_c_forward.16} parent=115 // pred_fallthru
        _
    $region116: #{inception_c_forward.16} parent=5 // pred_fallthru
      _
  $region6: #{inception_c_forward.16} parent=0 // loop_footer
    %s14 = sadd.s32 1, %s10
  $region7: #{inception_c_forward.16} parent=0 // loop_footer_branch
    %9 = sbr.rel target = $region3
  $region8: #{inception_c_forward.16} parent=0 // loop_exit
    _
  %1490 = vsyncmov [#allocation3]
  %s1491 = vpop.sfrf %1490
  %p1492 = scmp.eq.s32.totalorder %s1491, 0
  %p1493 = pneg %p1492
  %1495 = shalt.err (%p1493)
  %s1496 = scalar_lea.sflag [#allocation3], 1
  %1497 = vsyncmov %s1496
  %s1498 = vpop.sfrf %1497
  %p1499 = scmp.eq.s32.totalorder %s1498, 0
  %p1500 = pneg %p1499
  %1502 = shalt.err (%p1500)

</llo_original>
